<compile_context>
chip_gen: v5e
topology: v5e:2x2
jax: 0.10.0
libtpu: 0.0.40
codegen_flags: <defaults>
</compile_context>

<pallas_src>
import numpy as np
import jax
import jax.numpy as jnp
from jax.experimental import pallas as pl
from jax.experimental.pallas import tpu as pltpu


def _round_up(x, m):
    return ((x + m - 1) // m) * m


# ----------------------------- parameter prep -------------------------------

def init_params(seed=0):
    """PyTorch-style raw parameters (same shapes as the nn.Module)."""
    key = jax.random.PRNGKey(seed)
    ks = jax.random.split(key, 10)

    def uniform(k, shape, fan_in):
        bound = 1.0 / np.sqrt(float(fan_in))
        return jax.random.uniform(k, shape, jnp.float32, -bound, bound)

    return {
        "conv1_w": uniform(ks[0], (6, 1, 5, 5), 1 * 5 * 5),
        "conv1_b": uniform(ks[1], (6,), 1 * 5 * 5),
        "conv2_w": uniform(ks[2], (12, 6, 5, 5), 6 * 5 * 5),
        "conv2_b": uniform(ks[3], (12,), 6 * 5 * 5),
        "fc1_w":   uniform(ks[4], (120, 192), 192),
        "fc1_b":   uniform(ks[5], (120,), 192),
        "fc2_w":   uniform(ks[6], (60, 120), 120),
        "fc2_b":   uniform(ks[7], (60,), 120),
        "out_w":   uniform(ks[8], (10, 60), 60),
        "out_b":   uniform(ks[9], (10,), 60),
    }


def _conv_pool_dense(w, in_hw, pool_hw):
    """Fold `valid 5x5 conv, evaluated at pool offset (di,dj)` into dense mats.

    Returns A[4, cin*in_hw*in_hw, cout*pool_hw*pool_hw] such that
        (x_flat @ A[di*2+dj])[:, co*pool_hw^2 + oi*pool_hw + oj]
            = conv(x)[co, 2*oi + di, 2*oj + dj]
    so   relu(max_k(x @ A[k]) + bias) == maxpool2x2(relu(conv(x) + bias)).
    Rows use the NCHW flatten of the input (ci*in_hw^2 + h*in_hw + w); columns
    use the NCHW flatten of the pooled output (matches torch reshape(-1, CHW)).
    """
    w = np.asarray(w, np.float32)
    cout, cin, kh, kw = w.shape
    ncol = cout * pool_hw * pool_hw
    A = np.zeros((4, cin, in_hw, in_hw, ncol), np.float32)
    for di in range(2):
        for dj in range(2):
            k = di * 2 + dj
            for co in range(cout):
                for ci in range(cin):
                    for oi in range(pool_hw):
                        for oj in range(pool_hw):
                            i, j = 2 * oi + di, 2 * oj + dj
                            col = (co * pool_hw + oi) * pool_hw + oj
                            A[k, ci, i:i + kh, j:j + kw, col] = w[co, ci]
    return A.reshape(4, cin * in_hw * in_hw, ncol)


def prepare_params(params):
    """One-time rearrangement into kernel-friendly bf16, lane-dense layouts."""
    a1 = _conv_pool_dense(params["conv1_w"], in_hw=28, pool_hw=12)   # [4, 784, 864]
    a2 = _conv_pool_dense(params["conv2_w"], in_hw=12, pool_hw=4)    # [4, 864, 192]
    b1 = np.repeat(np.asarray(params["conv1_b"], np.float32), 12 * 12)[None, :]
    b2 = np.repeat(np.asarray(params["conv2_b"], np.float32), 4 * 4)[None, :]

    # Final layer padded to 128 output lanes -> lane-dense (unmasked) stores.
    w5 = np.zeros((60, 128), np.float32)
    w5[:, :10] = np.asarray(params["out_w"], np.float32).T
    b5 = np.zeros((1, 128), np.float32)
    b5[0, :10] = np.asarray(params["out_b"], np.float32)

    bf16, f32 = jnp.bfloat16, jnp.float32
    return {
        "a1": jnp.asarray(a1, bf16),                                    # [4,784,864]
        "b1": jnp.asarray(b1, f32),                                     # [1,864]
        "a2": jnp.asarray(a2, bf16),                                    # [4,864,192]
        "b2": jnp.asarray(b2, f32),                                     # [1,192]
        "w3": jnp.asarray(np.asarray(params["fc1_w"], np.float32).T, bf16),  # [192,120]
        "b3": jnp.asarray(np.asarray(params["fc1_b"], np.float32)[None, :], f32),
        "w4": jnp.asarray(np.asarray(params["fc2_w"], np.float32).T, bf16),  # [120,60]
        "b4": jnp.asarray(np.asarray(params["fc2_b"], np.float32)[None, :], f32),
        "w5": jnp.asarray(w5, bf16),                                    # [60,128]
        "b5": jnp.asarray(b5, f32),                                     # [1,128]
    }


# ------------------------------ fused kernel --------------------------------

def _lenet_kernel(x_ref, a1_ref, b1_ref, a2_ref, b2_ref, w3_ref, b3_ref,
                  w4_ref, b4_ref, w5_ref, b5_ref, out_ref):
    f32, bf16 = jnp.float32, jnp.bfloat16

    def dot(a, b):
        return jnp.dot(a, b, preferred_element_type=f32)   # bf16 in, f32 acc

    x = x_ref[...]                                          # [TB, 784] bf16

    # conv1 + bias + ReLU + 2x2/2 max-pool  (max of 4 dense matmuls)
    acc = dot(x, a1_ref[0])
    for k in range(1, 4):
        acc = jnp.maximum(acc, dot(x, a1_ref[k]))
    p1 = jnp.maximum(acc + b1_ref[...], 0.0).astype(bf16)   # [TB, 864]

    # conv2 + bias + ReLU + 2x2/2 max-pool
    acc = dot(p1, a2_ref[0])
    for k in range(1, 4):
        acc = jnp.maximum(acc, dot(p1, a2_ref[k]))
    p2 = jnp.maximum(acc + b2_ref[...], 0.0).astype(bf16)   # [TB, 192] (NCHW flat)

    # fc1 + ReLU, fc2 + ReLU, out (lane-padded to 128 columns)
    h = jnp.maximum(dot(p2, w3_ref[...]) + b3_ref[...], 0.0).astype(bf16)   # [TB,120]
    h = jnp.maximum(dot(h, w4_ref[...]) + b4_ref[...], 0.0).astype(bf16)    # [TB,60]
    out_ref[...] = (dot(h, w5_ref[...]) + b5_ref[...]).astype(out_ref.dtype)


# -------------------------------- wrapper ------------------------------------

def _pick_batch_tile(b):
    if b >= 256:
        return 128                              # cap for v7x 64 MiB VMEM
    if b >= 32:
        return _round_up((b + 1) // 2, 16)      # keep grid >= 2 (v7x: 2 TCs)
    return _round_up(b, 16)


def network_forward(prep, x_nchw):
    """x_nchw: [B, 1, 28, 28] -> logits [B, 10] float32."""
    b = x_nchw.shape[0]
    x_flat = x_nchw.reshape(b, 28 * 28).astype(jnp.bfloat16)

    tb = _pick_batch_tile(b)
    bpad = _round_up(b, tb)
    if bpad != b:
        x_flat = jnp.pad(x_flat, ((0, bpad - b), (0, 0)))

    names = ["a1", "b1", "a2", "b2", "w3", "b3", "w4", "b4", "w5", "b5"]
    consts = [prep[n] for n in names]

    def _const_spec(arr):
        return pl.BlockSpec(arr.shape, lambda i, _z=(0,) * arr.ndim: _z)

    out = pl.pallas_call(
        _lenet_kernel,
        out_shape=jax.ShapeDtypeStruct((bpad, 128), jnp.float32),
        grid=(bpad // tb,),
        in_specs=[pl.BlockSpec((tb, 28 * 28), lambda i: (i, 0))]
                 + [_const_spec(c) for c in consts],
        out_specs=pl.BlockSpec((tb, 128), lambda i: (i, 0)),
        compiler_params=pltpu.CompilerParams(
            dimension_semantics=("parallel",),
            vmem_limit_bytes=48 * 1024 * 1024,
        ),
    )(x_flat, *consts)
    return out[:b, :10]


# ------------------------- pure-XLA reference (check) ------------------------

def reference_forward(params, x_nchw):
    b = x_nchw.shape[0]
    dn = ("NCHW", "OIHW", "NCHW")
    hi = jax.lax.Precision.HIGHEST
    y = jax.lax.conv_general_dilated(x_nchw, params["conv1_w"], (1, 1), "VALID",
                                     dimension_numbers=dn, precision=hi)
    y = jax.nn.relu(y + params["conv1_b"][None, :, None, None])
    y = y.reshape(b, 6, 12, 2, 12, 2).max(axis=(3, 5))
    y = jax.lax.conv_general_dilated(y, params["conv2_w"], (1, 1), "VALID",
                                     dimension_numbers=dn, precision=hi)
    y = jax.nn.relu(y + params["conv2_b"][None, :, None, None])
    y = y.reshape(b, 12, 4, 2, 4, 2).max(axis=(3, 5))
    feat = y.reshape(b, 192)
    h = jax.nn.relu(feat @ params["fc1_w"].T + params["fc1_b"])
    h = jax.nn.relu(h @ params["fc2_w"].T + params["fc2_b"])
    return h @ params["out_w"].T + params["out_b"]


# ---------------------------------- main --------------------------------------

if __name__ == "__main__":
    params = init_params(seed=0)
    prep = prepare_params(params)

    key0, key1 = jax.random.split(jax.random.PRNGKey(0))
    # MNIST-shaped input [B, 1, 28, 28] (required by fc1: 12*4*4 = 192)
    x = jax.random.normal(key0, (2, 1, 28, 28), dtype=jnp.float32)

    fwd = jax.jit(network_forward)
    logits = fwd(prep, x)
    jax.block_until_ready(logits)

    assert logits.shape == (2, 10), logits.shape
    assert logits.dtype == jnp.float32

    ref = reference_forward(params, x)
    err = float(jnp.max(jnp.abs(logits - ref)))
    assert err < 5e-2, f"mismatch vs reference (B=2): max abs err = {err}"

    # Also exercise the batch-tiled path (grid > 1, batch padding).
    x2 = jax.random.normal(key1, (100, 1, 28, 28), dtype=jnp.float32)
    logits2 = jax.jit(network_forward)(prep, x2)
    jax.block_until_ready(logits2)
    ref2 = reference_forward(params, x2)
    err2 = float(jnp.max(jnp.abs(logits2 - ref2)))
    assert err2 < 5e-2, f"mismatch vs reference (B=100): max abs err = {err2}"

    print("KERNEL_OK")
</pallas_src>

<mosaic_0001>
module attributes {stable_mosaic.version = 11 : i64} {
  func.func @_lenet_kernel(%arg0: i32, %arg1: memref<16x784xbf16, #tpu.memory_space<vmem>>, %arg2: memref<4x784x864xbf16, #tpu.memory_space<vmem>>, %arg3: memref<1x864xf32, #tpu.memory_space<vmem>>, %arg4: memref<4x864x192xbf16, #tpu.memory_space<vmem>>, %arg5: memref<1x192xf32, #tpu.memory_space<vmem>>, %arg6: memref<192x120xbf16, #tpu.memory_space<vmem>>, %arg7: memref<1x120xf32, #tpu.memory_space<vmem>>, %arg8: memref<120x60xbf16, #tpu.memory_space<vmem>>, %arg9: memref<1x60xf32, #tpu.memory_space<vmem>>, %arg10: memref<60x128xbf16, #tpu.memory_space<vmem>>, %arg11: memref<1x128xf32, #tpu.memory_space<vmem>>, %arg12: memref<16x128xf32, #tpu.memory_space<vmem>>) attributes {dimension_semantics = [#tpu.dimension_semantics<parallel>], iteration_bounds = array<i64: 1>, scalar_prefetch = 0 : i64, scratch_operands = 0 : i64, tpu.core_type = #tpu.core_type<tc>, window_params = [{transform_indices = @transform_0, window_bounds = array<i64: 16, 784>}, {pipeline_mode = #tpu.pipeline_mode<synchronous>, transform_indices = @transform_1, window_bounds = array<i64: 4, 784, 864>}, {pipeline_mode = #tpu.pipeline_mode<synchronous>, transform_indices = @transform_2, window_bounds = array<i64: 1, 864>}, {pipeline_mode = #tpu.pipeline_mode<synchronous>, transform_indices = @transform_3, window_bounds = array<i64: 4, 864, 192>}, {pipeline_mode = #tpu.pipeline_mode<synchronous>, transform_indices = @transform_4, window_bounds = array<i64: 1, 192>}, {pipeline_mode = #tpu.pipeline_mode<synchronous>, transform_indices = @transform_5, window_bounds = array<i64: 192, 120>}, {pipeline_mode = #tpu.pipeline_mode<synchronous>, transform_indices = @transform_6, window_bounds = array<i64: 1, 120>}, {pipeline_mode = #tpu.pipeline_mode<synchronous>, transform_indices = @transform_7, window_bounds = array<i64: 120, 60>}, {pipeline_mode = #tpu.pipeline_mode<synchronous>, transform_indices = @transform_8, window_bounds = array<i64: 1, 60>}, {pipeline_mode = #tpu.pipeline_mode<synchronous>, transform_indices = @transform_9, window_bounds = array<i64: 60, 128>}, {pipeline_mode = #tpu.pipeline_mode<synchronous>, transform_indices = @transform_10, window_bounds = array<i64: 1, 128>}, {transform_indices = @transform_11, window_bounds = array<i64: 16, 128>}]} {
    %c0 = arith.constant 0 : index
    %c0_0 = arith.constant 0 : index
    %0 = vector.load %arg1[%c0, %c0_0] : memref<16x784xbf16, #tpu.memory_space<vmem>>, vector<16x784xbf16>
    %c0_1 = arith.constant 0 : index
    %c0_2 = arith.constant 0 : index
    %c0_3 = arith.constant 0 : index
    %1 = vector.load %arg2[%c0_1, %c0_2, %c0_3] : memref<4x784x864xbf16, #tpu.memory_space<vmem>>, vector<1x784x864xbf16>
    %2 = vector.shape_cast %1 : vector<1x784x864xbf16> to vector<784x864xbf16>
    %cst = arith.constant dense<0.000000e+00> : vector<16x864xf32>
    %3 = tpu.matmul %0, %2, %cst {dimension_numbers = #tpu.dot_dimension_numbers<[1], [0], [0], [1], [0, 0, 1, 1], [], []>} : vector<16x784xbf16>, vector<784x864xbf16>, vector<16x864xf32> -> vector<16x864xf32>
    %c1 = arith.constant 1 : index
    %c0_4 = arith.constant 0 : index
    %c0_5 = arith.constant 0 : index
    %4 = vector.load %arg2[%c1, %c0_4, %c0_5] : memref<4x784x864xbf16, #tpu.memory_space<vmem>>, vector<1x784x864xbf16>
    %5 = vector.shape_cast %4 : vector<1x784x864xbf16> to vector<784x864xbf16>
    %cst_6 = arith.constant dense<0.000000e+00> : vector<16x864xf32>
    %6 = tpu.matmul %0, %5, %cst_6 {dimension_numbers = #tpu.dot_dimension_numbers<[1], [0], [0], [1], [0, 0, 1, 1], [], []>} : vector<16x784xbf16>, vector<784x864xbf16>, vector<16x864xf32> -> vector<16x864xf32>
    %7 = arith.maximumf %3, %6 : vector<16x864xf32>
    %c2 = arith.constant 2 : index
    %c0_7 = arith.constant 0 : index
    %c0_8 = arith.constant 0 : index
    %8 = vector.load %arg2[%c2, %c0_7, %c0_8] : memref<4x784x864xbf16, #tpu.memory_space<vmem>>, vector<1x784x864xbf16>
    %9 = vector.shape_cast %8 : vector<1x784x864xbf16> to vector<784x864xbf16>
    %cst_9 = arith.constant dense<0.000000e+00> : vector<16x864xf32>
    %10 = tpu.matmul %0, %9, %cst_9 {dimension_numbers = #tpu.dot_dimension_numbers<[1], [0], [0], [1], [0, 0, 1, 1], [], []>} : vector<16x784xbf16>, vector<784x864xbf16>, vector<16x864xf32> -> vector<16x864xf32>
    %11 = arith.maximumf %7, %10 : vector<16x864xf32>
    %c3 = arith.constant 3 : index
    %c0_10 = arith.constant 0 : index
    %c0_11 = arith.constant 0 : index
    %12 = vector.load %arg2[%c3, %c0_10, %c0_11] : memref<4x784x864xbf16, #tpu.memory_space<vmem>>, vector<1x784x864xbf16>
    %13 = vector.shape_cast %12 : vector<1x784x864xbf16> to vector<784x864xbf16>
    %cst_12 = arith.constant dense<0.000000e+00> : vector<16x864xf32>
    %14 = tpu.matmul %0, %13, %cst_12 {dimension_numbers = #tpu.dot_dimension_numbers<[1], [0], [0], [1], [0, 0, 1, 1], [], []>} : vector<16x784xbf16>, vector<784x864xbf16>, vector<16x864xf32> -> vector<16x864xf32>
    %15 = arith.maximumf %11, %14 : vector<16x864xf32>
    %c0_13 = arith.constant 0 : index
    %c0_14 = arith.constant 0 : index
    %16 = vector.load %arg3[%c0_13, %c0_14] : memref<1x864xf32, #tpu.memory_space<vmem>>, vector<1x864xf32>
    %17 = vector.broadcast %16 : vector<1x864xf32> to vector<16x864xf32>
    %18 = arith.addf %15, %17 : vector<16x864xf32>
    %cst_15 = arith.constant 0.000000e+00 : f32
    %19 = vector.broadcast %cst_15 : f32 to vector<16x864xf32>
    %20 = arith.maximumf %18, %19 : vector<16x864xf32>
    %21 = arith.truncf %20 : vector<16x864xf32> to vector<16x864xbf16>
    %c0_16 = arith.constant 0 : index
    %c0_17 = arith.constant 0 : index
    %c0_18 = arith.constant 0 : index
    %22 = vector.load %arg4[%c0_16, %c0_17, %c0_18] : memref<4x864x192xbf16, #tpu.memory_space<vmem>>, vector<1x864x192xbf16>
    %23 = vector.shape_cast %22 : vector<1x864x192xbf16> to vector<864x192xbf16>
    %cst_19 = arith.constant dense<0.000000e+00> : vector<16x192xf32>
    %24 = tpu.matmul %21, %23, %cst_19 {dimension_numbers = #tpu.dot_dimension_numbers<[1], [0], [0], [1], [0, 0, 1, 1], [], []>} : vector<16x864xbf16>, vector<864x192xbf16>, vector<16x192xf32> -> vector<16x192xf32>
    %c1_20 = arith.constant 1 : index
    %c0_21 = arith.constant 0 : index
    %c0_22 = arith.constant 0 : index
    %25 = vector.load %arg4[%c1_20, %c0_21, %c0_22] : memref<4x864x192xbf16, #tpu.memory_space<vmem>>, vector<1x864x192xbf16>
    %26 = vector.shape_cast %25 : vector<1x864x192xbf16> to vector<864x192xbf16>
    %cst_23 = arith.constant dense<0.000000e+00> : vector<16x192xf32>
    %27 = tpu.matmul %21, %26, %cst_23 {dimension_numbers = #tpu.dot_dimension_numbers<[1], [0], [0], [1], [0, 0, 1, 1], [], []>} : vector<16x864xbf16>, vector<864x192xbf16>, vector<16x192xf32> -> vector<16x192xf32>
    %28 = arith.maximumf %24, %27 : vector<16x192xf32>
    %c2_24 = arith.constant 2 : index
    %c0_25 = arith.constant 0 : index
    %c0_26 = arith.constant 0 : index
    %29 = vector.load %arg4[%c2_24, %c0_25, %c0_26] : memref<4x864x192xbf16, #tpu.memory_space<vmem>>, vector<1x864x192xbf16>
    %30 = vector.shape_cast %29 : vector<1x864x192xbf16> to vector<864x192xbf16>
    %cst_27 = arith.constant dense<0.000000e+00> : vector<16x192xf32>
    %31 = tpu.matmul %21, %30, %cst_27 {dimension_numbers = #tpu.dot_dimension_numbers<[1], [0], [0], [1], [0, 0, 1, 1], [], []>} : vector<16x864xbf16>, vector<864x192xbf16>, vector<16x192xf32> -> vector<16x192xf32>
    %32 = arith.maximumf %28, %31 : vector<16x192xf32>
    %c3_28 = arith.constant 3 : index
    %c0_29 = arith.constant 0 : index
    %c0_30 = arith.constant 0 : index
    %33 = vector.load %arg4[%c3_28, %c0_29, %c0_30] : memref<4x864x192xbf16, #tpu.memory_space<vmem>>, vector<1x864x192xbf16>
    %34 = vector.shape_cast %33 : vector<1x864x192xbf16> to vector<864x192xbf16>
    %cst_31 = arith.constant dense<0.000000e+00> : vector<16x192xf32>
    %35 = tpu.matmul %21, %34, %cst_31 {dimension_numbers = #tpu.dot_dimension_numbers<[1], [0], [0], [1], [0, 0, 1, 1], [], []>} : vector<16x864xbf16>, vector<864x192xbf16>, vector<16x192xf32> -> vector<16x192xf32>
    %36 = arith.maximumf %32, %35 : vector<16x192xf32>
    %c0_32 = arith.constant 0 : index
    %c0_33 = arith.constant 0 : index
    %37 = vector.load %arg5[%c0_32, %c0_33] : memref<1x192xf32, #tpu.memory_space<vmem>>, vector<1x192xf32>
    %38 = vector.broadcast %37 : vector<1x192xf32> to vector<16x192xf32>
    %39 = arith.addf %36, %38 : vector<16x192xf32>
    %cst_34 = arith.constant 0.000000e+00 : f32
    %40 = vector.broadcast %cst_34 : f32 to vector<16x192xf32>
    %41 = arith.maximumf %39, %40 : vector<16x192xf32>
    %42 = arith.truncf %41 : vector<16x192xf32> to vector<16x192xbf16>
    %c0_35 = arith.constant 0 : index
    %c0_36 = arith.constant 0 : index
    %43 = vector.load %arg6[%c0_35, %c0_36] : memref<192x120xbf16, #tpu.memory_space<vmem>>, vector<192x120xbf16>
    %cst_37 = arith.constant dense<0.000000e+00> : vector<16x120xf32>
    %44 = tpu.matmul %42, %43, %cst_37 {dimension_numbers = #tpu.dot_dimension_numbers<[1], [0], [0], [1], [0, 0, 1, 1], [], []>} : vector<16x192xbf16>, vector<192x120xbf16>, vector<16x120xf32> -> vector<16x120xf32>
    %c0_38 = arith.constant 0 : index
    %c0_39 = arith.constant 0 : index
    %45 = vector.load %arg7[%c0_38, %c0_39] : memref<1x120xf32, #tpu.memory_space<vmem>>, vector<1x120xf32>
    %46 = vector.broadcast %45 : vector<1x120xf32> to vector<16x120xf32>
    %47 = arith.addf %44, %46 : vector<16x120xf32>
    %cst_40 = arith.constant 0.000000e+00 : f32
    %48 = vector.broadcast %cst_40 : f32 to vector<16x120xf32>
    %49 = arith.maximumf %47, %48 : vector<16x120xf32>
    %50 = arith.truncf %49 : vector<16x120xf32> to vector<16x120xbf16>
    %c0_41 = arith.constant 0 : index
    %c0_42 = arith.constant 0 : index
    %51 = vector.load %arg8[%c0_41, %c0_42] : memref<120x60xbf16, #tpu.memory_space<vmem>>, vector<120x60xbf16>
    %cst_43 = arith.constant dense<0.000000e+00> : vector<16x60xf32>
    %52 = tpu.matmul %50, %51, %cst_43 {dimension_numbers = #tpu.dot_dimension_numbers<[1], [0], [0], [1], [0, 0, 1, 1], [], []>} : vector<16x120xbf16>, vector<120x60xbf16>, vector<16x60xf32> -> vector<16x60xf32>
    %c0_44 = arith.constant 0 : index
    %c0_45 = arith.constant 0 : index
    %53 = vector.load %arg9[%c0_44, %c0_45] : memref<1x60xf32, #tpu.memory_space<vmem>>, vector<1x60xf32>
    %54 = vector.broadcast %53 : vector<1x60xf32> to vector<16x60xf32>
    %55 = arith.addf %52, %54 : vector<16x60xf32>
    %cst_46 = arith.constant 0.000000e+00 : f32
    %56 = vector.broadcast %cst_46 : f32 to vector<16x60xf32>
    %57 = arith.maximumf %55, %56 : vector<16x60xf32>
    %58 = arith.truncf %57 : vector<16x60xf32> to vector<16x60xbf16>
    %c0_47 = arith.constant 0 : index
    %c0_48 = arith.constant 0 : index
    %59 = vector.load %arg10[%c0_47, %c0_48] : memref<60x128xbf16, #tpu.memory_space<vmem>>, vector<60x128xbf16>
    %cst_49 = arith.constant dense<0.000000e+00> : vector<16x128xf32>
    %60 = tpu.matmul %58, %59, %cst_49 {dimension_numbers = #tpu.dot_dimension_numbers<[1], [0], [0], [1], [0, 0, 1, 1], [], []>} : vector<16x60xbf16>, vector<60x128xbf16>, vector<16x128xf32> -> vector<16x128xf32>
    %c0_50 = arith.constant 0 : index
    %c0_51 = arith.constant 0 : index
    %61 = vector.load %arg11[%c0_50, %c0_51] : memref<1x128xf32, #tpu.memory_space<vmem>>, vector<1x128xf32>
    %62 = vector.broadcast %61 : vector<1x128xf32> to vector<16x128xf32>
    %63 = arith.addf %60, %62 : vector<16x128xf32>
    %c0_52 = arith.constant 0 : index
    %c0_53 = arith.constant 0 : index
    %64 = vector.load %arg12[%c0_52, %c0_53] : memref<16x128xf32, #tpu.memory_space<vmem>>, vector<16x128xf32>
    tpu.vector_store %arg12[%c0_52, %c0_53], %63 {strides = array<i32>} : memref<16x128xf32, #tpu.memory_space<vmem>>, vector<16x128xf32>,
    return
  }
  func.func @transform_0(%arg0: i32) -> (i32, i32) {
    %c0_i32 = arith.constant 0 : i32
    %c0_i32_0 = arith.constant 0 : i32
    return %arg0, %c0_i32 : i32, i32
  }
  func.func @transform_1(%arg0: i32) -> (i32, i32, i32) {
    %c0_i32 = arith.constant 0 : i32
    %c0_i32_0 = arith.constant 0 : i32
    %c0_i32_1 = arith.constant 0 : i32
    %c0_i32_2 = arith.constant 0 : i32
    return %c0_i32, %c0_i32_0, %c0_i32_1 : i32, i32, i32
  }
  func.func @transform_2(%arg0: i32) -> (i32, i32) {
    %c0_i32 = arith.constant 0 : i32
    %c0_i32_0 = arith.constant 0 : i32
    %c0_i32_1 = arith.constant 0 : i32
    return %c0_i32, %c0_i32_0 : i32, i32
  }
  func.func @transform_3(%arg0: i32) -> (i32, i32, i32) {
    %c0_i32 = arith.constant 0 : i32
    %c0_i32_0 = arith.constant 0 : i32
    %c0_i32_1 = arith.constant 0 : i32
    %c0_i32_2 = arith.constant 0 : i32
    return %c0_i32, %c0_i32_0, %c0_i32_1 : i32, i32, i32
  }
  func.func @transform_4(%arg0: i32) -> (i32, i32) {
    %c0_i32 = arith.constant 0 : i32
    %c0_i32_0 = arith.constant 0 : i32
    %c0_i32_1 = arith.constant 0 : i32
    return %c0_i32, %c0_i32_0 : i32, i32
  }
  func.func @transform_5(%arg0: i32) -> (i32, i32) {
    %c0_i32 = arith.constant 0 : i32
    %c0_i32_0 = arith.constant 0 : i32
    %c0_i32_1 = arith.constant 0 : i32
    return %c0_i32, %c0_i32_0 : i32, i32
  }
  func.func @transform_6(%arg0: i32) -> (i32, i32) {
    %c0_i32 = arith.constant 0 : i32
    %c0_i32_0 = arith.constant 0 : i32
    %c0_i32_1 = arith.constant 0 : i32
    return %c0_i32, %c0_i32_0 : i32, i32
  }
  func.func @transform_7(%arg0: i32) -> (i32, i32) {
    %c0_i32 = arith.constant 0 : i32
    %c0_i32_0 = arith.constant 0 : i32
    %c0_i32_1 = arith.constant 0 : i32
    return %c0_i32, %c0_i32_0 : i32, i32
  }
  func.func @transform_8(%arg0: i32) -> (i32, i32) {
    %c0_i32 = arith.constant 0 : i32
    %c0_i32_0 = arith.constant 0 : i32
    %c0_i32_1 = arith.constant 0 : i32
    return %c0_i32, %c0_i32_0 : i32, i32
  }
  func.func @transform_9(%arg0: i32) -> (i32, i32) {
    %c0_i32 = arith.constant 0 : i32
    %c0_i32_0 = arith.constant 0 : i32
    %c0_i32_1 = arith.constant 0 : i32
    return %c0_i32, %c0_i32_0 : i32, i32
  }
  func.func @transform_10(%arg0: i32) -> (i32, i32) {
    %c0_i32 = arith.constant 0 : i32
    %c0_i32_0 = arith.constant 0 : i32
    %c0_i32_1 = arith.constant 0 : i32
    return %c0_i32, %c0_i32_0 : i32, i32
  }
  func.func @transform_11(%arg0: i32) -> (i32, i32) {
    %c0_i32 = arith.constant 0 : i32
    %c0_i32_0 = arith.constant 0 : i32
    return %arg0, %c0_i32 : i32, i32
  }
}

</mosaic_0001>

<llo_original>
// kernel: network_forward.1
$region0: #{network_forward.1}
  #allocation0 [shape = 'u32[]', space=smem, size = 0x4, offset = 0x4, fixed_abs, tag = 'smem constant byte address 0x4 - core index']
  #allocation1 [shape = 'u32[72,128]{1,0:T(1,128)}', space=vmem, size = 0x9000, scoped, tag = 'internal scratch']
  %s0 = inlined_call_operand.vmem [shape: bf16[16,784], index: 0, kind: input, shape index: {}]
  %s1 = inlined_call_operand.hbm [shape: bf16[4,784,864], index: 1, kind: input, shape index: {}]
  %s2 = inlined_call_operand.vmem [shape: f32[1,864], index: 2, kind: input, shape index: {}]
  %s3 = inlined_call_operand.vmem [shape: bf16[4,864,192], index: 3, kind: input, shape index: {}]
  %s4 = inlined_call_operand.vmem [shape: f32[1,192], index: 4, kind: input, shape index: {}]
  %s5 = inlined_call_operand.vmem [shape: bf16[192,120], index: 5, kind: input, shape index: {}]
  %s6 = inlined_call_operand.vmem [shape: f32[1,120], index: 6, kind: input, shape index: {}]
  %s7 = inlined_call_operand.vmem [shape: bf16[120,60], index: 7, kind: input, shape index: {}]
  %s8 = inlined_call_operand.vmem [shape: f32[1,60], index: 8, kind: input, shape index: {}]
  %s9 = inlined_call_operand.vmem [shape: bf16[60,128], index: 9, kind: input, shape index: {}]
  %s10 = inlined_call_operand.vmem [shape: f32[1,128], index: 10, kind: input, shape index: {}]
  %s11 = inlined_call_operand.vmem [shape: f32[16,128], index: 11, kind: output, shape index: {}]
  %s12 = sld [smem:[#allocation0]]
  $region58: #{network_forward.1} parent=0
    _
  %s14 = ssub.s32 1, %s12
  %s15 = scalar_select 0, %s14, %s12
  $region1: #{network_forward.1} parent=0
    #allocation2 [shape = 'u8[5619712]{0}', space=vmem, size = 0x55c000, scoped, tag = 'input window, operand 1, single buffered']
    #allocation3 [shape = 's32[1]{0}', space=sflag, size = 0x4, scoped, tag = 'scoped memory for network_forward.1']
    %16 = vsyncpa [#allocation3], 0
    // Predicated region
    $region2: #{network_forward.1} parent=1 // pred_check
      _
    $region3: #{network_forward.1} parent=1 // pred_check_branch
      %18 = sbr.rel (0) target = $region5
    $region4: #{network_forward.1} parent=1 // pred_region
      _
    $region5: #{network_forward.1} parent=1 // pred_fallthru
      _
    // Predicated region
    $region6: #{network_forward.1} parent=1 // pred_check
      _
    $region7: #{network_forward.1} parent=1 // pred_check_branch
      %20 = sbr.rel (0) target = $region9
    $region8: #{network_forward.1} parent=1 // pred_region
      %22 = vsyncadd [#allocation3], 0
      %s23 = sshll.u32 %s1, 4
      %s24 = int_to_ptr.hbm [resolvable:$true] %s23
      %s25 = sshll.u32 [#allocation2], 4
      %s26 = int_to_ptr.vmem [resolvable:$true] %s25
      %31 = dma.hbm_to_vmem [thread:$0]  %s24, 175616, %s26, [#allocation3], 448, 448, 28
    $region9: #{network_forward.1} parent=1 // pred_fallthru
      _
    // Predicated region
    $region10: #{network_forward.1} parent=1 // pred_check
      _
    $region11: #{network_forward.1} parent=1 // pred_check_branch
      %33 = sbr.rel (0) target = $region13
    $region12: #{network_forward.1} parent=1 // pred_region
      _
    $region13: #{network_forward.1} parent=1 // pred_fallthru
      _
    // Predicated region
    $region14: #{network_forward.1} parent=1 // pred_check
      _
    $region15: #{network_forward.1} parent=1 // pred_check_branch
      %35 = sbr.rel (0) target = $region17
    $region16: #{network_forward.1} parent=1 // pred_region
      _
    $region17: #{network_forward.1} parent=1 // pred_fallthru
      _
    // Predicated region
    $region18: #{network_forward.1} parent=1 // pred_check
      _
    $region19: #{network_forward.1} parent=1 // pred_check_branch
      %37 = sbr.rel (0) target = $region21
    $region20: #{network_forward.1} parent=1 // pred_region
      _
    $region21: #{network_forward.1} parent=1 // pred_fallthru
      _
    // Predicated region
    $region22: #{network_forward.1} parent=1 // pred_check
      _
    $region23: #{network_forward.1} parent=1 // pred_check_branch
      %39 = sbr.rel (0) target = $region25
    $region24: #{network_forward.1} parent=1 // pred_region
      _
    $region25: #{network_forward.1} parent=1 // pred_fallthru
      _
    // Predicated region
    $region26: #{network_forward.1} parent=1 // pred_check
      _
    $region27: #{network_forward.1} parent=1 // pred_check_branch
      %41 = sbr.rel (0) target = $region29
    $region28: #{network_forward.1} parent=1 // pred_region
      _
    $region29: #{network_forward.1} parent=1 // pred_fallthru
      _
    // Predicated region
    $region30: #{network_forward.1} parent=1 // pred_check
      _
    $region31: #{network_forward.1} parent=1 // pred_check_branch
      %43 = sbr.rel (0) target = $region33
    $region32: #{network_forward.1} parent=1 // pred_region
      _
    $region33: #{network_forward.1} parent=1 // pred_fallthru
      _
    // Predicated region
    $region34: #{network_forward.1} parent=1 // pred_check
      _
    $region35: #{network_forward.1} parent=1 // pred_check_branch
      %45 = sbr.rel (0) target = $region37
    $region36: #{network_forward.1} parent=1 // pred_region
      _
    $region37: #{network_forward.1} parent=1 // pred_fallthru
      _
    // Predicated region
    $region38: #{network_forward.1} parent=1 // pred_check
      _
    $region39: #{network_forward.1} parent=1 // pred_check_branch
      %47 = sbr.rel (0) target = $region41
    $region40: #{network_forward.1} parent=1 // pred_region
      _
    $region41: #{network_forward.1} parent=1 // pred_fallthru
      _
    // Predicated region
    $region42: #{network_forward.1} parent=1 // pred_check
      _
    $region43: #{network_forward.1} parent=1 // pred_check_branch
      %49 = sbr.rel (0) target = $region45
    $region44: #{network_forward.1} parent=1 // pred_region
      _
    $region45: #{network_forward.1} parent=1 // pred_fallthru
      _
    // Predicated region
    $region46: #{network_forward.1} parent=1 // pred_check
      _
    $region47: #{network_forward.1} parent=1 // pred_check_branch
      %51 = sbr.rel (0) target = $region49
    $region48: #{network_forward.1} parent=1 // pred_region
      %53 = dma.done [#allocation3], 175616
    $region49: #{network_forward.1} parent=1 // pred_fallthru
      _
    %v55 = vld [vmem:[%s0] sm:$0xff]
    %v56 = vld [vmem:[%s0 + $0x8] sm:$0xff]
    %v57 = vld [vmem:[%s0 + $0x10] sm:$0xff]
    %v58 = vld [vmem:[%s0 + $0x18] sm:$0xf]
    %v59 = vld [vmem:[%s0 + $0x1c] sm:$0xff]
    %v60 = vld [vmem:[%s0 + $0x24] sm:$0xff]
    %v61 = vld [vmem:[%s0 + $0x2c] sm:$0xff]
    %v62 = vld [vmem:[%s0 + $0x34] sm:$0xf]
    %v63 = vld [vmem:[#allocation2] sm:$0xff]
    %v64 = vld [vmem:[#allocation2 + $0x8] sm:$0xff]
    %v65 = vld [vmem:[#allocation2 + $0x10] sm:$0xff]
    %v66 = vld [vmem:[#allocation2 + $0x18] sm:$0xf]
    %v67 = vld [vmem:[#allocation2 + $0x1c] sm:$0xff]
    %v68 = vld [vmem:[#allocation2 + $0x24] sm:$0xff]
    %v69 = vld [vmem:[#allocation2 + $0x2c] sm:$0xff]
    %v70 = vld [vmem:[#allocation2 + $0x34] sm:$0xf]
    %v71 = vld [vmem:[#allocation2 + $0x38] sm:$0xff]
    %v72 = vld [vmem:[#allocation2 + $0x40] sm:$0xff]
    %v73 = vld [vmem:[#allocation2 + $0x48] sm:$0xff]
    %v74 = vld [vmem:[#allocation2 + $0x50] sm:$0xf]
    %v75 = vld [vmem:[#allocation2 + $0x54] sm:$0xff]
    %v76 = vld [vmem:[#allocation2 + $0x5c] sm:$0xff]
    %v77 = vld [vmem:[#allocation2 + $0x64] sm:$0xff]
    %v78 = vld [vmem:[#allocation2 + $0x6c] sm:$0xf]
    %v79 = vld [vmem:[#allocation2 + $0x70] sm:$0xff]
    %v80 = vld [vmem:[#allocation2 + $0x78] sm:$0xff]
    %v81 = vld [vmem:[#allocation2 + $0x80] sm:$0xff]
    %v82 = vld [vmem:[#allocation2 + $0x88] sm:$0xf]
    %v83 = vld [vmem:[#allocation2 + $0x8c] sm:$0xff]
    %v84 = vld [vmem:[#allocation2 + $0x94] sm:$0xff]
    %v85 = vld [vmem:[#allocation2 + $0x9c] sm:$0xff]
    %v86 = vld [vmem:[#allocation2 + $0xa4] sm:$0xf]
    %v87 = vld [vmem:[#allocation2 + $0xa8] sm:$0xff]
    %v88 = vld [vmem:[#allocation2 + $0xb0] sm:$0xff]
    %v89 = vld [vmem:[#allocation2 + $0xb8] sm:$0xff]
    %v90 = vld [vmem:[#allocation2 + $0xc0] sm:$0xf]
    %v91 = vld [vmem:[#allocation2 + $0xc4] sm:$0xff]
    %v92 = vld [vmem:[#allocation2 + $0xcc] sm:$0xff]
    %v93 = vld [vmem:[#allocation2 + $0xd4] sm:$0xff]
    %v94 = vld [vmem:[#allocation2 + $0xdc] sm:$0xf]
    %v95 = vld [vmem:[#allocation2 + $0xe0] sm:$0xff]
    %v96 = vld [vmem:[#allocation2 + $0xe8] sm:$0xff]
    %v97 = vld [vmem:[#allocation2 + $0xf0] sm:$0xff]
    %v98 = vld [vmem:[#allocation2 + $0xf8] sm:$0xf]
    %v99 = vld [vmem:[#allocation2 + $0xfc] sm:$0xff]
    %v100 = vld [vmem:[#allocation2 + $0x104] sm:$0xff]
    %v101 = vld [vmem:[#allocation2 + $0x10c] sm:$0xff]
    %v102 = vld [vmem:[#allocation2 + $0x114] sm:$0xf]
    %v103 = vld [vmem:[#allocation2 + $0x118] sm:$0xff]
    %v104 = vld [vmem:[#allocation2 + $0x120] sm:$0xff]
    %v105 = vld [vmem:[#allocation2 + $0x128] sm:$0xff]
    %v106 = vld [vmem:[#allocation2 + $0x130] sm:$0xf]
    %v107 = vld [vmem:[#allocation2 + $0x134] sm:$0xff]
    %v108 = vld [vmem:[#allocation2 + $0x13c] sm:$0xff]
    %v109 = vld [vmem:[#allocation2 + $0x144] sm:$0xff]
    %v110 = vld [vmem:[#allocation2 + $0x14c] sm:$0xf]
    %v111 = vld [vmem:[#allocation2 + $0x150] sm:$0xff]
    %v112 = vld [vmem:[#allocation2 + $0x158] sm:$0xff]
    %v113 = vld [vmem:[#allocation2 + $0x160] sm:$0xff]
    %v114 = vld [vmem:[#allocation2 + $0x168] sm:$0xf]
    %v115 = vld [vmem:[#allocation2 + $0x16c] sm:$0xff]
    %v116 = vld [vmem:[#allocation2 + $0x174] sm:$0xff]
    %v117 = vld [vmem:[#allocation2 + $0x17c] sm:$0xff]
    %v118 = vld [vmem:[#allocation2 + $0x184] sm:$0xf]
    %v119 = vld [vmem:[#allocation2 + $0x188] sm:$0xff]
    %v120 = vld [vmem:[#allocation2 + $0x190] sm:$0xff]
    %v121 = vld [vmem:[#allocation2 + $0x198] sm:$0xff]
    %v122 = vld [vmem:[#allocation2 + $0x1a0] sm:$0xf]
    %v123 = vld [vmem:[#allocation2 + $0x1a4] sm:$0xff]
    %v124 = vld [vmem:[#allocation2 + $0x1ac] sm:$0xff]
    %v125 = vld [vmem:[#allocation2 + $0x1b4] sm:$0xff]
    %v126 = vld [vmem:[#allocation2 + $0x1bc] sm:$0xf]
    %v127 = vld [vmem:[#allocation2 + $0x1c0] sm:$0xff]
    %v128 = vld [vmem:[#allocation2 + $0x1c8] sm:$0xff]
    %v129 = vld [vmem:[#allocation2 + $0x1d0] sm:$0xff]
    %v130 = vld [vmem:[#allocation2 + $0x1d8] sm:$0xf]
    %v131 = vld [vmem:[#allocation2 + $0x1dc] sm:$0xff]
    %v132 = vld [vmem:[#allocation2 + $0x1e4] sm:$0xff]
    %v133 = vld [vmem:[#allocation2 + $0x1ec] sm:$0xff]
    %v134 = vld [vmem:[#allocation2 + $0x1f4] sm:$0xf]
    %v135 = vld [vmem:[#allocation2 + $0x1f8] sm:$0xff]
    %v136 = vld [vmem:[#allocation2 + $0x200] sm:$0xff]
    %v137 = vld [vmem:[#allocation2 + $0x208] sm:$0xff]
    %v138 = vld [vmem:[#allocation2 + $0x210] sm:$0xf]
    %v139 = vld [vmem:[#allocation2 + $0x214] sm:$0xff]
    %v140 = vld [vmem:[#allocation2 + $0x21c] sm:$0xff]
    %v141 = vld [vmem:[#allocation2 + $0x224] sm:$0xff]
    %v142 = vld [vmem:[#allocation2 + $0x22c] sm:$0xf]
    %v143 = vld [vmem:[#allocation2 + $0x230] sm:$0xff]
    %v144 = vld [vmem:[#allocation2 + $0x238] sm:$0xff]
    %v145 = vld [vmem:[#allocation2 + $0x240] sm:$0xff]
    %v146 = vld [vmem:[#allocation2 + $0x248] sm:$0xf]
    %v147 = vld [vmem:[#allocation2 + $0x24c] sm:$0xff]
    %v148 = vld [vmem:[#allocation2 + $0x254] sm:$0xff]
    %v149 = vld [vmem:[#allocation2 + $0x25c] sm:$0xff]
    %v150 = vld [vmem:[#allocation2 + $0x264] sm:$0xf]
    %v151 = vld [vmem:[#allocation2 + $0x268] sm:$0xff]
    %v152 = vld [vmem:[#allocation2 + $0x270] sm:$0xff]
    %v153 = vld [vmem:[#allocation2 + $0x278] sm:$0xff]
    %v154 = vld [vmem:[#allocation2 + $0x280] sm:$0xf]
    %v155 = vld [vmem:[#allocation2 + $0x284] sm:$0xff]
    %v156 = vld [vmem:[#allocation2 + $0x28c] sm:$0xff]
    %v157 = vld [vmem:[#allocation2 + $0x294] sm:$0xff]
    %v158 = vld [vmem:[#allocation2 + $0x29c] sm:$0xf]
    %v159 = vld [vmem:[#allocation2 + $0x2a0] sm:$0xff]
    %v160 = vld [vmem:[#allocation2 + $0x2a8] sm:$0xff]
    %v161 = vld [vmem:[#allocation2 + $0x2b0] sm:$0xff]
    %v162 = vld [vmem:[#allocation2 + $0x2b8] sm:$0xf]
    %v163 = vld [vmem:[#allocation2 + $0x2bc] sm:$0xff]
    %v164 = vld [vmem:[#allocation2 + $0x2c4] sm:$0xff]
    %v165 = vld [vmem:[#allocation2 + $0x2cc] sm:$0xff]
    %v166 = vld [vmem:[#allocation2 + $0x2d4] sm:$0xf]
    %v167 = vld [vmem:[#allocation2 + $0x2d8] sm:$0xff]
    %v168 = vld [vmem:[#allocation2 + $0x2e0] sm:$0xff]
    %v169 = vld [vmem:[#allocation2 + $0x2e8] sm:$0xff]
    %v170 = vld [vmem:[#allocation2 + $0x2f0] sm:$0xf]
    %v171 = vld [vmem:[#allocation2 + $0x2f4] sm:$0xff]
    %v172 = vld [vmem:[#allocation2 + $0x2fc] sm:$0xff]
    %v173 = vld [vmem:[#allocation2 + $0x304] sm:$0xff]
    %v174 = vld [vmem:[#allocation2 + $0x30c] sm:$0xf]
    %v175 = vld [vmem:[#allocation2 + $0x310] sm:$0xff]
    %v176 = vld [vmem:[#allocation2 + $0x318] sm:$0xff]
    %v177 = vld [vmem:[#allocation2 + $0x320] sm:$0xff]
    %v178 = vld [vmem:[#allocation2 + $0x328] sm:$0xf]
    %v179 = vld [vmem:[#allocation2 + $0x32c] sm:$0xff]
    %v180 = vld [vmem:[#allocation2 + $0x334] sm:$0xff]
    %v181 = vld [vmem:[#allocation2 + $0x33c] sm:$0xff]
    %v182 = vld [vmem:[#allocation2 + $0x344] sm:$0xf]
    %v183 = vld [vmem:[#allocation2 + $0x348] sm:$0xff]
    %v184 = vld [vmem:[#allocation2 + $0x350] sm:$0xff]
    %v185 = vld [vmem:[#allocation2 + $0x358] sm:$0xff]
    %v186 = vld [vmem:[#allocation2 + $0x360] sm:$0xf]
    %v187 = vld [vmem:[#allocation2 + $0x364] sm:$0xff]
    %v188 = vld [vmem:[#allocation2 + $0x36c] sm:$0xff]
    %v189 = vld [vmem:[#allocation2 + $0x374] sm:$0xff]
    %v190 = vld [vmem:[#allocation2 + $0x37c] sm:$0xf]
    %v191 = vld [vmem:[#allocation2 + $0x380] sm:$0xff]
    %v192 = vld [vmem:[#allocation2 + $0x388] sm:$0xff]
    %v193 = vld [vmem:[#allocation2 + $0x390] sm:$0xff]
    %v194 = vld [vmem:[#allocation2 + $0x398] sm:$0xf]
    %v195 = vld [vmem:[#allocation2 + $0x39c] sm:$0xff]
    %v196 = vld [vmem:[#allocation2 + $0x3a4] sm:$0xff]
    %v197 = vld [vmem:[#allocation2 + $0x3ac] sm:$0xff]
    %v198 = vld [vmem:[#allocation2 + $0x3b4] sm:$0xf]
    %v199 = vld [vmem:[#allocation2 + $0x3b8] sm:$0xff]
    %v200 = vld [vmem:[#allocation2 + $0x3c0] sm:$0xff]
    %v201 = vld [vmem:[#allocation2 + $0x3c8] sm:$0xff]
    %v202 = vld [vmem:[#allocation2 + $0x3d0] sm:$0xf]
    %v203 = vld [vmem:[#allocation2 + $0x3d4] sm:$0xff]
    %v204 = vld [vmem:[#allocation2 + $0x3dc] sm:$0xff]
    %v205 = vld [vmem:[#allocation2 + $0x3e4] sm:$0xff]
    %v206 = vld [vmem:[#allocation2 + $0x3ec] sm:$0xf]
    %v207 = vld [vmem:[#allocation2 + $0x3f0] sm:$0xff]
    %v208 = vld [vmem:[#allocation2 + $0x3f8] sm:$0xff]
    %v209 = vld [vmem:[#allocation2 + $0x400] sm:$0xff]
    %v210 = vld [vmem:[#allocation2 + $0x408] sm:$0xf]
    %v211 = vld [vmem:[#allocation2 + $0x40c] sm:$0xff]
    %v212 = vld [vmem:[#allocation2 + $0x414] sm:$0xff]
    %v213 = vld [vmem:[#allocation2 + $0x41c] sm:$0xff]
    %v214 = vld [vmem:[#allocation2 + $0x424] sm:$0xf]
    %v215 = vld [vmem:[#allocation2 + $0x428] sm:$0xff]
    %v216 = vld [vmem:[#allocation2 + $0x430] sm:$0xff]
    %v217 = vld [vmem:[#allocation2 + $0x438] sm:$0xff]
    %v218 = vld [vmem:[#allocation2 + $0x440] sm:$0xf]
    %v219 = vld [vmem:[#allocation2 + $0x444] sm:$0xff]
    %v220 = vld [vmem:[#allocation2 + $0x44c] sm:$0xff]
    %v221 = vld [vmem:[#allocation2 + $0x454] sm:$0xff]
    %v222 = vld [vmem:[#allocation2 + $0x45c] sm:$0xf]
    %v223 = vld [vmem:[#allocation2 + $0x460] sm:$0xff]
    %v224 = vld [vmem:[#allocation2 + $0x468] sm:$0xff]
    %v225 = vld [vmem:[#allocation2 + $0x470] sm:$0xff]
    %v226 = vld [vmem:[#allocation2 + $0x478] sm:$0xf]
    %v227 = vld [vmem:[#allocation2 + $0x47c] sm:$0xff]
    %v228 = vld [vmem:[#allocation2 + $0x484] sm:$0xff]
    %v229 = vld [vmem:[#allocation2 + $0x48c] sm:$0xff]
    %v230 = vld [vmem:[#allocation2 + $0x494] sm:$0xf]
    %v231 = vld [vmem:[#allocation2 + $0x498] sm:$0xff]
    %v232 = vld [vmem:[#allocation2 + $0x4a0] sm:$0xff]
    %v233 = vld [vmem:[#allocation2 + $0x4a8] sm:$0xff]
    %v234 = vld [vmem:[#allocation2 + $0x4b0] sm:$0xf]
    %v235 = vld [vmem:[#allocation2 + $0x4b4] sm:$0xff]
    %v236 = vld [vmem:[#allocation2 + $0x4bc] sm:$0xff]
    %v237 = vld [vmem:[#allocation2 + $0x4c4] sm:$0xff]
    %v238 = vld [vmem:[#allocation2 + $0x4cc] sm:$0xf]
    %v239 = vld [vmem:[#allocation2 + $0x4d0] sm:$0xff]
    %v240 = vld [vmem:[#allocation2 + $0x4d8] sm:$0xff]
    %v241 = vld [vmem:[#allocation2 + $0x4e0] sm:$0xff]
    %v242 = vld [vmem:[#allocation2 + $0x4e8] sm:$0xf]
    %v243 = vld [vmem:[#allocation2 + $0x4ec] sm:$0xff]
    %v244 = vld [vmem:[#allocation2 + $0x4f4] sm:$0xff]
    %v245 = vld [vmem:[#allocation2 + $0x4fc] sm:$0xff]
    %v246 = vld [vmem:[#allocation2 + $0x504] sm:$0xf]
    %v247 = vld [vmem:[#allocation2 + $0x508] sm:$0xff]
    %v248 = vld [vmem:[#allocation2 + $0x510] sm:$0xff]
    %v249 = vld [vmem:[#allocation2 + $0x518] sm:$0xff]
    %v250 = vld [vmem:[#allocation2 + $0x520] sm:$0xf]
    %v251 = vld [vmem:[#allocation2 + $0x524] sm:$0xff]
    %v252 = vld [vmem:[#allocation2 + $0x52c] sm:$0xff]
    %v253 = vld [vmem:[#allocation2 + $0x534] sm:$0xff]
    %v254 = vld [vmem:[#allocation2 + $0x53c] sm:$0xf]
    %v255 = vld [vmem:[#allocation2 + $0x540] sm:$0xff]
    %v256 = vld [vmem:[#allocation2 + $0x548] sm:$0xff]
    %v257 = vld [vmem:[#allocation2 + $0x550] sm:$0xff]
    %v258 = vld [vmem:[#allocation2 + $0x558] sm:$0xf]
    %v259 = vld [vmem:[#allocation2 + $0x55c] sm:$0xff]
    %v260 = vld [vmem:[#allocation2 + $0x564] sm:$0xff]
    %v261 = vld [vmem:[#allocation2 + $0x56c] sm:$0xff]
    %v262 = vld [vmem:[#allocation2 + $0x574] sm:$0xf]
    %v263 = vld [vmem:[#allocation2 + $0x578] sm:$0xff]
    %v264 = vld [vmem:[#allocation2 + $0x580] sm:$0xff]
    %v265 = vld [vmem:[#allocation2 + $0x588] sm:$0xff]
    %v266 = vld [vmem:[#allocation2 + $0x590] sm:$0xf]
    %v267 = vld [vmem:[#allocation2 + $0x594] sm:$0xff]
    %v268 = vld [vmem:[#allocation2 + $0x59c] sm:$0xff]
    %v269 = vld [vmem:[#allocation2 + $0x5a4] sm:$0xff]
    %v270 = vld [vmem:[#allocation2 + $0x5ac] sm:$0xf]
    %v271 = vld [vmem:[#allocation2 + $0x5b0] sm:$0xff]
    %v272 = vld [vmem:[#allocation2 + $0x5b8] sm:$0xff]
    %v273 = vld [vmem:[#allocation2 + $0x5c0] sm:$0xff]
    %v274 = vld [vmem:[#allocation2 + $0x5c8] sm:$0xf]
    %v275 = vld [vmem:[#allocation2 + $0x5cc] sm:$0xff]
    %v276 = vld [vmem:[#allocation2 + $0x5d4] sm:$0xff]
    %v277 = vld [vmem:[#allocation2 + $0x5dc] sm:$0xff]
    %v278 = vld [vmem:[#allocation2 + $0x5e4] sm:$0xf]
    %v279 = vld [vmem:[#allocation2 + $0x5e8] sm:$0xff]
    %v280 = vld [vmem:[#allocation2 + $0x5f0] sm:$0xff]
    %v281 = vld [vmem:[#allocation2 + $0x5f8] sm:$0xff]
    %v282 = vld [vmem:[#allocation2 + $0x600] sm:$0xf]
    %v283 = vld [vmem:[#allocation2 + $0x604] sm:$0xff]
    %v284 = vld [vmem:[#allocation2 + $0x60c] sm:$0xff]
    %v285 = vld [vmem:[#allocation2 + $0x614] sm:$0xff]
    %v286 = vld [vmem:[#allocation2 + $0x61c] sm:$0xf]
    %v287 = vld [vmem:[#allocation2 + $0x620] sm:$0xff]
    %v288 = vld [vmem:[#allocation2 + $0x628] sm:$0xff]
    %v289 = vld [vmem:[#allocation2 + $0x630] sm:$0xff]
    %v290 = vld [vmem:[#allocation2 + $0x638] sm:$0xf]
    %v291 = vld [vmem:[#allocation2 + $0x63c] sm:$0xff]
    %v292 = vld [vmem:[#allocation2 + $0x644] sm:$0xff]
    %v293 = vld [vmem:[#allocation2 + $0x64c] sm:$0xff]
    %v294 = vld [vmem:[#allocation2 + $0x654] sm:$0xf]
    %v295 = vld [vmem:[#allocation2 + $0x658] sm:$0xff]
    %v296 = vld [vmem:[#allocation2 + $0x660] sm:$0xff]
    %v297 = vld [vmem:[#allocation2 + $0x668] sm:$0xff]
    %v298 = vld [vmem:[#allocation2 + $0x670] sm:$0xf]
    %v299 = vld [vmem:[#allocation2 + $0x674] sm:$0xff]
    %v300 = vld [vmem:[#allocation2 + $0x67c] sm:$0xff]
    %v301 = vld [vmem:[#allocation2 + $0x684] sm:$0xff]
    %v302 = vld [vmem:[#allocation2 + $0x68c] sm:$0xf]
    %v303 = vld [vmem:[#allocation2 + $0x690] sm:$0xff]
    %v304 = vld [vmem:[#allocation2 + $0x698] sm:$0xff]
    %v305 = vld [vmem:[#allocation2 + $0x6a0] sm:$0xff]
    %v306 = vld [vmem:[#allocation2 + $0x6a8] sm:$0xf]
    %v307 = vld [vmem:[#allocation2 + $0x6ac] sm:$0xff]
    %v308 = vld [vmem:[#allocation2 + $0x6b4] sm:$0xff]
    %v309 = vld [vmem:[#allocation2 + $0x6bc] sm:$0xff]
    %v310 = vld [vmem:[#allocation2 + $0x6c4] sm:$0xf]
    %v311 = vld [vmem:[#allocation2 + $0x6c8] sm:$0xff]
    %v312 = vld [vmem:[#allocation2 + $0x6d0] sm:$0xff]
    %v313 = vld [vmem:[#allocation2 + $0x6d8] sm:$0xff]
    %v314 = vld [vmem:[#allocation2 + $0x6e0] sm:$0xf]
    %v315 = vld [vmem:[#allocation2 + $0x6e4] sm:$0xff]
    %v316 = vld [vmem:[#allocation2 + $0x6ec] sm:$0xff]
    %v317 = vld [vmem:[#allocation2 + $0x6f4] sm:$0xff]
    %v318 = vld [vmem:[#allocation2 + $0x6fc] sm:$0xf]
    %v319 = vld [vmem:[#allocation2 + $0x700] sm:$0xff]
    %v320 = vld [vmem:[#allocation2 + $0x708] sm:$0xff]
    %v321 = vld [vmem:[#allocation2 + $0x710] sm:$0xff]
    %v322 = vld [vmem:[#allocation2 + $0x718] sm:$0xf]
    %v323 = vld [vmem:[#allocation2 + $0x71c] sm:$0xff]
    %v324 = vld [vmem:[#allocation2 + $0x724] sm:$0xff]
    %v325 = vld [vmem:[#allocation2 + $0x72c] sm:$0xff]
    %v326 = vld [vmem:[#allocation2 + $0x734] sm:$0xf]
    %v327 = vld [vmem:[#allocation2 + $0x738] sm:$0xff]
    %v328 = vld [vmem:[#allocation2 + $0x740] sm:$0xff]
    %v329 = vld [vmem:[#allocation2 + $0x748] sm:$0xff]
    %v330 = vld [vmem:[#allocation2 + $0x750] sm:$0xf]
    %v331 = vld [vmem:[#allocation2 + $0x754] sm:$0xff]
    %v332 = vld [vmem:[#allocation2 + $0x75c] sm:$0xff]
    %v333 = vld [vmem:[#allocation2 + $0x764] sm:$0xff]
    %v334 = vld [vmem:[#allocation2 + $0x76c] sm:$0xf]
    %v335 = vld [vmem:[#allocation2 + $0x770] sm:$0xff]
    %v336 = vld [vmem:[#allocation2 + $0x778] sm:$0xff]
    %v337 = vld [vmem:[#allocation2 + $0x780] sm:$0xff]
    %v338 = vld [vmem:[#allocation2 + $0x788] sm:$0xf]
    %v339 = vld [vmem:[#allocation2 + $0x78c] sm:$0xff]
    %v340 = vld [vmem:[#allocation2 + $0x794] sm:$0xff]
    %v341 = vld [vmem:[#allocation2 + $0x79c] sm:$0xff]
    %v342 = vld [vmem:[#allocation2 + $0x7a4] sm:$0xf]
    %v343 = vld [vmem:[#allocation2 + $0x7a8] sm:$0xff]
    %v344 = vld [vmem:[#allocation2 + $0x7b0] sm:$0xff]
    %v345 = vld [vmem:[#allocation2 + $0x7b8] sm:$0xff]
    %v346 = vld [vmem:[#allocation2 + $0x7c0] sm:$0xf]
    %v347 = vld [vmem:[#allocation2 + $0x7c4] sm:$0xff]
    %v348 = vld [vmem:[#allocation2 + $0x7cc] sm:$0xff]
    %v349 = vld [vmem:[#allocation2 + $0x7d4] sm:$0xff]
    %v350 = vld [vmem:[#allocation2 + $0x7dc] sm:$0xf]
    %v351 = vld [vmem:[#allocation2 + $0x7e0] sm:$0xff]
    %v352 = vld [vmem:[#allocation2 + $0x7e8] sm:$0xff]
    %v353 = vld [vmem:[#allocation2 + $0x7f0] sm:$0xff]
    %v354 = vld [vmem:[#allocation2 + $0x7f8] sm:$0xf]
    %v355 = vld [vmem:[#allocation2 + $0x7fc] sm:$0xff]
    %v356 = vld [vmem:[#allocation2 + $0x804] sm:$0xff]
    %v357 = vld [vmem:[#allocation2 + $0x80c] sm:$0xff]
    %v358 = vld [vmem:[#allocation2 + $0x814] sm:$0xf]
    %v359 = vld [vmem:[#allocation2 + $0x818] sm:$0xff]
    %v360 = vld [vmem:[#allocation2 + $0x820] sm:$0xff]
    %v361 = vld [vmem:[#allocation2 + $0x828] sm:$0xff]
    %v362 = vld [vmem:[#allocation2 + $0x830] sm:$0xf]
    %v363 = vld [vmem:[#allocation2 + $0x834] sm:$0xff]
    %v364 = vld [vmem:[#allocation2 + $0x83c] sm:$0xff]
    %v365 = vld [vmem:[#allocation2 + $0x844] sm:$0xff]
    %v366 = vld [vmem:[#allocation2 + $0x84c] sm:$0xf]
    %v367 = vld [vmem:[#allocation2 + $0x850] sm:$0xff]
    %v368 = vld [vmem:[#allocation2 + $0x858] sm:$0xff]
    %v369 = vld [vmem:[#allocation2 + $0x860] sm:$0xff]
    %v370 = vld [vmem:[#allocation2 + $0x868] sm:$0xf]
    %v371 = vld [vmem:[#allocation2 + $0x86c] sm:$0xff]
    %v372 = vld [vmem:[#allocation2 + $0x874] sm:$0xff]
    %v373 = vld [vmem:[#allocation2 + $0x87c] sm:$0xff]
    %v374 = vld [vmem:[#allocation2 + $0x884] sm:$0xf]
    %v375 = vld [vmem:[#allocation2 + $0x888] sm:$0xff]
    %v376 = vld [vmem:[#allocation2 + $0x890] sm:$0xff]
    %v377 = vld [vmem:[#allocation2 + $0x898] sm:$0xff]
    %v378 = vld [vmem:[#allocation2 + $0x8a0] sm:$0xf]
    %v379 = vld [vmem:[#allocation2 + $0x8a4] sm:$0xff]
    %v380 = vld [vmem:[#allocation2 + $0x8ac] sm:$0xff]
    %v381 = vld [vmem:[#allocation2 + $0x8b4] sm:$0xff]
    %v382 = vld [vmem:[#allocation2 + $0x8bc] sm:$0xf]
    %v383 = vld [vmem:[#allocation2 + $0x8c0] sm:$0xff]
    %v384 = vld [vmem:[#allocation2 + $0x8c8] sm:$0xff]
    %v385 = vld [vmem:[#allocation2 + $0x8d0] sm:$0xff]
    %v386 = vld [vmem:[#allocation2 + $0x8d8] sm:$0xf]
    %v387 = vld [vmem:[#allocation2 + $0x8dc] sm:$0xff]
    %v388 = vld [vmem:[#allocation2 + $0x8e4] sm:$0xff]
    %v389 = vld [vmem:[#allocation2 + $0x8ec] sm:$0xff]
    %v390 = vld [vmem:[#allocation2 + $0x8f4] sm:$0xf]
    %v391 = vld [vmem:[#allocation2 + $0x8f8] sm:$0xff]
    %v392 = vld [vmem:[#allocation2 + $0x900] sm:$0xff]
    %v393 = vld [vmem:[#allocation2 + $0x908] sm:$0xff]
    %v394 = vld [vmem:[#allocation2 + $0x910] sm:$0xf]
    %v395 = vld [vmem:[#allocation2 + $0x914] sm:$0xff]
    %v396 = vld [vmem:[#allocation2 + $0x91c] sm:$0xff]
    %v397 = vld [vmem:[#allocation2 + $0x924] sm:$0xff]
    %v398 = vld [vmem:[#allocation2 + $0x92c] sm:$0xf]
    %v399 = vld [vmem:[#allocation2 + $0x930] sm:$0xff]
    %v400 = vld [vmem:[#allocation2 + $0x938] sm:$0xff]
    %v401 = vld [vmem:[#allocation2 + $0x940] sm:$0xff]
    %v402 = vld [vmem:[#allocation2 + $0x948] sm:$0xf]
    %v403 = vld [vmem:[#allocation2 + $0x94c] sm:$0xff]
    %v404 = vld [vmem:[#allocation2 + $0x954] sm:$0xff]
    %v405 = vld [vmem:[#allocation2 + $0x95c] sm:$0xff]
    %v406 = vld [vmem:[#allocation2 + $0x964] sm:$0xf]
    %v407 = vld [vmem:[#allocation2 + $0x968] sm:$0xff]
    %v408 = vld [vmem:[#allocation2 + $0x970] sm:$0xff]
    %v409 = vld [vmem:[#allocation2 + $0x978] sm:$0xff]
    %v410 = vld [vmem:[#allocation2 + $0x980] sm:$0xf]
    %v411 = vld [vmem:[#allocation2 + $0x984] sm:$0xff]
    %v412 = vld [vmem:[#allocation2 + $0x98c] sm:$0xff]
    %v413 = vld [vmem:[#allocation2 + $0x994] sm:$0xff]
    %v414 = vld [vmem:[#allocation2 + $0x99c] sm:$0xf]
    %v415 = vld [vmem:[#allocation2 + $0x9a0] sm:$0xff]
    %v416 = vld [vmem:[#allocation2 + $0x9a8] sm:$0xff]
    %v417 = vld [vmem:[#allocation2 + $0x9b0] sm:$0xff]
    %v418 = vld [vmem:[#allocation2 + $0x9b8] sm:$0xf]
    %v419 = vld [vmem:[#allocation2 + $0x9bc] sm:$0xff]
    %v420 = vld [vmem:[#allocation2 + $0x9c4] sm:$0xff]
    %v421 = vld [vmem:[#allocation2 + $0x9cc] sm:$0xff]
    %v422 = vld [vmem:[#allocation2 + $0x9d4] sm:$0xf]
    %v423 = vld [vmem:[#allocation2 + $0x9d8] sm:$0xff]
    %v424 = vld [vmem:[#allocation2 + $0x9e0] sm:$0xff]
    %v425 = vld [vmem:[#allocation2 + $0x9e8] sm:$0xff]
    %v426 = vld [vmem:[#allocation2 + $0x9f0] sm:$0xf]
    %v427 = vld [vmem:[#allocation2 + $0x9f4] sm:$0xff]
    %v428 = vld [vmem:[#allocation2 + $0x9fc] sm:$0xff]
    %v429 = vld [vmem:[#allocation2 + $0xa04] sm:$0xff]
    %v430 = vld [vmem:[#allocation2 + $0xa0c] sm:$0xf]
    %v431 = vld [vmem:[#allocation2 + $0xa10] sm:$0xff]
    %v432 = vld [vmem:[#allocation2 + $0xa18] sm:$0xff]
    %v433 = vld [vmem:[#allocation2 + $0xa20] sm:$0xff]
    %v434 = vld [vmem:[#allocation2 + $0xa28] sm:$0xf]
    %v435 = vld [vmem:[#allocation2 + $0xa2c] sm:$0xff]
    %v436 = vld [vmem:[#allocation2 + $0xa34] sm:$0xff]
    %v437 = vld [vmem:[#allocation2 + $0xa3c] sm:$0xff]
    %v438 = vld [vmem:[#allocation2 + $0xa44] sm:$0xf]
    %v439 = vld [vmem:[#allocation2 + $0xa48] sm:$0xff]
    %v440 = vld [vmem:[#allocation2 + $0xa50] sm:$0xff]
    %v441 = vld [vmem:[#allocation2 + $0xa58] sm:$0xff]
    %v442 = vld [vmem:[#allocation2 + $0xa60] sm:$0xf]
    %v443 = vld [vmem:[#allocation2 + $0xa64] sm:$0xff]
    %v444 = vld [vmem:[#allocation2 + $0xa6c] sm:$0xff]
    %v445 = vld [vmem:[#allocation2 + $0xa74] sm:$0xff]
    %v446 = vld [vmem:[#allocation2 + $0xa7c] sm:$0xf]
    %v447 = vld [vmem:[#allocation2 + $0xa80] sm:$0xff]
    %v448 = vld [vmem:[#allocation2 + $0xa88] sm:$0xff]
    %v449 = vld [vmem:[#allocation2 + $0xa90] sm:$0xff]
    %v450 = vld [vmem:[#allocation2 + $0xa98] sm:$0xf]
    %v451 = vld [vmem:[#allocation2 + $0xa9c] sm:$0xff]
    %v452 = vld [vmem:[#allocation2 + $0xaa4] sm:$0xff]
    %v453 = vld [vmem:[#allocation2 + $0xaac] sm:$0xff]
    %v454 = vld [vmem:[#allocation2 + $0xab4] sm:$0xf]
    %v463 = vunpack.c.l.b16 %v55
    %v464 = vunpack.c.h.b16 %v55
    %v465 = vunpack.c.l.b16 %v56
    %v466 = vunpack.c.h.b16 %v56
    %v467 = vunpack.c.l.b16 %v57
    %v468 = vunpack.c.h.b16 %v57
    %v469 = vunpack.c.l.b16 %v58
    %v470 = vunpack.c.l.b16 %v59
    %v471 = vunpack.c.h.b16 %v59
    %v472 = vunpack.c.l.b16 %v60
    %v473 = vunpack.c.h.b16 %v60
    %v474 = vunpack.c.l.b16 %v61
    %v475 = vunpack.c.h.b16 %v61
    %v476 = vunpack.c.l.b16 %v62
    %v477 = vpack.c.b16 %v470, %v463
    %v478 = vpack.c.b16 %v471, %v464
    %v479 = vpack.c.b16 %v472, %v465
    %v480 = vpack.c.b16 %v473, %v466
    %v481 = vpack.c.b16 %v474, %v467
    %v482 = vpack.c.b16 %v475, %v468
    %v483 = vpack.c.b16 %v476, %v469
    %v882 = vunpack.c.l.b16 %v63
    %v883 = vunpack.c.h.b16 %v63
    %v884 = vunpack.c.l.b16 %v64
    %v885 = vunpack.c.h.b16 %v64
    %v886 = vunpack.c.l.b16 %v65
    %v887 = vunpack.c.h.b16 %v65
    %v888 = vunpack.c.l.b16 %v66
    %v889 = vunpack.c.l.b16 %v67
    %v890 = vunpack.c.h.b16 %v67
    %v891 = vunpack.c.l.b16 %v68
    %v892 = vunpack.c.h.b16 %v68
    %v893 = vunpack.c.l.b16 %v69
    %v894 = vunpack.c.h.b16 %v69
    %v895 = vunpack.c.l.b16 %v70
    %v896 = vunpack.c.l.b16 %v71
    %v897 = vunpack.c.h.b16 %v71
    %v898 = vunpack.c.l.b16 %v72
    %v899 = vunpack.c.h.b16 %v72
    %v900 = vunpack.c.l.b16 %v73
    %v901 = vunpack.c.h.b16 %v73
    %v902 = vunpack.c.l.b16 %v74
    %v903 = vunpack.c.l.b16 %v75
    %v904 = vunpack.c.h.b16 %v75
    %v905 = vunpack.c.l.b16 %v76
    %v906 = vunpack.c.h.b16 %v76
    %v907 = vunpack.c.l.b16 %v77
    %v908 = vunpack.c.h.b16 %v77
    %v909 = vunpack.c.l.b16 %v78
    %v910 = vunpack.c.l.b16 %v79
    %v911 = vunpack.c.h.b16 %v79
    %v912 = vunpack.c.l.b16 %v80
    %v913 = vunpack.c.h.b16 %v80
    %v914 = vunpack.c.l.b16 %v81
    %v915 = vunpack.c.h.b16 %v81
    %v916 = vunpack.c.l.b16 %v82
    %v917 = vunpack.c.l.b16 %v83
    %v918 = vunpack.c.h.b16 %v83
    %v919 = vunpack.c.l.b16 %v84
    %v920 = vunpack.c.h.b16 %v84
    %v921 = vunpack.c.l.b16 %v85
    %v922 = vunpack.c.h.b16 %v85
    %v923 = vunpack.c.l.b16 %v86
    %v924 = vunpack.c.l.b16 %v87
    %v925 = vunpack.c.h.b16 %v87
    %v926 = vunpack.c.l.b16 %v88
    %v927 = vunpack.c.h.b16 %v88
    %v928 = vunpack.c.l.b16 %v89
    %v929 = vunpack.c.h.b16 %v89
    %v930 = vunpack.c.l.b16 %v90
    %v931 = vunpack.c.l.b16 %v91
    %v932 = vunpack.c.h.b16 %v91
    %v933 = vunpack.c.l.b16 %v92
    %v934 = vunpack.c.h.b16 %v92
    %v935 = vunpack.c.l.b16 %v93
    %v936 = vunpack.c.h.b16 %v93
    %v937 = vunpack.c.l.b16 %v94
    %v938 = vunpack.c.l.b16 %v95
    %v939 = vunpack.c.h.b16 %v95
    %v940 = vunpack.c.l.b16 %v96
    %v941 = vunpack.c.h.b16 %v96
    %v942 = vunpack.c.l.b16 %v97
    %v943 = vunpack.c.h.b16 %v97
    %v944 = vunpack.c.l.b16 %v98
    %v945 = vunpack.c.l.b16 %v99
    %v946 = vunpack.c.h.b16 %v99
    %v947 = vunpack.c.l.b16 %v100
    %v948 = vunpack.c.h.b16 %v100
    %v949 = vunpack.c.l.b16 %v101
    %v950 = vunpack.c.h.b16 %v101
    %v951 = vunpack.c.l.b16 %v102
    %v952 = vunpack.c.l.b16 %v103
    %v953 = vunpack.c.h.b16 %v103
    %v954 = vunpack.c.l.b16 %v104
    %v955 = vunpack.c.h.b16 %v104
    %v956 = vunpack.c.l.b16 %v105
    %v957 = vunpack.c.h.b16 %v105
    %v958 = vunpack.c.l.b16 %v106
    %v959 = vunpack.c.l.b16 %v107
    %v960 = vunpack.c.h.b16 %v107
    %v961 = vunpack.c.l.b16 %v108
    %v962 = vunpack.c.h.b16 %v108
    %v963 = vunpack.c.l.b16 %v109
    %v964 = vunpack.c.h.b16 %v109
    %v965 = vunpack.c.l.b16 %v110
    %v966 = vunpack.c.l.b16 %v111
    %v967 = vunpack.c.h.b16 %v111
    %v968 = vunpack.c.l.b16 %v112
    %v969 = vunpack.c.h.b16 %v112
    %v970 = vunpack.c.l.b16 %v113
    %v971 = vunpack.c.h.b16 %v113
    %v972 = vunpack.c.l.b16 %v114
    %v973 = vunpack.c.l.b16 %v115
    %v974 = vunpack.c.h.b16 %v115
    %v975 = vunpack.c.l.b16 %v116
    %v976 = vunpack.c.h.b16 %v116
    %v977 = vunpack.c.l.b16 %v117
    %v978 = vunpack.c.h.b16 %v117
    %v979 = vunpack.c.l.b16 %v118
    %v980 = vunpack.c.l.b16 %v119
    %v981 = vunpack.c.h.b16 %v119
    %v982 = vunpack.c.l.b16 %v120
    %v983 = vunpack.c.h.b16 %v120
    %v984 = vunpack.c.l.b16 %v121
    %v985 = vunpack.c.h.b16 %v121
    %v986 = vunpack.c.l.b16 %v122
    %v987 = vunpack.c.l.b16 %v123
    %v988 = vunpack.c.h.b16 %v123
    %v989 = vunpack.c.l.b16 %v124
    %v990 = vunpack.c.h.b16 %v124
    %v991 = vunpack.c.l.b16 %v125
    %v992 = vunpack.c.h.b16 %v125
    %v993 = vunpack.c.l.b16 %v126
    %v994 = vunpack.c.l.b16 %v127
    %v995 = vunpack.c.h.b16 %v127
    %v996 = vunpack.c.l.b16 %v128
    %v997 = vunpack.c.h.b16 %v128
    %v998 = vunpack.c.l.b16 %v129
    %v999 = vunpack.c.h.b16 %v129
    %v1000 = vunpack.c.l.b16 %v130
    %v1001 = vunpack.c.l.b16 %v131
    %v1002 = vunpack.c.h.b16 %v131
    %v1003 = vunpack.c.l.b16 %v132
    %v1004 = vunpack.c.h.b16 %v132
    %v1005 = vunpack.c.l.b16 %v133
    %v1006 = vunpack.c.h.b16 %v133
    %v1007 = vunpack.c.l.b16 %v134
    %v1008 = vunpack.c.l.b16 %v135
    %v1009 = vunpack.c.h.b16 %v135
    %v1010 = vunpack.c.l.b16 %v136
    %v1011 = vunpack.c.h.b16 %v136
    %v1012 = vunpack.c.l.b16 %v137
    %v1013 = vunpack.c.h.b16 %v137
    %v1014 = vunpack.c.l.b16 %v138
    %v1015 = vunpack.c.l.b16 %v139
    %v1016 = vunpack.c.h.b16 %v139
    %v1017 = vunpack.c.l.b16 %v140
    %v1018 = vunpack.c.h.b16 %v140
    %v1019 = vunpack.c.l.b16 %v141
    %v1020 = vunpack.c.h.b16 %v141
    %v1021 = vunpack.c.l.b16 %v142
    %v1022 = vunpack.c.l.b16 %v143
    %v1023 = vunpack.c.h.b16 %v143
    %v1024 = vunpack.c.l.b16 %v144
    %v1025 = vunpack.c.h.b16 %v144
    %v1026 = vunpack.c.l.b16 %v145
    %v1027 = vunpack.c.h.b16 %v145
    %v1028 = vunpack.c.l.b16 %v146
    %v1029 = vunpack.c.l.b16 %v147
    %v1030 = vunpack.c.h.b16 %v147
    %v1031 = vunpack.c.l.b16 %v148
    %v1032 = vunpack.c.h.b16 %v148
    %v1033 = vunpack.c.l.b16 %v149
    %v1034 = vunpack.c.h.b16 %v149
    %v1035 = vunpack.c.l.b16 %v150
    %v1036 = vunpack.c.l.b16 %v151
    %v1037 = vunpack.c.h.b16 %v151
    %v1038 = vunpack.c.l.b16 %v152
    %v1039 = vunpack.c.h.b16 %v152
    %v1040 = vunpack.c.l.b16 %v153
    %v1041 = vunpack.c.h.b16 %v153
    %v1042 = vunpack.c.l.b16 %v154
    %v1043 = vunpack.c.l.b16 %v155
    %v1044 = vunpack.c.h.b16 %v155
    %v1045 = vunpack.c.l.b16 %v156
    %v1046 = vunpack.c.h.b16 %v156
    %v1047 = vunpack.c.l.b16 %v157
    %v1048 = vunpack.c.h.b16 %v157
    %v1049 = vunpack.c.l.b16 %v158
    %v1050 = vunpack.c.l.b16 %v159
    %v1051 = vunpack.c.h.b16 %v159
    %v1052 = vunpack.c.l.b16 %v160
    %v1053 = vunpack.c.h.b16 %v160
    %v1054 = vunpack.c.l.b16 %v161
    %v1055 = vunpack.c.h.b16 %v161
    %v1056 = vunpack.c.l.b16 %v162
    %v1057 = vunpack.c.l.b16 %v163
    %v1058 = vunpack.c.h.b16 %v163
    %v1059 = vunpack.c.l.b16 %v164
    %v1060 = vunpack.c.h.b16 %v164
    %v1061 = vunpack.c.l.b16 %v165
    %v1062 = vunpack.c.h.b16 %v165
    %v1063 = vunpack.c.l.b16 %v166
    %v1064 = vunpack.c.l.b16 %v167
    %v1065 = vunpack.c.h.b16 %v167
    %v1066 = vunpack.c.l.b16 %v168
    %v1067 = vunpack.c.h.b16 %v168
    %v1068 = vunpack.c.l.b16 %v169
    %v1069 = vunpack.c.h.b16 %v169
    %v1070 = vunpack.c.l.b16 %v170
    %v1071 = vunpack.c.l.b16 %v171
    %v1072 = vunpack.c.h.b16 %v171
    %v1073 = vunpack.c.l.b16 %v172
    %v1074 = vunpack.c.h.b16 %v172
    %v1075 = vunpack.c.l.b16 %v173
    %v1076 = vunpack.c.h.b16 %v173
    %v1077 = vunpack.c.l.b16 %v174
    %v1078 = vunpack.c.l.b16 %v175
    %v1079 = vunpack.c.h.b16 %v175
    %v1080 = vunpack.c.l.b16 %v176
    %v1081 = vunpack.c.h.b16 %v176
    %v1082 = vunpack.c.l.b16 %v177
    %v1083 = vunpack.c.h.b16 %v177
    %v1084 = vunpack.c.l.b16 %v178
    %v1085 = vunpack.c.l.b16 %v179
    %v1086 = vunpack.c.h.b16 %v179
    %v1087 = vunpack.c.l.b16 %v180
    %v1088 = vunpack.c.h.b16 %v180
    %v1089 = vunpack.c.l.b16 %v181
    %v1090 = vunpack.c.h.b16 %v181
    %v1091 = vunpack.c.l.b16 %v182
    %v1092 = vunpack.c.l.b16 %v183
    %v1093 = vunpack.c.h.b16 %v183
    %v1094 = vunpack.c.l.b16 %v184
    %v1095 = vunpack.c.h.b16 %v184
    %v1096 = vunpack.c.l.b16 %v185
    %v1097 = vunpack.c.h.b16 %v185
    %v1098 = vunpack.c.l.b16 %v186
    %v1099 = vunpack.c.l.b16 %v187
    %v1100 = vunpack.c.h.b16 %v187
    %v1101 = vunpack.c.l.b16 %v188
    %v1102 = vunpack.c.h.b16 %v188
    %v1103 = vunpack.c.l.b16 %v189
    %v1104 = vunpack.c.h.b16 %v189
    %v1105 = vunpack.c.l.b16 %v190
    %v1106 = vunpack.c.l.b16 %v191
    %v1107 = vunpack.c.h.b16 %v191
    %v1108 = vunpack.c.l.b16 %v192
    %v1109 = vunpack.c.h.b16 %v192
    %v1110 = vunpack.c.l.b16 %v193
    %v1111 = vunpack.c.h.b16 %v193
    %v1112 = vunpack.c.l.b16 %v194
    %v1113 = vunpack.c.l.b16 %v195
    %v1114 = vunpack.c.h.b16 %v195
    %v1115 = vunpack.c.l.b16 %v196
    %v1116 = vunpack.c.h.b16 %v196
    %v1117 = vunpack.c.l.b16 %v197
    %v1118 = vunpack.c.h.b16 %v197
    %v1119 = vunpack.c.l.b16 %v198
    %v1120 = vunpack.c.l.b16 %v199
    %v1121 = vunpack.c.h.b16 %v199
    %v1122 = vunpack.c.l.b16 %v200
    %v1123 = vunpack.c.h.b16 %v200
    %v1124 = vunpack.c.l.b16 %v201
    %v1125 = vunpack.c.h.b16 %v201
    %v1126 = vunpack.c.l.b16 %v202
    %v1127 = vunpack.c.l.b16 %v203
    %v1128 = vunpack.c.h.b16 %v203
    %v1129 = vunpack.c.l.b16 %v204
    %v1130 = vunpack.c.h.b16 %v204
    %v1131 = vunpack.c.l.b16 %v205
    %v1132 = vunpack.c.h.b16 %v205
    %v1133 = vunpack.c.l.b16 %v206
    %v1134 = vunpack.c.l.b16 %v207
    %v1135 = vunpack.c.h.b16 %v207
    %v1136 = vunpack.c.l.b16 %v208
    %v1137 = vunpack.c.h.b16 %v208
    %v1138 = vunpack.c.l.b16 %v209
    %v1139 = vunpack.c.h.b16 %v209
    %v1140 = vunpack.c.l.b16 %v210
    %v1141 = vunpack.c.l.b16 %v211
    %v1142 = vunpack.c.h.b16 %v211
    %v1143 = vunpack.c.l.b16 %v212
    %v1144 = vunpack.c.h.b16 %v212
    %v1145 = vunpack.c.l.b16 %v213
    %v1146 = vunpack.c.h.b16 %v213
    %v1147 = vunpack.c.l.b16 %v214
    %v1148 = vunpack.c.l.b16 %v215
    %v1149 = vunpack.c.h.b16 %v215
    %v1150 = vunpack.c.l.b16 %v216
    %v1151 = vunpack.c.h.b16 %v216
    %v1152 = vunpack.c.l.b16 %v217
    %v1153 = vunpack.c.h.b16 %v217
    %v1154 = vunpack.c.l.b16 %v218
    %v1155 = vunpack.c.l.b16 %v219
    %v1156 = vunpack.c.h.b16 %v219
    %v1157 = vunpack.c.l.b16 %v220
    %v1158 = vunpack.c.h.b16 %v220
    %v1159 = vunpack.c.l.b16 %v221
    %v1160 = vunpack.c.h.b16 %v221
    %v1161 = vunpack.c.l.b16 %v222
    %v1162 = vunpack.c.l.b16 %v223
    %v1163 = vunpack.c.h.b16 %v223
    %v1164 = vunpack.c.l.b16 %v224
    %v1165 = vunpack.c.h.b16 %v224
    %v1166 = vunpack.c.l.b16 %v225
    %v1167 = vunpack.c.h.b16 %v225
    %v1168 = vunpack.c.l.b16 %v226
    %v1169 = vunpack.c.l.b16 %v227
    %v1170 = vunpack.c.h.b16 %v227
    %v1171 = vunpack.c.l.b16 %v228
    %v1172 = vunpack.c.h.b16 %v228
    %v1173 = vunpack.c.l.b16 %v229
    %v1174 = vunpack.c.h.b16 %v229
    %v1175 = vunpack.c.l.b16 %v230
    %v1176 = vunpack.c.l.b16 %v231
    %v1177 = vunpack.c.h.b16 %v231
    %v1178 = vunpack.c.l.b16 %v232
    %v1179 = vunpack.c.h.b16 %v232
    %v1180 = vunpack.c.l.b16 %v233
    %v1181 = vunpack.c.h.b16 %v233
    %v1182 = vunpack.c.l.b16 %v234
    %v1183 = vunpack.c.l.b16 %v235
    %v1184 = vunpack.c.h.b16 %v235
    %v1185 = vunpack.c.l.b16 %v236
    %v1186 = vunpack.c.h.b16 %v236
    %v1187 = vunpack.c.l.b16 %v237
    %v1188 = vunpack.c.h.b16 %v237
    %v1189 = vunpack.c.l.b16 %v238
    %v1190 = vunpack.c.l.b16 %v239
    %v1191 = vunpack.c.h.b16 %v239
    %v1192 = vunpack.c.l.b16 %v240
    %v1193 = vunpack.c.h.b16 %v240
    %v1194 = vunpack.c.l.b16 %v241
    %v1195 = vunpack.c.h.b16 %v241
    %v1196 = vunpack.c.l.b16 %v242
    %v1197 = vunpack.c.l.b16 %v243
    %v1198 = vunpack.c.h.b16 %v243
    %v1199 = vunpack.c.l.b16 %v244
    %v1200 = vunpack.c.h.b16 %v244
    %v1201 = vunpack.c.l.b16 %v245
    %v1202 = vunpack.c.h.b16 %v245
    %v1203 = vunpack.c.l.b16 %v246
    %v1204 = vunpack.c.l.b16 %v247
    %v1205 = vunpack.c.h.b16 %v247
    %v1206 = vunpack.c.l.b16 %v248
    %v1207 = vunpack.c.h.b16 %v248
    %v1208 = vunpack.c.l.b16 %v249
    %v1209 = vunpack.c.h.b16 %v249
    %v1210 = vunpack.c.l.b16 %v250
    %v1211 = vunpack.c.l.b16 %v251
    %v1212 = vunpack.c.h.b16 %v251
    %v1213 = vunpack.c.l.b16 %v252
    %v1214 = vunpack.c.h.b16 %v252
    %v1215 = vunpack.c.l.b16 %v253
    %v1216 = vunpack.c.h.b16 %v253
    %v1217 = vunpack.c.l.b16 %v254
    %v1218 = vunpack.c.l.b16 %v255
    %v1219 = vunpack.c.h.b16 %v255
    %v1220 = vunpack.c.l.b16 %v256
    %v1221 = vunpack.c.h.b16 %v256
    %v1222 = vunpack.c.l.b16 %v257
    %v1223 = vunpack.c.h.b16 %v257
    %v1224 = vunpack.c.l.b16 %v258
    %v1225 = vunpack.c.l.b16 %v259
    %v1226 = vunpack.c.h.b16 %v259
    %v1227 = vunpack.c.l.b16 %v260
    %v1228 = vunpack.c.h.b16 %v260
    %v1229 = vunpack.c.l.b16 %v261
    %v1230 = vunpack.c.h.b16 %v261
    %v1231 = vunpack.c.l.b16 %v262
    %v1232 = vunpack.c.l.b16 %v263
    %v1233 = vunpack.c.h.b16 %v263
    %v1234 = vunpack.c.l.b16 %v264
    %v1235 = vunpack.c.h.b16 %v264
    %v1236 = vunpack.c.l.b16 %v265
    %v1237 = vunpack.c.h.b16 %v265
    %v1238 = vunpack.c.l.b16 %v266
    %v1239 = vunpack.c.l.b16 %v267
    %v1240 = vunpack.c.h.b16 %v267
    %v1241 = vunpack.c.l.b16 %v268
    %v1242 = vunpack.c.h.b16 %v268
    %v1243 = vunpack.c.l.b16 %v269
    %v1244 = vunpack.c.h.b16 %v269
    %v1245 = vunpack.c.l.b16 %v270
    %v1246 = vunpack.c.l.b16 %v271
    %v1247 = vunpack.c.h.b16 %v271
    %v1248 = vunpack.c.l.b16 %v272
    %v1249 = vunpack.c.h.b16 %v272
    %v1250 = vunpack.c.l.b16 %v273
    %v1251 = vunpack.c.h.b16 %v273
    %v1252 = vunpack.c.l.b16 %v274
    %v1253 = vunpack.c.l.b16 %v275
    %v1254 = vunpack.c.h.b16 %v275
    %v1255 = vunpack.c.l.b16 %v276
    %v1256 = vunpack.c.h.b16 %v276
    %v1257 = vunpack.c.l.b16 %v277
    %v1258 = vunpack.c.h.b16 %v277
    %v1259 = vunpack.c.l.b16 %v278
    %v1260 = vunpack.c.l.b16 %v279
    %v1261 = vunpack.c.h.b16 %v279
    %v1262 = vunpack.c.l.b16 %v280
    %v1263 = vunpack.c.h.b16 %v280
    %v1264 = vunpack.c.l.b16 %v281
    %v1265 = vunpack.c.h.b16 %v281
    %v1266 = vunpack.c.l.b16 %v282
    %v1267 = vunpack.c.l.b16 %v283
    %v1268 = vunpack.c.h.b16 %v283
    %v1269 = vunpack.c.l.b16 %v284
    %v1270 = vunpack.c.h.b16 %v284
    %v1271 = vunpack.c.l.b16 %v285
    %v1272 = vunpack.c.h.b16 %v285
    %v1273 = vunpack.c.l.b16 %v286
    %v1274 = vunpack.c.l.b16 %v287
    %v1275 = vunpack.c.h.b16 %v287
    %v1276 = vunpack.c.l.b16 %v288
    %v1277 = vunpack.c.h.b16 %v288
    %v1278 = vunpack.c.l.b16 %v289
    %v1279 = vunpack.c.h.b16 %v289
    %v1280 = vunpack.c.l.b16 %v290
    %v1281 = vunpack.c.l.b16 %v291
    %v1282 = vunpack.c.h.b16 %v291
    %v1283 = vunpack.c.l.b16 %v292
    %v1284 = vunpack.c.h.b16 %v292
    %v1285 = vunpack.c.l.b16 %v293
    %v1286 = vunpack.c.h.b16 %v293
    %v1287 = vunpack.c.l.b16 %v294
    %v1288 = vunpack.c.l.b16 %v295
    %v1289 = vunpack.c.h.b16 %v295
    %v1290 = vunpack.c.l.b16 %v296
    %v1291 = vunpack.c.h.b16 %v296
    %v1292 = vunpack.c.l.b16 %v297
    %v1293 = vunpack.c.h.b16 %v297
    %v1294 = vunpack.c.l.b16 %v298
    %v1295 = vunpack.c.l.b16 %v299
    %v1296 = vunpack.c.h.b16 %v299
    %v1297 = vunpack.c.l.b16 %v300
    %v1298 = vunpack.c.h.b16 %v300
    %v1299 = vunpack.c.l.b16 %v301
    %v1300 = vunpack.c.h.b16 %v301
    %v1301 = vunpack.c.l.b16 %v302
    %v1302 = vunpack.c.l.b16 %v303
    %v1303 = vunpack.c.h.b16 %v303
    %v1304 = vunpack.c.l.b16 %v304
    %v1305 = vunpack.c.h.b16 %v304
    %v1306 = vunpack.c.l.b16 %v305
    %v1307 = vunpack.c.h.b16 %v305
    %v1308 = vunpack.c.l.b16 %v306
    %v1309 = vunpack.c.l.b16 %v307
    %v1310 = vunpack.c.h.b16 %v307
    %v1311 = vunpack.c.l.b16 %v308
    %v1312 = vunpack.c.h.b16 %v308
    %v1313 = vunpack.c.l.b16 %v309
    %v1314 = vunpack.c.h.b16 %v309
    %v1315 = vunpack.c.l.b16 %v310
    %v1316 = vunpack.c.l.b16 %v311
    %v1317 = vunpack.c.h.b16 %v311
    %v1318 = vunpack.c.l.b16 %v312
    %v1319 = vunpack.c.h.b16 %v312
    %v1320 = vunpack.c.l.b16 %v313
    %v1321 = vunpack.c.h.b16 %v313
    %v1322 = vunpack.c.l.b16 %v314
    %v1323 = vunpack.c.l.b16 %v315
    %v1324 = vunpack.c.h.b16 %v315
    %v1325 = vunpack.c.l.b16 %v316
    %v1326 = vunpack.c.h.b16 %v316
    %v1327 = vunpack.c.l.b16 %v317
    %v1328 = vunpack.c.h.b16 %v317
    %v1329 = vunpack.c.l.b16 %v318
    %v1330 = vunpack.c.l.b16 %v319
    %v1331 = vunpack.c.h.b16 %v319
    %v1332 = vunpack.c.l.b16 %v320
    %v1333 = vunpack.c.h.b16 %v320
    %v1334 = vunpack.c.l.b16 %v321
    %v1335 = vunpack.c.h.b16 %v321
    %v1336 = vunpack.c.l.b16 %v322
    %v1337 = vunpack.c.l.b16 %v323
    %v1338 = vunpack.c.h.b16 %v323
    %v1339 = vunpack.c.l.b16 %v324
    %v1340 = vunpack.c.h.b16 %v324
    %v1341 = vunpack.c.l.b16 %v325
    %v1342 = vunpack.c.h.b16 %v325
    %v1343 = vunpack.c.l.b16 %v326
    %v1344 = vunpack.c.l.b16 %v327
    %v1345 = vunpack.c.h.b16 %v327
    %v1346 = vunpack.c.l.b16 %v328
    %v1347 = vunpack.c.h.b16 %v328
    %v1348 = vunpack.c.l.b16 %v329
    %v1349 = vunpack.c.h.b16 %v329
    %v1350 = vunpack.c.l.b16 %v330
    %v1351 = vunpack.c.l.b16 %v331
    %v1352 = vunpack.c.h.b16 %v331
    %v1353 = vunpack.c.l.b16 %v332
    %v1354 = vunpack.c.h.b16 %v332
    %v1355 = vunpack.c.l.b16 %v333
    %v1356 = vunpack.c.h.b16 %v333
    %v1357 = vunpack.c.l.b16 %v334
    %v1358 = vunpack.c.l.b16 %v335
    %v1359 = vunpack.c.h.b16 %v335
    %v1360 = vunpack.c.l.b16 %v336
    %v1361 = vunpack.c.h.b16 %v336
    %v1362 = vunpack.c.l.b16 %v337
    %v1363 = vunpack.c.h.b16 %v337
    %v1364 = vunpack.c.l.b16 %v338
    %v1365 = vunpack.c.l.b16 %v339
    %v1366 = vunpack.c.h.b16 %v339
    %v1367 = vunpack.c.l.b16 %v340
    %v1368 = vunpack.c.h.b16 %v340
    %v1369 = vunpack.c.l.b16 %v341
    %v1370 = vunpack.c.h.b16 %v341
    %v1371 = vunpack.c.l.b16 %v342
    %v1372 = vunpack.c.l.b16 %v343
    %v1373 = vunpack.c.h.b16 %v343
    %v1374 = vunpack.c.l.b16 %v344
    %v1375 = vunpack.c.h.b16 %v344
    %v1376 = vunpack.c.l.b16 %v345
    %v1377 = vunpack.c.h.b16 %v345
    %v1378 = vunpack.c.l.b16 %v346
    %v1379 = vunpack.c.l.b16 %v347
    %v1380 = vunpack.c.h.b16 %v347
    %v1381 = vunpack.c.l.b16 %v348
    %v1382 = vunpack.c.h.b16 %v348
    %v1383 = vunpack.c.l.b16 %v349
    %v1384 = vunpack.c.h.b16 %v349
    %v1385 = vunpack.c.l.b16 %v350
    %v1386 = vunpack.c.l.b16 %v351
    %v1387 = vunpack.c.h.b16 %v351
    %v1388 = vunpack.c.l.b16 %v352
    %v1389 = vunpack.c.h.b16 %v352
    %v1390 = vunpack.c.l.b16 %v353
    %v1391 = vunpack.c.h.b16 %v353
    %v1392 = vunpack.c.l.b16 %v354
    %v1393 = vunpack.c.l.b16 %v355
    %v1394 = vunpack.c.h.b16 %v355
    %v1395 = vunpack.c.l.b16 %v356
    %v1396 = vunpack.c.h.b16 %v356
    %v1397 = vunpack.c.l.b16 %v357
    %v1398 = vunpack.c.h.b16 %v357
    %v1399 = vunpack.c.l.b16 %v358
    %v1400 = vunpack.c.l.b16 %v359
    %v1401 = vunpack.c.h.b16 %v359
    %v1402 = vunpack.c.l.b16 %v360
    %v1403 = vunpack.c.h.b16 %v360
    %v1404 = vunpack.c.l.b16 %v361
    %v1405 = vunpack.c.h.b16 %v361
    %v1406 = vunpack.c.l.b16 %v362
    %v1407 = vunpack.c.l.b16 %v363
    %v1408 = vunpack.c.h.b16 %v363
    %v1409 = vunpack.c.l.b16 %v364
    %v1410 = vunpack.c.h.b16 %v364
    %v1411 = vunpack.c.l.b16 %v365
    %v1412 = vunpack.c.h.b16 %v365
    %v1413 = vunpack.c.l.b16 %v366
    %v1414 = vunpack.c.l.b16 %v367
    %v1415 = vunpack.c.h.b16 %v367
    %v1416 = vunpack.c.l.b16 %v368
    %v1417 = vunpack.c.h.b16 %v368
    %v1418 = vunpack.c.l.b16 %v369
    %v1419 = vunpack.c.h.b16 %v369
    %v1420 = vunpack.c.l.b16 %v370
    %v1421 = vunpack.c.l.b16 %v371
    %v1422 = vunpack.c.h.b16 %v371
    %v1423 = vunpack.c.l.b16 %v372
    %v1424 = vunpack.c.h.b16 %v372
    %v1425 = vunpack.c.l.b16 %v373
    %v1426 = vunpack.c.h.b16 %v373
    %v1427 = vunpack.c.l.b16 %v374
    %v1428 = vunpack.c.l.b16 %v375
    %v1429 = vunpack.c.h.b16 %v375
    %v1430 = vunpack.c.l.b16 %v376
    %v1431 = vunpack.c.h.b16 %v376
    %v1432 = vunpack.c.l.b16 %v377
    %v1433 = vunpack.c.h.b16 %v377
    %v1434 = vunpack.c.l.b16 %v378
    %v1435 = vunpack.c.l.b16 %v379
    %v1436 = vunpack.c.h.b16 %v379
    %v1437 = vunpack.c.l.b16 %v380
    %v1438 = vunpack.c.h.b16 %v380
    %v1439 = vunpack.c.l.b16 %v381
    %v1440 = vunpack.c.h.b16 %v381
    %v1441 = vunpack.c.l.b16 %v382
    %v1442 = vunpack.c.l.b16 %v383
    %v1443 = vunpack.c.h.b16 %v383
    %v1444 = vunpack.c.l.b16 %v384
    %v1445 = vunpack.c.h.b16 %v384
    %v1446 = vunpack.c.l.b16 %v385
    %v1447 = vunpack.c.h.b16 %v385
    %v1448 = vunpack.c.l.b16 %v386
    %v1449 = vunpack.c.l.b16 %v387
    %v1450 = vunpack.c.h.b16 %v387
    %v1451 = vunpack.c.l.b16 %v388
    %v1452 = vunpack.c.h.b16 %v388
    %v1453 = vunpack.c.l.b16 %v389
    %v1454 = vunpack.c.h.b16 %v389
    %v1455 = vunpack.c.l.b16 %v390
    %v1456 = vunpack.c.l.b16 %v391
    %v1457 = vunpack.c.h.b16 %v391
    %v1458 = vunpack.c.l.b16 %v392
    %v1459 = vunpack.c.h.b16 %v392
    %v1460 = vunpack.c.l.b16 %v393
    %v1461 = vunpack.c.h.b16 %v393
    %v1462 = vunpack.c.l.b16 %v394
    %v1463 = vunpack.c.l.b16 %v395
    %v1464 = vunpack.c.h.b16 %v395
    %v1465 = vunpack.c.l.b16 %v396
    %v1466 = vunpack.c.h.b16 %v396
    %v1467 = vunpack.c.l.b16 %v397
    %v1468 = vunpack.c.h.b16 %v397
    %v1469 = vunpack.c.l.b16 %v398
    %v1470 = vunpack.c.l.b16 %v399
    %v1471 = vunpack.c.h.b16 %v399
    %v1472 = vunpack.c.l.b16 %v400
    %v1473 = vunpack.c.h.b16 %v400
    %v1474 = vunpack.c.l.b16 %v401
    %v1475 = vunpack.c.h.b16 %v401
    %v1476 = vunpack.c.l.b16 %v402
    %v1477 = vunpack.c.l.b16 %v403
    %v1478 = vunpack.c.h.b16 %v403
    %v1479 = vunpack.c.l.b16 %v404
    %v1480 = vunpack.c.h.b16 %v404
    %v1481 = vunpack.c.l.b16 %v405
    %v1482 = vunpack.c.h.b16 %v405
    %v1483 = vunpack.c.l.b16 %v406
    %v1484 = vunpack.c.l.b16 %v407
    %v1485 = vunpack.c.h.b16 %v407
    %v1486 = vunpack.c.l.b16 %v408
    %v1487 = vunpack.c.h.b16 %v408
    %v1488 = vunpack.c.l.b16 %v409
    %v1489 = vunpack.c.h.b16 %v409
    %v1490 = vunpack.c.l.b16 %v410
    %v1491 = vunpack.c.l.b16 %v411
    %v1492 = vunpack.c.h.b16 %v411
    %v1493 = vunpack.c.l.b16 %v412
    %v1494 = vunpack.c.h.b16 %v412
    %v1495 = vunpack.c.l.b16 %v413
    %v1496 = vunpack.c.h.b16 %v413
    %v1497 = vunpack.c.l.b16 %v414
    %v1498 = vunpack.c.l.b16 %v415
    %v1499 = vunpack.c.h.b16 %v415
    %v1500 = vunpack.c.l.b16 %v416
    %v1501 = vunpack.c.h.b16 %v416
    %v1502 = vunpack.c.l.b16 %v417
    %v1503 = vunpack.c.h.b16 %v417
    %v1504 = vunpack.c.l.b16 %v418
    %v1505 = vunpack.c.l.b16 %v419
    %v1506 = vunpack.c.h.b16 %v419
    %v1507 = vunpack.c.l.b16 %v420
    %v1508 = vunpack.c.h.b16 %v420
    %v1509 = vunpack.c.l.b16 %v421
    %v1510 = vunpack.c.h.b16 %v421
    %v1511 = vunpack.c.l.b16 %v422
    %v1512 = vunpack.c.l.b16 %v423
    %v1513 = vunpack.c.h.b16 %v423
    %v1514 = vunpack.c.l.b16 %v424
    %v1515 = vunpack.c.h.b16 %v424
    %v1516 = vunpack.c.l.b16 %v425
    %v1517 = vunpack.c.h.b16 %v425
    %v1518 = vunpack.c.l.b16 %v426
    %v1519 = vunpack.c.l.b16 %v427
    %v1520 = vunpack.c.h.b16 %v427
    %v1521 = vunpack.c.l.b16 %v428
    %v1522 = vunpack.c.h.b16 %v428
    %v1523 = vunpack.c.l.b16 %v429
    %v1524 = vunpack.c.h.b16 %v429
    %v1525 = vunpack.c.l.b16 %v430
    %v1526 = vunpack.c.l.b16 %v431
    %v1527 = vunpack.c.h.b16 %v431
    %v1528 = vunpack.c.l.b16 %v432
    %v1529 = vunpack.c.h.b16 %v432
    %v1530 = vunpack.c.l.b16 %v433
    %v1531 = vunpack.c.h.b16 %v433
    %v1532 = vunpack.c.l.b16 %v434
    %v1533 = vunpack.c.l.b16 %v435
    %v1534 = vunpack.c.h.b16 %v435
    %v1535 = vunpack.c.l.b16 %v436
    %v1536 = vunpack.c.h.b16 %v436
    %v1537 = vunpack.c.l.b16 %v437
    %v1538 = vunpack.c.h.b16 %v437
    %v1539 = vunpack.c.l.b16 %v438
    %v1540 = vunpack.c.l.b16 %v439
    %v1541 = vunpack.c.h.b16 %v439
    %v1542 = vunpack.c.l.b16 %v440
    %v1543 = vunpack.c.h.b16 %v440
    %v1544 = vunpack.c.l.b16 %v441
    %v1545 = vunpack.c.h.b16 %v441
    %v1546 = vunpack.c.l.b16 %v442
    %v1547 = vunpack.c.l.b16 %v443
    %v1548 = vunpack.c.h.b16 %v443
    %v1549 = vunpack.c.l.b16 %v444
    %v1550 = vunpack.c.h.b16 %v444
    %v1551 = vunpack.c.l.b16 %v445
    %v1552 = vunpack.c.h.b16 %v445
    %v1553 = vunpack.c.l.b16 %v446
    %v1554 = vunpack.c.l.b16 %v447
    %v1555 = vunpack.c.h.b16 %v447
    %v1556 = vunpack.c.l.b16 %v448
    %v1557 = vunpack.c.h.b16 %v448
    %v1558 = vunpack.c.l.b16 %v449
    %v1559 = vunpack.c.h.b16 %v449
    %v1560 = vunpack.c.l.b16 %v450
    %v1561 = vunpack.c.l.b16 %v451
    %v1562 = vunpack.c.h.b16 %v451
    %v1563 = vunpack.c.l.b16 %v452
    %v1564 = vunpack.c.h.b16 %v452
    %v1565 = vunpack.c.l.b16 %v453
    %v1566 = vunpack.c.h.b16 %v453
    %v1567 = vunpack.c.l.b16 %v454
    %v1568 = vpack.c.b16 %v889, %v882
    %v1569 = vpack.c.b16 %v890, %v883
    %v1570 = vpack.c.b16 %v891, %v884
    %v1571 = vpack.c.b16 %v892, %v885
    %v1572 = vpack.c.b16 %v893, %v886
    %v1573 = vpack.c.b16 %v894, %v887
    %v1574 = vpack.c.b16 %v895, %v888
    %v1575 = vpack.c.b16 %v903, %v896
    %v1576 = vpack.c.b16 %v904, %v897
    %v1577 = vpack.c.b16 %v905, %v898
    %v1578 = vpack.c.b16 %v906, %v899
    %v1579 = vpack.c.b16 %v907, %v900
    %v1580 = vpack.c.b16 %v908, %v901
    %v1581 = vpack.c.b16 %v909, %v902
    %v1582 = vpack.c.b16 %v917, %v910
    %v1583 = vpack.c.b16 %v918, %v911
    %v1584 = vpack.c.b16 %v919, %v912
    %v1585 = vpack.c.b16 %v920, %v913
    %v1586 = vpack.c.b16 %v921, %v914
    %v1587 = vpack.c.b16 %v922, %v915
    %v1588 = vpack.c.b16 %v923, %v916
    %v1589 = vpack.c.b16 %v931, %v924
    %v1590 = vpack.c.b16 %v932, %v925
    %v1591 = vpack.c.b16 %v933, %v926
    %v1592 = vpack.c.b16 %v934, %v927
    %v1593 = vpack.c.b16 %v935, %v928
    %v1594 = vpack.c.b16 %v936, %v929
    %v1595 = vpack.c.b16 %v937, %v930
    %v1596 = vpack.c.b16 %v945, %v938
    %v1597 = vpack.c.b16 %v946, %v939
    %v1598 = vpack.c.b16 %v947, %v940
    %v1599 = vpack.c.b16 %v948, %v941
    %v1600 = vpack.c.b16 %v949, %v942
    %v1601 = vpack.c.b16 %v950, %v943
    %v1602 = vpack.c.b16 %v951, %v944
    %v1603 = vpack.c.b16 %v959, %v952
    %v1604 = vpack.c.b16 %v960, %v953
    %v1605 = vpack.c.b16 %v961, %v954
    %v1606 = vpack.c.b16 %v962, %v955
    %v1607 = vpack.c.b16 %v963, %v956
    %v1608 = vpack.c.b16 %v964, %v957
    %v1609 = vpack.c.b16 %v965, %v958
    %v1610 = vpack.c.b16 %v973, %v966
    %v1611 = vpack.c.b16 %v974, %v967
    %v1612 = vpack.c.b16 %v975, %v968
    %v1613 = vpack.c.b16 %v976, %v969
    %v1614 = vpack.c.b16 %v977, %v970
    %v1615 = vpack.c.b16 %v978, %v971
    %v1616 = vpack.c.b16 %v979, %v972
    %v1617 = vpack.c.b16 %v987, %v980
    %v1618 = vpack.c.b16 %v988, %v981
    %v1619 = vpack.c.b16 %v989, %v982
    %v1620 = vpack.c.b16 %v990, %v983
    %v1621 = vpack.c.b16 %v991, %v984
    %v1622 = vpack.c.b16 %v992, %v985
    %v1623 = vpack.c.b16 %v993, %v986
    %v1624 = vpack.c.b16 %v1001, %v994
    %v1625 = vpack.c.b16 %v1002, %v995
    %v1626 = vpack.c.b16 %v1003, %v996
    %v1627 = vpack.c.b16 %v1004, %v997
    %v1628 = vpack.c.b16 %v1005, %v998
    %v1629 = vpack.c.b16 %v1006, %v999
    %v1630 = vpack.c.b16 %v1007, %v1000
    %v1631 = vpack.c.b16 %v1015, %v1008
    %v1632 = vpack.c.b16 %v1016, %v1009
    %v1633 = vpack.c.b16 %v1017, %v1010
    %v1634 = vpack.c.b16 %v1018, %v1011
    %v1635 = vpack.c.b16 %v1019, %v1012
    %v1636 = vpack.c.b16 %v1020, %v1013
    %v1637 = vpack.c.b16 %v1021, %v1014
    %v1638 = vpack.c.b16 %v1029, %v1022
    %v1639 = vpack.c.b16 %v1030, %v1023
    %v1640 = vpack.c.b16 %v1031, %v1024
    %v1641 = vpack.c.b16 %v1032, %v1025
    %v1642 = vpack.c.b16 %v1033, %v1026
    %v1643 = vpack.c.b16 %v1034, %v1027
    %v1644 = vpack.c.b16 %v1035, %v1028
    %v1645 = vpack.c.b16 %v1043, %v1036
    %v1646 = vpack.c.b16 %v1044, %v1037
    %v1647 = vpack.c.b16 %v1045, %v1038
    %v1648 = vpack.c.b16 %v1046, %v1039
    %v1649 = vpack.c.b16 %v1047, %v1040
    %v1650 = vpack.c.b16 %v1048, %v1041
    %v1651 = vpack.c.b16 %v1049, %v1042
    %v1652 = vpack.c.b16 %v1057, %v1050
    %v1653 = vpack.c.b16 %v1058, %v1051
    %v1654 = vpack.c.b16 %v1059, %v1052
    %v1655 = vpack.c.b16 %v1060, %v1053
    %v1656 = vpack.c.b16 %v1061, %v1054
    %v1657 = vpack.c.b16 %v1062, %v1055
    %v1658 = vpack.c.b16 %v1063, %v1056
    %v1659 = vpack.c.b16 %v1071, %v1064
    %v1660 = vpack.c.b16 %v1072, %v1065
    %v1661 = vpack.c.b16 %v1073, %v1066
    %v1662 = vpack.c.b16 %v1074, %v1067
    %v1663 = vpack.c.b16 %v1075, %v1068
    %v1664 = vpack.c.b16 %v1076, %v1069
    %v1665 = vpack.c.b16 %v1077, %v1070
    %v1666 = vpack.c.b16 %v1085, %v1078
    %v1667 = vpack.c.b16 %v1086, %v1079
    %v1668 = vpack.c.b16 %v1087, %v1080
    %v1669 = vpack.c.b16 %v1088, %v1081
    %v1670 = vpack.c.b16 %v1089, %v1082
    %v1671 = vpack.c.b16 %v1090, %v1083
    %v1672 = vpack.c.b16 %v1091, %v1084
    %v1673 = vpack.c.b16 %v1099, %v1092
    %v1674 = vpack.c.b16 %v1100, %v1093
    %v1675 = vpack.c.b16 %v1101, %v1094
    %v1676 = vpack.c.b16 %v1102, %v1095
    %v1677 = vpack.c.b16 %v1103, %v1096
    %v1678 = vpack.c.b16 %v1104, %v1097
    %v1679 = vpack.c.b16 %v1105, %v1098
    %v1680 = vpack.c.b16 %v1113, %v1106
    %v1681 = vpack.c.b16 %v1114, %v1107
    %v1682 = vpack.c.b16 %v1115, %v1108
    %v1683 = vpack.c.b16 %v1116, %v1109
    %v1684 = vpack.c.b16 %v1117, %v1110
    %v1685 = vpack.c.b16 %v1118, %v1111
    %v1686 = vpack.c.b16 %v1119, %v1112
    %v1687 = vpack.c.b16 %v1127, %v1120
    %v1688 = vpack.c.b16 %v1128, %v1121
    %v1689 = vpack.c.b16 %v1129, %v1122
    %v1690 = vpack.c.b16 %v1130, %v1123
    %v1691 = vpack.c.b16 %v1131, %v1124
    %v1692 = vpack.c.b16 %v1132, %v1125
    %v1693 = vpack.c.b16 %v1133, %v1126
    %v1694 = vpack.c.b16 %v1141, %v1134
    %v1695 = vpack.c.b16 %v1142, %v1135
    %v1696 = vpack.c.b16 %v1143, %v1136
    %v1697 = vpack.c.b16 %v1144, %v1137
    %v1698 = vpack.c.b16 %v1145, %v1138
    %v1699 = vpack.c.b16 %v1146, %v1139
    %v1700 = vpack.c.b16 %v1147, %v1140
    %v1701 = vpack.c.b16 %v1155, %v1148
    %v1702 = vpack.c.b16 %v1156, %v1149
    %v1703 = vpack.c.b16 %v1157, %v1150
    %v1704 = vpack.c.b16 %v1158, %v1151
    %v1705 = vpack.c.b16 %v1159, %v1152
    %v1706 = vpack.c.b16 %v1160, %v1153
    %v1707 = vpack.c.b16 %v1161, %v1154
    %v1708 = vpack.c.b16 %v1169, %v1162
    %v1709 = vpack.c.b16 %v1170, %v1163
    %v1710 = vpack.c.b16 %v1171, %v1164
    %v1711 = vpack.c.b16 %v1172, %v1165
    %v1712 = vpack.c.b16 %v1173, %v1166
    %v1713 = vpack.c.b16 %v1174, %v1167
    %v1714 = vpack.c.b16 %v1175, %v1168
    %v1715 = vpack.c.b16 %v1183, %v1176
    %v1716 = vpack.c.b16 %v1184, %v1177
    %v1717 = vpack.c.b16 %v1185, %v1178
    %v1718 = vpack.c.b16 %v1186, %v1179
    %v1719 = vpack.c.b16 %v1187, %v1180
    %v1720 = vpack.c.b16 %v1188, %v1181
    %v1721 = vpack.c.b16 %v1189, %v1182
    %v1722 = vpack.c.b16 %v1197, %v1190
    %v1723 = vpack.c.b16 %v1198, %v1191
    %v1724 = vpack.c.b16 %v1199, %v1192
    %v1725 = vpack.c.b16 %v1200, %v1193
    %v1726 = vpack.c.b16 %v1201, %v1194
    %v1727 = vpack.c.b16 %v1202, %v1195
    %v1728 = vpack.c.b16 %v1203, %v1196
    %v1729 = vpack.c.b16 %v1211, %v1204
    %v1730 = vpack.c.b16 %v1212, %v1205
    %v1731 = vpack.c.b16 %v1213, %v1206
    %v1732 = vpack.c.b16 %v1214, %v1207
    %v1733 = vpack.c.b16 %v1215, %v1208
    %v1734 = vpack.c.b16 %v1216, %v1209
    %v1735 = vpack.c.b16 %v1217, %v1210
    %v1736 = vpack.c.b16 %v1225, %v1218
    %v1737 = vpack.c.b16 %v1226, %v1219
    %v1738 = vpack.c.b16 %v1227, %v1220
    %v1739 = vpack.c.b16 %v1228, %v1221
    %v1740 = vpack.c.b16 %v1229, %v1222
    %v1741 = vpack.c.b16 %v1230, %v1223
    %v1742 = vpack.c.b16 %v1231, %v1224
    %v1743 = vpack.c.b16 %v1239, %v1232
    %v1744 = vpack.c.b16 %v1240, %v1233
    %v1745 = vpack.c.b16 %v1241, %v1234
    %v1746 = vpack.c.b16 %v1242, %v1235
    %v1747 = vpack.c.b16 %v1243, %v1236
    %v1748 = vpack.c.b16 %v1244, %v1237
    %v1749 = vpack.c.b16 %v1245, %v1238
    %v1750 = vpack.c.b16 %v1253, %v1246
    %v1751 = vpack.c.b16 %v1254, %v1247
    %v1752 = vpack.c.b16 %v1255, %v1248
    %v1753 = vpack.c.b16 %v1256, %v1249
    %v1754 = vpack.c.b16 %v1257, %v1250
    %v1755 = vpack.c.b16 %v1258, %v1251
    %v1756 = vpack.c.b16 %v1259, %v1252
    %v1757 = vpack.c.b16 %v1267, %v1260
    %v1758 = vpack.c.b16 %v1268, %v1261
    %v1759 = vpack.c.b16 %v1269, %v1262
    %v1760 = vpack.c.b16 %v1270, %v1263
    %v1761 = vpack.c.b16 %v1271, %v1264
    %v1762 = vpack.c.b16 %v1272, %v1265
    %v1763 = vpack.c.b16 %v1273, %v1266
    %v1764 = vpack.c.b16 %v1281, %v1274
    %v1765 = vpack.c.b16 %v1282, %v1275
    %v1766 = vpack.c.b16 %v1283, %v1276
    %v1767 = vpack.c.b16 %v1284, %v1277
    %v1768 = vpack.c.b16 %v1285, %v1278
    %v1769 = vpack.c.b16 %v1286, %v1279
    %v1770 = vpack.c.b16 %v1287, %v1280
    %v1771 = vpack.c.b16 %v1295, %v1288
    %v1772 = vpack.c.b16 %v1296, %v1289
    %v1773 = vpack.c.b16 %v1297, %v1290
    %v1774 = vpack.c.b16 %v1298, %v1291
    %v1775 = vpack.c.b16 %v1299, %v1292
    %v1776 = vpack.c.b16 %v1300, %v1293
    %v1777 = vpack.c.b16 %v1301, %v1294
    %v1778 = vpack.c.b16 %v1309, %v1302
    %v1779 = vpack.c.b16 %v1310, %v1303
    %v1780 = vpack.c.b16 %v1311, %v1304
    %v1781 = vpack.c.b16 %v1312, %v1305
    %v1782 = vpack.c.b16 %v1313, %v1306
    %v1783 = vpack.c.b16 %v1314, %v1307
    %v1784 = vpack.c.b16 %v1315, %v1308
    %v1785 = vpack.c.b16 %v1323, %v1316
    %v1786 = vpack.c.b16 %v1324, %v1317
    %v1787 = vpack.c.b16 %v1325, %v1318
    %v1788 = vpack.c.b16 %v1326, %v1319
    %v1789 = vpack.c.b16 %v1327, %v1320
    %v1790 = vpack.c.b16 %v1328, %v1321
    %v1791 = vpack.c.b16 %v1329, %v1322
    %v1792 = vpack.c.b16 %v1337, %v1330
    %v1793 = vpack.c.b16 %v1338, %v1331
    %v1794 = vpack.c.b16 %v1339, %v1332
    %v1795 = vpack.c.b16 %v1340, %v1333
    %v1796 = vpack.c.b16 %v1341, %v1334
    %v1797 = vpack.c.b16 %v1342, %v1335
    %v1798 = vpack.c.b16 %v1343, %v1336
    %v1799 = vpack.c.b16 %v1351, %v1344
    %v1800 = vpack.c.b16 %v1352, %v1345
    %v1801 = vpack.c.b16 %v1353, %v1346
    %v1802 = vpack.c.b16 %v1354, %v1347
    %v1803 = vpack.c.b16 %v1355, %v1348
    %v1804 = vpack.c.b16 %v1356, %v1349
    %v1805 = vpack.c.b16 %v1357, %v1350
    %v1806 = vpack.c.b16 %v1365, %v1358
    %v1807 = vpack.c.b16 %v1366, %v1359
    %v1808 = vpack.c.b16 %v1367, %v1360
    %v1809 = vpack.c.b16 %v1368, %v1361
    %v1810 = vpack.c.b16 %v1369, %v1362
    %v1811 = vpack.c.b16 %v1370, %v1363
    %v1812 = vpack.c.b16 %v1371, %v1364
    %v1813 = vpack.c.b16 %v1379, %v1372
    %v1814 = vpack.c.b16 %v1380, %v1373
    %v1815 = vpack.c.b16 %v1381, %v1374
    %v1816 = vpack.c.b16 %v1382, %v1375
    %v1817 = vpack.c.b16 %v1383, %v1376
    %v1818 = vpack.c.b16 %v1384, %v1377
    %v1819 = vpack.c.b16 %v1385, %v1378
    %v1820 = vpack.c.b16 %v1393, %v1386
    %v1821 = vpack.c.b16 %v1394, %v1387
    %v1822 = vpack.c.b16 %v1395, %v1388
    %v1823 = vpack.c.b16 %v1396, %v1389
    %v1824 = vpack.c.b16 %v1397, %v1390
    %v1825 = vpack.c.b16 %v1398, %v1391
    %v1826 = vpack.c.b16 %v1399, %v1392
    %v1827 = vpack.c.b16 %v1407, %v1400
    %v1828 = vpack.c.b16 %v1408, %v1401
    %v1829 = vpack.c.b16 %v1409, %v1402
    %v1830 = vpack.c.b16 %v1410, %v1403
    %v1831 = vpack.c.b16 %v1411, %v1404
    %v1832 = vpack.c.b16 %v1412, %v1405
    %v1833 = vpack.c.b16 %v1413, %v1406
    %v1834 = vpack.c.b16 %v1421, %v1414
    %v1835 = vpack.c.b16 %v1422, %v1415
    %v1836 = vpack.c.b16 %v1423, %v1416
    %v1837 = vpack.c.b16 %v1424, %v1417
    %v1838 = vpack.c.b16 %v1425, %v1418
    %v1839 = vpack.c.b16 %v1426, %v1419
    %v1840 = vpack.c.b16 %v1427, %v1420
    %v1841 = vpack.c.b16 %v1435, %v1428
    %v1842 = vpack.c.b16 %v1436, %v1429
    %v1843 = vpack.c.b16 %v1437, %v1430
    %v1844 = vpack.c.b16 %v1438, %v1431
    %v1845 = vpack.c.b16 %v1439, %v1432
    %v1846 = vpack.c.b16 %v1440, %v1433
    %v1847 = vpack.c.b16 %v1441, %v1434
    %v1848 = vpack.c.b16 %v1449, %v1442
    %v1849 = vpack.c.b16 %v1450, %v1443
    %v1850 = vpack.c.b16 %v1451, %v1444
    %v1851 = vpack.c.b16 %v1452, %v1445
    %v1852 = vpack.c.b16 %v1453, %v1446
    %v1853 = vpack.c.b16 %v1454, %v1447
    %v1854 = vpack.c.b16 %v1455, %v1448
    %v1855 = vpack.c.b16 %v1463, %v1456
    %v1856 = vpack.c.b16 %v1464, %v1457
    %v1857 = vpack.c.b16 %v1465, %v1458
    %v1858 = vpack.c.b16 %v1466, %v1459
    %v1859 = vpack.c.b16 %v1467, %v1460
    %v1860 = vpack.c.b16 %v1468, %v1461
    %v1861 = vpack.c.b16 %v1469, %v1462
    %v1862 = vpack.c.b16 %v1477, %v1470
    %v1863 = vpack.c.b16 %v1478, %v1471
    %v1864 = vpack.c.b16 %v1479, %v1472
    %v1865 = vpack.c.b16 %v1480, %v1473
    %v1866 = vpack.c.b16 %v1481, %v1474
    %v1867 = vpack.c.b16 %v1482, %v1475
    %v1868 = vpack.c.b16 %v1483, %v1476
    %v1869 = vpack.c.b16 %v1491, %v1484
    %v1870 = vpack.c.b16 %v1492, %v1485
    %v1871 = vpack.c.b16 %v1493, %v1486
    %v1872 = vpack.c.b16 %v1494, %v1487
    %v1873 = vpack.c.b16 %v1495, %v1488
    %v1874 = vpack.c.b16 %v1496, %v1489
    %v1875 = vpack.c.b16 %v1497, %v1490
    %v1876 = vpack.c.b16 %v1505, %v1498
    %v1877 = vpack.c.b16 %v1506, %v1499
    %v1878 = vpack.c.b16 %v1507, %v1500
    %v1879 = vpack.c.b16 %v1508, %v1501
    %v1880 = vpack.c.b16 %v1509, %v1502
    %v1881 = vpack.c.b16 %v1510, %v1503
    %v1882 = vpack.c.b16 %v1511, %v1504
    %v1883 = vpack.c.b16 %v1519, %v1512
    %v1884 = vpack.c.b16 %v1520, %v1513
    %v1885 = vpack.c.b16 %v1521, %v1514
    %v1886 = vpack.c.b16 %v1522, %v1515
    %v1887 = vpack.c.b16 %v1523, %v1516
    %v1888 = vpack.c.b16 %v1524, %v1517
    %v1889 = vpack.c.b16 %v1525, %v1518
    %v1890 = vpack.c.b16 %v1533, %v1526
    %v1891 = vpack.c.b16 %v1534, %v1527
    %v1892 = vpack.c.b16 %v1535, %v1528
    %v1893 = vpack.c.b16 %v1536, %v1529
    %v1894 = vpack.c.b16 %v1537, %v1530
    %v1895 = vpack.c.b16 %v1538, %v1531
    %v1896 = vpack.c.b16 %v1539, %v1532
    %v1897 = vpack.c.b16 %v1547, %v1540
    %v1898 = vpack.c.b16 %v1548, %v1541
    %v1899 = vpack.c.b16 %v1549, %v1542
    %v1900 = vpack.c.b16 %v1550, %v1543
    %v1901 = vpack.c.b16 %v1551, %v1544
    %v1902 = vpack.c.b16 %v1552, %v1545
    %v1903 = vpack.c.b16 %v1553, %v1546
    %v1904 = vpack.c.b16 %v1561, %v1554
    %v1905 = vpack.c.b16 %v1562, %v1555
    %v1906 = vpack.c.b16 %v1563, %v1556
    %v1907 = vpack.c.b16 %v1564, %v1557
    %v1908 = vpack.c.b16 %v1565, %v1558
    %v1909 = vpack.c.b16 %v1566, %v1559
    %v1910 = vpack.c.b16 %v1567, %v1560
    %vm2254 = vcmask 130048
    %v2256 = vsel %vm2254, %v483, 0
    %2258 = vmatpush.bf16.msra.mxu0 %v1617
    %2259 = vmatpush.bf16.msra.mxu0 %v1610
    %2260 = vmatpush.bf16.msra.mxu0 %v1603
    %2261 = vmatpush.bf16.msra.mxu0 %v1596
    %2262 = vmatpush.bf16.msra.mxu0 %v1589
    %2263 = vmatpush.bf16.msra.mxu0 %v1582
    %2264 = vmatpush.bf16.msra.mxu0 %v1575
    %2265 = vmatpush.bf16.msra.mxu0 %v1568
    %2266 = vmatmul.bf16.gmra.mxu0 %v477
    %v2267 = vpop.f32.mrf.mxu0
    %v2268 = vadd.f32 0.0, %v2267
    %v2269 = vpop.f32.mrf.mxu0
    %v2270 = vadd.f32 0.0, %v2269
    %2271 = vdwg.mxu0
    %2272 = vmatpush.bf16.msra.mxu0 %v1673
    %2273 = vmatpush.bf16.msra.mxu0 %v1666
    %2274 = vmatpush.bf16.msra.mxu0 %v1659
    %2275 = vmatpush.bf16.msra.mxu0 %v1652
    %2276 = vmatpush.bf16.msra.mxu0 %v1645
    %2277 = vmatpush.bf16.msra.mxu0 %v1638
    %2278 = vmatpush.bf16.msra.mxu0 %v1631
    %2279 = vmatpush.bf16.msra.mxu0 %v1624
    %2280 = vmatmul.bf16.gmra.mxu0 %v478
    %v2281 = vpop.f32.mrf.mxu0
    %v2282 = vadd.f32 %v2268, %v2281
    %v2283 = vpop.f32.mrf.mxu0
    %v2284 = vadd.f32 %v2270, %v2283
    %2285 = vdwg.mxu0
    %2286 = vmatpush.bf16.msra.mxu0 %v1729
    %2287 = vmatpush.bf16.msra.mxu0 %v1722
    %2288 = vmatpush.bf16.msra.mxu0 %v1715
    %2289 = vmatpush.bf16.msra.mxu0 %v1708
    %2290 = vmatpush.bf16.msra.mxu0 %v1701
    %2291 = vmatpush.bf16.msra.mxu0 %v1694
    %2292 = vmatpush.bf16.msra.mxu0 %v1687
    %2293 = vmatpush.bf16.msra.mxu0 %v1680
    %2294 = vmatmul.bf16.gmra.mxu0 %v479
    %v2295 = vpop.f32.mrf.mxu0
    %v2296 = vadd.f32 %v2282, %v2295
    %v2297 = vpop.f32.mrf.mxu0
    %v2298 = vadd.f32 %v2284, %v2297
    %2299 = vdwg.mxu0
    %2300 = vmatpush.bf16.msra.mxu0 %v1785
    %2301 = vmatpush.bf16.msra.mxu0 %v1778
    %2302 = vmatpush.bf16.msra.mxu0 %v1771
    %2303 = vmatpush.bf16.msra.mxu0 %v1764
    %2304 = vmatpush.bf16.msra.mxu0 %v1757
    %2305 = vmatpush.bf16.msra.mxu0 %v1750
    %2306 = vmatpush.bf16.msra.mxu0 %v1743
    %2307 = vmatpush.bf16.msra.mxu0 %v1736
    %2308 = vmatmul.bf16.gmra.mxu0 %v480
    %v2309 = vpop.f32.mrf.mxu0
    %v2310 = vadd.f32 %v2296, %v2309
    %v2311 = vpop.f32.mrf.mxu0
    %v2312 = vadd.f32 %v2298, %v2311
    %2313 = vdwg.mxu0
    %2314 = vmatpush.bf16.msra.mxu0 %v1841
    %2315 = vmatpush.bf16.msra.mxu0 %v1834
    %2316 = vmatpush.bf16.msra.mxu0 %v1827
    %2317 = vmatpush.bf16.msra.mxu0 %v1820
    %2318 = vmatpush.bf16.msra.mxu0 %v1813
    %2319 = vmatpush.bf16.msra.mxu0 %v1806
    %2320 = vmatpush.bf16.msra.mxu0 %v1799
    %2321 = vmatpush.bf16.msra.mxu0 %v1792
    %2322 = vmatmul.bf16.gmra.mxu0 %v481
    %v2323 = vpop.f32.mrf.mxu0
    %v2324 = vadd.f32 %v2310, %v2323
    %v2325 = vpop.f32.mrf.mxu0
    %v2326 = vadd.f32 %v2312, %v2325
    %2327 = vdwg.mxu0
    %2328 = vmatpush.bf16.msra.mxu0 %v1897
    %2329 = vmatpush.bf16.msra.mxu0 %v1890
    %2330 = vmatpush.bf16.msra.mxu0 %v1883
    %2331 = vmatpush.bf16.msra.mxu0 %v1876
    %2332 = vmatpush.bf16.msra.mxu0 %v1869
    %2333 = vmatpush.bf16.msra.mxu0 %v1862
    %2334 = vmatpush.bf16.msra.mxu0 %v1855
    %2335 = vmatpush.bf16.msra.mxu0 %v1848
    %2336 = vmatmul.bf16.gmra.mxu0 %v482
    %v2337 = vpop.f32.mrf.mxu0
    %v2338 = vadd.f32 %v2324, %v2337
    %v2339 = vpop.f32.mrf.mxu0
    %v2340 = vadd.f32 %v2326, %v2339
    %2341 = vdwg.mxu0
    %2342 = vmatpush.bf16.msra.mxu0 0
    %2343 = vmatpush.bf16.msra.mxu0 0
    %2344 = vmatpush.bf16.msra.mxu0 0
    %2345 = vmatpush.bf16.msra.mxu0 0
    %2346 = vmatpush.bf16.msra.mxu0 0
    %2347 = vmatpush.bf16.msra.mxu0 0
    %2348 = vmatpush.bf16.msra.mxu0 0
    %2349 = vmatpush.bf16.msra.mxu0 %v1904
    %2350 = vmatmul.bf16.gmra.mxu0 %v2256
    %v2351 = vpop.f32.mrf.mxu0
    %v2352 = vadd.f32 %v2338, %v2351
    %v2353 = vpop.f32.mrf.mxu0
    %v2354 = vadd.f32 %v2340, %v2353
    %2355 = vdwg.mxu0
    %2356 = vmatpush.bf16.msra.mxu0 %v1618
    %2357 = vmatpush.bf16.msra.mxu0 %v1611
    %2358 = vmatpush.bf16.msra.mxu0 %v1604
    %2359 = vmatpush.bf16.msra.mxu0 %v1597
    %2360 = vmatpush.bf16.msra.mxu0 %v1590
    %2361 = vmatpush.bf16.msra.mxu0 %v1583
    %2362 = vmatpush.bf16.msra.mxu0 %v1576
    %2363 = vmatpush.bf16.msra.mxu0 %v1569
    %2364 = vmatmul.bf16.gmra.mxu0 %v477
    %v2365 = vpop.f32.mrf.mxu0
    %v2366 = vadd.f32 0.0, %v2365
    %v2367 = vpop.f32.mrf.mxu0
    %v2368 = vadd.f32 0.0, %v2367
    %2369 = vdwg.mxu0
    %2370 = vmatpush.bf16.msra.mxu0 %v1674
    %2371 = vmatpush.bf16.msra.mxu0 %v1667
    %2372 = vmatpush.bf16.msra.mxu0 %v1660
    %2373 = vmatpush.bf16.msra.mxu0 %v1653
    %2374 = vmatpush.bf16.msra.mxu0 %v1646
    %2375 = vmatpush.bf16.msra.mxu0 %v1639
    %2376 = vmatpush.bf16.msra.mxu0 %v1632
    %2377 = vmatpush.bf16.msra.mxu0 %v1625
    %2378 = vmatmul.bf16.gmra.mxu0 %v478
    %v2379 = vpop.f32.mrf.mxu0
    %v2380 = vadd.f32 %v2366, %v2379
    %v2381 = vpop.f32.mrf.mxu0
    %v2382 = vadd.f32 %v2368, %v2381
    %2383 = vdwg.mxu0
    %2384 = vmatpush.bf16.msra.mxu0 %v1730
    %2385 = vmatpush.bf16.msra.mxu0 %v1723
    %2386 = vmatpush.bf16.msra.mxu0 %v1716
    %2387 = vmatpush.bf16.msra.mxu0 %v1709
    %2388 = vmatpush.bf16.msra.mxu0 %v1702
    %2389 = vmatpush.bf16.msra.mxu0 %v1695
    %2390 = vmatpush.bf16.msra.mxu0 %v1688
    %2391 = vmatpush.bf16.msra.mxu0 %v1681
    %2392 = vmatmul.bf16.gmra.mxu0 %v479
    %v2393 = vpop.f32.mrf.mxu0
    %v2394 = vadd.f32 %v2380, %v2393
    %v2395 = vpop.f32.mrf.mxu0
    %v2396 = vadd.f32 %v2382, %v2395
    %2397 = vdwg.mxu0
    %2398 = vmatpush.bf16.msra.mxu0 %v1786
    %2399 = vmatpush.bf16.msra.mxu0 %v1779
    %2400 = vmatpush.bf16.msra.mxu0 %v1772
    %2401 = vmatpush.bf16.msra.mxu0 %v1765
    %2402 = vmatpush.bf16.msra.mxu0 %v1758
    %2403 = vmatpush.bf16.msra.mxu0 %v1751
    %2404 = vmatpush.bf16.msra.mxu0 %v1744
    %2405 = vmatpush.bf16.msra.mxu0 %v1737
    %2406 = vmatmul.bf16.gmra.mxu0 %v480
    %v2407 = vpop.f32.mrf.mxu0
    %v2408 = vadd.f32 %v2394, %v2407
    %v2409 = vpop.f32.mrf.mxu0
    %v2410 = vadd.f32 %v2396, %v2409
    %2411 = vdwg.mxu0
    %2412 = vmatpush.bf16.msra.mxu0 %v1842
    %2413 = vmatpush.bf16.msra.mxu0 %v1835
    %2414 = vmatpush.bf16.msra.mxu0 %v1828
    %2415 = vmatpush.bf16.msra.mxu0 %v1821
    %2416 = vmatpush.bf16.msra.mxu0 %v1814
    %2417 = vmatpush.bf16.msra.mxu0 %v1807
    %2418 = vmatpush.bf16.msra.mxu0 %v1800
    %2419 = vmatpush.bf16.msra.mxu0 %v1793
    %2420 = vmatmul.bf16.gmra.mxu0 %v481
    %v2421 = vpop.f32.mrf.mxu0
    %v2422 = vadd.f32 %v2408, %v2421
    %v2423 = vpop.f32.mrf.mxu0
    %v2424 = vadd.f32 %v2410, %v2423
    %2425 = vdwg.mxu0
    %2426 = vmatpush.bf16.msra.mxu0 %v1898
    %2427 = vmatpush.bf16.msra.mxu0 %v1891
    %2428 = vmatpush.bf16.msra.mxu0 %v1884
    %2429 = vmatpush.bf16.msra.mxu0 %v1877
    %2430 = vmatpush.bf16.msra.mxu0 %v1870
    %2431 = vmatpush.bf16.msra.mxu0 %v1863
    %2432 = vmatpush.bf16.msra.mxu0 %v1856
    %2433 = vmatpush.bf16.msra.mxu0 %v1849
    %2434 = vmatmul.bf16.gmra.mxu0 %v482
    %v2435 = vpop.f32.mrf.mxu0
    %v2436 = vadd.f32 %v2422, %v2435
    %v2437 = vpop.f32.mrf.mxu0
    %v2438 = vadd.f32 %v2424, %v2437
    %2439 = vdwg.mxu0
    %2440 = vmatpush.bf16.msra.mxu0 0
    %2441 = vmatpush.bf16.msra.mxu0 0
    %2442 = vmatpush.bf16.msra.mxu0 0
    %2443 = vmatpush.bf16.msra.mxu0 0
    %2444 = vmatpush.bf16.msra.mxu0 0
    %2445 = vmatpush.bf16.msra.mxu0 0
    %2446 = vmatpush.bf16.msra.mxu0 0
    %2447 = vmatpush.bf16.msra.mxu0 %v1905
    %2448 = vmatmul.bf16.gmra.mxu0 %v2256
    %v2449 = vpop.f32.mrf.mxu0
    %v2450 = vadd.f32 %v2436, %v2449
    %v2451 = vpop.f32.mrf.mxu0
    %v2452 = vadd.f32 %v2438, %v2451
    %2453 = vdwg.mxu0
    %2454 = vmatpush.bf16.msra.mxu0 %v1619
    %2455 = vmatpush.bf16.msra.mxu0 %v1612
    %2456 = vmatpush.bf16.msra.mxu0 %v1605
    %2457 = vmatpush.bf16.msra.mxu0 %v1598
    %2458 = vmatpush.bf16.msra.mxu0 %v1591
    %2459 = vmatpush.bf16.msra.mxu0 %v1584
    %2460 = vmatpush.bf16.msra.mxu0 %v1577
    %2461 = vmatpush.bf16.msra.mxu0 %v1570
    %2462 = vmatmul.bf16.gmra.mxu0 %v477
    %v2463 = vpop.f32.mrf.mxu0
    %v2464 = vadd.f32 0.0, %v2463
    %v2465 = vpop.f32.mrf.mxu0
    %v2466 = vadd.f32 0.0, %v2465
    %2467 = vdwg.mxu0
    %2468 = vmatpush.bf16.msra.mxu0 %v1675
    %2469 = vmatpush.bf16.msra.mxu0 %v1668
    %2470 = vmatpush.bf16.msra.mxu0 %v1661
    %2471 = vmatpush.bf16.msra.mxu0 %v1654
    %2472 = vmatpush.bf16.msra.mxu0 %v1647
    %2473 = vmatpush.bf16.msra.mxu0 %v1640
    %2474 = vmatpush.bf16.msra.mxu0 %v1633
    %2475 = vmatpush.bf16.msra.mxu0 %v1626
    %2476 = vmatmul.bf16.gmra.mxu0 %v478
    %v2477 = vpop.f32.mrf.mxu0
    %v2478 = vadd.f32 %v2464, %v2477
    %v2479 = vpop.f32.mrf.mxu0
    %v2480 = vadd.f32 %v2466, %v2479
    %2481 = vdwg.mxu0
    %2482 = vmatpush.bf16.msra.mxu0 %v1731
    %2483 = vmatpush.bf16.msra.mxu0 %v1724
    %2484 = vmatpush.bf16.msra.mxu0 %v1717
    %2485 = vmatpush.bf16.msra.mxu0 %v1710
    %2486 = vmatpush.bf16.msra.mxu0 %v1703
    %2487 = vmatpush.bf16.msra.mxu0 %v1696
    %2488 = vmatpush.bf16.msra.mxu0 %v1689
    %2489 = vmatpush.bf16.msra.mxu0 %v1682
    %2490 = vmatmul.bf16.gmra.mxu0 %v479
    %v2491 = vpop.f32.mrf.mxu0
    %v2492 = vadd.f32 %v2478, %v2491
    %v2493 = vpop.f32.mrf.mxu0
    %v2494 = vadd.f32 %v2480, %v2493
    %2495 = vdwg.mxu0
    %2496 = vmatpush.bf16.msra.mxu0 %v1787
    %2497 = vmatpush.bf16.msra.mxu0 %v1780
    %2498 = vmatpush.bf16.msra.mxu0 %v1773
    %2499 = vmatpush.bf16.msra.mxu0 %v1766
    %2500 = vmatpush.bf16.msra.mxu0 %v1759
    %2501 = vmatpush.bf16.msra.mxu0 %v1752
    %2502 = vmatpush.bf16.msra.mxu0 %v1745
    %2503 = vmatpush.bf16.msra.mxu0 %v1738
    %2504 = vmatmul.bf16.gmra.mxu0 %v480
    %v2505 = vpop.f32.mrf.mxu0
    %v2506 = vadd.f32 %v2492, %v2505
    %v2507 = vpop.f32.mrf.mxu0
    %v2508 = vadd.f32 %v2494, %v2507
    %2509 = vdwg.mxu0
    %2510 = vmatpush.bf16.msra.mxu0 %v1843
    %2511 = vmatpush.bf16.msra.mxu0 %v1836
    %2512 = vmatpush.bf16.msra.mxu0 %v1829
    %2513 = vmatpush.bf16.msra.mxu0 %v1822
    %2514 = vmatpush.bf16.msra.mxu0 %v1815
    %2515 = vmatpush.bf16.msra.mxu0 %v1808
    %2516 = vmatpush.bf16.msra.mxu0 %v1801
    %2517 = vmatpush.bf16.msra.mxu0 %v1794
    %2518 = vmatmul.bf16.gmra.mxu0 %v481
    %v2519 = vpop.f32.mrf.mxu0
    %v2520 = vadd.f32 %v2506, %v2519
    %v2521 = vpop.f32.mrf.mxu0
    %v2522 = vadd.f32 %v2508, %v2521
    %2523 = vdwg.mxu0
    %2524 = vmatpush.bf16.msra.mxu0 %v1899
    %2525 = vmatpush.bf16.msra.mxu0 %v1892
    %2526 = vmatpush.bf16.msra.mxu0 %v1885
    %2527 = vmatpush.bf16.msra.mxu0 %v1878
    %2528 = vmatpush.bf16.msra.mxu0 %v1871
    %2529 = vmatpush.bf16.msra.mxu0 %v1864
    %2530 = vmatpush.bf16.msra.mxu0 %v1857
    %2531 = vmatpush.bf16.msra.mxu0 %v1850
    %2532 = vmatmul.bf16.gmra.mxu0 %v482
    %v2533 = vpop.f32.mrf.mxu0
    %v2534 = vadd.f32 %v2520, %v2533
    %v2535 = vpop.f32.mrf.mxu0
    %v2536 = vadd.f32 %v2522, %v2535
    %2537 = vdwg.mxu0
    %2538 = vmatpush.bf16.msra.mxu0 0
    %2539 = vmatpush.bf16.msra.mxu0 0
    %2540 = vmatpush.bf16.msra.mxu0 0
    %2541 = vmatpush.bf16.msra.mxu0 0
    %2542 = vmatpush.bf16.msra.mxu0 0
    %2543 = vmatpush.bf16.msra.mxu0 0
    %2544 = vmatpush.bf16.msra.mxu0 0
    %2545 = vmatpush.bf16.msra.mxu0 %v1906
    %2546 = vmatmul.bf16.gmra.mxu0 %v2256
    %v2547 = vpop.f32.mrf.mxu0
    %v2548 = vadd.f32 %v2534, %v2547
    %v2549 = vpop.f32.mrf.mxu0
    %v2550 = vadd.f32 %v2536, %v2549
    %2551 = vdwg.mxu0
    %2552 = vmatpush.bf16.msra.mxu0 %v1620
    %2553 = vmatpush.bf16.msra.mxu0 %v1613
    %2554 = vmatpush.bf16.msra.mxu0 %v1606
    %2555 = vmatpush.bf16.msra.mxu0 %v1599
    %2556 = vmatpush.bf16.msra.mxu0 %v1592
    %2557 = vmatpush.bf16.msra.mxu0 %v1585
    %2558 = vmatpush.bf16.msra.mxu0 %v1578
    %2559 = vmatpush.bf16.msra.mxu0 %v1571
    %2560 = vmatmul.bf16.gmra.mxu0 %v477
    %v2561 = vpop.f32.mrf.mxu0
    %v2562 = vadd.f32 0.0, %v2561
    %v2563 = vpop.f32.mrf.mxu0
    %v2564 = vadd.f32 0.0, %v2563
    %2565 = vdwg.mxu0
    %2566 = vmatpush.bf16.msra.mxu0 %v1676
    %2567 = vmatpush.bf16.msra.mxu0 %v1669
    %2568 = vmatpush.bf16.msra.mxu0 %v1662
    %2569 = vmatpush.bf16.msra.mxu0 %v1655
    %2570 = vmatpush.bf16.msra.mxu0 %v1648
    %2571 = vmatpush.bf16.msra.mxu0 %v1641
    %2572 = vmatpush.bf16.msra.mxu0 %v1634
    %2573 = vmatpush.bf16.msra.mxu0 %v1627
    %2574 = vmatmul.bf16.gmra.mxu0 %v478
    %v2575 = vpop.f32.mrf.mxu0
    %v2576 = vadd.f32 %v2562, %v2575
    %v2577 = vpop.f32.mrf.mxu0
    %v2578 = vadd.f32 %v2564, %v2577
    %2579 = vdwg.mxu0
    %2580 = vmatpush.bf16.msra.mxu0 %v1732
    %2581 = vmatpush.bf16.msra.mxu0 %v1725
    %2582 = vmatpush.bf16.msra.mxu0 %v1718
    %2583 = vmatpush.bf16.msra.mxu0 %v1711
    %2584 = vmatpush.bf16.msra.mxu0 %v1704
    %2585 = vmatpush.bf16.msra.mxu0 %v1697
    %2586 = vmatpush.bf16.msra.mxu0 %v1690
    %2587 = vmatpush.bf16.msra.mxu0 %v1683
    %2588 = vmatmul.bf16.gmra.mxu0 %v479
    %v2589 = vpop.f32.mrf.mxu0
    %v2590 = vadd.f32 %v2576, %v2589
    %v2591 = vpop.f32.mrf.mxu0
    %v2592 = vadd.f32 %v2578, %v2591
    %2593 = vdwg.mxu0
    %2594 = vmatpush.bf16.msra.mxu0 %v1788
    %2595 = vmatpush.bf16.msra.mxu0 %v1781
    %2596 = vmatpush.bf16.msra.mxu0 %v1774
    %2597 = vmatpush.bf16.msra.mxu0 %v1767
    %2598 = vmatpush.bf16.msra.mxu0 %v1760
    %2599 = vmatpush.bf16.msra.mxu0 %v1753
    %2600 = vmatpush.bf16.msra.mxu0 %v1746
    %2601 = vmatpush.bf16.msra.mxu0 %v1739
    %2602 = vmatmul.bf16.gmra.mxu0 %v480
    %v2603 = vpop.f32.mrf.mxu0
    %v2604 = vadd.f32 %v2590, %v2603
    %v2605 = vpop.f32.mrf.mxu0
    %v2606 = vadd.f32 %v2592, %v2605
    %2607 = vdwg.mxu0
    %2608 = vmatpush.bf16.msra.mxu0 %v1844
    %2609 = vmatpush.bf16.msra.mxu0 %v1837
    %2610 = vmatpush.bf16.msra.mxu0 %v1830
    %2611 = vmatpush.bf16.msra.mxu0 %v1823
    %2612 = vmatpush.bf16.msra.mxu0 %v1816
    %2613 = vmatpush.bf16.msra.mxu0 %v1809
    %2614 = vmatpush.bf16.msra.mxu0 %v1802
    %2615 = vmatpush.bf16.msra.mxu0 %v1795
    %2616 = vmatmul.bf16.gmra.mxu0 %v481
    %v2617 = vpop.f32.mrf.mxu0
    %v2618 = vadd.f32 %v2604, %v2617
    %v2619 = vpop.f32.mrf.mxu0
    %v2620 = vadd.f32 %v2606, %v2619
    %2621 = vdwg.mxu0
    %2622 = vmatpush.bf16.msra.mxu0 %v1900
    %2623 = vmatpush.bf16.msra.mxu0 %v1893
    %2624 = vmatpush.bf16.msra.mxu0 %v1886
    %2625 = vmatpush.bf16.msra.mxu0 %v1879
    %2626 = vmatpush.bf16.msra.mxu0 %v1872
    %2627 = vmatpush.bf16.msra.mxu0 %v1865
    %2628 = vmatpush.bf16.msra.mxu0 %v1858
    %2629 = vmatpush.bf16.msra.mxu0 %v1851
    %2630 = vmatmul.bf16.gmra.mxu0 %v482
    %v2631 = vpop.f32.mrf.mxu0
    %v2632 = vadd.f32 %v2618, %v2631
    %v2633 = vpop.f32.mrf.mxu0
    %v2634 = vadd.f32 %v2620, %v2633
    %2635 = vdwg.mxu0
    %2636 = vmatpush.bf16.msra.mxu0 0
    %2637 = vmatpush.bf16.msra.mxu0 0
    %2638 = vmatpush.bf16.msra.mxu0 0
    %2639 = vmatpush.bf16.msra.mxu0 0
    %2640 = vmatpush.bf16.msra.mxu0 0
    %2641 = vmatpush.bf16.msra.mxu0 0
    %2642 = vmatpush.bf16.msra.mxu0 0
    %2643 = vmatpush.bf16.msra.mxu0 %v1907
    %2644 = vmatmul.bf16.gmra.mxu0 %v2256
    %v2645 = vpop.f32.mrf.mxu0
    %v2646 = vadd.f32 %v2632, %v2645
    %v2647 = vpop.f32.mrf.mxu0
    %v2648 = vadd.f32 %v2634, %v2647
    %2649 = vdwg.mxu0
    %2650 = vmatpush.bf16.msra.mxu0 %v1621
    %2651 = vmatpush.bf16.msra.mxu0 %v1614
    %2652 = vmatpush.bf16.msra.mxu0 %v1607
    %2653 = vmatpush.bf16.msra.mxu0 %v1600
    %2654 = vmatpush.bf16.msra.mxu0 %v1593
    %2655 = vmatpush.bf16.msra.mxu0 %v1586
    %2656 = vmatpush.bf16.msra.mxu0 %v1579
    %2657 = vmatpush.bf16.msra.mxu0 %v1572
    %2658 = vmatmul.bf16.gmra.mxu0 %v477
    %v2659 = vpop.f32.mrf.mxu0
    %v2660 = vadd.f32 0.0, %v2659
    %v2661 = vpop.f32.mrf.mxu0
    %v2662 = vadd.f32 0.0, %v2661
    %2663 = vdwg.mxu0
    %2664 = vmatpush.bf16.msra.mxu0 %v1677
    %2665 = vmatpush.bf16.msra.mxu0 %v1670
    %2666 = vmatpush.bf16.msra.mxu0 %v1663
    %2667 = vmatpush.bf16.msra.mxu0 %v1656
    %2668 = vmatpush.bf16.msra.mxu0 %v1649
    %2669 = vmatpush.bf16.msra.mxu0 %v1642
    %2670 = vmatpush.bf16.msra.mxu0 %v1635
    %2671 = vmatpush.bf16.msra.mxu0 %v1628
    %2672 = vmatmul.bf16.gmra.mxu0 %v478
    %v2673 = vpop.f32.mrf.mxu0
    %v2674 = vadd.f32 %v2660, %v2673
    %v2675 = vpop.f32.mrf.mxu0
    %v2676 = vadd.f32 %v2662, %v2675
    %2677 = vdwg.mxu0
    %2678 = vmatpush.bf16.msra.mxu0 %v1733
    %2679 = vmatpush.bf16.msra.mxu0 %v1726
    %2680 = vmatpush.bf16.msra.mxu0 %v1719
    %2681 = vmatpush.bf16.msra.mxu0 %v1712
    %2682 = vmatpush.bf16.msra.mxu0 %v1705
    %2683 = vmatpush.bf16.msra.mxu0 %v1698
    %2684 = vmatpush.bf16.msra.mxu0 %v1691
    %2685 = vmatpush.bf16.msra.mxu0 %v1684
    %2686 = vmatmul.bf16.gmra.mxu0 %v479
    %v2687 = vpop.f32.mrf.mxu0
    %v2688 = vadd.f32 %v2674, %v2687
    %v2689 = vpop.f32.mrf.mxu0
    %v2690 = vadd.f32 %v2676, %v2689
    %2691 = vdwg.mxu0
    %2692 = vmatpush.bf16.msra.mxu0 %v1789
    %2693 = vmatpush.bf16.msra.mxu0 %v1782
    %2694 = vmatpush.bf16.msra.mxu0 %v1775
    %2695 = vmatpush.bf16.msra.mxu0 %v1768
    %2696 = vmatpush.bf16.msra.mxu0 %v1761
    %2697 = vmatpush.bf16.msra.mxu0 %v1754
    %2698 = vmatpush.bf16.msra.mxu0 %v1747
    %2699 = vmatpush.bf16.msra.mxu0 %v1740
    %2700 = vmatmul.bf16.gmra.mxu0 %v480
    %v2701 = vpop.f32.mrf.mxu0
    %v2702 = vadd.f32 %v2688, %v2701
    %v2703 = vpop.f32.mrf.mxu0
    %v2704 = vadd.f32 %v2690, %v2703
    %2705 = vdwg.mxu0
    %2706 = vmatpush.bf16.msra.mxu0 %v1845
    %2707 = vmatpush.bf16.msra.mxu0 %v1838
    %2708 = vmatpush.bf16.msra.mxu0 %v1831
    %2709 = vmatpush.bf16.msra.mxu0 %v1824
    %2710 = vmatpush.bf16.msra.mxu0 %v1817
    %2711 = vmatpush.bf16.msra.mxu0 %v1810
    %2712 = vmatpush.bf16.msra.mxu0 %v1803
    %2713 = vmatpush.bf16.msra.mxu0 %v1796
    %2714 = vmatmul.bf16.gmra.mxu0 %v481
    %v2715 = vpop.f32.mrf.mxu0
    %v2716 = vadd.f32 %v2702, %v2715
    %v2717 = vpop.f32.mrf.mxu0
    %v2718 = vadd.f32 %v2704, %v2717
    %2719 = vdwg.mxu0
    %2720 = vmatpush.bf16.msra.mxu0 %v1901
    %2721 = vmatpush.bf16.msra.mxu0 %v1894
    %2722 = vmatpush.bf16.msra.mxu0 %v1887
    %2723 = vmatpush.bf16.msra.mxu0 %v1880
    %2724 = vmatpush.bf16.msra.mxu0 %v1873
    %2725 = vmatpush.bf16.msra.mxu0 %v1866
    %2726 = vmatpush.bf16.msra.mxu0 %v1859
    %2727 = vmatpush.bf16.msra.mxu0 %v1852
    %2728 = vmatmul.bf16.gmra.mxu0 %v482
    %v2729 = vpop.f32.mrf.mxu0
    %v2730 = vadd.f32 %v2716, %v2729
    %v2731 = vpop.f32.mrf.mxu0
    %v2732 = vadd.f32 %v2718, %v2731
    %2733 = vdwg.mxu0
    %2734 = vmatpush.bf16.msra.mxu0 0
    %2735 = vmatpush.bf16.msra.mxu0 0
    %2736 = vmatpush.bf16.msra.mxu0 0
    %2737 = vmatpush.bf16.msra.mxu0 0
    %2738 = vmatpush.bf16.msra.mxu0 0
    %2739 = vmatpush.bf16.msra.mxu0 0
    %2740 = vmatpush.bf16.msra.mxu0 0
    %2741 = vmatpush.bf16.msra.mxu0 %v1908
    %2742 = vmatmul.bf16.gmra.mxu0 %v2256
    %v2743 = vpop.f32.mrf.mxu0
    %v2744 = vadd.f32 %v2730, %v2743
    %v2745 = vpop.f32.mrf.mxu0
    %v2746 = vadd.f32 %v2732, %v2745
    %2747 = vdwg.mxu0
    %2748 = vmatpush.bf16.msra.mxu0 %v1622
    %2749 = vmatpush.bf16.msra.mxu0 %v1615
    %2750 = vmatpush.bf16.msra.mxu0 %v1608
    %2751 = vmatpush.bf16.msra.mxu0 %v1601
    %2752 = vmatpush.bf16.msra.mxu0 %v1594
    %2753 = vmatpush.bf16.msra.mxu0 %v1587
    %2754 = vmatpush.bf16.msra.mxu0 %v1580
    %2755 = vmatpush.bf16.msra.mxu0 %v1573
    %2756 = vmatmul.bf16.gmra.mxu0 %v477
    %v2757 = vpop.f32.mrf.mxu0
    %v2758 = vadd.f32 0.0, %v2757
    %v2759 = vpop.f32.mrf.mxu0
    %v2760 = vadd.f32 0.0, %v2759
    %2761 = vdwg.mxu0
    %2762 = vmatpush.bf16.msra.mxu0 %v1678
    %2763 = vmatpush.bf16.msra.mxu0 %v1671
    %2764 = vmatpush.bf16.msra.mxu0 %v1664
    %2765 = vmatpush.bf16.msra.mxu0 %v1657
    %2766 = vmatpush.bf16.msra.mxu0 %v1650
    %2767 = vmatpush.bf16.msra.mxu0 %v1643
    %2768 = vmatpush.bf16.msra.mxu0 %v1636
    %2769 = vmatpush.bf16.msra.mxu0 %v1629
    %2770 = vmatmul.bf16.gmra.mxu0 %v478
    %v2771 = vpop.f32.mrf.mxu0
    %v2772 = vadd.f32 %v2758, %v2771
    %v2773 = vpop.f32.mrf.mxu0
    %v2774 = vadd.f32 %v2760, %v2773
    %2775 = vdwg.mxu0
    %2776 = vmatpush.bf16.msra.mxu0 %v1734
    %2777 = vmatpush.bf16.msra.mxu0 %v1727
    %2778 = vmatpush.bf16.msra.mxu0 %v1720
    %2779 = vmatpush.bf16.msra.mxu0 %v1713
    %2780 = vmatpush.bf16.msra.mxu0 %v1706
    %2781 = vmatpush.bf16.msra.mxu0 %v1699
    %2782 = vmatpush.bf16.msra.mxu0 %v1692
    %2783 = vmatpush.bf16.msra.mxu0 %v1685
    %2784 = vmatmul.bf16.gmra.mxu0 %v479
    %v2785 = vpop.f32.mrf.mxu0
    %v2786 = vadd.f32 %v2772, %v2785
    %v2787 = vpop.f32.mrf.mxu0
    %v2788 = vadd.f32 %v2774, %v2787
    %2789 = vdwg.mxu0
    %2790 = vmatpush.bf16.msra.mxu0 %v1790
    %2791 = vmatpush.bf16.msra.mxu0 %v1783
    %2792 = vmatpush.bf16.msra.mxu0 %v1776
    %2793 = vmatpush.bf16.msra.mxu0 %v1769
    %2794 = vmatpush.bf16.msra.mxu0 %v1762
    %2795 = vmatpush.bf16.msra.mxu0 %v1755
    %2796 = vmatpush.bf16.msra.mxu0 %v1748
    %2797 = vmatpush.bf16.msra.mxu0 %v1741
    %2798 = vmatmul.bf16.gmra.mxu0 %v480
    %v2799 = vpop.f32.mrf.mxu0
    %v2800 = vadd.f32 %v2786, %v2799
    %v2801 = vpop.f32.mrf.mxu0
    %v2802 = vadd.f32 %v2788, %v2801
    %2803 = vdwg.mxu0
    %2804 = vmatpush.bf16.msra.mxu0 %v1846
    %2805 = vmatpush.bf16.msra.mxu0 %v1839
    %2806 = vmatpush.bf16.msra.mxu0 %v1832
    %2807 = vmatpush.bf16.msra.mxu0 %v1825
    %2808 = vmatpush.bf16.msra.mxu0 %v1818
    %2809 = vmatpush.bf16.msra.mxu0 %v1811
    %2810 = vmatpush.bf16.msra.mxu0 %v1804
    %2811 = vmatpush.bf16.msra.mxu0 %v1797
    %2812 = vmatmul.bf16.gmra.mxu0 %v481
    %v2813 = vpop.f32.mrf.mxu0
    %v2814 = vadd.f32 %v2800, %v2813
    %v2815 = vpop.f32.mrf.mxu0
    %v2816 = vadd.f32 %v2802, %v2815
    %2817 = vdwg.mxu0
    %2818 = vmatpush.bf16.msra.mxu0 %v1902
    %2819 = vmatpush.bf16.msra.mxu0 %v1895
    %2820 = vmatpush.bf16.msra.mxu0 %v1888
    %2821 = vmatpush.bf16.msra.mxu0 %v1881
    %2822 = vmatpush.bf16.msra.mxu0 %v1874
    %2823 = vmatpush.bf16.msra.mxu0 %v1867
    %2824 = vmatpush.bf16.msra.mxu0 %v1860
    %2825 = vmatpush.bf16.msra.mxu0 %v1853
    %2826 = vmatmul.bf16.gmra.mxu0 %v482
    %v2827 = vpop.f32.mrf.mxu0
    %v2828 = vadd.f32 %v2814, %v2827
    %v2829 = vpop.f32.mrf.mxu0
    %v2830 = vadd.f32 %v2816, %v2829
    %2831 = vdwg.mxu0
    %2832 = vmatpush.bf16.msra.mxu0 0
    %2833 = vmatpush.bf16.msra.mxu0 0
    %2834 = vmatpush.bf16.msra.mxu0 0
    %2835 = vmatpush.bf16.msra.mxu0 0
    %2836 = vmatpush.bf16.msra.mxu0 0
    %2837 = vmatpush.bf16.msra.mxu0 0
    %2838 = vmatpush.bf16.msra.mxu0 0
    %2839 = vmatpush.bf16.msra.mxu0 %v1909
    %2840 = vmatmul.bf16.gmra.mxu0 %v2256
    %v2841 = vpop.f32.mrf.mxu0
    %v2842 = vadd.f32 %v2828, %v2841
    %v2843 = vpop.f32.mrf.mxu0
    %v2844 = vadd.f32 %v2830, %v2843
    %2845 = vdwg.mxu0
    %2846 = vmatpush.bf16.msra.mxu0 %v1623
    %2847 = vmatpush.bf16.msra.mxu0 %v1616
    %2848 = vmatpush.bf16.msra.mxu0 %v1609
    %2849 = vmatpush.bf16.msra.mxu0 %v1602
    %2850 = vmatpush.bf16.msra.mxu0 %v1595
    %2851 = vmatpush.bf16.msra.mxu0 %v1588
    %2852 = vmatpush.bf16.msra.mxu0 %v1581
    %2853 = vmatpush.bf16.msra.mxu0 %v1574
    %2854 = vmatmul.bf16.gmra.mxu0 %v477
    %v2855 = vpop.f32.mrf.mxu0
    %v2856 = vadd.f32 0.0, %v2855
    %v2857 = vpop.f32.mrf.mxu0
    %v2858 = vadd.f32 0.0, %v2857
    %2859 = vdwg.mxu0
    %2860 = vmatpush.bf16.msra.mxu0 %v1679
    %2861 = vmatpush.bf16.msra.mxu0 %v1672
    %2862 = vmatpush.bf16.msra.mxu0 %v1665
    %2863 = vmatpush.bf16.msra.mxu0 %v1658
    %2864 = vmatpush.bf16.msra.mxu0 %v1651
    %2865 = vmatpush.bf16.msra.mxu0 %v1644
    %2866 = vmatpush.bf16.msra.mxu0 %v1637
    %2867 = vmatpush.bf16.msra.mxu0 %v1630
    %2868 = vmatmul.bf16.gmra.mxu0 %v478
    %v2869 = vpop.f32.mrf.mxu0
    %v2870 = vadd.f32 %v2856, %v2869
    %v2871 = vpop.f32.mrf.mxu0
    %v2872 = vadd.f32 %v2858, %v2871
    %2873 = vdwg.mxu0
    %2874 = vmatpush.bf16.msra.mxu0 %v1735
    %2875 = vmatpush.bf16.msra.mxu0 %v1728
    %2876 = vmatpush.bf16.msra.mxu0 %v1721
    %2877 = vmatpush.bf16.msra.mxu0 %v1714
    %2878 = vmatpush.bf16.msra.mxu0 %v1707
    %2879 = vmatpush.bf16.msra.mxu0 %v1700
    %2880 = vmatpush.bf16.msra.mxu0 %v1693
    %2881 = vmatpush.bf16.msra.mxu0 %v1686
    %2882 = vmatmul.bf16.gmra.mxu0 %v479
    %v2883 = vpop.f32.mrf.mxu0
    %v2884 = vadd.f32 %v2870, %v2883
    %v2885 = vpop.f32.mrf.mxu0
    %v2886 = vadd.f32 %v2872, %v2885
    %2887 = vdwg.mxu0
    %2888 = vmatpush.bf16.msra.mxu0 %v1791
    %2889 = vmatpush.bf16.msra.mxu0 %v1784
    %2890 = vmatpush.bf16.msra.mxu0 %v1777
    %2891 = vmatpush.bf16.msra.mxu0 %v1770
    %2892 = vmatpush.bf16.msra.mxu0 %v1763
    %2893 = vmatpush.bf16.msra.mxu0 %v1756
    %2894 = vmatpush.bf16.msra.mxu0 %v1749
    %2895 = vmatpush.bf16.msra.mxu0 %v1742
    %2896 = vmatmul.bf16.gmra.mxu0 %v480
    %v2897 = vpop.f32.mrf.mxu0
    %v2898 = vadd.f32 %v2884, %v2897
    %v2899 = vpop.f32.mrf.mxu0
    %v2900 = vadd.f32 %v2886, %v2899
    %2901 = vdwg.mxu0
    %2902 = vmatpush.bf16.msra.mxu0 %v1847
    %2903 = vmatpush.bf16.msra.mxu0 %v1840
    %2904 = vmatpush.bf16.msra.mxu0 %v1833
    %2905 = vmatpush.bf16.msra.mxu0 %v1826
    %2906 = vmatpush.bf16.msra.mxu0 %v1819
    %2907 = vmatpush.bf16.msra.mxu0 %v1812
    %2908 = vmatpush.bf16.msra.mxu0 %v1805
    %2909 = vmatpush.bf16.msra.mxu0 %v1798
    %2910 = vmatmul.bf16.gmra.mxu0 %v481
    %v2911 = vpop.f32.mrf.mxu0
    %v2912 = vadd.f32 %v2898, %v2911
    %v2913 = vpop.f32.mrf.mxu0
    %v2914 = vadd.f32 %v2900, %v2913
    %2915 = vdwg.mxu0
    %2916 = vmatpush.bf16.msra.mxu0 %v1903
    %2917 = vmatpush.bf16.msra.mxu0 %v1896
    %2918 = vmatpush.bf16.msra.mxu0 %v1889
    %2919 = vmatpush.bf16.msra.mxu0 %v1882
    %2920 = vmatpush.bf16.msra.mxu0 %v1875
    %2921 = vmatpush.bf16.msra.mxu0 %v1868
    %2922 = vmatpush.bf16.msra.mxu0 %v1861
    %2923 = vmatpush.bf16.msra.mxu0 %v1854
    %2924 = vmatmul.bf16.gmra.mxu0 %v482
    %v2925 = vpop.f32.mrf.mxu0
    %v2926 = vadd.f32 %v2912, %v2925
    %v2927 = vpop.f32.mrf.mxu0
    %v2928 = vadd.f32 %v2914, %v2927
    %2929 = vdwg.mxu0
    %2930 = vmatpush.bf16.msra.mxu0 0
    %2931 = vmatpush.bf16.msra.mxu0 0
    %2932 = vmatpush.bf16.msra.mxu0 0
    %2933 = vmatpush.bf16.msra.mxu0 0
    %2934 = vmatpush.bf16.msra.mxu0 0
    %2935 = vmatpush.bf16.msra.mxu0 0
    %2936 = vmatpush.bf16.msra.mxu0 0
    %2937 = vmatpush.bf16.msra.mxu0 %v1910
    %2938 = vmatmul.bf16.gmra.mxu0 %v2256
    %v2939 = vpop.f32.mrf.mxu0
    %v2940 = vadd.f32 %v2926, %v2939
    %v2941 = vpop.f32.mrf.mxu0
    %v2942 = vadd.f32 %v2928, %v2941
    %2943 = vdwg.mxu0
    %s2944 = scalar_lea.vmem [#allocation2], 2744
    %v2945 = vld [vmem:[%s2944] sm:$0xff]
    %v2946 = vld [vmem:[%s2944 + $0x8] sm:$0xff]
    %v2947 = vld [vmem:[%s2944 + $0x10] sm:$0xff]
    %v2948 = vld [vmem:[%s2944 + $0x18] sm:$0xf]
    %v2949 = vld [vmem:[%s2944 + $0x1c] sm:$0xff]
    %v2950 = vld [vmem:[%s2944 + $0x24] sm:$0xff]
    %v2951 = vld [vmem:[%s2944 + $0x2c] sm:$0xff]
    %v2952 = vld [vmem:[%s2944 + $0x34] sm:$0xf]
    %v2953 = vld [vmem:[%s2944 + $0x38] sm:$0xff]
    %v2954 = vld [vmem:[%s2944 + $0x40] sm:$0xff]
    %v2955 = vld [vmem:[%s2944 + $0x48] sm:$0xff]
    %v2956 = vld [vmem:[%s2944 + $0x50] sm:$0xf]
    %v2957 = vld [vmem:[%s2944 + $0x54] sm:$0xff]
    %v2958 = vld [vmem:[%s2944 + $0x5c] sm:$0xff]
    %v2959 = vld [vmem:[%s2944 + $0x64] sm:$0xff]
    %v2960 = vld [vmem:[%s2944 + $0x6c] sm:$0xf]
    %v2961 = vld [vmem:[%s2944 + $0x70] sm:$0xff]
    %v2962 = vld [vmem:[%s2944 + $0x78] sm:$0xff]
    %v2963 = vld [vmem:[%s2944 + $0x80] sm:$0xff]
    %v2964 = vld [vmem:[%s2944 + $0x88] sm:$0xf]
    %v2965 = vld [vmem:[%s2944 + $0x8c] sm:$0xff]
    %v2966 = vld [vmem:[%s2944 + $0x94] sm:$0xff]
    %v2967 = vld [vmem:[%s2944 + $0x9c] sm:$0xff]
    %v2968 = vld [vmem:[%s2944 + $0xa4] sm:$0xf]
    %v2969 = vld [vmem:[%s2944 + $0xa8] sm:$0xff]
    %v2970 = vld [vmem:[%s2944 + $0xb0] sm:$0xff]
    %v2971 = vld [vmem:[%s2944 + $0xb8] sm:$0xff]
    %v2972 = vld [vmem:[%s2944 + $0xc0] sm:$0xf]
    %v2973 = vld [vmem:[%s2944 + $0xc4] sm:$0xff]
    %v2974 = vld [vmem:[%s2944 + $0xcc] sm:$0xff]
    %v2975 = vld [vmem:[%s2944 + $0xd4] sm:$0xff]
    %v2976 = vld [vmem:[%s2944 + $0xdc] sm:$0xf]
    %v2977 = vld [vmem:[%s2944 + $0xe0] sm:$0xff]
    %v2978 = vld [vmem:[%s2944 + $0xe8] sm:$0xff]
    %v2979 = vld [vmem:[%s2944 + $0xf0] sm:$0xff]
    %v2980 = vld [vmem:[%s2944 + $0xf8] sm:$0xf]
    %v2981 = vld [vmem:[%s2944 + $0xfc] sm:$0xff]
    %v2982 = vld [vmem:[%s2944 + $0x104] sm:$0xff]
    %v2983 = vld [vmem:[%s2944 + $0x10c] sm:$0xff]
    %v2984 = vld [vmem:[%s2944 + $0x114] sm:$0xf]
    %v2985 = vld [vmem:[%s2944 + $0x118] sm:$0xff]
    %v2986 = vld [vmem:[%s2944 + $0x120] sm:$0xff]
    %v2987 = vld [vmem:[%s2944 + $0x128] sm:$0xff]
    %v2988 = vld [vmem:[%s2944 + $0x130] sm:$0xf]
    %v2989 = vld [vmem:[%s2944 + $0x134] sm:$0xff]
    %v2990 = vld [vmem:[%s2944 + $0x13c] sm:$0xff]
    %v2991 = vld [vmem:[%s2944 + $0x144] sm:$0xff]
    %v2992 = vld [vmem:[%s2944 + $0x14c] sm:$0xf]
    %v2993 = vld [vmem:[%s2944 + $0x150] sm:$0xff]
    %v2994 = vld [vmem:[%s2944 + $0x158] sm:$0xff]
    %v2995 = vld [vmem:[%s2944 + $0x160] sm:$0xff]
    %v2996 = vld [vmem:[%s2944 + $0x168] sm:$0xf]
    %v2997 = vld [vmem:[%s2944 + $0x16c] sm:$0xff]
    %v2998 = vld [vmem:[%s2944 + $0x174] sm:$0xff]
    %v2999 = vld [vmem:[%s2944 + $0x17c] sm:$0xff]
    %v3000 = vld [vmem:[%s2944 + $0x184] sm:$0xf]
    %v3001 = vld [vmem:[%s2944 + $0x188] sm:$0xff]
    %v3002 = vld [vmem:[%s2944 + $0x190] sm:$0xff]
    %v3003 = vld [vmem:[%s2944 + $0x198] sm:$0xff]
    %v3004 = vld [vmem:[%s2944 + $0x1a0] sm:$0xf]
    %v3005 = vld [vmem:[%s2944 + $0x1a4] sm:$0xff]
    %v3006 = vld [vmem:[%s2944 + $0x1ac] sm:$0xff]
    %v3007 = vld [vmem:[%s2944 + $0x1b4] sm:$0xff]
    %v3008 = vld [vmem:[%s2944 + $0x1bc] sm:$0xf]
    %v3009 = vld [vmem:[%s2944 + $0x1c0] sm:$0xff]
    %v3010 = vld [vmem:[%s2944 + $0x1c8] sm:$0xff]
    %v3011 = vld [vmem:[%s2944 + $0x1d0] sm:$0xff]
    %v3012 = vld [vmem:[%s2944 + $0x1d8] sm:$0xf]
    %v3013 = vld [vmem:[%s2944 + $0x1dc] sm:$0xff]
    %v3014 = vld [vmem:[%s2944 + $0x1e4] sm:$0xff]
    %v3015 = vld [vmem:[%s2944 + $0x1ec] sm:$0xff]
    %v3016 = vld [vmem:[%s2944 + $0x1f4] sm:$0xf]
    %v3017 = vld [vmem:[%s2944 + $0x1f8] sm:$0xff]
    %v3018 = vld [vmem:[%s2944 + $0x200] sm:$0xff]
    %v3019 = vld [vmem:[%s2944 + $0x208] sm:$0xff]
    %v3020 = vld [vmem:[%s2944 + $0x210] sm:$0xf]
    %v3021 = vld [vmem:[%s2944 + $0x214] sm:$0xff]
    %v3022 = vld [vmem:[%s2944 + $0x21c] sm:$0xff]
    %v3023 = vld [vmem:[%s2944 + $0x224] sm:$0xff]
    %v3024 = vld [vmem:[%s2944 + $0x22c] sm:$0xf]
    %v3025 = vld [vmem:[%s2944 + $0x230] sm:$0xff]
    %v3026 = vld [vmem:[%s2944 + $0x238] sm:$0xff]
    %v3027 = vld [vmem:[%s2944 + $0x240] sm:$0xff]
    %v3028 = vld [vmem:[%s2944 + $0x248] sm:$0xf]
    %v3029 = vld [vmem:[%s2944 + $0x24c] sm:$0xff]
    %v3030 = vld [vmem:[%s2944 + $0x254] sm:$0xff]
    %v3031 = vld [vmem:[%s2944 + $0x25c] sm:$0xff]
    %v3032 = vld [vmem:[%s2944 + $0x264] sm:$0xf]
    %v3033 = vld [vmem:[%s2944 + $0x268] sm:$0xff]
    %v3034 = vld [vmem:[%s2944 + $0x270] sm:$0xff]
    %v3035 = vld [vmem:[%s2944 + $0x278] sm:$0xff]
    %v3036 = vld [vmem:[%s2944 + $0x280] sm:$0xf]
    %v3037 = vld [vmem:[%s2944 + $0x284] sm:$0xff]
    %v3038 = vld [vmem:[%s2944 + $0x28c] sm:$0xff]
    %v3039 = vld [vmem:[%s2944 + $0x294] sm:$0xff]
    %v3040 = vld [vmem:[%s2944 + $0x29c] sm:$0xf]
    %v3041 = vld [vmem:[%s2944 + $0x2a0] sm:$0xff]
    %v3042 = vld [vmem:[%s2944 + $0x2a8] sm:$0xff]
    %v3043 = vld [vmem:[%s2944 + $0x2b0] sm:$0xff]
    %v3044 = vld [vmem:[%s2944 + $0x2b8] sm:$0xf]
    %v3045 = vld [vmem:[%s2944 + $0x2bc] sm:$0xff]
    %v3046 = vld [vmem:[%s2944 + $0x2c4] sm:$0xff]
    %v3047 = vld [vmem:[%s2944 + $0x2cc] sm:$0xff]
    %v3048 = vld [vmem:[%s2944 + $0x2d4] sm:$0xf]
    %v3049 = vld [vmem:[%s2944 + $0x2d8] sm:$0xff]
    %v3050 = vld [vmem:[%s2944 + $0x2e0] sm:$0xff]
    %v3051 = vld [vmem:[%s2944 + $0x2e8] sm:$0xff]
    %v3052 = vld [vmem:[%s2944 + $0x2f0] sm:$0xf]
    %v3053 = vld [vmem:[%s2944 + $0x2f4] sm:$0xff]
    %v3054 = vld [vmem:[%s2944 + $0x2fc] sm:$0xff]
    %v3055 = vld [vmem:[%s2944 + $0x304] sm:$0xff]
    %v3056 = vld [vmem:[%s2944 + $0x30c] sm:$0xf]
    %v3057 = vld [vmem:[%s2944 + $0x310] sm:$0xff]
    %v3058 = vld [vmem:[%s2944 + $0x318] sm:$0xff]
    %v3059 = vld [vmem:[%s2944 + $0x320] sm:$0xff]
    %v3060 = vld [vmem:[%s2944 + $0x328] sm:$0xf]
    %v3061 = vld [vmem:[%s2944 + $0x32c] sm:$0xff]
    %v3062 = vld [vmem:[%s2944 + $0x334] sm:$0xff]
    %v3063 = vld [vmem:[%s2944 + $0x33c] sm:$0xff]
    %v3064 = vld [vmem:[%s2944 + $0x344] sm:$0xf]
    %v3065 = vld [vmem:[%s2944 + $0x348] sm:$0xff]
    %v3066 = vld [vmem:[%s2944 + $0x350] sm:$0xff]
    %v3067 = vld [vmem:[%s2944 + $0x358] sm:$0xff]
    %v3068 = vld [vmem:[%s2944 + $0x360] sm:$0xf]
    %v3069 = vld [vmem:[%s2944 + $0x364] sm:$0xff]
    %v3070 = vld [vmem:[%s2944 + $0x36c] sm:$0xff]
    %v3071 = vld [vmem:[%s2944 + $0x374] sm:$0xff]
    %v3072 = vld [vmem:[%s2944 + $0x37c] sm:$0xf]
    %v3073 = vld [vmem:[%s2944 + $0x380] sm:$0xff]
    %v3074 = vld [vmem:[%s2944 + $0x388] sm:$0xff]
    %v3075 = vld [vmem:[%s2944 + $0x390] sm:$0xff]
    %v3076 = vld [vmem:[%s2944 + $0x398] sm:$0xf]
    %v3077 = vld [vmem:[%s2944 + $0x39c] sm:$0xff]
    %v3078 = vld [vmem:[%s2944 + $0x3a4] sm:$0xff]
    %v3079 = vld [vmem:[%s2944 + $0x3ac] sm:$0xff]
    %v3080 = vld [vmem:[%s2944 + $0x3b4] sm:$0xf]
    %v3081 = vld [vmem:[%s2944 + $0x3b8] sm:$0xff]
    %v3082 = vld [vmem:[%s2944 + $0x3c0] sm:$0xff]
    %v3083 = vld [vmem:[%s2944 + $0x3c8] sm:$0xff]
    %v3084 = vld [vmem:[%s2944 + $0x3d0] sm:$0xf]
    %v3085 = vld [vmem:[%s2944 + $0x3d4] sm:$0xff]
    %v3086 = vld [vmem:[%s2944 + $0x3dc] sm:$0xff]
    %v3087 = vld [vmem:[%s2944 + $0x3e4] sm:$0xff]
    %v3088 = vld [vmem:[%s2944 + $0x3ec] sm:$0xf]
    %v3089 = vld [vmem:[%s2944 + $0x3f0] sm:$0xff]
    %v3090 = vld [vmem:[%s2944 + $0x3f8] sm:$0xff]
    %v3091 = vld [vmem:[%s2944 + $0x400] sm:$0xff]
    %v3092 = vld [vmem:[%s2944 + $0x408] sm:$0xf]
    %v3093 = vld [vmem:[%s2944 + $0x40c] sm:$0xff]
    %v3094 = vld [vmem:[%s2944 + $0x414] sm:$0xff]
    %v3095 = vld [vmem:[%s2944 + $0x41c] sm:$0xff]
    %v3096 = vld [vmem:[%s2944 + $0x424] sm:$0xf]
    %v3097 = vld [vmem:[%s2944 + $0x428] sm:$0xff]
    %v3098 = vld [vmem:[%s2944 + $0x430] sm:$0xff]
    %v3099 = vld [vmem:[%s2944 + $0x438] sm:$0xff]
    %v3100 = vld [vmem:[%s2944 + $0x440] sm:$0xf]
    %v3101 = vld [vmem:[%s2944 + $0x444] sm:$0xff]
    %v3102 = vld [vmem:[%s2944 + $0x44c] sm:$0xff]
    %v3103 = vld [vmem:[%s2944 + $0x454] sm:$0xff]
    %v3104 = vld [vmem:[%s2944 + $0x45c] sm:$0xf]
    %v3105 = vld [vmem:[%s2944 + $0x460] sm:$0xff]
    %v3106 = vld [vmem:[%s2944 + $0x468] sm:$0xff]
    %v3107 = vld [vmem:[%s2944 + $0x470] sm:$0xff]
    %v3108 = vld [vmem:[%s2944 + $0x478] sm:$0xf]
    %v3109 = vld [vmem:[%s2944 + $0x47c] sm:$0xff]
    %v3110 = vld [vmem:[%s2944 + $0x484] sm:$0xff]
    %v3111 = vld [vmem:[%s2944 + $0x48c] sm:$0xff]
    %v3112 = vld [vmem:[%s2944 + $0x494] sm:$0xf]
    %v3113 = vld [vmem:[%s2944 + $0x498] sm:$0xff]
    %v3114 = vld [vmem:[%s2944 + $0x4a0] sm:$0xff]
    %v3115 = vld [vmem:[%s2944 + $0x4a8] sm:$0xff]
    %v3116 = vld [vmem:[%s2944 + $0x4b0] sm:$0xf]
    %v3117 = vld [vmem:[%s2944 + $0x4b4] sm:$0xff]
    %v3118 = vld [vmem:[%s2944 + $0x4bc] sm:$0xff]
    %v3119 = vld [vmem:[%s2944 + $0x4c4] sm:$0xff]
    %v3120 = vld [vmem:[%s2944 + $0x4cc] sm:$0xf]
    %v3121 = vld [vmem:[%s2944 + $0x4d0] sm:$0xff]
    %v3122 = vld [vmem:[%s2944 + $0x4d8] sm:$0xff]
    %v3123 = vld [vmem:[%s2944 + $0x4e0] sm:$0xff]
    %v3124 = vld [vmem:[%s2944 + $0x4e8] sm:$0xf]
    %v3125 = vld [vmem:[%s2944 + $0x4ec] sm:$0xff]
    %v3126 = vld [vmem:[%s2944 + $0x4f4] sm:$0xff]
    %v3127 = vld [vmem:[%s2944 + $0x4fc] sm:$0xff]
    %v3128 = vld [vmem:[%s2944 + $0x504] sm:$0xf]
    %v3129 = vld [vmem:[%s2944 + $0x508] sm:$0xff]
    %v3130 = vld [vmem:[%s2944 + $0x510] sm:$0xff]
    %v3131 = vld [vmem:[%s2944 + $0x518] sm:$0xff]
    %v3132 = vld [vmem:[%s2944 + $0x520] sm:$0xf]
    %v3133 = vld [vmem:[%s2944 + $0x524] sm:$0xff]
    %v3134 = vld [vmem:[%s2944 + $0x52c] sm:$0xff]
    %v3135 = vld [vmem:[%s2944 + $0x534] sm:$0xff]
    %v3136 = vld [vmem:[%s2944 + $0x53c] sm:$0xf]
    %v3137 = vld [vmem:[%s2944 + $0x540] sm:$0xff]
    %v3138 = vld [vmem:[%s2944 + $0x548] sm:$0xff]
    %v3139 = vld [vmem:[%s2944 + $0x550] sm:$0xff]
    %v3140 = vld [vmem:[%s2944 + $0x558] sm:$0xf]
    %v3141 = vld [vmem:[%s2944 + $0x55c] sm:$0xff]
    %v3142 = vld [vmem:[%s2944 + $0x564] sm:$0xff]
    %v3143 = vld [vmem:[%s2944 + $0x56c] sm:$0xff]
    %v3144 = vld [vmem:[%s2944 + $0x574] sm:$0xf]
    %v3145 = vld [vmem:[%s2944 + $0x578] sm:$0xff]
    %v3146 = vld [vmem:[%s2944 + $0x580] sm:$0xff]
    %v3147 = vld [vmem:[%s2944 + $0x588] sm:$0xff]
    %v3148 = vld [vmem:[%s2944 + $0x590] sm:$0xf]
    %v3149 = vld [vmem:[%s2944 + $0x594] sm:$0xff]
    %v3150 = vld [vmem:[%s2944 + $0x59c] sm:$0xff]
    %v3151 = vld [vmem:[%s2944 + $0x5a4] sm:$0xff]
    %v3152 = vld [vmem:[%s2944 + $0x5ac] sm:$0xf]
    %v3153 = vld [vmem:[%s2944 + $0x5b0] sm:$0xff]
    %v3154 = vld [vmem:[%s2944 + $0x5b8] sm:$0xff]
    %v3155 = vld [vmem:[%s2944 + $0x5c0] sm:$0xff]
    %v3156 = vld [vmem:[%s2944 + $0x5c8] sm:$0xf]
    %v3157 = vld [vmem:[%s2944 + $0x5cc] sm:$0xff]
    %v3158 = vld [vmem:[%s2944 + $0x5d4] sm:$0xff]
    %v3159 = vld [vmem:[%s2944 + $0x5dc] sm:$0xff]
    %v3160 = vld [vmem:[%s2944 + $0x5e4] sm:$0xf]
    %v3161 = vld [vmem:[%s2944 + $0x5e8] sm:$0xff]
    %v3162 = vld [vmem:[%s2944 + $0x5f0] sm:$0xff]
    %v3163 = vld [vmem:[%s2944 + $0x5f8] sm:$0xff]
    %v3164 = vld [vmem:[%s2944 + $0x600] sm:$0xf]
    %v3165 = vld [vmem:[%s2944 + $0x604] sm:$0xff]
    %v3166 = vld [vmem:[%s2944 + $0x60c] sm:$0xff]
    %v3167 = vld [vmem:[%s2944 + $0x614] sm:$0xff]
    %v3168 = vld [vmem:[%s2944 + $0x61c] sm:$0xf]
    %v3169 = vld [vmem:[%s2944 + $0x620] sm:$0xff]
    %v3170 = vld [vmem:[%s2944 + $0x628] sm:$0xff]
    %v3171 = vld [vmem:[%s2944 + $0x630] sm:$0xff]
    %v3172 = vld [vmem:[%s2944 + $0x638] sm:$0xf]
    %v3173 = vld [vmem:[%s2944 + $0x63c] sm:$0xff]
    %v3174 = vld [vmem:[%s2944 + $0x644] sm:$0xff]
    %v3175 = vld [vmem:[%s2944 + $0x64c] sm:$0xff]
    %v3176 = vld [vmem:[%s2944 + $0x654] sm:$0xf]
    %v3177 = vld [vmem:[%s2944 + $0x658] sm:$0xff]
    %v3178 = vld [vmem:[%s2944 + $0x660] sm:$0xff]
    %v3179 = vld [vmem:[%s2944 + $0x668] sm:$0xff]
    %v3180 = vld [vmem:[%s2944 + $0x670] sm:$0xf]
    %v3181 = vld [vmem:[%s2944 + $0x674] sm:$0xff]
    %v3182 = vld [vmem:[%s2944 + $0x67c] sm:$0xff]
    %v3183 = vld [vmem:[%s2944 + $0x684] sm:$0xff]
    %v3184 = vld [vmem:[%s2944 + $0x68c] sm:$0xf]
    %v3185 = vld [vmem:[%s2944 + $0x690] sm:$0xff]
    %v3186 = vld [vmem:[%s2944 + $0x698] sm:$0xff]
    %v3187 = vld [vmem:[%s2944 + $0x6a0] sm:$0xff]
    %v3188 = vld [vmem:[%s2944 + $0x6a8] sm:$0xf]
    %v3189 = vld [vmem:[%s2944 + $0x6ac] sm:$0xff]
    %v3190 = vld [vmem:[%s2944 + $0x6b4] sm:$0xff]
    %v3191 = vld [vmem:[%s2944 + $0x6bc] sm:$0xff]
    %v3192 = vld [vmem:[%s2944 + $0x6c4] sm:$0xf]
    %v3193 = vld [vmem:[%s2944 + $0x6c8] sm:$0xff]
    %v3194 = vld [vmem:[%s2944 + $0x6d0] sm:$0xff]
    %v3195 = vld [vmem:[%s2944 + $0x6d8] sm:$0xff]
    %v3196 = vld [vmem:[%s2944 + $0x6e0] sm:$0xf]
    %v3197 = vld [vmem:[%s2944 + $0x6e4] sm:$0xff]
    %v3198 = vld [vmem:[%s2944 + $0x6ec] sm:$0xff]
    %v3199 = vld [vmem:[%s2944 + $0x6f4] sm:$0xff]
    %v3200 = vld [vmem:[%s2944 + $0x6fc] sm:$0xf]
    %v3201 = vld [vmem:[%s2944 + $0x700] sm:$0xff]
    %v3202 = vld [vmem:[%s2944 + $0x708] sm:$0xff]
    %v3203 = vld [vmem:[%s2944 + $0x710] sm:$0xff]
    %v3204 = vld [vmem:[%s2944 + $0x718] sm:$0xf]
    %v3205 = vld [vmem:[%s2944 + $0x71c] sm:$0xff]
    %v3206 = vld [vmem:[%s2944 + $0x724] sm:$0xff]
    %v3207 = vld [vmem:[%s2944 + $0x72c] sm:$0xff]
    %v3208 = vld [vmem:[%s2944 + $0x734] sm:$0xf]
    %v3209 = vld [vmem:[%s2944 + $0x738] sm:$0xff]
    %v3210 = vld [vmem:[%s2944 + $0x740] sm:$0xff]
    %v3211 = vld [vmem:[%s2944 + $0x748] sm:$0xff]
    %v3212 = vld [vmem:[%s2944 + $0x750] sm:$0xf]
    %v3213 = vld [vmem:[%s2944 + $0x754] sm:$0xff]
    %v3214 = vld [vmem:[%s2944 + $0x75c] sm:$0xff]
    %v3215 = vld [vmem:[%s2944 + $0x764] sm:$0xff]
    %v3216 = vld [vmem:[%s2944 + $0x76c] sm:$0xf]
    %v3217 = vld [vmem:[%s2944 + $0x770] sm:$0xff]
    %v3218 = vld [vmem:[%s2944 + $0x778] sm:$0xff]
    %v3219 = vld [vmem:[%s2944 + $0x780] sm:$0xff]
    %v3220 = vld [vmem:[%s2944 + $0x788] sm:$0xf]
    %v3221 = vld [vmem:[%s2944 + $0x78c] sm:$0xff]
    %v3222 = vld [vmem:[%s2944 + $0x794] sm:$0xff]
    %v3223 = vld [vmem:[%s2944 + $0x79c] sm:$0xff]
    %v3224 = vld [vmem:[%s2944 + $0x7a4] sm:$0xf]
    %v3225 = vld [vmem:[%s2944 + $0x7a8] sm:$0xff]
    %v3226 = vld [vmem:[%s2944 + $0x7b0] sm:$0xff]
    %v3227 = vld [vmem:[%s2944 + $0x7b8] sm:$0xff]
    %v3228 = vld [vmem:[%s2944 + $0x7c0] sm:$0xf]
    %v3229 = vld [vmem:[%s2944 + $0x7c4] sm:$0xff]
    %v3230 = vld [vmem:[%s2944 + $0x7cc] sm:$0xff]
    %v3231 = vld [vmem:[%s2944 + $0x7d4] sm:$0xff]
    %v3232 = vld [vmem:[%s2944 + $0x7dc] sm:$0xf]
    %v3233 = vld [vmem:[%s2944 + $0x7e0] sm:$0xff]
    %v3234 = vld [vmem:[%s2944 + $0x7e8] sm:$0xff]
    %v3235 = vld [vmem:[%s2944 + $0x7f0] sm:$0xff]
    %v3236 = vld [vmem:[%s2944 + $0x7f8] sm:$0xf]
    %v3237 = vld [vmem:[%s2944 + $0x7fc] sm:$0xff]
    %v3238 = vld [vmem:[%s2944 + $0x804] sm:$0xff]
    %v3239 = vld [vmem:[%s2944 + $0x80c] sm:$0xff]
    %v3240 = vld [vmem:[%s2944 + $0x814] sm:$0xf]
    %v3241 = vld [vmem:[%s2944 + $0x818] sm:$0xff]
    %v3242 = vld [vmem:[%s2944 + $0x820] sm:$0xff]
    %v3243 = vld [vmem:[%s2944 + $0x828] sm:$0xff]
    %v3244 = vld [vmem:[%s2944 + $0x830] sm:$0xf]
    %v3245 = vld [vmem:[%s2944 + $0x834] sm:$0xff]
    %v3246 = vld [vmem:[%s2944 + $0x83c] sm:$0xff]
    %v3247 = vld [vmem:[%s2944 + $0x844] sm:$0xff]
    %v3248 = vld [vmem:[%s2944 + $0x84c] sm:$0xf]
    %v3249 = vld [vmem:[%s2944 + $0x850] sm:$0xff]
    %v3250 = vld [vmem:[%s2944 + $0x858] sm:$0xff]
    %v3251 = vld [vmem:[%s2944 + $0x860] sm:$0xff]
    %v3252 = vld [vmem:[%s2944 + $0x868] sm:$0xf]
    %v3253 = vld [vmem:[%s2944 + $0x86c] sm:$0xff]
    %v3254 = vld [vmem:[%s2944 + $0x874] sm:$0xff]
    %v3255 = vld [vmem:[%s2944 + $0x87c] sm:$0xff]
    %v3256 = vld [vmem:[%s2944 + $0x884] sm:$0xf]
    %v3257 = vld [vmem:[%s2944 + $0x888] sm:$0xff]
    %v3258 = vld [vmem:[%s2944 + $0x890] sm:$0xff]
    %v3259 = vld [vmem:[%s2944 + $0x898] sm:$0xff]
    %v3260 = vld [vmem:[%s2944 + $0x8a0] sm:$0xf]
    %v3261 = vld [vmem:[%s2944 + $0x8a4] sm:$0xff]
    %v3262 = vld [vmem:[%s2944 + $0x8ac] sm:$0xff]
    %v3263 = vld [vmem:[%s2944 + $0x8b4] sm:$0xff]
    %v3264 = vld [vmem:[%s2944 + $0x8bc] sm:$0xf]
    %v3265 = vld [vmem:[%s2944 + $0x8c0] sm:$0xff]
    %v3266 = vld [vmem:[%s2944 + $0x8c8] sm:$0xff]
    %v3267 = vld [vmem:[%s2944 + $0x8d0] sm:$0xff]
    %v3268 = vld [vmem:[%s2944 + $0x8d8] sm:$0xf]
    %v3269 = vld [vmem:[%s2944 + $0x8dc] sm:$0xff]
    %v3270 = vld [vmem:[%s2944 + $0x8e4] sm:$0xff]
    %v3271 = vld [vmem:[%s2944 + $0x8ec] sm:$0xff]
    %v3272 = vld [vmem:[%s2944 + $0x8f4] sm:$0xf]
    %v3273 = vld [vmem:[%s2944 + $0x8f8] sm:$0xff]
    %v3274 = vld [vmem:[%s2944 + $0x900] sm:$0xff]
    %v3275 = vld [vmem:[%s2944 + $0x908] sm:$0xff]
    %v3276 = vld [vmem:[%s2944 + $0x910] sm:$0xf]
    %v3277 = vld [vmem:[%s2944 + $0x914] sm:$0xff]
    %v3278 = vld [vmem:[%s2944 + $0x91c] sm:$0xff]
    %v3279 = vld [vmem:[%s2944 + $0x924] sm:$0xff]
    %v3280 = vld [vmem:[%s2944 + $0x92c] sm:$0xf]
    %v3281 = vld [vmem:[%s2944 + $0x930] sm:$0xff]
    %v3282 = vld [vmem:[%s2944 + $0x938] sm:$0xff]
    %v3283 = vld [vmem:[%s2944 + $0x940] sm:$0xff]
    %v3284 = vld [vmem:[%s2944 + $0x948] sm:$0xf]
    %v3285 = vld [vmem:[%s2944 + $0x94c] sm:$0xff]
    %v3286 = vld [vmem:[%s2944 + $0x954] sm:$0xff]
    %v3287 = vld [vmem:[%s2944 + $0x95c] sm:$0xff]
    %v3288 = vld [vmem:[%s2944 + $0x964] sm:$0xf]
    %v3289 = vld [vmem:[%s2944 + $0x968] sm:$0xff]
    %v3290 = vld [vmem:[%s2944 + $0x970] sm:$0xff]
    %v3291 = vld [vmem:[%s2944 + $0x978] sm:$0xff]
    %v3292 = vld [vmem:[%s2944 + $0x980] sm:$0xf]
    %v3293 = vld [vmem:[%s2944 + $0x984] sm:$0xff]
    %v3294 = vld [vmem:[%s2944 + $0x98c] sm:$0xff]
    %v3295 = vld [vmem:[%s2944 + $0x994] sm:$0xff]
    %v3296 = vld [vmem:[%s2944 + $0x99c] sm:$0xf]
    %v3297 = vld [vmem:[%s2944 + $0x9a0] sm:$0xff]
    %v3298 = vld [vmem:[%s2944 + $0x9a8] sm:$0xff]
    %v3299 = vld [vmem:[%s2944 + $0x9b0] sm:$0xff]
    %v3300 = vld [vmem:[%s2944 + $0x9b8] sm:$0xf]
    %v3301 = vld [vmem:[%s2944 + $0x9bc] sm:$0xff]
    %v3302 = vld [vmem:[%s2944 + $0x9c4] sm:$0xff]
    %v3303 = vld [vmem:[%s2944 + $0x9cc] sm:$0xff]
    %v3304 = vld [vmem:[%s2944 + $0x9d4] sm:$0xf]
    %v3305 = vld [vmem:[%s2944 + $0x9d8] sm:$0xff]
    %v3306 = vld [vmem:[%s2944 + $0x9e0] sm:$0xff]
    %v3307 = vld [vmem:[%s2944 + $0x9e8] sm:$0xff]
    %v3308 = vld [vmem:[%s2944 + $0x9f0] sm:$0xf]
    %v3309 = vld [vmem:[%s2944 + $0x9f4] sm:$0xff]
    %v3310 = vld [vmem:[%s2944 + $0x9fc] sm:$0xff]
    %v3311 = vld [vmem:[%s2944 + $0xa04] sm:$0xff]
    %v3312 = vld [vmem:[%s2944 + $0xa0c] sm:$0xf]
    %v3313 = vld [vmem:[%s2944 + $0xa10] sm:$0xff]
    %v3314 = vld [vmem:[%s2944 + $0xa18] sm:$0xff]
    %v3315 = vld [vmem:[%s2944 + $0xa20] sm:$0xff]
    %v3316 = vld [vmem:[%s2944 + $0xa28] sm:$0xf]
    %v3317 = vld [vmem:[%s2944 + $0xa2c] sm:$0xff]
    %v3318 = vld [vmem:[%s2944 + $0xa34] sm:$0xff]
    %v3319 = vld [vmem:[%s2944 + $0xa3c] sm:$0xff]
    %v3320 = vld [vmem:[%s2944 + $0xa44] sm:$0xf]
    %v3321 = vld [vmem:[%s2944 + $0xa48] sm:$0xff]
    %v3322 = vld [vmem:[%s2944 + $0xa50] sm:$0xff]
    %v3323 = vld [vmem:[%s2944 + $0xa58] sm:$0xff]
    %v3324 = vld [vmem:[%s2944 + $0xa60] sm:$0xf]
    %v3325 = vld [vmem:[%s2944 + $0xa64] sm:$0xff]
    %v3326 = vld [vmem:[%s2944 + $0xa6c] sm:$0xff]
    %v3327 = vld [vmem:[%s2944 + $0xa74] sm:$0xff]
    %v3328 = vld [vmem:[%s2944 + $0xa7c] sm:$0xf]
    %v3329 = vld [vmem:[%s2944 + $0xa80] sm:$0xff]
    %v3330 = vld [vmem:[%s2944 + $0xa88] sm:$0xff]
    %v3331 = vld [vmem:[%s2944 + $0xa90] sm:$0xff]
    %v3332 = vld [vmem:[%s2944 + $0xa98] sm:$0xf]
    %v3333 = vld [vmem:[%s2944 + $0xa9c] sm:$0xff]
    %v3334 = vld [vmem:[%s2944 + $0xaa4] sm:$0xff]
    %v3335 = vld [vmem:[%s2944 + $0xaac] sm:$0xff]
    %v3336 = vld [vmem:[%s2944 + $0xab4] sm:$0xf]
    %v3729 = vunpack.c.l.b16 %v2945
    %v3730 = vunpack.c.h.b16 %v2945
    %v3731 = vunpack.c.l.b16 %v2946
    %v3732 = vunpack.c.h.b16 %v2946
    %v3733 = vunpack.c.l.b16 %v2947
    %v3734 = vunpack.c.h.b16 %v2947
    %v3735 = vunpack.c.l.b16 %v2948
    %v3736 = vunpack.c.l.b16 %v2949
    %v3737 = vunpack.c.h.b16 %v2949
    %v3738 = vunpack.c.l.b16 %v2950
    %v3739 = vunpack.c.h.b16 %v2950
    %v3740 = vunpack.c.l.b16 %v2951
    %v3741 = vunpack.c.h.b16 %v2951
    %v3742 = vunpack.c.l.b16 %v2952
    %v3743 = vunpack.c.l.b16 %v2953
    %v3744 = vunpack.c.h.b16 %v2953
    %v3745 = vunpack.c.l.b16 %v2954
    %v3746 = vunpack.c.h.b16 %v2954
    %v3747 = vunpack.c.l.b16 %v2955
    %v3748 = vunpack.c.h.b16 %v2955
    %v3749 = vunpack.c.l.b16 %v2956
    %v3750 = vunpack.c.l.b16 %v2957
    %v3751 = vunpack.c.h.b16 %v2957
    %v3752 = vunpack.c.l.b16 %v2958
    %v3753 = vunpack.c.h.b16 %v2958
    %v3754 = vunpack.c.l.b16 %v2959
    %v3755 = vunpack.c.h.b16 %v2959
    %v3756 = vunpack.c.l.b16 %v2960
    %v3757 = vunpack.c.l.b16 %v2961
    %v3758 = vunpack.c.h.b16 %v2961
    %v3759 = vunpack.c.l.b16 %v2962
    %v3760 = vunpack.c.h.b16 %v2962
    %v3761 = vunpack.c.l.b16 %v2963
    %v3762 = vunpack.c.h.b16 %v2963
    %v3763 = vunpack.c.l.b16 %v2964
    %v3764 = vunpack.c.l.b16 %v2965
    %v3765 = vunpack.c.h.b16 %v2965
    %v3766 = vunpack.c.l.b16 %v2966
    %v3767 = vunpack.c.h.b16 %v2966
    %v3768 = vunpack.c.l.b16 %v2967
    %v3769 = vunpack.c.h.b16 %v2967
    %v3770 = vunpack.c.l.b16 %v2968
    %v3771 = vunpack.c.l.b16 %v2969
    %v3772 = vunpack.c.h.b16 %v2969
    %v3773 = vunpack.c.l.b16 %v2970
    %v3774 = vunpack.c.h.b16 %v2970
    %v3775 = vunpack.c.l.b16 %v2971
    %v3776 = vunpack.c.h.b16 %v2971
    %v3777 = vunpack.c.l.b16 %v2972
    %v3778 = vunpack.c.l.b16 %v2973
    %v3779 = vunpack.c.h.b16 %v2973
    %v3780 = vunpack.c.l.b16 %v2974
    %v3781 = vunpack.c.h.b16 %v2974
    %v3782 = vunpack.c.l.b16 %v2975
    %v3783 = vunpack.c.h.b16 %v2975
    %v3784 = vunpack.c.l.b16 %v2976
    %v3785 = vunpack.c.l.b16 %v2977
    %v3786 = vunpack.c.h.b16 %v2977
    %v3787 = vunpack.c.l.b16 %v2978
    %v3788 = vunpack.c.h.b16 %v2978
    %v3789 = vunpack.c.l.b16 %v2979
    %v3790 = vunpack.c.h.b16 %v2979
    %v3791 = vunpack.c.l.b16 %v2980
    %v3792 = vunpack.c.l.b16 %v2981
    %v3793 = vunpack.c.h.b16 %v2981
    %v3794 = vunpack.c.l.b16 %v2982
    %v3795 = vunpack.c.h.b16 %v2982
    %v3796 = vunpack.c.l.b16 %v2983
    %v3797 = vunpack.c.h.b16 %v2983
    %v3798 = vunpack.c.l.b16 %v2984
    %v3799 = vunpack.c.l.b16 %v2985
    %v3800 = vunpack.c.h.b16 %v2985
    %v3801 = vunpack.c.l.b16 %v2986
    %v3802 = vunpack.c.h.b16 %v2986
    %v3803 = vunpack.c.l.b16 %v2987
    %v3804 = vunpack.c.h.b16 %v2987
    %v3805 = vunpack.c.l.b16 %v2988
    %v3806 = vunpack.c.l.b16 %v2989
    %v3807 = vunpack.c.h.b16 %v2989
    %v3808 = vunpack.c.l.b16 %v2990
    %v3809 = vunpack.c.h.b16 %v2990
    %v3810 = vunpack.c.l.b16 %v2991
    %v3811 = vunpack.c.h.b16 %v2991
    %v3812 = vunpack.c.l.b16 %v2992
    %v3813 = vunpack.c.l.b16 %v2993
    %v3814 = vunpack.c.h.b16 %v2993
    %v3815 = vunpack.c.l.b16 %v2994
    %v3816 = vunpack.c.h.b16 %v2994
    %v3817 = vunpack.c.l.b16 %v2995
    %v3818 = vunpack.c.h.b16 %v2995
    %v3819 = vunpack.c.l.b16 %v2996
    %v3820 = vunpack.c.l.b16 %v2997
    %v3821 = vunpack.c.h.b16 %v2997
    %v3822 = vunpack.c.l.b16 %v2998
    %v3823 = vunpack.c.h.b16 %v2998
    %v3824 = vunpack.c.l.b16 %v2999
    %v3825 = vunpack.c.h.b16 %v2999
    %v3826 = vunpack.c.l.b16 %v3000
    %v3827 = vunpack.c.l.b16 %v3001
    %v3828 = vunpack.c.h.b16 %v3001
    %v3829 = vunpack.c.l.b16 %v3002
    %v3830 = vunpack.c.h.b16 %v3002
    %v3831 = vunpack.c.l.b16 %v3003
    %v3832 = vunpack.c.h.b16 %v3003
    %v3833 = vunpack.c.l.b16 %v3004
    %v3834 = vunpack.c.l.b16 %v3005
    %v3835 = vunpack.c.h.b16 %v3005
    %v3836 = vunpack.c.l.b16 %v3006
    %v3837 = vunpack.c.h.b16 %v3006
    %v3838 = vunpack.c.l.b16 %v3007
    %v3839 = vunpack.c.h.b16 %v3007
    %v3840 = vunpack.c.l.b16 %v3008
    %v3841 = vunpack.c.l.b16 %v3009
    %v3842 = vunpack.c.h.b16 %v3009
    %v3843 = vunpack.c.l.b16 %v3010
    %v3844 = vunpack.c.h.b16 %v3010
    %v3845 = vunpack.c.l.b16 %v3011
    %v3846 = vunpack.c.h.b16 %v3011
    %v3847 = vunpack.c.l.b16 %v3012
    %v3848 = vunpack.c.l.b16 %v3013
    %v3849 = vunpack.c.h.b16 %v3013
    %v3850 = vunpack.c.l.b16 %v3014
    %v3851 = vunpack.c.h.b16 %v3014
    %v3852 = vunpack.c.l.b16 %v3015
    %v3853 = vunpack.c.h.b16 %v3015
    %v3854 = vunpack.c.l.b16 %v3016
    %v3855 = vunpack.c.l.b16 %v3017
    %v3856 = vunpack.c.h.b16 %v3017
    %v3857 = vunpack.c.l.b16 %v3018
    %v3858 = vunpack.c.h.b16 %v3018
    %v3859 = vunpack.c.l.b16 %v3019
    %v3860 = vunpack.c.h.b16 %v3019
    %v3861 = vunpack.c.l.b16 %v3020
    %v3862 = vunpack.c.l.b16 %v3021
    %v3863 = vunpack.c.h.b16 %v3021
    %v3864 = vunpack.c.l.b16 %v3022
    %v3865 = vunpack.c.h.b16 %v3022
    %v3866 = vunpack.c.l.b16 %v3023
    %v3867 = vunpack.c.h.b16 %v3023
    %v3868 = vunpack.c.l.b16 %v3024
    %v3869 = vunpack.c.l.b16 %v3025
    %v3870 = vunpack.c.h.b16 %v3025
    %v3871 = vunpack.c.l.b16 %v3026
    %v3872 = vunpack.c.h.b16 %v3026
    %v3873 = vunpack.c.l.b16 %v3027
    %v3874 = vunpack.c.h.b16 %v3027
    %v3875 = vunpack.c.l.b16 %v3028
    %v3876 = vunpack.c.l.b16 %v3029
    %v3877 = vunpack.c.h.b16 %v3029
    %v3878 = vunpack.c.l.b16 %v3030
    %v3879 = vunpack.c.h.b16 %v3030
    %v3880 = vunpack.c.l.b16 %v3031
    %v3881 = vunpack.c.h.b16 %v3031
    %v3882 = vunpack.c.l.b16 %v3032
    %v3883 = vunpack.c.l.b16 %v3033
    %v3884 = vunpack.c.h.b16 %v3033
    %v3885 = vunpack.c.l.b16 %v3034
    %v3886 = vunpack.c.h.b16 %v3034
    %v3887 = vunpack.c.l.b16 %v3035
    %v3888 = vunpack.c.h.b16 %v3035
    %v3889 = vunpack.c.l.b16 %v3036
    %v3890 = vunpack.c.l.b16 %v3037
    %v3891 = vunpack.c.h.b16 %v3037
    %v3892 = vunpack.c.l.b16 %v3038
    %v3893 = vunpack.c.h.b16 %v3038
    %v3894 = vunpack.c.l.b16 %v3039
    %v3895 = vunpack.c.h.b16 %v3039
    %v3896 = vunpack.c.l.b16 %v3040
    %v3897 = vunpack.c.l.b16 %v3041
    %v3898 = vunpack.c.h.b16 %v3041
    %v3899 = vunpack.c.l.b16 %v3042
    %v3900 = vunpack.c.h.b16 %v3042
    %v3901 = vunpack.c.l.b16 %v3043
    %v3902 = vunpack.c.h.b16 %v3043
    %v3903 = vunpack.c.l.b16 %v3044
    %v3904 = vunpack.c.l.b16 %v3045
    %v3905 = vunpack.c.h.b16 %v3045
    %v3906 = vunpack.c.l.b16 %v3046
    %v3907 = vunpack.c.h.b16 %v3046
    %v3908 = vunpack.c.l.b16 %v3047
    %v3909 = vunpack.c.h.b16 %v3047
    %v3910 = vunpack.c.l.b16 %v3048
    %v3911 = vunpack.c.l.b16 %v3049
    %v3912 = vunpack.c.h.b16 %v3049
    %v3913 = vunpack.c.l.b16 %v3050
    %v3914 = vunpack.c.h.b16 %v3050
    %v3915 = vunpack.c.l.b16 %v3051
    %v3916 = vunpack.c.h.b16 %v3051
    %v3917 = vunpack.c.l.b16 %v3052
    %v3918 = vunpack.c.l.b16 %v3053
    %v3919 = vunpack.c.h.b16 %v3053
    %v3920 = vunpack.c.l.b16 %v3054
    %v3921 = vunpack.c.h.b16 %v3054
    %v3922 = vunpack.c.l.b16 %v3055
    %v3923 = vunpack.c.h.b16 %v3055
    %v3924 = vunpack.c.l.b16 %v3056
    %v3925 = vunpack.c.l.b16 %v3057
    %v3926 = vunpack.c.h.b16 %v3057
    %v3927 = vunpack.c.l.b16 %v3058
    %v3928 = vunpack.c.h.b16 %v3058
    %v3929 = vunpack.c.l.b16 %v3059
    %v3930 = vunpack.c.h.b16 %v3059
    %v3931 = vunpack.c.l.b16 %v3060
    %v3932 = vunpack.c.l.b16 %v3061
    %v3933 = vunpack.c.h.b16 %v3061
    %v3934 = vunpack.c.l.b16 %v3062
    %v3935 = vunpack.c.h.b16 %v3062
    %v3936 = vunpack.c.l.b16 %v3063
    %v3937 = vunpack.c.h.b16 %v3063
    %v3938 = vunpack.c.l.b16 %v3064
    %v3939 = vunpack.c.l.b16 %v3065
    %v3940 = vunpack.c.h.b16 %v3065
    %v3941 = vunpack.c.l.b16 %v3066
    %v3942 = vunpack.c.h.b16 %v3066
    %v3943 = vunpack.c.l.b16 %v3067
    %v3944 = vunpack.c.h.b16 %v3067
    %v3945 = vunpack.c.l.b16 %v3068
    %v3946 = vunpack.c.l.b16 %v3069
    %v3947 = vunpack.c.h.b16 %v3069
    %v3948 = vunpack.c.l.b16 %v3070
    %v3949 = vunpack.c.h.b16 %v3070
    %v3950 = vunpack.c.l.b16 %v3071
    %v3951 = vunpack.c.h.b16 %v3071
    %v3952 = vunpack.c.l.b16 %v3072
    %v3953 = vunpack.c.l.b16 %v3073
    %v3954 = vunpack.c.h.b16 %v3073
    %v3955 = vunpack.c.l.b16 %v3074
    %v3956 = vunpack.c.h.b16 %v3074
    %v3957 = vunpack.c.l.b16 %v3075
    %v3958 = vunpack.c.h.b16 %v3075
    %v3959 = vunpack.c.l.b16 %v3076
    %v3960 = vunpack.c.l.b16 %v3077
    %v3961 = vunpack.c.h.b16 %v3077
    %v3962 = vunpack.c.l.b16 %v3078
    %v3963 = vunpack.c.h.b16 %v3078
    %v3964 = vunpack.c.l.b16 %v3079
    %v3965 = vunpack.c.h.b16 %v3079
    %v3966 = vunpack.c.l.b16 %v3080
    %v3967 = vunpack.c.l.b16 %v3081
    %v3968 = vunpack.c.h.b16 %v3081
    %v3969 = vunpack.c.l.b16 %v3082
    %v3970 = vunpack.c.h.b16 %v3082
    %v3971 = vunpack.c.l.b16 %v3083
    %v3972 = vunpack.c.h.b16 %v3083
    %v3973 = vunpack.c.l.b16 %v3084
    %v3974 = vunpack.c.l.b16 %v3085
    %v3975 = vunpack.c.h.b16 %v3085
    %v3976 = vunpack.c.l.b16 %v3086
    %v3977 = vunpack.c.h.b16 %v3086
    %v3978 = vunpack.c.l.b16 %v3087
    %v3979 = vunpack.c.h.b16 %v3087
    %v3980 = vunpack.c.l.b16 %v3088
    %v3981 = vunpack.c.l.b16 %v3089
    %v3982 = vunpack.c.h.b16 %v3089
    %v3983 = vunpack.c.l.b16 %v3090
    %v3984 = vunpack.c.h.b16 %v3090
    %v3985 = vunpack.c.l.b16 %v3091
    %v3986 = vunpack.c.h.b16 %v3091
    %v3987 = vunpack.c.l.b16 %v3092
    %v3988 = vunpack.c.l.b16 %v3093
    %v3989 = vunpack.c.h.b16 %v3093
    %v3990 = vunpack.c.l.b16 %v3094
    %v3991 = vunpack.c.h.b16 %v3094
    %v3992 = vunpack.c.l.b16 %v3095
    %v3993 = vunpack.c.h.b16 %v3095
    %v3994 = vunpack.c.l.b16 %v3096
    %v3995 = vunpack.c.l.b16 %v3097
    %v3996 = vunpack.c.h.b16 %v3097
    %v3997 = vunpack.c.l.b16 %v3098
    %v3998 = vunpack.c.h.b16 %v3098
    %v3999 = vunpack.c.l.b16 %v3099
    %v4000 = vunpack.c.h.b16 %v3099
    %v4001 = vunpack.c.l.b16 %v3100
    %v4002 = vunpack.c.l.b16 %v3101
    %v4003 = vunpack.c.h.b16 %v3101
    %v4004 = vunpack.c.l.b16 %v3102
    %v4005 = vunpack.c.h.b16 %v3102
    %v4006 = vunpack.c.l.b16 %v3103
    %v4007 = vunpack.c.h.b16 %v3103
    %v4008 = vunpack.c.l.b16 %v3104
    %v4009 = vunpack.c.l.b16 %v3105
    %v4010 = vunpack.c.h.b16 %v3105
    %v4011 = vunpack.c.l.b16 %v3106
    %v4012 = vunpack.c.h.b16 %v3106
    %v4013 = vunpack.c.l.b16 %v3107
    %v4014 = vunpack.c.h.b16 %v3107
    %v4015 = vunpack.c.l.b16 %v3108
    %v4016 = vunpack.c.l.b16 %v3109
    %v4017 = vunpack.c.h.b16 %v3109
    %v4018 = vunpack.c.l.b16 %v3110
    %v4019 = vunpack.c.h.b16 %v3110
    %v4020 = vunpack.c.l.b16 %v3111
    %v4021 = vunpack.c.h.b16 %v3111
    %v4022 = vunpack.c.l.b16 %v3112
    %v4023 = vunpack.c.l.b16 %v3113
    %v4024 = vunpack.c.h.b16 %v3113
    %v4025 = vunpack.c.l.b16 %v3114
    %v4026 = vunpack.c.h.b16 %v3114
    %v4027 = vunpack.c.l.b16 %v3115
    %v4028 = vunpack.c.h.b16 %v3115
    %v4029 = vunpack.c.l.b16 %v3116
    %v4030 = vunpack.c.l.b16 %v3117
    %v4031 = vunpack.c.h.b16 %v3117
    %v4032 = vunpack.c.l.b16 %v3118
    %v4033 = vunpack.c.h.b16 %v3118
    %v4034 = vunpack.c.l.b16 %v3119
    %v4035 = vunpack.c.h.b16 %v3119
    %v4036 = vunpack.c.l.b16 %v3120
    %v4037 = vunpack.c.l.b16 %v3121
    %v4038 = vunpack.c.h.b16 %v3121
    %v4039 = vunpack.c.l.b16 %v3122
    %v4040 = vunpack.c.h.b16 %v3122
    %v4041 = vunpack.c.l.b16 %v3123
    %v4042 = vunpack.c.h.b16 %v3123
    %v4043 = vunpack.c.l.b16 %v3124
    %v4044 = vunpack.c.l.b16 %v3125
    %v4045 = vunpack.c.h.b16 %v3125
    %v4046 = vunpack.c.l.b16 %v3126
    %v4047 = vunpack.c.h.b16 %v3126
    %v4048 = vunpack.c.l.b16 %v3127
    %v4049 = vunpack.c.h.b16 %v3127
    %v4050 = vunpack.c.l.b16 %v3128
    %v4051 = vunpack.c.l.b16 %v3129
    %v4052 = vunpack.c.h.b16 %v3129
    %v4053 = vunpack.c.l.b16 %v3130
    %v4054 = vunpack.c.h.b16 %v3130
    %v4055 = vunpack.c.l.b16 %v3131
    %v4056 = vunpack.c.h.b16 %v3131
    %v4057 = vunpack.c.l.b16 %v3132
    %v4058 = vunpack.c.l.b16 %v3133
    %v4059 = vunpack.c.h.b16 %v3133
    %v4060 = vunpack.c.l.b16 %v3134
    %v4061 = vunpack.c.h.b16 %v3134
    %v4062 = vunpack.c.l.b16 %v3135
    %v4063 = vunpack.c.h.b16 %v3135
    %v4064 = vunpack.c.l.b16 %v3136
    %v4065 = vunpack.c.l.b16 %v3137
    %v4066 = vunpack.c.h.b16 %v3137
    %v4067 = vunpack.c.l.b16 %v3138
    %v4068 = vunpack.c.h.b16 %v3138
    %v4069 = vunpack.c.l.b16 %v3139
    %v4070 = vunpack.c.h.b16 %v3139
    %v4071 = vunpack.c.l.b16 %v3140
    %v4072 = vunpack.c.l.b16 %v3141
    %v4073 = vunpack.c.h.b16 %v3141
    %v4074 = vunpack.c.l.b16 %v3142
    %v4075 = vunpack.c.h.b16 %v3142
    %v4076 = vunpack.c.l.b16 %v3143
    %v4077 = vunpack.c.h.b16 %v3143
    %v4078 = vunpack.c.l.b16 %v3144
    %v4079 = vunpack.c.l.b16 %v3145
    %v4080 = vunpack.c.h.b16 %v3145
    %v4081 = vunpack.c.l.b16 %v3146
    %v4082 = vunpack.c.h.b16 %v3146
    %v4083 = vunpack.c.l.b16 %v3147
    %v4084 = vunpack.c.h.b16 %v3147
    %v4085 = vunpack.c.l.b16 %v3148
    %v4086 = vunpack.c.l.b16 %v3149
    %v4087 = vunpack.c.h.b16 %v3149
    %v4088 = vunpack.c.l.b16 %v3150
    %v4089 = vunpack.c.h.b16 %v3150
    %v4090 = vunpack.c.l.b16 %v3151
    %v4091 = vunpack.c.h.b16 %v3151
    %v4092 = vunpack.c.l.b16 %v3152
    %v4093 = vunpack.c.l.b16 %v3153
    %v4094 = vunpack.c.h.b16 %v3153
    %v4095 = vunpack.c.l.b16 %v3154
    %v4096 = vunpack.c.h.b16 %v3154
    %v4097 = vunpack.c.l.b16 %v3155
    %v4098 = vunpack.c.h.b16 %v3155
    %v4099 = vunpack.c.l.b16 %v3156
    %v4100 = vunpack.c.l.b16 %v3157
    %v4101 = vunpack.c.h.b16 %v3157
    %v4102 = vunpack.c.l.b16 %v3158
    %v4103 = vunpack.c.h.b16 %v3158
    %v4104 = vunpack.c.l.b16 %v3159
    %v4105 = vunpack.c.h.b16 %v3159
    %v4106 = vunpack.c.l.b16 %v3160
    %v4107 = vunpack.c.l.b16 %v3161
    %v4108 = vunpack.c.h.b16 %v3161
    %v4109 = vunpack.c.l.b16 %v3162
    %v4110 = vunpack.c.h.b16 %v3162
    %v4111 = vunpack.c.l.b16 %v3163
    %v4112 = vunpack.c.h.b16 %v3163
    %v4113 = vunpack.c.l.b16 %v3164
    %v4114 = vunpack.c.l.b16 %v3165
    %v4115 = vunpack.c.h.b16 %v3165
    %v4116 = vunpack.c.l.b16 %v3166
    %v4117 = vunpack.c.h.b16 %v3166
    %v4118 = vunpack.c.l.b16 %v3167
    %v4119 = vunpack.c.h.b16 %v3167
    %v4120 = vunpack.c.l.b16 %v3168
    %v4121 = vunpack.c.l.b16 %v3169
    %v4122 = vunpack.c.h.b16 %v3169
    %v4123 = vunpack.c.l.b16 %v3170
    %v4124 = vunpack.c.h.b16 %v3170
    %v4125 = vunpack.c.l.b16 %v3171
    %v4126 = vunpack.c.h.b16 %v3171
    %v4127 = vunpack.c.l.b16 %v3172
    %v4128 = vunpack.c.l.b16 %v3173
    %v4129 = vunpack.c.h.b16 %v3173
    %v4130 = vunpack.c.l.b16 %v3174
    %v4131 = vunpack.c.h.b16 %v3174
    %v4132 = vunpack.c.l.b16 %v3175
    %v4133 = vunpack.c.h.b16 %v3175
    %v4134 = vunpack.c.l.b16 %v3176
    %v4135 = vunpack.c.l.b16 %v3177
    %v4136 = vunpack.c.h.b16 %v3177
    %v4137 = vunpack.c.l.b16 %v3178
    %v4138 = vunpack.c.h.b16 %v3178
    %v4139 = vunpack.c.l.b16 %v3179
    %v4140 = vunpack.c.h.b16 %v3179
    %v4141 = vunpack.c.l.b16 %v3180
    %v4142 = vunpack.c.l.b16 %v3181
    %v4143 = vunpack.c.h.b16 %v3181
    %v4144 = vunpack.c.l.b16 %v3182
    %v4145 = vunpack.c.h.b16 %v3182
    %v4146 = vunpack.c.l.b16 %v3183
    %v4147 = vunpack.c.h.b16 %v3183
    %v4148 = vunpack.c.l.b16 %v3184
    %v4149 = vunpack.c.l.b16 %v3185
    %v4150 = vunpack.c.h.b16 %v3185
    %v4151 = vunpack.c.l.b16 %v3186
    %v4152 = vunpack.c.h.b16 %v3186
    %v4153 = vunpack.c.l.b16 %v3187
    %v4154 = vunpack.c.h.b16 %v3187
    %v4155 = vunpack.c.l.b16 %v3188
    %v4156 = vunpack.c.l.b16 %v3189
    %v4157 = vunpack.c.h.b16 %v3189
    %v4158 = vunpack.c.l.b16 %v3190
    %v4159 = vunpack.c.h.b16 %v3190
    %v4160 = vunpack.c.l.b16 %v3191
    %v4161 = vunpack.c.h.b16 %v3191
    %v4162 = vunpack.c.l.b16 %v3192
    %v4163 = vunpack.c.l.b16 %v3193
    %v4164 = vunpack.c.h.b16 %v3193
    %v4165 = vunpack.c.l.b16 %v3194
    %v4166 = vunpack.c.h.b16 %v3194
    %v4167 = vunpack.c.l.b16 %v3195
    %v4168 = vunpack.c.h.b16 %v3195
    %v4169 = vunpack.c.l.b16 %v3196
    %v4170 = vunpack.c.l.b16 %v3197
    %v4171 = vunpack.c.h.b16 %v3197
    %v4172 = vunpack.c.l.b16 %v3198
    %v4173 = vunpack.c.h.b16 %v3198
    %v4174 = vunpack.c.l.b16 %v3199
    %v4175 = vunpack.c.h.b16 %v3199
    %v4176 = vunpack.c.l.b16 %v3200
    %v4177 = vunpack.c.l.b16 %v3201
    %v4178 = vunpack.c.h.b16 %v3201
    %v4179 = vunpack.c.l.b16 %v3202
    %v4180 = vunpack.c.h.b16 %v3202
    %v4181 = vunpack.c.l.b16 %v3203
    %v4182 = vunpack.c.h.b16 %v3203
    %v4183 = vunpack.c.l.b16 %v3204
    %v4184 = vunpack.c.l.b16 %v3205
    %v4185 = vunpack.c.h.b16 %v3205
    %v4186 = vunpack.c.l.b16 %v3206
    %v4187 = vunpack.c.h.b16 %v3206
    %v4188 = vunpack.c.l.b16 %v3207
    %v4189 = vunpack.c.h.b16 %v3207
    %v4190 = vunpack.c.l.b16 %v3208
    %v4191 = vunpack.c.l.b16 %v3209
    %v4192 = vunpack.c.h.b16 %v3209
    %v4193 = vunpack.c.l.b16 %v3210
    %v4194 = vunpack.c.h.b16 %v3210
    %v4195 = vunpack.c.l.b16 %v3211
    %v4196 = vunpack.c.h.b16 %v3211
    %v4197 = vunpack.c.l.b16 %v3212
    %v4198 = vunpack.c.l.b16 %v3213
    %v4199 = vunpack.c.h.b16 %v3213
    %v4200 = vunpack.c.l.b16 %v3214
    %v4201 = vunpack.c.h.b16 %v3214
    %v4202 = vunpack.c.l.b16 %v3215
    %v4203 = vunpack.c.h.b16 %v3215
    %v4204 = vunpack.c.l.b16 %v3216
    %v4205 = vunpack.c.l.b16 %v3217
    %v4206 = vunpack.c.h.b16 %v3217
    %v4207 = vunpack.c.l.b16 %v3218
    %v4208 = vunpack.c.h.b16 %v3218
    %v4209 = vunpack.c.l.b16 %v3219
    %v4210 = vunpack.c.h.b16 %v3219
    %v4211 = vunpack.c.l.b16 %v3220
    %v4212 = vunpack.c.l.b16 %v3221
    %v4213 = vunpack.c.h.b16 %v3221
    %v4214 = vunpack.c.l.b16 %v3222
    %v4215 = vunpack.c.h.b16 %v3222
    %v4216 = vunpack.c.l.b16 %v3223
    %v4217 = vunpack.c.h.b16 %v3223
    %v4218 = vunpack.c.l.b16 %v3224
    %v4219 = vunpack.c.l.b16 %v3225
    %v4220 = vunpack.c.h.b16 %v3225
    %v4221 = vunpack.c.l.b16 %v3226
    %v4222 = vunpack.c.h.b16 %v3226
    %v4223 = vunpack.c.l.b16 %v3227
    %v4224 = vunpack.c.h.b16 %v3227
    %v4225 = vunpack.c.l.b16 %v3228
    %v4226 = vunpack.c.l.b16 %v3229
    %v4227 = vunpack.c.h.b16 %v3229
    %v4228 = vunpack.c.l.b16 %v3230
    %v4229 = vunpack.c.h.b16 %v3230
    %v4230 = vunpack.c.l.b16 %v3231
    %v4231 = vunpack.c.h.b16 %v3231
    %v4232 = vunpack.c.l.b16 %v3232
    %v4233 = vunpack.c.l.b16 %v3233
    %v4234 = vunpack.c.h.b16 %v3233
    %v4235 = vunpack.c.l.b16 %v3234
    %v4236 = vunpack.c.h.b16 %v3234
    %v4237 = vunpack.c.l.b16 %v3235
    %v4238 = vunpack.c.h.b16 %v3235
    %v4239 = vunpack.c.l.b16 %v3236
    %v4240 = vunpack.c.l.b16 %v3237
    %v4241 = vunpack.c.h.b16 %v3237
    %v4242 = vunpack.c.l.b16 %v3238
    %v4243 = vunpack.c.h.b16 %v3238
    %v4244 = vunpack.c.l.b16 %v3239
    %v4245 = vunpack.c.h.b16 %v3239
    %v4246 = vunpack.c.l.b16 %v3240
    %v4247 = vunpack.c.l.b16 %v3241
    %v4248 = vunpack.c.h.b16 %v3241
    %v4249 = vunpack.c.l.b16 %v3242
    %v4250 = vunpack.c.h.b16 %v3242
    %v4251 = vunpack.c.l.b16 %v3243
    %v4252 = vunpack.c.h.b16 %v3243
    %v4253 = vunpack.c.l.b16 %v3244
    %v4254 = vunpack.c.l.b16 %v3245
    %v4255 = vunpack.c.h.b16 %v3245
    %v4256 = vunpack.c.l.b16 %v3246
    %v4257 = vunpack.c.h.b16 %v3246
    %v4258 = vunpack.c.l.b16 %v3247
    %v4259 = vunpack.c.h.b16 %v3247
    %v4260 = vunpack.c.l.b16 %v3248
    %v4261 = vunpack.c.l.b16 %v3249
    %v4262 = vunpack.c.h.b16 %v3249
    %v4263 = vunpack.c.l.b16 %v3250
    %v4264 = vunpack.c.h.b16 %v3250
    %v4265 = vunpack.c.l.b16 %v3251
    %v4266 = vunpack.c.h.b16 %v3251
    %v4267 = vunpack.c.l.b16 %v3252
    %v4268 = vunpack.c.l.b16 %v3253
    %v4269 = vunpack.c.h.b16 %v3253
    %v4270 = vunpack.c.l.b16 %v3254
    %v4271 = vunpack.c.h.b16 %v3254
    %v4272 = vunpack.c.l.b16 %v3255
    %v4273 = vunpack.c.h.b16 %v3255
    %v4274 = vunpack.c.l.b16 %v3256
    %v4275 = vunpack.c.l.b16 %v3257
    %v4276 = vunpack.c.h.b16 %v3257
    %v4277 = vunpack.c.l.b16 %v3258
    %v4278 = vunpack.c.h.b16 %v3258
    %v4279 = vunpack.c.l.b16 %v3259
    %v4280 = vunpack.c.h.b16 %v3259
    %v4281 = vunpack.c.l.b16 %v3260
    %v4282 = vunpack.c.l.b16 %v3261
    %v4283 = vunpack.c.h.b16 %v3261
    %v4284 = vunpack.c.l.b16 %v3262
    %v4285 = vunpack.c.h.b16 %v3262
    %v4286 = vunpack.c.l.b16 %v3263
    %v4287 = vunpack.c.h.b16 %v3263
    %v4288 = vunpack.c.l.b16 %v3264
    %v4289 = vunpack.c.l.b16 %v3265
    %v4290 = vunpack.c.h.b16 %v3265
    %v4291 = vunpack.c.l.b16 %v3266
    %v4292 = vunpack.c.h.b16 %v3266
    %v4293 = vunpack.c.l.b16 %v3267
    %v4294 = vunpack.c.h.b16 %v3267
    %v4295 = vunpack.c.l.b16 %v3268
    %v4296 = vunpack.c.l.b16 %v3269
    %v4297 = vunpack.c.h.b16 %v3269
    %v4298 = vunpack.c.l.b16 %v3270
    %v4299 = vunpack.c.h.b16 %v3270
    %v4300 = vunpack.c.l.b16 %v3271
    %v4301 = vunpack.c.h.b16 %v3271
    %v4302 = vunpack.c.l.b16 %v3272
    %v4303 = vunpack.c.l.b16 %v3273
    %v4304 = vunpack.c.h.b16 %v3273
    %v4305 = vunpack.c.l.b16 %v3274
    %v4306 = vunpack.c.h.b16 %v3274
    %v4307 = vunpack.c.l.b16 %v3275
    %v4308 = vunpack.c.h.b16 %v3275
    %v4309 = vunpack.c.l.b16 %v3276
    %v4310 = vunpack.c.l.b16 %v3277
    %v4311 = vunpack.c.h.b16 %v3277
    %v4312 = vunpack.c.l.b16 %v3278
    %v4313 = vunpack.c.h.b16 %v3278
    %v4314 = vunpack.c.l.b16 %v3279
    %v4315 = vunpack.c.h.b16 %v3279
    %v4316 = vunpack.c.l.b16 %v3280
    %v4317 = vunpack.c.l.b16 %v3281
    %v4318 = vunpack.c.h.b16 %v3281
    %v4319 = vunpack.c.l.b16 %v3282
    %v4320 = vunpack.c.h.b16 %v3282
    %v4321 = vunpack.c.l.b16 %v3283
    %v4322 = vunpack.c.h.b16 %v3283
    %v4323 = vunpack.c.l.b16 %v3284
    %v4324 = vunpack.c.l.b16 %v3285
    %v4325 = vunpack.c.h.b16 %v3285
    %v4326 = vunpack.c.l.b16 %v3286
    %v4327 = vunpack.c.h.b16 %v3286
    %v4328 = vunpack.c.l.b16 %v3287
    %v4329 = vunpack.c.h.b16 %v3287
    %v4330 = vunpack.c.l.b16 %v3288
    %v4331 = vunpack.c.l.b16 %v3289
    %v4332 = vunpack.c.h.b16 %v3289
    %v4333 = vunpack.c.l.b16 %v3290
    %v4334 = vunpack.c.h.b16 %v3290
    %v4335 = vunpack.c.l.b16 %v3291
    %v4336 = vunpack.c.h.b16 %v3291
    %v4337 = vunpack.c.l.b16 %v3292
    %v4338 = vunpack.c.l.b16 %v3293
    %v4339 = vunpack.c.h.b16 %v3293
    %v4340 = vunpack.c.l.b16 %v3294
    %v4341 = vunpack.c.h.b16 %v3294
    %v4342 = vunpack.c.l.b16 %v3295
    %v4343 = vunpack.c.h.b16 %v3295
    %v4344 = vunpack.c.l.b16 %v3296
    %v4345 = vunpack.c.l.b16 %v3297
    %v4346 = vunpack.c.h.b16 %v3297
    %v4347 = vunpack.c.l.b16 %v3298
    %v4348 = vunpack.c.h.b16 %v3298
    %v4349 = vunpack.c.l.b16 %v3299
    %v4350 = vunpack.c.h.b16 %v3299
    %v4351 = vunpack.c.l.b16 %v3300
    %v4352 = vunpack.c.l.b16 %v3301
    %v4353 = vunpack.c.h.b16 %v3301
    %v4354 = vunpack.c.l.b16 %v3302
    %v4355 = vunpack.c.h.b16 %v3302
    %v4356 = vunpack.c.l.b16 %v3303
    %v4357 = vunpack.c.h.b16 %v3303
    %v4358 = vunpack.c.l.b16 %v3304
    %v4359 = vunpack.c.l.b16 %v3305
    %v4360 = vunpack.c.h.b16 %v3305
    %v4361 = vunpack.c.l.b16 %v3306
    %v4362 = vunpack.c.h.b16 %v3306
    %v4363 = vunpack.c.l.b16 %v3307
    %v4364 = vunpack.c.h.b16 %v3307
    %v4365 = vunpack.c.l.b16 %v3308
    %v4366 = vunpack.c.l.b16 %v3309
    %v4367 = vunpack.c.h.b16 %v3309
    %v4368 = vunpack.c.l.b16 %v3310
    %v4369 = vunpack.c.h.b16 %v3310
    %v4370 = vunpack.c.l.b16 %v3311
    %v4371 = vunpack.c.h.b16 %v3311
    %v4372 = vunpack.c.l.b16 %v3312
    %v4373 = vunpack.c.l.b16 %v3313
    %v4374 = vunpack.c.h.b16 %v3313
    %v4375 = vunpack.c.l.b16 %v3314
    %v4376 = vunpack.c.h.b16 %v3314
    %v4377 = vunpack.c.l.b16 %v3315
    %v4378 = vunpack.c.h.b16 %v3315
    %v4379 = vunpack.c.l.b16 %v3316
    %v4380 = vunpack.c.l.b16 %v3317
    %v4381 = vunpack.c.h.b16 %v3317
    %v4382 = vunpack.c.l.b16 %v3318
    %v4383 = vunpack.c.h.b16 %v3318
    %v4384 = vunpack.c.l.b16 %v3319
    %v4385 = vunpack.c.h.b16 %v3319
    %v4386 = vunpack.c.l.b16 %v3320
    %v4387 = vunpack.c.l.b16 %v3321
    %v4388 = vunpack.c.h.b16 %v3321
    %v4389 = vunpack.c.l.b16 %v3322
    %v4390 = vunpack.c.h.b16 %v3322
    %v4391 = vunpack.c.l.b16 %v3323
    %v4392 = vunpack.c.h.b16 %v3323
    %v4393 = vunpack.c.l.b16 %v3324
    %v4394 = vunpack.c.l.b16 %v3325
    %v4395 = vunpack.c.h.b16 %v3325
    %v4396 = vunpack.c.l.b16 %v3326
    %v4397 = vunpack.c.h.b16 %v3326
    %v4398 = vunpack.c.l.b16 %v3327
    %v4399 = vunpack.c.h.b16 %v3327
    %v4400 = vunpack.c.l.b16 %v3328
    %v4401 = vunpack.c.l.b16 %v3329
    %v4402 = vunpack.c.h.b16 %v3329
    %v4403 = vunpack.c.l.b16 %v3330
    %v4404 = vunpack.c.h.b16 %v3330
    %v4405 = vunpack.c.l.b16 %v3331
    %v4406 = vunpack.c.h.b16 %v3331
    %v4407 = vunpack.c.l.b16 %v3332
    %v4408 = vunpack.c.l.b16 %v3333
    %v4409 = vunpack.c.h.b16 %v3333
    %v4410 = vunpack.c.l.b16 %v3334
    %v4411 = vunpack.c.h.b16 %v3334
    %v4412 = vunpack.c.l.b16 %v3335
    %v4413 = vunpack.c.h.b16 %v3335
    %v4414 = vunpack.c.l.b16 %v3336
    %v4415 = vpack.c.b16 %v3736, %v3729
    %v4416 = vpack.c.b16 %v3737, %v3730
    %v4417 = vpack.c.b16 %v3738, %v3731
    %v4418 = vpack.c.b16 %v3739, %v3732
    %v4419 = vpack.c.b16 %v3740, %v3733
    %v4420 = vpack.c.b16 %v3741, %v3734
    %v4421 = vpack.c.b16 %v3742, %v3735
    %v4422 = vpack.c.b16 %v3750, %v3743
    %v4423 = vpack.c.b16 %v3751, %v3744
    %v4424 = vpack.c.b16 %v3752, %v3745
    %v4425 = vpack.c.b16 %v3753, %v3746
    %v4426 = vpack.c.b16 %v3754, %v3747
    %v4427 = vpack.c.b16 %v3755, %v3748
    %v4428 = vpack.c.b16 %v3756, %v3749
    %v4429 = vpack.c.b16 %v3764, %v3757
    %v4430 = vpack.c.b16 %v3765, %v3758
    %v4431 = vpack.c.b16 %v3766, %v3759
    %v4432 = vpack.c.b16 %v3767, %v3760
    %v4433 = vpack.c.b16 %v3768, %v3761
    %v4434 = vpack.c.b16 %v3769, %v3762
    %v4435 = vpack.c.b16 %v3770, %v3763
    %v4436 = vpack.c.b16 %v3778, %v3771
    %v4437 = vpack.c.b16 %v3779, %v3772
    %v4438 = vpack.c.b16 %v3780, %v3773
    %v4439 = vpack.c.b16 %v3781, %v3774
    %v4440 = vpack.c.b16 %v3782, %v3775
    %v4441 = vpack.c.b16 %v3783, %v3776
    %v4442 = vpack.c.b16 %v3784, %v3777
    %v4443 = vpack.c.b16 %v3792, %v3785
    %v4444 = vpack.c.b16 %v3793, %v3786
    %v4445 = vpack.c.b16 %v3794, %v3787
    %v4446 = vpack.c.b16 %v3795, %v3788
    %v4447 = vpack.c.b16 %v3796, %v3789
    %v4448 = vpack.c.b16 %v3797, %v3790
    %v4449 = vpack.c.b16 %v3798, %v3791
    %v4450 = vpack.c.b16 %v3806, %v3799
    %v4451 = vpack.c.b16 %v3807, %v3800
    %v4452 = vpack.c.b16 %v3808, %v3801
    %v4453 = vpack.c.b16 %v3809, %v3802
    %v4454 = vpack.c.b16 %v3810, %v3803
    %v4455 = vpack.c.b16 %v3811, %v3804
    %v4456 = vpack.c.b16 %v3812, %v3805
    %v4457 = vpack.c.b16 %v3820, %v3813
    %v4458 = vpack.c.b16 %v3821, %v3814
    %v4459 = vpack.c.b16 %v3822, %v3815
    %v4460 = vpack.c.b16 %v3823, %v3816
    %v4461 = vpack.c.b16 %v3824, %v3817
    %v4462 = vpack.c.b16 %v3825, %v3818
    %v4463 = vpack.c.b16 %v3826, %v3819
    %v4464 = vpack.c.b16 %v3834, %v3827
    %v4465 = vpack.c.b16 %v3835, %v3828
    %v4466 = vpack.c.b16 %v3836, %v3829
    %v4467 = vpack.c.b16 %v3837, %v3830
    %v4468 = vpack.c.b16 %v3838, %v3831
    %v4469 = vpack.c.b16 %v3839, %v3832
    %v4470 = vpack.c.b16 %v3840, %v3833
    %v4471 = vpack.c.b16 %v3848, %v3841
    %v4472 = vpack.c.b16 %v3849, %v3842
    %v4473 = vpack.c.b16 %v3850, %v3843
    %v4474 = vpack.c.b16 %v3851, %v3844
    %v4475 = vpack.c.b16 %v3852, %v3845
    %v4476 = vpack.c.b16 %v3853, %v3846
    %v4477 = vpack.c.b16 %v3854, %v3847
    %v4478 = vpack.c.b16 %v3862, %v3855
    %v4479 = vpack.c.b16 %v3863, %v3856
    %v4480 = vpack.c.b16 %v3864, %v3857
    %v4481 = vpack.c.b16 %v3865, %v3858
    %v4482 = vpack.c.b16 %v3866, %v3859
    %v4483 = vpack.c.b16 %v3867, %v3860
    %v4484 = vpack.c.b16 %v3868, %v3861
    %v4485 = vpack.c.b16 %v3876, %v3869
    %v4486 = vpack.c.b16 %v3877, %v3870
    %v4487 = vpack.c.b16 %v3878, %v3871
    %v4488 = vpack.c.b16 %v3879, %v3872
    %v4489 = vpack.c.b16 %v3880, %v3873
    %v4490 = vpack.c.b16 %v3881, %v3874
    %v4491 = vpack.c.b16 %v3882, %v3875
    %v4492 = vpack.c.b16 %v3890, %v3883
    %v4493 = vpack.c.b16 %v3891, %v3884
    %v4494 = vpack.c.b16 %v3892, %v3885
    %v4495 = vpack.c.b16 %v3893, %v3886
    %v4496 = vpack.c.b16 %v3894, %v3887
    %v4497 = vpack.c.b16 %v3895, %v3888
    %v4498 = vpack.c.b16 %v3896, %v3889
    %v4499 = vpack.c.b16 %v3904, %v3897
    %v4500 = vpack.c.b16 %v3905, %v3898
    %v4501 = vpack.c.b16 %v3906, %v3899
    %v4502 = vpack.c.b16 %v3907, %v3900
    %v4503 = vpack.c.b16 %v3908, %v3901
    %v4504 = vpack.c.b16 %v3909, %v3902
    %v4505 = vpack.c.b16 %v3910, %v3903
    %v4506 = vpack.c.b16 %v3918, %v3911
    %v4507 = vpack.c.b16 %v3919, %v3912
    %v4508 = vpack.c.b16 %v3920, %v3913
    %v4509 = vpack.c.b16 %v3921, %v3914
    %v4510 = vpack.c.b16 %v3922, %v3915
    %v4511 = vpack.c.b16 %v3923, %v3916
    %v4512 = vpack.c.b16 %v3924, %v3917
    %v4513 = vpack.c.b16 %v3932, %v3925
    %v4514 = vpack.c.b16 %v3933, %v3926
    %v4515 = vpack.c.b16 %v3934, %v3927
    %v4516 = vpack.c.b16 %v3935, %v3928
    %v4517 = vpack.c.b16 %v3936, %v3929
    %v4518 = vpack.c.b16 %v3937, %v3930
    %v4519 = vpack.c.b16 %v3938, %v3931
    %v4520 = vpack.c.b16 %v3946, %v3939
    %v4521 = vpack.c.b16 %v3947, %v3940
    %v4522 = vpack.c.b16 %v3948, %v3941
    %v4523 = vpack.c.b16 %v3949, %v3942
    %v4524 = vpack.c.b16 %v3950, %v3943
    %v4525 = vpack.c.b16 %v3951, %v3944
    %v4526 = vpack.c.b16 %v3952, %v3945
    %v4527 = vpack.c.b16 %v3960, %v3953
    %v4528 = vpack.c.b16 %v3961, %v3954
    %v4529 = vpack.c.b16 %v3962, %v3955
    %v4530 = vpack.c.b16 %v3963, %v3956
    %v4531 = vpack.c.b16 %v3964, %v3957
    %v4532 = vpack.c.b16 %v3965, %v3958
    %v4533 = vpack.c.b16 %v3966, %v3959
    %v4534 = vpack.c.b16 %v3974, %v3967
    %v4535 = vpack.c.b16 %v3975, %v3968
    %v4536 = vpack.c.b16 %v3976, %v3969
    %v4537 = vpack.c.b16 %v3977, %v3970
    %v4538 = vpack.c.b16 %v3978, %v3971
    %v4539 = vpack.c.b16 %v3979, %v3972
    %v4540 = vpack.c.b16 %v3980, %v3973
    %v4541 = vpack.c.b16 %v3988, %v3981
    %v4542 = vpack.c.b16 %v3989, %v3982
    %v4543 = vpack.c.b16 %v3990, %v3983
    %v4544 = vpack.c.b16 %v3991, %v3984
    %v4545 = vpack.c.b16 %v3992, %v3985
    %v4546 = vpack.c.b16 %v3993, %v3986
    %v4547 = vpack.c.b16 %v3994, %v3987
    %v4548 = vpack.c.b16 %v4002, %v3995
    %v4549 = vpack.c.b16 %v4003, %v3996
    %v4550 = vpack.c.b16 %v4004, %v3997
    %v4551 = vpack.c.b16 %v4005, %v3998
    %v4552 = vpack.c.b16 %v4006, %v3999
    %v4553 = vpack.c.b16 %v4007, %v4000
    %v4554 = vpack.c.b16 %v4008, %v4001
    %v4555 = vpack.c.b16 %v4016, %v4009
    %v4556 = vpack.c.b16 %v4017, %v4010
    %v4557 = vpack.c.b16 %v4018, %v4011
    %v4558 = vpack.c.b16 %v4019, %v4012
    %v4559 = vpack.c.b16 %v4020, %v4013
    %v4560 = vpack.c.b16 %v4021, %v4014
    %v4561 = vpack.c.b16 %v4022, %v4015
    %v4562 = vpack.c.b16 %v4030, %v4023
    %v4563 = vpack.c.b16 %v4031, %v4024
    %v4564 = vpack.c.b16 %v4032, %v4025
    %v4565 = vpack.c.b16 %v4033, %v4026
    %v4566 = vpack.c.b16 %v4034, %v4027
    %v4567 = vpack.c.b16 %v4035, %v4028
    %v4568 = vpack.c.b16 %v4036, %v4029
    %v4569 = vpack.c.b16 %v4044, %v4037
    %v4570 = vpack.c.b16 %v4045, %v4038
    %v4571 = vpack.c.b16 %v4046, %v4039
    %v4572 = vpack.c.b16 %v4047, %v4040
    %v4573 = vpack.c.b16 %v4048, %v4041
    %v4574 = vpack.c.b16 %v4049, %v4042
    %v4575 = vpack.c.b16 %v4050, %v4043
    %v4576 = vpack.c.b16 %v4058, %v4051
    %v4577 = vpack.c.b16 %v4059, %v4052
    %v4578 = vpack.c.b16 %v4060, %v4053
    %v4579 = vpack.c.b16 %v4061, %v4054
    %v4580 = vpack.c.b16 %v4062, %v4055
    %v4581 = vpack.c.b16 %v4063, %v4056
    %v4582 = vpack.c.b16 %v4064, %v4057
    %v4583 = vpack.c.b16 %v4072, %v4065
    %v4584 = vpack.c.b16 %v4073, %v4066
    %v4585 = vpack.c.b16 %v4074, %v4067
    %v4586 = vpack.c.b16 %v4075, %v4068
    %v4587 = vpack.c.b16 %v4076, %v4069
    %v4588 = vpack.c.b16 %v4077, %v4070
    %v4589 = vpack.c.b16 %v4078, %v4071
    %v4590 = vpack.c.b16 %v4086, %v4079
    %v4591 = vpack.c.b16 %v4087, %v4080
    %v4592 = vpack.c.b16 %v4088, %v4081
    %v4593 = vpack.c.b16 %v4089, %v4082
    %v4594 = vpack.c.b16 %v4090, %v4083
    %v4595 = vpack.c.b16 %v4091, %v4084
    %v4596 = vpack.c.b16 %v4092, %v4085
    %v4597 = vpack.c.b16 %v4100, %v4093
    %v4598 = vpack.c.b16 %v4101, %v4094
    %v4599 = vpack.c.b16 %v4102, %v4095
    %v4600 = vpack.c.b16 %v4103, %v4096
    %v4601 = vpack.c.b16 %v4104, %v4097
    %v4602 = vpack.c.b16 %v4105, %v4098
    %v4603 = vpack.c.b16 %v4106, %v4099
    %v4604 = vpack.c.b16 %v4114, %v4107
    %v4605 = vpack.c.b16 %v4115, %v4108
    %v4606 = vpack.c.b16 %v4116, %v4109
    %v4607 = vpack.c.b16 %v4117, %v4110
    %v4608 = vpack.c.b16 %v4118, %v4111
    %v4609 = vpack.c.b16 %v4119, %v4112
    %v4610 = vpack.c.b16 %v4120, %v4113
    %v4611 = vpack.c.b16 %v4128, %v4121
    %v4612 = vpack.c.b16 %v4129, %v4122
    %v4613 = vpack.c.b16 %v4130, %v4123
    %v4614 = vpack.c.b16 %v4131, %v4124
    %v4615 = vpack.c.b16 %v4132, %v4125
    %v4616 = vpack.c.b16 %v4133, %v4126
    %v4617 = vpack.c.b16 %v4134, %v4127
    %v4618 = vpack.c.b16 %v4142, %v4135
    %v4619 = vpack.c.b16 %v4143, %v4136
    %v4620 = vpack.c.b16 %v4144, %v4137
    %v4621 = vpack.c.b16 %v4145, %v4138
    %v4622 = vpack.c.b16 %v4146, %v4139
    %v4623 = vpack.c.b16 %v4147, %v4140
    %v4624 = vpack.c.b16 %v4148, %v4141
    %v4625 = vpack.c.b16 %v4156, %v4149
    %v4626 = vpack.c.b16 %v4157, %v4150
    %v4627 = vpack.c.b16 %v4158, %v4151
    %v4628 = vpack.c.b16 %v4159, %v4152
    %v4629 = vpack.c.b16 %v4160, %v4153
    %v4630 = vpack.c.b16 %v4161, %v4154
    %v4631 = vpack.c.b16 %v4162, %v4155
    %v4632 = vpack.c.b16 %v4170, %v4163
    %v4633 = vpack.c.b16 %v4171, %v4164
    %v4634 = vpack.c.b16 %v4172, %v4165
    %v4635 = vpack.c.b16 %v4173, %v4166
    %v4636 = vpack.c.b16 %v4174, %v4167
    %v4637 = vpack.c.b16 %v4175, %v4168
    %v4638 = vpack.c.b16 %v4176, %v4169
    %v4639 = vpack.c.b16 %v4184, %v4177
    %v4640 = vpack.c.b16 %v4185, %v4178
    %v4641 = vpack.c.b16 %v4186, %v4179
    %v4642 = vpack.c.b16 %v4187, %v4180
    %v4643 = vpack.c.b16 %v4188, %v4181
    %v4644 = vpack.c.b16 %v4189, %v4182
    %v4645 = vpack.c.b16 %v4190, %v4183
    %v4646 = vpack.c.b16 %v4198, %v4191
    %v4647 = vpack.c.b16 %v4199, %v4192
    %v4648 = vpack.c.b16 %v4200, %v4193
    %v4649 = vpack.c.b16 %v4201, %v4194
    %v4650 = vpack.c.b16 %v4202, %v4195
    %v4651 = vpack.c.b16 %v4203, %v4196
    %v4652 = vpack.c.b16 %v4204, %v4197
    %v4653 = vpack.c.b16 %v4212, %v4205
    %v4654 = vpack.c.b16 %v4213, %v4206
    %v4655 = vpack.c.b16 %v4214, %v4207
    %v4656 = vpack.c.b16 %v4215, %v4208
    %v4657 = vpack.c.b16 %v4216, %v4209
    %v4658 = vpack.c.b16 %v4217, %v4210
    %v4659 = vpack.c.b16 %v4218, %v4211
    %v4660 = vpack.c.b16 %v4226, %v4219
    %v4661 = vpack.c.b16 %v4227, %v4220
    %v4662 = vpack.c.b16 %v4228, %v4221
    %v4663 = vpack.c.b16 %v4229, %v4222
    %v4664 = vpack.c.b16 %v4230, %v4223
    %v4665 = vpack.c.b16 %v4231, %v4224
    %v4666 = vpack.c.b16 %v4232, %v4225
    %v4667 = vpack.c.b16 %v4240, %v4233
    %v4668 = vpack.c.b16 %v4241, %v4234
    %v4669 = vpack.c.b16 %v4242, %v4235
    %v4670 = vpack.c.b16 %v4243, %v4236
    %v4671 = vpack.c.b16 %v4244, %v4237
    %v4672 = vpack.c.b16 %v4245, %v4238
    %v4673 = vpack.c.b16 %v4246, %v4239
    %v4674 = vpack.c.b16 %v4254, %v4247
    %v4675 = vpack.c.b16 %v4255, %v4248
    %v4676 = vpack.c.b16 %v4256, %v4249
    %v4677 = vpack.c.b16 %v4257, %v4250
    %v4678 = vpack.c.b16 %v4258, %v4251
    %v4679 = vpack.c.b16 %v4259, %v4252
    %v4680 = vpack.c.b16 %v4260, %v4253
    %v4681 = vpack.c.b16 %v4268, %v4261
    %v4682 = vpack.c.b16 %v4269, %v4262
    %v4683 = vpack.c.b16 %v4270, %v4263
    %v4684 = vpack.c.b16 %v4271, %v4264
    %v4685 = vpack.c.b16 %v4272, %v4265
    %v4686 = vpack.c.b16 %v4273, %v4266
    %v4687 = vpack.c.b16 %v4274, %v4267
    %v4688 = vpack.c.b16 %v4282, %v4275
    %v4689 = vpack.c.b16 %v4283, %v4276
    %v4690 = vpack.c.b16 %v4284, %v4277
    %v4691 = vpack.c.b16 %v4285, %v4278
    %v4692 = vpack.c.b16 %v4286, %v4279
    %v4693 = vpack.c.b16 %v4287, %v4280
    %v4694 = vpack.c.b16 %v4288, %v4281
    %v4695 = vpack.c.b16 %v4296, %v4289
    %v4696 = vpack.c.b16 %v4297, %v4290
    %v4697 = vpack.c.b16 %v4298, %v4291
    %v4698 = vpack.c.b16 %v4299, %v4292
    %v4699 = vpack.c.b16 %v4300, %v4293
    %v4700 = vpack.c.b16 %v4301, %v4294
    %v4701 = vpack.c.b16 %v4302, %v4295
    %v4702 = vpack.c.b16 %v4310, %v4303
    %v4703 = vpack.c.b16 %v4311, %v4304
    %v4704 = vpack.c.b16 %v4312, %v4305
    %v4705 = vpack.c.b16 %v4313, %v4306
    %v4706 = vpack.c.b16 %v4314, %v4307
    %v4707 = vpack.c.b16 %v4315, %v4308
    %v4708 = vpack.c.b16 %v4316, %v4309
    %v4709 = vpack.c.b16 %v4324, %v4317
    %v4710 = vpack.c.b16 %v4325, %v4318
    %v4711 = vpack.c.b16 %v4326, %v4319
    %v4712 = vpack.c.b16 %v4327, %v4320
    %v4713 = vpack.c.b16 %v4328, %v4321
    %v4714 = vpack.c.b16 %v4329, %v4322
    %v4715 = vpack.c.b16 %v4330, %v4323
    %v4716 = vpack.c.b16 %v4338, %v4331
    %v4717 = vpack.c.b16 %v4339, %v4332
    %v4718 = vpack.c.b16 %v4340, %v4333
    %v4719 = vpack.c.b16 %v4341, %v4334
    %v4720 = vpack.c.b16 %v4342, %v4335
    %v4721 = vpack.c.b16 %v4343, %v4336
    %v4722 = vpack.c.b16 %v4344, %v4337
    %v4723 = vpack.c.b16 %v4352, %v4345
    %v4724 = vpack.c.b16 %v4353, %v4346
    %v4725 = vpack.c.b16 %v4354, %v4347
    %v4726 = vpack.c.b16 %v4355, %v4348
    %v4727 = vpack.c.b16 %v4356, %v4349
    %v4728 = vpack.c.b16 %v4357, %v4350
    %v4729 = vpack.c.b16 %v4358, %v4351
    %v4730 = vpack.c.b16 %v4366, %v4359
    %v4731 = vpack.c.b16 %v4367, %v4360
    %v4732 = vpack.c.b16 %v4368, %v4361
    %v4733 = vpack.c.b16 %v4369, %v4362
    %v4734 = vpack.c.b16 %v4370, %v4363
    %v4735 = vpack.c.b16 %v4371, %v4364
    %v4736 = vpack.c.b16 %v4372, %v4365
    %v4737 = vpack.c.b16 %v4380, %v4373
    %v4738 = vpack.c.b16 %v4381, %v4374
    %v4739 = vpack.c.b16 %v4382, %v4375
    %v4740 = vpack.c.b16 %v4383, %v4376
    %v4741 = vpack.c.b16 %v4384, %v4377
    %v4742 = vpack.c.b16 %v4385, %v4378
    %v4743 = vpack.c.b16 %v4386, %v4379
    %v4744 = vpack.c.b16 %v4394, %v4387
    %v4745 = vpack.c.b16 %v4395, %v4388
    %v4746 = vpack.c.b16 %v4396, %v4389
    %v4747 = vpack.c.b16 %v4397, %v4390
    %v4748 = vpack.c.b16 %v4398, %v4391
    %v4749 = vpack.c.b16 %v4399, %v4392
    %v4750 = vpack.c.b16 %v4400, %v4393
    %v4751 = vpack.c.b16 %v4408, %v4401
    %v4752 = vpack.c.b16 %v4409, %v4402
    %v4753 = vpack.c.b16 %v4410, %v4403
    %v4754 = vpack.c.b16 %v4411, %v4404
    %v4755 = vpack.c.b16 %v4412, %v4405
    %v4756 = vpack.c.b16 %v4413, %v4406
    %v4757 = vpack.c.b16 %v4414, %v4407
    %5101 = vmatpush.bf16.msra.mxu0 %v4464
    %5102 = vmatpush.bf16.msra.mxu0 %v4457
    %5103 = vmatpush.bf16.msra.mxu0 %v4450
    %5104 = vmatpush.bf16.msra.mxu0 %v4443
    %5105 = vmatpush.bf16.msra.mxu0 %v4436
    %5106 = vmatpush.bf16.msra.mxu0 %v4429
    %5107 = vmatpush.bf16.msra.mxu0 %v4422
    %5108 = vmatpush.bf16.msra.mxu0 %v4415
    %5109 = vmatmul.bf16.gmra.mxu0 %v477
    %v5110 = vpop.f32.mrf.mxu0
    %v5111 = vadd.f32 0.0, %v5110
    %v5112 = vpop.f32.mrf.mxu0
    %v5113 = vadd.f32 0.0, %v5112
    %5114 = vdwg.mxu0
    %5115 = vmatpush.bf16.msra.mxu0 %v4520
    %5116 = vmatpush.bf16.msra.mxu0 %v4513
    %5117 = vmatpush.bf16.msra.mxu0 %v4506
    %5118 = vmatpush.bf16.msra.mxu0 %v4499
    %5119 = vmatpush.bf16.msra.mxu0 %v4492
    %5120 = vmatpush.bf16.msra.mxu0 %v4485
    %5121 = vmatpush.bf16.msra.mxu0 %v4478
    %5122 = vmatpush.bf16.msra.mxu0 %v4471
    %5123 = vmatmul.bf16.gmra.mxu0 %v478
    %v5124 = vpop.f32.mrf.mxu0
    %v5125 = vadd.f32 %v5111, %v5124
    %v5126 = vpop.f32.mrf.mxu0
    %v5127 = vadd.f32 %v5113, %v5126
    %5128 = vdwg.mxu0
    %5129 = vmatpush.bf16.msra.mxu0 %v4576
    %5130 = vmatpush.bf16.msra.mxu0 %v4569
    %5131 = vmatpush.bf16.msra.mxu0 %v4562
    %5132 = vmatpush.bf16.msra.mxu0 %v4555
    %5133 = vmatpush.bf16.msra.mxu0 %v4548
    %5134 = vmatpush.bf16.msra.mxu0 %v4541
    %5135 = vmatpush.bf16.msra.mxu0 %v4534
    %5136 = vmatpush.bf16.msra.mxu0 %v4527
    %5137 = vmatmul.bf16.gmra.mxu0 %v479
    %v5138 = vpop.f32.mrf.mxu0
    %v5139 = vadd.f32 %v5125, %v5138
    %v5140 = vpop.f32.mrf.mxu0
    %v5141 = vadd.f32 %v5127, %v5140
    %5142 = vdwg.mxu0
    %5143 = vmatpush.bf16.msra.mxu0 %v4632
    %5144 = vmatpush.bf16.msra.mxu0 %v4625
    %5145 = vmatpush.bf16.msra.mxu0 %v4618
    %5146 = vmatpush.bf16.msra.mxu0 %v4611
    %5147 = vmatpush.bf16.msra.mxu0 %v4604
    %5148 = vmatpush.bf16.msra.mxu0 %v4597
    %5149 = vmatpush.bf16.msra.mxu0 %v4590
    %5150 = vmatpush.bf16.msra.mxu0 %v4583
    %5151 = vmatmul.bf16.gmra.mxu0 %v480
    %v5152 = vpop.f32.mrf.mxu0
    %v5153 = vadd.f32 %v5139, %v5152
    %v5154 = vpop.f32.mrf.mxu0
    %v5155 = vadd.f32 %v5141, %v5154
    %5156 = vdwg.mxu0
    %5157 = vmatpush.bf16.msra.mxu0 %v4688
    %5158 = vmatpush.bf16.msra.mxu0 %v4681
    %5159 = vmatpush.bf16.msra.mxu0 %v4674
    %5160 = vmatpush.bf16.msra.mxu0 %v4667
    %5161 = vmatpush.bf16.msra.mxu0 %v4660
    %5162 = vmatpush.bf16.msra.mxu0 %v4653
    %5163 = vmatpush.bf16.msra.mxu0 %v4646
    %5164 = vmatpush.bf16.msra.mxu0 %v4639
    %5165 = vmatmul.bf16.gmra.mxu0 %v481
    %v5166 = vpop.f32.mrf.mxu0
    %v5167 = vadd.f32 %v5153, %v5166
    %v5168 = vpop.f32.mrf.mxu0
    %v5169 = vadd.f32 %v5155, %v5168
    %5170 = vdwg.mxu0
    %5171 = vmatpush.bf16.msra.mxu0 %v4744
    %5172 = vmatpush.bf16.msra.mxu0 %v4737
    %5173 = vmatpush.bf16.msra.mxu0 %v4730
    %5174 = vmatpush.bf16.msra.mxu0 %v4723
    %5175 = vmatpush.bf16.msra.mxu0 %v4716
    %5176 = vmatpush.bf16.msra.mxu0 %v4709
    %5177 = vmatpush.bf16.msra.mxu0 %v4702
    %5178 = vmatpush.bf16.msra.mxu0 %v4695
    %5179 = vmatmul.bf16.gmra.mxu0 %v482
    %v5180 = vpop.f32.mrf.mxu0
    %v5181 = vadd.f32 %v5167, %v5180
    %v5182 = vpop.f32.mrf.mxu0
    %v5183 = vadd.f32 %v5169, %v5182
    %5184 = vdwg.mxu0
    %5185 = vmatpush.bf16.msra.mxu0 0
    %5186 = vmatpush.bf16.msra.mxu0 0
    %5187 = vmatpush.bf16.msra.mxu0 0
    %5188 = vmatpush.bf16.msra.mxu0 0
    %5189 = vmatpush.bf16.msra.mxu0 0
    %5190 = vmatpush.bf16.msra.mxu0 0
    %5191 = vmatpush.bf16.msra.mxu0 0
    %5192 = vmatpush.bf16.msra.mxu0 %v4751
    %5193 = vmatmul.bf16.gmra.mxu0 %v2256
    %v5194 = vpop.f32.mrf.mxu0
    %v5195 = vadd.f32 %v5181, %v5194
    %v5196 = vpop.f32.mrf.mxu0
    %v5197 = vadd.f32 %v5183, %v5196
    %5198 = vdwg.mxu0
    %5199 = vmatpush.bf16.msra.mxu0 %v4465
    %5200 = vmatpush.bf16.msra.mxu0 %v4458
    %5201 = vmatpush.bf16.msra.mxu0 %v4451
    %5202 = vmatpush.bf16.msra.mxu0 %v4444
    %5203 = vmatpush.bf16.msra.mxu0 %v4437
    %5204 = vmatpush.bf16.msra.mxu0 %v4430
    %5205 = vmatpush.bf16.msra.mxu0 %v4423
    %5206 = vmatpush.bf16.msra.mxu0 %v4416
    %5207 = vmatmul.bf16.gmra.mxu0 %v477
    %v5208 = vpop.f32.mrf.mxu0
    %v5209 = vadd.f32 0.0, %v5208
    %v5210 = vpop.f32.mrf.mxu0
    %v5211 = vadd.f32 0.0, %v5210
    %5212 = vdwg.mxu0
    %5213 = vmatpush.bf16.msra.mxu0 %v4521
    %5214 = vmatpush.bf16.msra.mxu0 %v4514
    %5215 = vmatpush.bf16.msra.mxu0 %v4507
    %5216 = vmatpush.bf16.msra.mxu0 %v4500
    %5217 = vmatpush.bf16.msra.mxu0 %v4493
    %5218 = vmatpush.bf16.msra.mxu0 %v4486
    %5219 = vmatpush.bf16.msra.mxu0 %v4479
    %5220 = vmatpush.bf16.msra.mxu0 %v4472
    %5221 = vmatmul.bf16.gmra.mxu0 %v478
    %v5222 = vpop.f32.mrf.mxu0
    %v5223 = vadd.f32 %v5209, %v5222
    %v5224 = vpop.f32.mrf.mxu0
    %v5225 = vadd.f32 %v5211, %v5224
    %5226 = vdwg.mxu0
    %5227 = vmatpush.bf16.msra.mxu0 %v4577
    %5228 = vmatpush.bf16.msra.mxu0 %v4570
    %5229 = vmatpush.bf16.msra.mxu0 %v4563
    %5230 = vmatpush.bf16.msra.mxu0 %v4556
    %5231 = vmatpush.bf16.msra.mxu0 %v4549
    %5232 = vmatpush.bf16.msra.mxu0 %v4542
    %5233 = vmatpush.bf16.msra.mxu0 %v4535
    %5234 = vmatpush.bf16.msra.mxu0 %v4528
    %5235 = vmatmul.bf16.gmra.mxu0 %v479
    %v5236 = vpop.f32.mrf.mxu0
    %v5237 = vadd.f32 %v5223, %v5236
    %v5238 = vpop.f32.mrf.mxu0
    %v5239 = vadd.f32 %v5225, %v5238
    %5240 = vdwg.mxu0
    %5241 = vmatpush.bf16.msra.mxu0 %v4633
    %5242 = vmatpush.bf16.msra.mxu0 %v4626
    %5243 = vmatpush.bf16.msra.mxu0 %v4619
    %5244 = vmatpush.bf16.msra.mxu0 %v4612
    %5245 = vmatpush.bf16.msra.mxu0 %v4605
    %5246 = vmatpush.bf16.msra.mxu0 %v4598
    %5247 = vmatpush.bf16.msra.mxu0 %v4591
    %5248 = vmatpush.bf16.msra.mxu0 %v4584
    %5249 = vmatmul.bf16.gmra.mxu0 %v480
    %v5250 = vpop.f32.mrf.mxu0
    %v5251 = vadd.f32 %v5237, %v5250
    %v5252 = vpop.f32.mrf.mxu0
    %v5253 = vadd.f32 %v5239, %v5252
    %5254 = vdwg.mxu0
    %5255 = vmatpush.bf16.msra.mxu0 %v4689
    %5256 = vmatpush.bf16.msra.mxu0 %v4682
    %5257 = vmatpush.bf16.msra.mxu0 %v4675
    %5258 = vmatpush.bf16.msra.mxu0 %v4668
    %5259 = vmatpush.bf16.msra.mxu0 %v4661
    %5260 = vmatpush.bf16.msra.mxu0 %v4654
    %5261 = vmatpush.bf16.msra.mxu0 %v4647
    %5262 = vmatpush.bf16.msra.mxu0 %v4640
    %5263 = vmatmul.bf16.gmra.mxu0 %v481
    %v5264 = vpop.f32.mrf.mxu0
    %v5265 = vadd.f32 %v5251, %v5264
    %v5266 = vpop.f32.mrf.mxu0
    %v5267 = vadd.f32 %v5253, %v5266
    %5268 = vdwg.mxu0
    %5269 = vmatpush.bf16.msra.mxu0 %v4745
    %5270 = vmatpush.bf16.msra.mxu0 %v4738
    %5271 = vmatpush.bf16.msra.mxu0 %v4731
    %5272 = vmatpush.bf16.msra.mxu0 %v4724
    %5273 = vmatpush.bf16.msra.mxu0 %v4717
    %5274 = vmatpush.bf16.msra.mxu0 %v4710
    %5275 = vmatpush.bf16.msra.mxu0 %v4703
    %5276 = vmatpush.bf16.msra.mxu0 %v4696
    %5277 = vmatmul.bf16.gmra.mxu0 %v482
    %v5278 = vpop.f32.mrf.mxu0
    %v5279 = vadd.f32 %v5265, %v5278
    %v5280 = vpop.f32.mrf.mxu0
    %v5281 = vadd.f32 %v5267, %v5280
    %5282 = vdwg.mxu0
    %5283 = vmatpush.bf16.msra.mxu0 0
    %5284 = vmatpush.bf16.msra.mxu0 0
    %5285 = vmatpush.bf16.msra.mxu0 0
    %5286 = vmatpush.bf16.msra.mxu0 0
    %5287 = vmatpush.bf16.msra.mxu0 0
    %5288 = vmatpush.bf16.msra.mxu0 0
    %5289 = vmatpush.bf16.msra.mxu0 0
    %5290 = vmatpush.bf16.msra.mxu0 %v4752
    %5291 = vmatmul.bf16.gmra.mxu0 %v2256
    %v5292 = vpop.f32.mrf.mxu0
    %v5293 = vadd.f32 %v5279, %v5292
    %v5294 = vpop.f32.mrf.mxu0
    %v5295 = vadd.f32 %v5281, %v5294
    %5296 = vdwg.mxu0
    %5297 = vmatpush.bf16.msra.mxu0 %v4466
    %5298 = vmatpush.bf16.msra.mxu0 %v4459
    %5299 = vmatpush.bf16.msra.mxu0 %v4452
    %5300 = vmatpush.bf16.msra.mxu0 %v4445
    %5301 = vmatpush.bf16.msra.mxu0 %v4438
    %5302 = vmatpush.bf16.msra.mxu0 %v4431
    %5303 = vmatpush.bf16.msra.mxu0 %v4424
    %5304 = vmatpush.bf16.msra.mxu0 %v4417
    %5305 = vmatmul.bf16.gmra.mxu0 %v477
    %v5306 = vpop.f32.mrf.mxu0
    %v5307 = vadd.f32 0.0, %v5306
    %v5308 = vpop.f32.mrf.mxu0
    %v5309 = vadd.f32 0.0, %v5308
    %5310 = vdwg.mxu0
    %5311 = vmatpush.bf16.msra.mxu0 %v4522
    %5312 = vmatpush.bf16.msra.mxu0 %v4515
    %5313 = vmatpush.bf16.msra.mxu0 %v4508
    %5314 = vmatpush.bf16.msra.mxu0 %v4501
    %5315 = vmatpush.bf16.msra.mxu0 %v4494
    %5316 = vmatpush.bf16.msra.mxu0 %v4487
    %5317 = vmatpush.bf16.msra.mxu0 %v4480
    %5318 = vmatpush.bf16.msra.mxu0 %v4473
    %5319 = vmatmul.bf16.gmra.mxu0 %v478
    %v5320 = vpop.f32.mrf.mxu0
    %v5321 = vadd.f32 %v5307, %v5320
    %v5322 = vpop.f32.mrf.mxu0
    %v5323 = vadd.f32 %v5309, %v5322
    %5324 = vdwg.mxu0
    %5325 = vmatpush.bf16.msra.mxu0 %v4578
    %5326 = vmatpush.bf16.msra.mxu0 %v4571
    %5327 = vmatpush.bf16.msra.mxu0 %v4564
    %5328 = vmatpush.bf16.msra.mxu0 %v4557
    %5329 = vmatpush.bf16.msra.mxu0 %v4550
    %5330 = vmatpush.bf16.msra.mxu0 %v4543
    %5331 = vmatpush.bf16.msra.mxu0 %v4536
    %5332 = vmatpush.bf16.msra.mxu0 %v4529
    %5333 = vmatmul.bf16.gmra.mxu0 %v479
    %v5334 = vpop.f32.mrf.mxu0
    %v5335 = vadd.f32 %v5321, %v5334
    %v5336 = vpop.f32.mrf.mxu0
    %v5337 = vadd.f32 %v5323, %v5336
    %5338 = vdwg.mxu0
    %5339 = vmatpush.bf16.msra.mxu0 %v4634
    %5340 = vmatpush.bf16.msra.mxu0 %v4627
    %5341 = vmatpush.bf16.msra.mxu0 %v4620
    %5342 = vmatpush.bf16.msra.mxu0 %v4613
    %5343 = vmatpush.bf16.msra.mxu0 %v4606
    %5344 = vmatpush.bf16.msra.mxu0 %v4599
    %5345 = vmatpush.bf16.msra.mxu0 %v4592
    %5346 = vmatpush.bf16.msra.mxu0 %v4585
    %5347 = vmatmul.bf16.gmra.mxu0 %v480
    %v5348 = vpop.f32.mrf.mxu0
    %v5349 = vadd.f32 %v5335, %v5348
    %v5350 = vpop.f32.mrf.mxu0
    %v5351 = vadd.f32 %v5337, %v5350
    %5352 = vdwg.mxu0
    %5353 = vmatpush.bf16.msra.mxu0 %v4690
    %5354 = vmatpush.bf16.msra.mxu0 %v4683
    %5355 = vmatpush.bf16.msra.mxu0 %v4676
    %5356 = vmatpush.bf16.msra.mxu0 %v4669
    %5357 = vmatpush.bf16.msra.mxu0 %v4662
    %5358 = vmatpush.bf16.msra.mxu0 %v4655
    %5359 = vmatpush.bf16.msra.mxu0 %v4648
    %5360 = vmatpush.bf16.msra.mxu0 %v4641
    %5361 = vmatmul.bf16.gmra.mxu0 %v481
    %v5362 = vpop.f32.mrf.mxu0
    %v5363 = vadd.f32 %v5349, %v5362
    %v5364 = vpop.f32.mrf.mxu0
    %v5365 = vadd.f32 %v5351, %v5364
    %5366 = vdwg.mxu0
    %5367 = vmatpush.bf16.msra.mxu0 %v4746
    %5368 = vmatpush.bf16.msra.mxu0 %v4739
    %5369 = vmatpush.bf16.msra.mxu0 %v4732
    %5370 = vmatpush.bf16.msra.mxu0 %v4725
    %5371 = vmatpush.bf16.msra.mxu0 %v4718
    %5372 = vmatpush.bf16.msra.mxu0 %v4711
    %5373 = vmatpush.bf16.msra.mxu0 %v4704
    %5374 = vmatpush.bf16.msra.mxu0 %v4697
    %5375 = vmatmul.bf16.gmra.mxu0 %v482
    %v5376 = vpop.f32.mrf.mxu0
    %v5377 = vadd.f32 %v5363, %v5376
    %v5378 = vpop.f32.mrf.mxu0
    %v5379 = vadd.f32 %v5365, %v5378
    %5380 = vdwg.mxu0
    %5381 = vmatpush.bf16.msra.mxu0 0
    %5382 = vmatpush.bf16.msra.mxu0 0
    %5383 = vmatpush.bf16.msra.mxu0 0
    %5384 = vmatpush.bf16.msra.mxu0 0
    %5385 = vmatpush.bf16.msra.mxu0 0
    %5386 = vmatpush.bf16.msra.mxu0 0
    %5387 = vmatpush.bf16.msra.mxu0 0
    %5388 = vmatpush.bf16.msra.mxu0 %v4753
    %5389 = vmatmul.bf16.gmra.mxu0 %v2256
    %v5390 = vpop.f32.mrf.mxu0
    %v5391 = vadd.f32 %v5377, %v5390
    %v5392 = vpop.f32.mrf.mxu0
    %v5393 = vadd.f32 %v5379, %v5392
    %5394 = vdwg.mxu0
    %5395 = vmatpush.bf16.msra.mxu0 %v4467
    %5396 = vmatpush.bf16.msra.mxu0 %v4460
    %5397 = vmatpush.bf16.msra.mxu0 %v4453
    %5398 = vmatpush.bf16.msra.mxu0 %v4446
    %5399 = vmatpush.bf16.msra.mxu0 %v4439
    %5400 = vmatpush.bf16.msra.mxu0 %v4432
    %5401 = vmatpush.bf16.msra.mxu0 %v4425
    %5402 = vmatpush.bf16.msra.mxu0 %v4418
    %5403 = vmatmul.bf16.gmra.mxu0 %v477
    %v5404 = vpop.f32.mrf.mxu0
    %v5405 = vadd.f32 0.0, %v5404
    %v5406 = vpop.f32.mrf.mxu0
    %v5407 = vadd.f32 0.0, %v5406
    %5408 = vdwg.mxu0
    %5409 = vmatpush.bf16.msra.mxu0 %v4523
    %5410 = vmatpush.bf16.msra.mxu0 %v4516
    %5411 = vmatpush.bf16.msra.mxu0 %v4509
    %5412 = vmatpush.bf16.msra.mxu0 %v4502
    %5413 = vmatpush.bf16.msra.mxu0 %v4495
    %5414 = vmatpush.bf16.msra.mxu0 %v4488
    %5415 = vmatpush.bf16.msra.mxu0 %v4481
    %5416 = vmatpush.bf16.msra.mxu0 %v4474
    %5417 = vmatmul.bf16.gmra.mxu0 %v478
    %v5418 = vpop.f32.mrf.mxu0
    %v5419 = vadd.f32 %v5405, %v5418
    %v5420 = vpop.f32.mrf.mxu0
    %v5421 = vadd.f32 %v5407, %v5420
    %5422 = vdwg.mxu0
    %5423 = vmatpush.bf16.msra.mxu0 %v4579
    %5424 = vmatpush.bf16.msra.mxu0 %v4572
    %5425 = vmatpush.bf16.msra.mxu0 %v4565
    %5426 = vmatpush.bf16.msra.mxu0 %v4558
    %5427 = vmatpush.bf16.msra.mxu0 %v4551
    %5428 = vmatpush.bf16.msra.mxu0 %v4544
    %5429 = vmatpush.bf16.msra.mxu0 %v4537
    %5430 = vmatpush.bf16.msra.mxu0 %v4530
    %5431 = vmatmul.bf16.gmra.mxu0 %v479
    %v5432 = vpop.f32.mrf.mxu0
    %v5433 = vadd.f32 %v5419, %v5432
    %v5434 = vpop.f32.mrf.mxu0
    %v5435 = vadd.f32 %v5421, %v5434
    %5436 = vdwg.mxu0
    %5437 = vmatpush.bf16.msra.mxu0 %v4635
    %5438 = vmatpush.bf16.msra.mxu0 %v4628
    %5439 = vmatpush.bf16.msra.mxu0 %v4621
    %5440 = vmatpush.bf16.msra.mxu0 %v4614
    %5441 = vmatpush.bf16.msra.mxu0 %v4607
    %5442 = vmatpush.bf16.msra.mxu0 %v4600
    %5443 = vmatpush.bf16.msra.mxu0 %v4593
    %5444 = vmatpush.bf16.msra.mxu0 %v4586
    %5445 = vmatmul.bf16.gmra.mxu0 %v480
    %v5446 = vpop.f32.mrf.mxu0
    %v5447 = vadd.f32 %v5433, %v5446
    %v5448 = vpop.f32.mrf.mxu0
    %v5449 = vadd.f32 %v5435, %v5448
    %5450 = vdwg.mxu0
    %5451 = vmatpush.bf16.msra.mxu0 %v4691
    %5452 = vmatpush.bf16.msra.mxu0 %v4684
    %5453 = vmatpush.bf16.msra.mxu0 %v4677
    %5454 = vmatpush.bf16.msra.mxu0 %v4670
    %5455 = vmatpush.bf16.msra.mxu0 %v4663
    %5456 = vmatpush.bf16.msra.mxu0 %v4656
    %5457 = vmatpush.bf16.msra.mxu0 %v4649
    %5458 = vmatpush.bf16.msra.mxu0 %v4642
    %5459 = vmatmul.bf16.gmra.mxu0 %v481
    %v5460 = vpop.f32.mrf.mxu0
    %v5461 = vadd.f32 %v5447, %v5460
    %v5462 = vpop.f32.mrf.mxu0
    %v5463 = vadd.f32 %v5449, %v5462
    %5464 = vdwg.mxu0
    %5465 = vmatpush.bf16.msra.mxu0 %v4747
    %5466 = vmatpush.bf16.msra.mxu0 %v4740
    %5467 = vmatpush.bf16.msra.mxu0 %v4733
    %5468 = vmatpush.bf16.msra.mxu0 %v4726
    %5469 = vmatpush.bf16.msra.mxu0 %v4719
    %5470 = vmatpush.bf16.msra.mxu0 %v4712
    %5471 = vmatpush.bf16.msra.mxu0 %v4705
    %5472 = vmatpush.bf16.msra.mxu0 %v4698
    %5473 = vmatmul.bf16.gmra.mxu0 %v482
    %v5474 = vpop.f32.mrf.mxu0
    %v5475 = vadd.f32 %v5461, %v5474
    %v5476 = vpop.f32.mrf.mxu0
    %v5477 = vadd.f32 %v5463, %v5476
    %5478 = vdwg.mxu0
    %5479 = vmatpush.bf16.msra.mxu0 0
    %5480 = vmatpush.bf16.msra.mxu0 0
    %5481 = vmatpush.bf16.msra.mxu0 0
    %5482 = vmatpush.bf16.msra.mxu0 0
    %5483 = vmatpush.bf16.msra.mxu0 0
    %5484 = vmatpush.bf16.msra.mxu0 0
    %5485 = vmatpush.bf16.msra.mxu0 0
    %5486 = vmatpush.bf16.msra.mxu0 %v4754
    %5487 = vmatmul.bf16.gmra.mxu0 %v2256
    %v5488 = vpop.f32.mrf.mxu0
    %v5489 = vadd.f32 %v5475, %v5488
    %v5490 = vpop.f32.mrf.mxu0
    %v5491 = vadd.f32 %v5477, %v5490
    %5492 = vdwg.mxu0
    %5493 = vmatpush.bf16.msra.mxu0 %v4468
    %5494 = vmatpush.bf16.msra.mxu0 %v4461
    %5495 = vmatpush.bf16.msra.mxu0 %v4454
    %5496 = vmatpush.bf16.msra.mxu0 %v4447
    %5497 = vmatpush.bf16.msra.mxu0 %v4440
    %5498 = vmatpush.bf16.msra.mxu0 %v4433
    %5499 = vmatpush.bf16.msra.mxu0 %v4426
    %5500 = vmatpush.bf16.msra.mxu0 %v4419
    %5501 = vmatmul.bf16.gmra.mxu0 %v477
    %v5502 = vpop.f32.mrf.mxu0
    %v5503 = vadd.f32 0.0, %v5502
    %v5504 = vpop.f32.mrf.mxu0
    %v5505 = vadd.f32 0.0, %v5504
    %5506 = vdwg.mxu0
    %5507 = vmatpush.bf16.msra.mxu0 %v4524
    %5508 = vmatpush.bf16.msra.mxu0 %v4517
    %5509 = vmatpush.bf16.msra.mxu0 %v4510
    %5510 = vmatpush.bf16.msra.mxu0 %v4503
    %5511 = vmatpush.bf16.msra.mxu0 %v4496
    %5512 = vmatpush.bf16.msra.mxu0 %v4489
    %5513 = vmatpush.bf16.msra.mxu0 %v4482
    %5514 = vmatpush.bf16.msra.mxu0 %v4475
    %5515 = vmatmul.bf16.gmra.mxu0 %v478
    %v5516 = vpop.f32.mrf.mxu0
    %v5517 = vadd.f32 %v5503, %v5516
    %v5518 = vpop.f32.mrf.mxu0
    %v5519 = vadd.f32 %v5505, %v5518
    %5520 = vdwg.mxu0
    %5521 = vmatpush.bf16.msra.mxu0 %v4580
    %5522 = vmatpush.bf16.msra.mxu0 %v4573
    %5523 = vmatpush.bf16.msra.mxu0 %v4566
    %5524 = vmatpush.bf16.msra.mxu0 %v4559
    %5525 = vmatpush.bf16.msra.mxu0 %v4552
    %5526 = vmatpush.bf16.msra.mxu0 %v4545
    %5527 = vmatpush.bf16.msra.mxu0 %v4538
    %5528 = vmatpush.bf16.msra.mxu0 %v4531
    %5529 = vmatmul.bf16.gmra.mxu0 %v479
    %v5530 = vpop.f32.mrf.mxu0
    %v5531 = vadd.f32 %v5517, %v5530
    %v5532 = vpop.f32.mrf.mxu0
    %v5533 = vadd.f32 %v5519, %v5532
    %5534 = vdwg.mxu0
    %5535 = vmatpush.bf16.msra.mxu0 %v4636
    %5536 = vmatpush.bf16.msra.mxu0 %v4629
    %5537 = vmatpush.bf16.msra.mxu0 %v4622
    %5538 = vmatpush.bf16.msra.mxu0 %v4615
    %5539 = vmatpush.bf16.msra.mxu0 %v4608
    %5540 = vmatpush.bf16.msra.mxu0 %v4601
    %5541 = vmatpush.bf16.msra.mxu0 %v4594
    %5542 = vmatpush.bf16.msra.mxu0 %v4587
    %5543 = vmatmul.bf16.gmra.mxu0 %v480
    %v5544 = vpop.f32.mrf.mxu0
    %v5545 = vadd.f32 %v5531, %v5544
    %v5546 = vpop.f32.mrf.mxu0
    %v5547 = vadd.f32 %v5533, %v5546
    %5548 = vdwg.mxu0
    %5549 = vmatpush.bf16.msra.mxu0 %v4692
    %5550 = vmatpush.bf16.msra.mxu0 %v4685
    %5551 = vmatpush.bf16.msra.mxu0 %v4678
    %5552 = vmatpush.bf16.msra.mxu0 %v4671
    %5553 = vmatpush.bf16.msra.mxu0 %v4664
    %5554 = vmatpush.bf16.msra.mxu0 %v4657
    %5555 = vmatpush.bf16.msra.mxu0 %v4650
    %5556 = vmatpush.bf16.msra.mxu0 %v4643
    %5557 = vmatmul.bf16.gmra.mxu0 %v481
    %v5558 = vpop.f32.mrf.mxu0
    %v5559 = vadd.f32 %v5545, %v5558
    %v5560 = vpop.f32.mrf.mxu0
    %v5561 = vadd.f32 %v5547, %v5560
    %5562 = vdwg.mxu0
    %5563 = vmatpush.bf16.msra.mxu0 %v4748
    %5564 = vmatpush.bf16.msra.mxu0 %v4741
    %5565 = vmatpush.bf16.msra.mxu0 %v4734
    %5566 = vmatpush.bf16.msra.mxu0 %v4727
    %5567 = vmatpush.bf16.msra.mxu0 %v4720
    %5568 = vmatpush.bf16.msra.mxu0 %v4713
    %5569 = vmatpush.bf16.msra.mxu0 %v4706
    %5570 = vmatpush.bf16.msra.mxu0 %v4699
    %5571 = vmatmul.bf16.gmra.mxu0 %v482
    %v5572 = vpop.f32.mrf.mxu0
    %v5573 = vadd.f32 %v5559, %v5572
    %v5574 = vpop.f32.mrf.mxu0
    %v5575 = vadd.f32 %v5561, %v5574
    %5576 = vdwg.mxu0
    %5577 = vmatpush.bf16.msra.mxu0 0
    %5578 = vmatpush.bf16.msra.mxu0 0
    %5579 = vmatpush.bf16.msra.mxu0 0
    %5580 = vmatpush.bf16.msra.mxu0 0
    %5581 = vmatpush.bf16.msra.mxu0 0
    %5582 = vmatpush.bf16.msra.mxu0 0
    %5583 = vmatpush.bf16.msra.mxu0 0
    %5584 = vmatpush.bf16.msra.mxu0 %v4755
    %5585 = vmatmul.bf16.gmra.mxu0 %v2256
    %v5586 = vpop.f32.mrf.mxu0
    %v5587 = vadd.f32 %v5573, %v5586
    %v5588 = vpop.f32.mrf.mxu0
    %v5589 = vadd.f32 %v5575, %v5588
    %5590 = vdwg.mxu0
    %5591 = vmatpush.bf16.msra.mxu0 %v4469
    %5592 = vmatpush.bf16.msra.mxu0 %v4462
    %5593 = vmatpush.bf16.msra.mxu0 %v4455
    %5594 = vmatpush.bf16.msra.mxu0 %v4448
    %5595 = vmatpush.bf16.msra.mxu0 %v4441
    %5596 = vmatpush.bf16.msra.mxu0 %v4434
    %5597 = vmatpush.bf16.msra.mxu0 %v4427
    %5598 = vmatpush.bf16.msra.mxu0 %v4420
    %5599 = vmatmul.bf16.gmra.mxu0 %v477
    %v5600 = vpop.f32.mrf.mxu0
    %v5601 = vadd.f32 0.0, %v5600
    %v5602 = vpop.f32.mrf.mxu0
    %v5603 = vadd.f32 0.0, %v5602
    %5604 = vdwg.mxu0
    %5605 = vmatpush.bf16.msra.mxu0 %v4525
    %5606 = vmatpush.bf16.msra.mxu0 %v4518
    %5607 = vmatpush.bf16.msra.mxu0 %v4511
    %5608 = vmatpush.bf16.msra.mxu0 %v4504
    %5609 = vmatpush.bf16.msra.mxu0 %v4497
    %5610 = vmatpush.bf16.msra.mxu0 %v4490
    %5611 = vmatpush.bf16.msra.mxu0 %v4483
    %5612 = vmatpush.bf16.msra.mxu0 %v4476
    %5613 = vmatmul.bf16.gmra.mxu0 %v478
    %v5614 = vpop.f32.mrf.mxu0
    %v5615 = vadd.f32 %v5601, %v5614
    %v5616 = vpop.f32.mrf.mxu0
    %v5617 = vadd.f32 %v5603, %v5616
    %5618 = vdwg.mxu0
    %5619 = vmatpush.bf16.msra.mxu0 %v4581
    %5620 = vmatpush.bf16.msra.mxu0 %v4574
    %5621 = vmatpush.bf16.msra.mxu0 %v4567
    %5622 = vmatpush.bf16.msra.mxu0 %v4560
    %5623 = vmatpush.bf16.msra.mxu0 %v4553
    %5624 = vmatpush.bf16.msra.mxu0 %v4546
    %5625 = vmatpush.bf16.msra.mxu0 %v4539
    %5626 = vmatpush.bf16.msra.mxu0 %v4532
    %5627 = vmatmul.bf16.gmra.mxu0 %v479
    %v5628 = vpop.f32.mrf.mxu0
    %v5629 = vadd.f32 %v5615, %v5628
    %v5630 = vpop.f32.mrf.mxu0
    %v5631 = vadd.f32 %v5617, %v5630
    %5632 = vdwg.mxu0
    %5633 = vmatpush.bf16.msra.mxu0 %v4637
    %5634 = vmatpush.bf16.msra.mxu0 %v4630
    %5635 = vmatpush.bf16.msra.mxu0 %v4623
    %5636 = vmatpush.bf16.msra.mxu0 %v4616
    %5637 = vmatpush.bf16.msra.mxu0 %v4609
    %5638 = vmatpush.bf16.msra.mxu0 %v4602
    %5639 = vmatpush.bf16.msra.mxu0 %v4595
    %5640 = vmatpush.bf16.msra.mxu0 %v4588
    %5641 = vmatmul.bf16.gmra.mxu0 %v480
    %v5642 = vpop.f32.mrf.mxu0
    %v5643 = vadd.f32 %v5629, %v5642
    %v5644 = vpop.f32.mrf.mxu0
    %v5645 = vadd.f32 %v5631, %v5644
    %5646 = vdwg.mxu0
    %5647 = vmatpush.bf16.msra.mxu0 %v4693
    %5648 = vmatpush.bf16.msra.mxu0 %v4686
    %5649 = vmatpush.bf16.msra.mxu0 %v4679
    %5650 = vmatpush.bf16.msra.mxu0 %v4672
    %5651 = vmatpush.bf16.msra.mxu0 %v4665
    %5652 = vmatpush.bf16.msra.mxu0 %v4658
    %5653 = vmatpush.bf16.msra.mxu0 %v4651
    %5654 = vmatpush.bf16.msra.mxu0 %v4644
    %5655 = vmatmul.bf16.gmra.mxu0 %v481
    %v5656 = vpop.f32.mrf.mxu0
    %v5657 = vadd.f32 %v5643, %v5656
    %v5658 = vpop.f32.mrf.mxu0
    %v5659 = vadd.f32 %v5645, %v5658
    %5660 = vdwg.mxu0
    %5661 = vmatpush.bf16.msra.mxu0 %v4749
    %5662 = vmatpush.bf16.msra.mxu0 %v4742
    %5663 = vmatpush.bf16.msra.mxu0 %v4735
    %5664 = vmatpush.bf16.msra.mxu0 %v4728
    %5665 = vmatpush.bf16.msra.mxu0 %v4721
    %5666 = vmatpush.bf16.msra.mxu0 %v4714
    %5667 = vmatpush.bf16.msra.mxu0 %v4707
    %5668 = vmatpush.bf16.msra.mxu0 %v4700
    %5669 = vmatmul.bf16.gmra.mxu0 %v482
    %v5670 = vpop.f32.mrf.mxu0
    %v5671 = vadd.f32 %v5657, %v5670
    %v5672 = vpop.f32.mrf.mxu0
    %v5673 = vadd.f32 %v5659, %v5672
    %5674 = vdwg.mxu0
    %5675 = vmatpush.bf16.msra.mxu0 0
    %5676 = vmatpush.bf16.msra.mxu0 0
    %5677 = vmatpush.bf16.msra.mxu0 0
    %5678 = vmatpush.bf16.msra.mxu0 0
    %5679 = vmatpush.bf16.msra.mxu0 0
    %5680 = vmatpush.bf16.msra.mxu0 0
    %5681 = vmatpush.bf16.msra.mxu0 0
    %5682 = vmatpush.bf16.msra.mxu0 %v4756
    %5683 = vmatmul.bf16.gmra.mxu0 %v2256
    %v5684 = vpop.f32.mrf.mxu0
    %v5685 = vadd.f32 %v5671, %v5684
    %v5686 = vpop.f32.mrf.mxu0
    %v5687 = vadd.f32 %v5673, %v5686
    %5688 = vdwg.mxu0
    %5689 = vmatpush.bf16.msra.mxu0 %v4470
    %5690 = vmatpush.bf16.msra.mxu0 %v4463
    %5691 = vmatpush.bf16.msra.mxu0 %v4456
    %5692 = vmatpush.bf16.msra.mxu0 %v4449
    %5693 = vmatpush.bf16.msra.mxu0 %v4442
    %5694 = vmatpush.bf16.msra.mxu0 %v4435
    %5695 = vmatpush.bf16.msra.mxu0 %v4428
    %5696 = vmatpush.bf16.msra.mxu0 %v4421
    %5697 = vmatmul.bf16.gmra.mxu0 %v477
    %v5698 = vpop.f32.mrf.mxu0
    %v5699 = vadd.f32 0.0, %v5698
    %v5700 = vpop.f32.mrf.mxu0
    %v5701 = vadd.f32 0.0, %v5700
    %5702 = vdwg.mxu0
    %5703 = vmatpush.bf16.msra.mxu0 %v4526
    %5704 = vmatpush.bf16.msra.mxu0 %v4519
    %5705 = vmatpush.bf16.msra.mxu0 %v4512
    %5706 = vmatpush.bf16.msra.mxu0 %v4505
    %5707 = vmatpush.bf16.msra.mxu0 %v4498
    %5708 = vmatpush.bf16.msra.mxu0 %v4491
    %5709 = vmatpush.bf16.msra.mxu0 %v4484
    %5710 = vmatpush.bf16.msra.mxu0 %v4477
    %5711 = vmatmul.bf16.gmra.mxu0 %v478
    %v5712 = vpop.f32.mrf.mxu0
    %v5713 = vadd.f32 %v5699, %v5712
    %v5714 = vpop.f32.mrf.mxu0
    %v5715 = vadd.f32 %v5701, %v5714
    %5716 = vdwg.mxu0
    %5717 = vmatpush.bf16.msra.mxu0 %v4582
    %5718 = vmatpush.bf16.msra.mxu0 %v4575
    %5719 = vmatpush.bf16.msra.mxu0 %v4568
    %5720 = vmatpush.bf16.msra.mxu0 %v4561
    %5721 = vmatpush.bf16.msra.mxu0 %v4554
    %5722 = vmatpush.bf16.msra.mxu0 %v4547
    %5723 = vmatpush.bf16.msra.mxu0 %v4540
    %5724 = vmatpush.bf16.msra.mxu0 %v4533
    %5725 = vmatmul.bf16.gmra.mxu0 %v479
    %v5726 = vpop.f32.mrf.mxu0
    %v5727 = vadd.f32 %v5713, %v5726
    %v5728 = vpop.f32.mrf.mxu0
    %v5729 = vadd.f32 %v5715, %v5728
    %5730 = vdwg.mxu0
    %5731 = vmatpush.bf16.msra.mxu0 %v4638
    %5732 = vmatpush.bf16.msra.mxu0 %v4631
    %5733 = vmatpush.bf16.msra.mxu0 %v4624
    %5734 = vmatpush.bf16.msra.mxu0 %v4617
    %5735 = vmatpush.bf16.msra.mxu0 %v4610
    %5736 = vmatpush.bf16.msra.mxu0 %v4603
    %5737 = vmatpush.bf16.msra.mxu0 %v4596
    %5738 = vmatpush.bf16.msra.mxu0 %v4589
    %5739 = vmatmul.bf16.gmra.mxu0 %v480
    %v5740 = vpop.f32.mrf.mxu0
    %v5741 = vadd.f32 %v5727, %v5740
    %v5742 = vpop.f32.mrf.mxu0
    %v5743 = vadd.f32 %v5729, %v5742
    %5744 = vdwg.mxu0
    %5745 = vmatpush.bf16.msra.mxu0 %v4694
    %5746 = vmatpush.bf16.msra.mxu0 %v4687
    %5747 = vmatpush.bf16.msra.mxu0 %v4680
    %5748 = vmatpush.bf16.msra.mxu0 %v4673
    %5749 = vmatpush.bf16.msra.mxu0 %v4666
    %5750 = vmatpush.bf16.msra.mxu0 %v4659
    %5751 = vmatpush.bf16.msra.mxu0 %v4652
    %5752 = vmatpush.bf16.msra.mxu0 %v4645
    %5753 = vmatmul.bf16.gmra.mxu0 %v481
    %v5754 = vpop.f32.mrf.mxu0
    %v5755 = vadd.f32 %v5741, %v5754
    %v5756 = vpop.f32.mrf.mxu0
    %v5757 = vadd.f32 %v5743, %v5756
    %5758 = vdwg.mxu0
    %5759 = vmatpush.bf16.msra.mxu0 %v4750
    %5760 = vmatpush.bf16.msra.mxu0 %v4743
    %5761 = vmatpush.bf16.msra.mxu0 %v4736
    %5762 = vmatpush.bf16.msra.mxu0 %v4729
    %5763 = vmatpush.bf16.msra.mxu0 %v4722
    %5764 = vmatpush.bf16.msra.mxu0 %v4715
    %5765 = vmatpush.bf16.msra.mxu0 %v4708
    %5766 = vmatpush.bf16.msra.mxu0 %v4701
    %5767 = vmatmul.bf16.gmra.mxu0 %v482
    %v5768 = vpop.f32.mrf.mxu0
    %v5769 = vadd.f32 %v5755, %v5768
    %v5770 = vpop.f32.mrf.mxu0
    %v5771 = vadd.f32 %v5757, %v5770
    %5772 = vdwg.mxu0
    %5773 = vmatpush.bf16.msra.mxu0 0
    %5774 = vmatpush.bf16.msra.mxu0 0
    %5775 = vmatpush.bf16.msra.mxu0 0
    %5776 = vmatpush.bf16.msra.mxu0 0
    %5777 = vmatpush.bf16.msra.mxu0 0
    %5778 = vmatpush.bf16.msra.mxu0 0
    %5779 = vmatpush.bf16.msra.mxu0 0
    %5780 = vmatpush.bf16.msra.mxu0 %v4757
    %5781 = vmatmul.bf16.gmra.mxu0 %v2256
    %v5782 = vpop.f32.mrf.mxu0
    %v5783 = vadd.f32 %v5769, %v5782
    %v5784 = vpop.f32.mrf.mxu0
    %v5785 = vadd.f32 %v5771, %v5784
    %5786 = vdwg.mxu0
    %v5787 = vmax.f32 %v2352, %v5195
    %v5788 = vmax.f32 %v2450, %v5293
    %v5789 = vmax.f32 %v2548, %v5391
    %v5790 = vmax.f32 %v2646, %v5489
    %v5791 = vmax.f32 %v2744, %v5587
    %v5792 = vmax.f32 %v2842, %v5685
    %v5793 = vmax.f32 %v2940, %v5783
    %v5794 = vmax.f32 %v2354, %v5197
    %v5795 = vmax.f32 %v2452, %v5295
    %v5796 = vmax.f32 %v2550, %v5393
    %v5797 = vmax.f32 %v2648, %v5491
    %v5798 = vmax.f32 %v2746, %v5589
    %v5799 = vmax.f32 %v2844, %v5687
    %v5800 = vmax.f32 %v2942, %v5785
    %s5801 = scalar_lea.vmem [#allocation2], 5488
    %v5802 = vld [vmem:[%s5801] sm:$0xff]
    %v5803 = vld [vmem:[%s5801 + $0x8] sm:$0xff]
    %v5804 = vld [vmem:[%s5801 + $0x10] sm:$0xff]
    %v5805 = vld [vmem:[%s5801 + $0x18] sm:$0xf]
    %v5806 = vld [vmem:[%s5801 + $0x1c] sm:$0xff]
    %v5807 = vld [vmem:[%s5801 + $0x24] sm:$0xff]
    %v5808 = vld [vmem:[%s5801 + $0x2c] sm:$0xff]
    %v5809 = vld [vmem:[%s5801 + $0x34] sm:$0xf]
    %v5810 = vld [vmem:[%s5801 + $0x38] sm:$0xff]
    %v5811 = vld [vmem:[%s5801 + $0x40] sm:$0xff]
    %v5812 = vld [vmem:[%s5801 + $0x48] sm:$0xff]
    %v5813 = vld [vmem:[%s5801 + $0x50] sm:$0xf]
    %v5814 = vld [vmem:[%s5801 + $0x54] sm:$0xff]
    %v5815 = vld [vmem:[%s5801 + $0x5c] sm:$0xff]
    %v5816 = vld [vmem:[%s5801 + $0x64] sm:$0xff]
    %v5817 = vld [vmem:[%s5801 + $0x6c] sm:$0xf]
    %v5818 = vld [vmem:[%s5801 + $0x70] sm:$0xff]
    %v5819 = vld [vmem:[%s5801 + $0x78] sm:$0xff]
    %v5820 = vld [vmem:[%s5801 + $0x80] sm:$0xff]
    %v5821 = vld [vmem:[%s5801 + $0x88] sm:$0xf]
    %v5822 = vld [vmem:[%s5801 + $0x8c] sm:$0xff]
    %v5823 = vld [vmem:[%s5801 + $0x94] sm:$0xff]
    %v5824 = vld [vmem:[%s5801 + $0x9c] sm:$0xff]
    %v5825 = vld [vmem:[%s5801 + $0xa4] sm:$0xf]
    %v5826 = vld [vmem:[%s5801 + $0xa8] sm:$0xff]
    %v5827 = vld [vmem:[%s5801 + $0xb0] sm:$0xff]
    %v5828 = vld [vmem:[%s5801 + $0xb8] sm:$0xff]
    %v5829 = vld [vmem:[%s5801 + $0xc0] sm:$0xf]
    %v5830 = vld [vmem:[%s5801 + $0xc4] sm:$0xff]
    %v5831 = vld [vmem:[%s5801 + $0xcc] sm:$0xff]
    %v5832 = vld [vmem:[%s5801 + $0xd4] sm:$0xff]
    %v5833 = vld [vmem:[%s5801 + $0xdc] sm:$0xf]
    %v5834 = vld [vmem:[%s5801 + $0xe0] sm:$0xff]
    %v5835 = vld [vmem:[%s5801 + $0xe8] sm:$0xff]
    %v5836 = vld [vmem:[%s5801 + $0xf0] sm:$0xff]
    %v5837 = vld [vmem:[%s5801 + $0xf8] sm:$0xf]
    %v5838 = vld [vmem:[%s5801 + $0xfc] sm:$0xff]
    %v5839 = vld [vmem:[%s5801 + $0x104] sm:$0xff]
    %v5840 = vld [vmem:[%s5801 + $0x10c] sm:$0xff]
    %v5841 = vld [vmem:[%s5801 + $0x114] sm:$0xf]
    %v5842 = vld [vmem:[%s5801 + $0x118] sm:$0xff]
    %v5843 = vld [vmem:[%s5801 + $0x120] sm:$0xff]
    %v5844 = vld [vmem:[%s5801 + $0x128] sm:$0xff]
    %v5845 = vld [vmem:[%s5801 + $0x130] sm:$0xf]
    %v5846 = vld [vmem:[%s5801 + $0x134] sm:$0xff]
    %v5847 = vld [vmem:[%s5801 + $0x13c] sm:$0xff]
    %v5848 = vld [vmem:[%s5801 + $0x144] sm:$0xff]
    %v5849 = vld [vmem:[%s5801 + $0x14c] sm:$0xf]
    %v5850 = vld [vmem:[%s5801 + $0x150] sm:$0xff]
    %v5851 = vld [vmem:[%s5801 + $0x158] sm:$0xff]
    %v5852 = vld [vmem:[%s5801 + $0x160] sm:$0xff]
    %v5853 = vld [vmem:[%s5801 + $0x168] sm:$0xf]
    %v5854 = vld [vmem:[%s5801 + $0x16c] sm:$0xff]
    %v5855 = vld [vmem:[%s5801 + $0x174] sm:$0xff]
    %v5856 = vld [vmem:[%s5801 + $0x17c] sm:$0xff]
    %v5857 = vld [vmem:[%s5801 + $0x184] sm:$0xf]
    %v5858 = vld [vmem:[%s5801 + $0x188] sm:$0xff]
    %v5859 = vld [vmem:[%s5801 + $0x190] sm:$0xff]
    %v5860 = vld [vmem:[%s5801 + $0x198] sm:$0xff]
    %v5861 = vld [vmem:[%s5801 + $0x1a0] sm:$0xf]
    %v5862 = vld [vmem:[%s5801 + $0x1a4] sm:$0xff]
    %v5863 = vld [vmem:[%s5801 + $0x1ac] sm:$0xff]
    %v5864 = vld [vmem:[%s5801 + $0x1b4] sm:$0xff]
    %v5865 = vld [vmem:[%s5801 + $0x1bc] sm:$0xf]
    %v5866 = vld [vmem:[%s5801 + $0x1c0] sm:$0xff]
    %v5867 = vld [vmem:[%s5801 + $0x1c8] sm:$0xff]
    %v5868 = vld [vmem:[%s5801 + $0x1d0] sm:$0xff]
    %v5869 = vld [vmem:[%s5801 + $0x1d8] sm:$0xf]
    %v5870 = vld [vmem:[%s5801 + $0x1dc] sm:$0xff]
    %v5871 = vld [vmem:[%s5801 + $0x1e4] sm:$0xff]
    %v5872 = vld [vmem:[%s5801 + $0x1ec] sm:$0xff]
    %v5873 = vld [vmem:[%s5801 + $0x1f4] sm:$0xf]
    %v5874 = vld [vmem:[%s5801 + $0x1f8] sm:$0xff]
    %v5875 = vld [vmem:[%s5801 + $0x200] sm:$0xff]
    %v5876 = vld [vmem:[%s5801 + $0x208] sm:$0xff]
    %v5877 = vld [vmem:[%s5801 + $0x210] sm:$0xf]
    %v5878 = vld [vmem:[%s5801 + $0x214] sm:$0xff]
    %v5879 = vld [vmem:[%s5801 + $0x21c] sm:$0xff]
    %v5880 = vld [vmem:[%s5801 + $0x224] sm:$0xff]
    %v5881 = vld [vmem:[%s5801 + $0x22c] sm:$0xf]
    %v5882 = vld [vmem:[%s5801 + $0x230] sm:$0xff]
    %v5883 = vld [vmem:[%s5801 + $0x238] sm:$0xff]
    %v5884 = vld [vmem:[%s5801 + $0x240] sm:$0xff]
    %v5885 = vld [vmem:[%s5801 + $0x248] sm:$0xf]
    %v5886 = vld [vmem:[%s5801 + $0x24c] sm:$0xff]
    %v5887 = vld [vmem:[%s5801 + $0x254] sm:$0xff]
    %v5888 = vld [vmem:[%s5801 + $0x25c] sm:$0xff]
    %v5889 = vld [vmem:[%s5801 + $0x264] sm:$0xf]
    %v5890 = vld [vmem:[%s5801 + $0x268] sm:$0xff]
    %v5891 = vld [vmem:[%s5801 + $0x270] sm:$0xff]
    %v5892 = vld [vmem:[%s5801 + $0x278] sm:$0xff]
    %v5893 = vld [vmem:[%s5801 + $0x280] sm:$0xf]
    %v5894 = vld [vmem:[%s5801 + $0x284] sm:$0xff]
    %v5895 = vld [vmem:[%s5801 + $0x28c] sm:$0xff]
    %v5896 = vld [vmem:[%s5801 + $0x294] sm:$0xff]
    %v5897 = vld [vmem:[%s5801 + $0x29c] sm:$0xf]
    %v5898 = vld [vmem:[%s5801 + $0x2a0] sm:$0xff]
    %v5899 = vld [vmem:[%s5801 + $0x2a8] sm:$0xff]
    %v5900 = vld [vmem:[%s5801 + $0x2b0] sm:$0xff]
    %v5901 = vld [vmem:[%s5801 + $0x2b8] sm:$0xf]
    %v5902 = vld [vmem:[%s5801 + $0x2bc] sm:$0xff]
    %v5903 = vld [vmem:[%s5801 + $0x2c4] sm:$0xff]
    %v5904 = vld [vmem:[%s5801 + $0x2cc] sm:$0xff]
    %v5905 = vld [vmem:[%s5801 + $0x2d4] sm:$0xf]
    %v5906 = vld [vmem:[%s5801 + $0x2d8] sm:$0xff]
    %v5907 = vld [vmem:[%s5801 + $0x2e0] sm:$0xff]
    %v5908 = vld [vmem:[%s5801 + $0x2e8] sm:$0xff]
    %v5909 = vld [vmem:[%s5801 + $0x2f0] sm:$0xf]
    %v5910 = vld [vmem:[%s5801 + $0x2f4] sm:$0xff]
    %v5911 = vld [vmem:[%s5801 + $0x2fc] sm:$0xff]
    %v5912 = vld [vmem:[%s5801 + $0x304] sm:$0xff]
    %v5913 = vld [vmem:[%s5801 + $0x30c] sm:$0xf]
    %v5914 = vld [vmem:[%s5801 + $0x310] sm:$0xff]
    %v5915 = vld [vmem:[%s5801 + $0x318] sm:$0xff]
    %v5916 = vld [vmem:[%s5801 + $0x320] sm:$0xff]
    %v5917 = vld [vmem:[%s5801 + $0x328] sm:$0xf]
    %v5918 = vld [vmem:[%s5801 + $0x32c] sm:$0xff]
    %v5919 = vld [vmem:[%s5801 + $0x334] sm:$0xff]
    %v5920 = vld [vmem:[%s5801 + $0x33c] sm:$0xff]
    %v5921 = vld [vmem:[%s5801 + $0x344] sm:$0xf]
    %v5922 = vld [vmem:[%s5801 + $0x348] sm:$0xff]
    %v5923 = vld [vmem:[%s5801 + $0x350] sm:$0xff]
    %v5924 = vld [vmem:[%s5801 + $0x358] sm:$0xff]
    %v5925 = vld [vmem:[%s5801 + $0x360] sm:$0xf]
    %v5926 = vld [vmem:[%s5801 + $0x364] sm:$0xff]
    %v5927 = vld [vmem:[%s5801 + $0x36c] sm:$0xff]
    %v5928 = vld [vmem:[%s5801 + $0x374] sm:$0xff]
    %v5929 = vld [vmem:[%s5801 + $0x37c] sm:$0xf]
    %v5930 = vld [vmem:[%s5801 + $0x380] sm:$0xff]
    %v5931 = vld [vmem:[%s5801 + $0x388] sm:$0xff]
    %v5932 = vld [vmem:[%s5801 + $0x390] sm:$0xff]
    %v5933 = vld [vmem:[%s5801 + $0x398] sm:$0xf]
    %v5934 = vld [vmem:[%s5801 + $0x39c] sm:$0xff]
    %v5935 = vld [vmem:[%s5801 + $0x3a4] sm:$0xff]
    %v5936 = vld [vmem:[%s5801 + $0x3ac] sm:$0xff]
    %v5937 = vld [vmem:[%s5801 + $0x3b4] sm:$0xf]
    %v5938 = vld [vmem:[%s5801 + $0x3b8] sm:$0xff]
    %v5939 = vld [vmem:[%s5801 + $0x3c0] sm:$0xff]
    %v5940 = vld [vmem:[%s5801 + $0x3c8] sm:$0xff]
    %v5941 = vld [vmem:[%s5801 + $0x3d0] sm:$0xf]
    %v5942 = vld [vmem:[%s5801 + $0x3d4] sm:$0xff]
    %v5943 = vld [vmem:[%s5801 + $0x3dc] sm:$0xff]
    %v5944 = vld [vmem:[%s5801 + $0x3e4] sm:$0xff]
    %v5945 = vld [vmem:[%s5801 + $0x3ec] sm:$0xf]
    %v5946 = vld [vmem:[%s5801 + $0x3f0] sm:$0xff]
    %v5947 = vld [vmem:[%s5801 + $0x3f8] sm:$0xff]
    %v5948 = vld [vmem:[%s5801 + $0x400] sm:$0xff]
    %v5949 = vld [vmem:[%s5801 + $0x408] sm:$0xf]
    %v5950 = vld [vmem:[%s5801 + $0x40c] sm:$0xff]
    %v5951 = vld [vmem:[%s5801 + $0x414] sm:$0xff]
    %v5952 = vld [vmem:[%s5801 + $0x41c] sm:$0xff]
    %v5953 = vld [vmem:[%s5801 + $0x424] sm:$0xf]
    %v5954 = vld [vmem:[%s5801 + $0x428] sm:$0xff]
    %v5955 = vld [vmem:[%s5801 + $0x430] sm:$0xff]
    %v5956 = vld [vmem:[%s5801 + $0x438] sm:$0xff]
    %v5957 = vld [vmem:[%s5801 + $0x440] sm:$0xf]
    %v5958 = vld [vmem:[%s5801 + $0x444] sm:$0xff]
    %v5959 = vld [vmem:[%s5801 + $0x44c] sm:$0xff]
    %v5960 = vld [vmem:[%s5801 + $0x454] sm:$0xff]
    %v5961 = vld [vmem:[%s5801 + $0x45c] sm:$0xf]
    %v5962 = vld [vmem:[%s5801 + $0x460] sm:$0xff]
    %v5963 = vld [vmem:[%s5801 + $0x468] sm:$0xff]
    %v5964 = vld [vmem:[%s5801 + $0x470] sm:$0xff]
    %v5965 = vld [vmem:[%s5801 + $0x478] sm:$0xf]
    %v5966 = vld [vmem:[%s5801 + $0x47c] sm:$0xff]
    %v5967 = vld [vmem:[%s5801 + $0x484] sm:$0xff]
    %v5968 = vld [vmem:[%s5801 + $0x48c] sm:$0xff]
    %v5969 = vld [vmem:[%s5801 + $0x494] sm:$0xf]
    %v5970 = vld [vmem:[%s5801 + $0x498] sm:$0xff]
    %v5971 = vld [vmem:[%s5801 + $0x4a0] sm:$0xff]
    %v5972 = vld [vmem:[%s5801 + $0x4a8] sm:$0xff]
    %v5973 = vld [vmem:[%s5801 + $0x4b0] sm:$0xf]
    %v5974 = vld [vmem:[%s5801 + $0x4b4] sm:$0xff]
    %v5975 = vld [vmem:[%s5801 + $0x4bc] sm:$0xff]
    %v5976 = vld [vmem:[%s5801 + $0x4c4] sm:$0xff]
    %v5977 = vld [vmem:[%s5801 + $0x4cc] sm:$0xf]
    %v5978 = vld [vmem:[%s5801 + $0x4d0] sm:$0xff]
    %v5979 = vld [vmem:[%s5801 + $0x4d8] sm:$0xff]
    %v5980 = vld [vmem:[%s5801 + $0x4e0] sm:$0xff]
    %v5981 = vld [vmem:[%s5801 + $0x4e8] sm:$0xf]
    %v5982 = vld [vmem:[%s5801 + $0x4ec] sm:$0xff]
    %v5983 = vld [vmem:[%s5801 + $0x4f4] sm:$0xff]
    %v5984 = vld [vmem:[%s5801 + $0x4fc] sm:$0xff]
    %v5985 = vld [vmem:[%s5801 + $0x504] sm:$0xf]
    %v5986 = vld [vmem:[%s5801 + $0x508] sm:$0xff]
    %v5987 = vld [vmem:[%s5801 + $0x510] sm:$0xff]
    %v5988 = vld [vmem:[%s5801 + $0x518] sm:$0xff]
    %v5989 = vld [vmem:[%s5801 + $0x520] sm:$0xf]
    %v5990 = vld [vmem:[%s5801 + $0x524] sm:$0xff]
    %v5991 = vld [vmem:[%s5801 + $0x52c] sm:$0xff]
    %v5992 = vld [vmem:[%s5801 + $0x534] sm:$0xff]
    %v5993 = vld [vmem:[%s5801 + $0x53c] sm:$0xf]
    %v5994 = vld [vmem:[%s5801 + $0x540] sm:$0xff]
    %v5995 = vld [vmem:[%s5801 + $0x548] sm:$0xff]
    %v5996 = vld [vmem:[%s5801 + $0x550] sm:$0xff]
    %v5997 = vld [vmem:[%s5801 + $0x558] sm:$0xf]
    %v5998 = vld [vmem:[%s5801 + $0x55c] sm:$0xff]
    %v5999 = vld [vmem:[%s5801 + $0x564] sm:$0xff]
    %v6000 = vld [vmem:[%s5801 + $0x56c] sm:$0xff]
    %v6001 = vld [vmem:[%s5801 + $0x574] sm:$0xf]
    %v6002 = vld [vmem:[%s5801 + $0x578] sm:$0xff]
    %v6003 = vld [vmem:[%s5801 + $0x580] sm:$0xff]
    %v6004 = vld [vmem:[%s5801 + $0x588] sm:$0xff]
    %v6005 = vld [vmem:[%s5801 + $0x590] sm:$0xf]
    %v6006 = vld [vmem:[%s5801 + $0x594] sm:$0xff]
    %v6007 = vld [vmem:[%s5801 + $0x59c] sm:$0xff]
    %v6008 = vld [vmem:[%s5801 + $0x5a4] sm:$0xff]
    %v6009 = vld [vmem:[%s5801 + $0x5ac] sm:$0xf]
    %v6010 = vld [vmem:[%s5801 + $0x5b0] sm:$0xff]
    %v6011 = vld [vmem:[%s5801 + $0x5b8] sm:$0xff]
    %v6012 = vld [vmem:[%s5801 + $0x5c0] sm:$0xff]
    %v6013 = vld [vmem:[%s5801 + $0x5c8] sm:$0xf]
    %v6014 = vld [vmem:[%s5801 + $0x5cc] sm:$0xff]
    %v6015 = vld [vmem:[%s5801 + $0x5d4] sm:$0xff]
    %v6016 = vld [vmem:[%s5801 + $0x5dc] sm:$0xff]
    %v6017 = vld [vmem:[%s5801 + $0x5e4] sm:$0xf]
    %v6018 = vld [vmem:[%s5801 + $0x5e8] sm:$0xff]
    %v6019 = vld [vmem:[%s5801 + $0x5f0] sm:$0xff]
    %v6020 = vld [vmem:[%s5801 + $0x5f8] sm:$0xff]
    %v6021 = vld [vmem:[%s5801 + $0x600] sm:$0xf]
    %v6022 = vld [vmem:[%s5801 + $0x604] sm:$0xff]
    %v6023 = vld [vmem:[%s5801 + $0x60c] sm:$0xff]
    %v6024 = vld [vmem:[%s5801 + $0x614] sm:$0xff]
    %v6025 = vld [vmem:[%s5801 + $0x61c] sm:$0xf]
    %v6026 = vld [vmem:[%s5801 + $0x620] sm:$0xff]
    %v6027 = vld [vmem:[%s5801 + $0x628] sm:$0xff]
    %v6028 = vld [vmem:[%s5801 + $0x630] sm:$0xff]
    %v6029 = vld [vmem:[%s5801 + $0x638] sm:$0xf]
    %v6030 = vld [vmem:[%s5801 + $0x63c] sm:$0xff]
    %v6031 = vld [vmem:[%s5801 + $0x644] sm:$0xff]
    %v6032 = vld [vmem:[%s5801 + $0x64c] sm:$0xff]
    %v6033 = vld [vmem:[%s5801 + $0x654] sm:$0xf]
    %v6034 = vld [vmem:[%s5801 + $0x658] sm:$0xff]
    %v6035 = vld [vmem:[%s5801 + $0x660] sm:$0xff]
    %v6036 = vld [vmem:[%s5801 + $0x668] sm:$0xff]
    %v6037 = vld [vmem:[%s5801 + $0x670] sm:$0xf]
    %v6038 = vld [vmem:[%s5801 + $0x674] sm:$0xff]
    %v6039 = vld [vmem:[%s5801 + $0x67c] sm:$0xff]
    %v6040 = vld [vmem:[%s5801 + $0x684] sm:$0xff]
    %v6041 = vld [vmem:[%s5801 + $0x68c] sm:$0xf]
    %v6042 = vld [vmem:[%s5801 + $0x690] sm:$0xff]
    %v6043 = vld [vmem:[%s5801 + $0x698] sm:$0xff]
    %v6044 = vld [vmem:[%s5801 + $0x6a0] sm:$0xff]
    %v6045 = vld [vmem:[%s5801 + $0x6a8] sm:$0xf]
    %v6046 = vld [vmem:[%s5801 + $0x6ac] sm:$0xff]
    %v6047 = vld [vmem:[%s5801 + $0x6b4] sm:$0xff]
    %v6048 = vld [vmem:[%s5801 + $0x6bc] sm:$0xff]
    %v6049 = vld [vmem:[%s5801 + $0x6c4] sm:$0xf]
    %v6050 = vld [vmem:[%s5801 + $0x6c8] sm:$0xff]
    %v6051 = vld [vmem:[%s5801 + $0x6d0] sm:$0xff]
    %v6052 = vld [vmem:[%s5801 + $0x6d8] sm:$0xff]
    %v6053 = vld [vmem:[%s5801 + $0x6e0] sm:$0xf]
    %v6054 = vld [vmem:[%s5801 + $0x6e4] sm:$0xff]
    %v6055 = vld [vmem:[%s5801 + $0x6ec] sm:$0xff]
    %v6056 = vld [vmem:[%s5801 + $0x6f4] sm:$0xff]
    %v6057 = vld [vmem:[%s5801 + $0x6fc] sm:$0xf]
    %v6058 = vld [vmem:[%s5801 + $0x700] sm:$0xff]
    %v6059 = vld [vmem:[%s5801 + $0x708] sm:$0xff]
    %v6060 = vld [vmem:[%s5801 + $0x710] sm:$0xff]
    %v6061 = vld [vmem:[%s5801 + $0x718] sm:$0xf]
    %v6062 = vld [vmem:[%s5801 + $0x71c] sm:$0xff]
    %v6063 = vld [vmem:[%s5801 + $0x724] sm:$0xff]
    %v6064 = vld [vmem:[%s5801 + $0x72c] sm:$0xff]
    %v6065 = vld [vmem:[%s5801 + $0x734] sm:$0xf]
    %v6066 = vld [vmem:[%s5801 + $0x738] sm:$0xff]
    %v6067 = vld [vmem:[%s5801 + $0x740] sm:$0xff]
    %v6068 = vld [vmem:[%s5801 + $0x748] sm:$0xff]
    %v6069 = vld [vmem:[%s5801 + $0x750] sm:$0xf]
    %v6070 = vld [vmem:[%s5801 + $0x754] sm:$0xff]
    %v6071 = vld [vmem:[%s5801 + $0x75c] sm:$0xff]
    %v6072 = vld [vmem:[%s5801 + $0x764] sm:$0xff]
    %v6073 = vld [vmem:[%s5801 + $0x76c] sm:$0xf]
    %v6074 = vld [vmem:[%s5801 + $0x770] sm:$0xff]
    %v6075 = vld [vmem:[%s5801 + $0x778] sm:$0xff]
    %v6076 = vld [vmem:[%s5801 + $0x780] sm:$0xff]
    %v6077 = vld [vmem:[%s5801 + $0x788] sm:$0xf]
    %v6078 = vld [vmem:[%s5801 + $0x78c] sm:$0xff]
    %v6079 = vld [vmem:[%s5801 + $0x794] sm:$0xff]
    %v6080 = vld [vmem:[%s5801 + $0x79c] sm:$0xff]
    %v6081 = vld [vmem:[%s5801 + $0x7a4] sm:$0xf]
    %v6082 = vld [vmem:[%s5801 + $0x7a8] sm:$0xff]
    %v6083 = vld [vmem:[%s5801 + $0x7b0] sm:$0xff]
    %v6084 = vld [vmem:[%s5801 + $0x7b8] sm:$0xff]
    %v6085 = vld [vmem:[%s5801 + $0x7c0] sm:$0xf]
    %v6086 = vld [vmem:[%s5801 + $0x7c4] sm:$0xff]
    %v6087 = vld [vmem:[%s5801 + $0x7cc] sm:$0xff]
    %v6088 = vld [vmem:[%s5801 + $0x7d4] sm:$0xff]
    %v6089 = vld [vmem:[%s5801 + $0x7dc] sm:$0xf]
    %v6090 = vld [vmem:[%s5801 + $0x7e0] sm:$0xff]
    %v6091 = vld [vmem:[%s5801 + $0x7e8] sm:$0xff]
    %v6092 = vld [vmem:[%s5801 + $0x7f0] sm:$0xff]
    %v6093 = vld [vmem:[%s5801 + $0x7f8] sm:$0xf]
    %v6094 = vld [vmem:[%s5801 + $0x7fc] sm:$0xff]
    %v6095 = vld [vmem:[%s5801 + $0x804] sm:$0xff]
    %v6096 = vld [vmem:[%s5801 + $0x80c] sm:$0xff]
    %v6097 = vld [vmem:[%s5801 + $0x814] sm:$0xf]
    %v6098 = vld [vmem:[%s5801 + $0x818] sm:$0xff]
    %v6099 = vld [vmem:[%s5801 + $0x820] sm:$0xff]
    %v6100 = vld [vmem:[%s5801 + $0x828] sm:$0xff]
    %v6101 = vld [vmem:[%s5801 + $0x830] sm:$0xf]
    %v6102 = vld [vmem:[%s5801 + $0x834] sm:$0xff]
    %v6103 = vld [vmem:[%s5801 + $0x83c] sm:$0xff]
    %v6104 = vld [vmem:[%s5801 + $0x844] sm:$0xff]
    %v6105 = vld [vmem:[%s5801 + $0x84c] sm:$0xf]
    %v6106 = vld [vmem:[%s5801 + $0x850] sm:$0xff]
    %v6107 = vld [vmem:[%s5801 + $0x858] sm:$0xff]
    %v6108 = vld [vmem:[%s5801 + $0x860] sm:$0xff]
    %v6109 = vld [vmem:[%s5801 + $0x868] sm:$0xf]
    %v6110 = vld [vmem:[%s5801 + $0x86c] sm:$0xff]
    %v6111 = vld [vmem:[%s5801 + $0x874] sm:$0xff]
    %v6112 = vld [vmem:[%s5801 + $0x87c] sm:$0xff]
    %v6113 = vld [vmem:[%s5801 + $0x884] sm:$0xf]
    %v6114 = vld [vmem:[%s5801 + $0x888] sm:$0xff]
    %v6115 = vld [vmem:[%s5801 + $0x890] sm:$0xff]
    %v6116 = vld [vmem:[%s5801 + $0x898] sm:$0xff]
    %v6117 = vld [vmem:[%s5801 + $0x8a0] sm:$0xf]
    %v6118 = vld [vmem:[%s5801 + $0x8a4] sm:$0xff]
    %v6119 = vld [vmem:[%s5801 + $0x8ac] sm:$0xff]
    %v6120 = vld [vmem:[%s5801 + $0x8b4] sm:$0xff]
    %v6121 = vld [vmem:[%s5801 + $0x8bc] sm:$0xf]
    %v6122 = vld [vmem:[%s5801 + $0x8c0] sm:$0xff]
    %v6123 = vld [vmem:[%s5801 + $0x8c8] sm:$0xff]
    %v6124 = vld [vmem:[%s5801 + $0x8d0] sm:$0xff]
    %v6125 = vld [vmem:[%s5801 + $0x8d8] sm:$0xf]
    %v6126 = vld [vmem:[%s5801 + $0x8dc] sm:$0xff]
    %v6127 = vld [vmem:[%s5801 + $0x8e4] sm:$0xff]
    %v6128 = vld [vmem:[%s5801 + $0x8ec] sm:$0xff]
    %v6129 = vld [vmem:[%s5801 + $0x8f4] sm:$0xf]
    %v6130 = vld [vmem:[%s5801 + $0x8f8] sm:$0xff]
    %v6131 = vld [vmem:[%s5801 + $0x900] sm:$0xff]
    %v6132 = vld [vmem:[%s5801 + $0x908] sm:$0xff]
    %v6133 = vld [vmem:[%s5801 + $0x910] sm:$0xf]
    %v6134 = vld [vmem:[%s5801 + $0x914] sm:$0xff]
    %v6135 = vld [vmem:[%s5801 + $0x91c] sm:$0xff]
    %v6136 = vld [vmem:[%s5801 + $0x924] sm:$0xff]
    %v6137 = vld [vmem:[%s5801 + $0x92c] sm:$0xf]
    %v6138 = vld [vmem:[%s5801 + $0x930] sm:$0xff]
    %v6139 = vld [vmem:[%s5801 + $0x938] sm:$0xff]
    %v6140 = vld [vmem:[%s5801 + $0x940] sm:$0xff]
    %v6141 = vld [vmem:[%s5801 + $0x948] sm:$0xf]
    %v6142 = vld [vmem:[%s5801 + $0x94c] sm:$0xff]
    %v6143 = vld [vmem:[%s5801 + $0x954] sm:$0xff]
    %v6144 = vld [vmem:[%s5801 + $0x95c] sm:$0xff]
    %v6145 = vld [vmem:[%s5801 + $0x964] sm:$0xf]
    %v6146 = vld [vmem:[%s5801 + $0x968] sm:$0xff]
    %v6147 = vld [vmem:[%s5801 + $0x970] sm:$0xff]
    %v6148 = vld [vmem:[%s5801 + $0x978] sm:$0xff]
    %v6149 = vld [vmem:[%s5801 + $0x980] sm:$0xf]
    %v6150 = vld [vmem:[%s5801 + $0x984] sm:$0xff]
    %v6151 = vld [vmem:[%s5801 + $0x98c] sm:$0xff]
    %v6152 = vld [vmem:[%s5801 + $0x994] sm:$0xff]
    %v6153 = vld [vmem:[%s5801 + $0x99c] sm:$0xf]
    %v6154 = vld [vmem:[%s5801 + $0x9a0] sm:$0xff]
    %v6155 = vld [vmem:[%s5801 + $0x9a8] sm:$0xff]
    %v6156 = vld [vmem:[%s5801 + $0x9b0] sm:$0xff]
    %v6157 = vld [vmem:[%s5801 + $0x9b8] sm:$0xf]
    %v6158 = vld [vmem:[%s5801 + $0x9bc] sm:$0xff]
    %v6159 = vld [vmem:[%s5801 + $0x9c4] sm:$0xff]
    %v6160 = vld [vmem:[%s5801 + $0x9cc] sm:$0xff]
    %v6161 = vld [vmem:[%s5801 + $0x9d4] sm:$0xf]
    %v6162 = vld [vmem:[%s5801 + $0x9d8] sm:$0xff]
    %v6163 = vld [vmem:[%s5801 + $0x9e0] sm:$0xff]
    %v6164 = vld [vmem:[%s5801 + $0x9e8] sm:$0xff]
    %v6165 = vld [vmem:[%s5801 + $0x9f0] sm:$0xf]
    %v6166 = vld [vmem:[%s5801 + $0x9f4] sm:$0xff]
    %v6167 = vld [vmem:[%s5801 + $0x9fc] sm:$0xff]
    %v6168 = vld [vmem:[%s5801 + $0xa04] sm:$0xff]
    %v6169 = vld [vmem:[%s5801 + $0xa0c] sm:$0xf]
    %v6170 = vld [vmem:[%s5801 + $0xa10] sm:$0xff]
    %v6171 = vld [vmem:[%s5801 + $0xa18] sm:$0xff]
    %v6172 = vld [vmem:[%s5801 + $0xa20] sm:$0xff]
    %v6173 = vld [vmem:[%s5801 + $0xa28] sm:$0xf]
    %v6174 = vld [vmem:[%s5801 + $0xa2c] sm:$0xff]
    %v6175 = vld [vmem:[%s5801 + $0xa34] sm:$0xff]
    %v6176 = vld [vmem:[%s5801 + $0xa3c] sm:$0xff]
    %v6177 = vld [vmem:[%s5801 + $0xa44] sm:$0xf]
    %v6178 = vld [vmem:[%s5801 + $0xa48] sm:$0xff]
    %v6179 = vld [vmem:[%s5801 + $0xa50] sm:$0xff]
    %v6180 = vld [vmem:[%s5801 + $0xa58] sm:$0xff]
    %v6181 = vld [vmem:[%s5801 + $0xa60] sm:$0xf]
    %v6182 = vld [vmem:[%s5801 + $0xa64] sm:$0xff]
    %v6183 = vld [vmem:[%s5801 + $0xa6c] sm:$0xff]
    %v6184 = vld [vmem:[%s5801 + $0xa74] sm:$0xff]
    %v6185 = vld [vmem:[%s5801 + $0xa7c] sm:$0xf]
    %v6186 = vld [vmem:[%s5801 + $0xa80] sm:$0xff]
    %v6187 = vld [vmem:[%s5801 + $0xa88] sm:$0xff]
    %v6188 = vld [vmem:[%s5801 + $0xa90] sm:$0xff]
    %v6189 = vld [vmem:[%s5801 + $0xa98] sm:$0xf]
    %v6190 = vld [vmem:[%s5801 + $0xa9c] sm:$0xff]
    %v6191 = vld [vmem:[%s5801 + $0xaa4] sm:$0xff]
    %v6192 = vld [vmem:[%s5801 + $0xaac] sm:$0xff]
    %v6193 = vld [vmem:[%s5801 + $0xab4] sm:$0xf]
    %v6586 = vunpack.c.l.b16 %v5802
    %v6587 = vunpack.c.h.b16 %v5802
    %v6588 = vunpack.c.l.b16 %v5803
    %v6589 = vunpack.c.h.b16 %v5803
    %v6590 = vunpack.c.l.b16 %v5804
    %v6591 = vunpack.c.h.b16 %v5804
    %v6592 = vunpack.c.l.b16 %v5805
    %v6593 = vunpack.c.l.b16 %v5806
    %v6594 = vunpack.c.h.b16 %v5806
    %v6595 = vunpack.c.l.b16 %v5807
    %v6596 = vunpack.c.h.b16 %v5807
    %v6597 = vunpack.c.l.b16 %v5808
    %v6598 = vunpack.c.h.b16 %v5808
    %v6599 = vunpack.c.l.b16 %v5809
    %v6600 = vunpack.c.l.b16 %v5810
    %v6601 = vunpack.c.h.b16 %v5810
    %v6602 = vunpack.c.l.b16 %v5811
    %v6603 = vunpack.c.h.b16 %v5811
    %v6604 = vunpack.c.l.b16 %v5812
    %v6605 = vunpack.c.h.b16 %v5812
    %v6606 = vunpack.c.l.b16 %v5813
    %v6607 = vunpack.c.l.b16 %v5814
    %v6608 = vunpack.c.h.b16 %v5814
    %v6609 = vunpack.c.l.b16 %v5815
    %v6610 = vunpack.c.h.b16 %v5815
    %v6611 = vunpack.c.l.b16 %v5816
    %v6612 = vunpack.c.h.b16 %v5816
    %v6613 = vunpack.c.l.b16 %v5817
    %v6614 = vunpack.c.l.b16 %v5818
    %v6615 = vunpack.c.h.b16 %v5818
    %v6616 = vunpack.c.l.b16 %v5819
    %v6617 = vunpack.c.h.b16 %v5819
    %v6618 = vunpack.c.l.b16 %v5820
    %v6619 = vunpack.c.h.b16 %v5820
    %v6620 = vunpack.c.l.b16 %v5821
    %v6621 = vunpack.c.l.b16 %v5822
    %v6622 = vunpack.c.h.b16 %v5822
    %v6623 = vunpack.c.l.b16 %v5823
    %v6624 = vunpack.c.h.b16 %v5823
    %v6625 = vunpack.c.l.b16 %v5824
    %v6626 = vunpack.c.h.b16 %v5824
    %v6627 = vunpack.c.l.b16 %v5825
    %v6628 = vunpack.c.l.b16 %v5826
    %v6629 = vunpack.c.h.b16 %v5826
    %v6630 = vunpack.c.l.b16 %v5827
    %v6631 = vunpack.c.h.b16 %v5827
    %v6632 = vunpack.c.l.b16 %v5828
    %v6633 = vunpack.c.h.b16 %v5828
    %v6634 = vunpack.c.l.b16 %v5829
    %v6635 = vunpack.c.l.b16 %v5830
    %v6636 = vunpack.c.h.b16 %v5830
    %v6637 = vunpack.c.l.b16 %v5831
    %v6638 = vunpack.c.h.b16 %v5831
    %v6639 = vunpack.c.l.b16 %v5832
    %v6640 = vunpack.c.h.b16 %v5832
    %v6641 = vunpack.c.l.b16 %v5833
    %v6642 = vunpack.c.l.b16 %v5834
    %v6643 = vunpack.c.h.b16 %v5834
    %v6644 = vunpack.c.l.b16 %v5835
    %v6645 = vunpack.c.h.b16 %v5835
    %v6646 = vunpack.c.l.b16 %v5836
    %v6647 = vunpack.c.h.b16 %v5836
    %v6648 = vunpack.c.l.b16 %v5837
    %v6649 = vunpack.c.l.b16 %v5838
    %v6650 = vunpack.c.h.b16 %v5838
    %v6651 = vunpack.c.l.b16 %v5839
    %v6652 = vunpack.c.h.b16 %v5839
    %v6653 = vunpack.c.l.b16 %v5840
    %v6654 = vunpack.c.h.b16 %v5840
    %v6655 = vunpack.c.l.b16 %v5841
    %v6656 = vunpack.c.l.b16 %v5842
    %v6657 = vunpack.c.h.b16 %v5842
    %v6658 = vunpack.c.l.b16 %v5843
    %v6659 = vunpack.c.h.b16 %v5843
    %v6660 = vunpack.c.l.b16 %v5844
    %v6661 = vunpack.c.h.b16 %v5844
    %v6662 = vunpack.c.l.b16 %v5845
    %v6663 = vunpack.c.l.b16 %v5846
    %v6664 = vunpack.c.h.b16 %v5846
    %v6665 = vunpack.c.l.b16 %v5847
    %v6666 = vunpack.c.h.b16 %v5847
    %v6667 = vunpack.c.l.b16 %v5848
    %v6668 = vunpack.c.h.b16 %v5848
    %v6669 = vunpack.c.l.b16 %v5849
    %v6670 = vunpack.c.l.b16 %v5850
    %v6671 = vunpack.c.h.b16 %v5850
    %v6672 = vunpack.c.l.b16 %v5851
    %v6673 = vunpack.c.h.b16 %v5851
    %v6674 = vunpack.c.l.b16 %v5852
    %v6675 = vunpack.c.h.b16 %v5852
    %v6676 = vunpack.c.l.b16 %v5853
    %v6677 = vunpack.c.l.b16 %v5854
    %v6678 = vunpack.c.h.b16 %v5854
    %v6679 = vunpack.c.l.b16 %v5855
    %v6680 = vunpack.c.h.b16 %v5855
    %v6681 = vunpack.c.l.b16 %v5856
    %v6682 = vunpack.c.h.b16 %v5856
    %v6683 = vunpack.c.l.b16 %v5857
    %v6684 = vunpack.c.l.b16 %v5858
    %v6685 = vunpack.c.h.b16 %v5858
    %v6686 = vunpack.c.l.b16 %v5859
    %v6687 = vunpack.c.h.b16 %v5859
    %v6688 = vunpack.c.l.b16 %v5860
    %v6689 = vunpack.c.h.b16 %v5860
    %v6690 = vunpack.c.l.b16 %v5861
    %v6691 = vunpack.c.l.b16 %v5862
    %v6692 = vunpack.c.h.b16 %v5862
    %v6693 = vunpack.c.l.b16 %v5863
    %v6694 = vunpack.c.h.b16 %v5863
    %v6695 = vunpack.c.l.b16 %v5864
    %v6696 = vunpack.c.h.b16 %v5864
    %v6697 = vunpack.c.l.b16 %v5865
    %v6698 = vunpack.c.l.b16 %v5866
    %v6699 = vunpack.c.h.b16 %v5866
    %v6700 = vunpack.c.l.b16 %v5867
    %v6701 = vunpack.c.h.b16 %v5867
    %v6702 = vunpack.c.l.b16 %v5868
    %v6703 = vunpack.c.h.b16 %v5868
    %v6704 = vunpack.c.l.b16 %v5869
    %v6705 = vunpack.c.l.b16 %v5870
    %v6706 = vunpack.c.h.b16 %v5870
    %v6707 = vunpack.c.l.b16 %v5871
    %v6708 = vunpack.c.h.b16 %v5871
    %v6709 = vunpack.c.l.b16 %v5872
    %v6710 = vunpack.c.h.b16 %v5872
    %v6711 = vunpack.c.l.b16 %v5873
    %v6712 = vunpack.c.l.b16 %v5874
    %v6713 = vunpack.c.h.b16 %v5874
    %v6714 = vunpack.c.l.b16 %v5875
    %v6715 = vunpack.c.h.b16 %v5875
    %v6716 = vunpack.c.l.b16 %v5876
    %v6717 = vunpack.c.h.b16 %v5876
    %v6718 = vunpack.c.l.b16 %v5877
    %v6719 = vunpack.c.l.b16 %v5878
    %v6720 = vunpack.c.h.b16 %v5878
    %v6721 = vunpack.c.l.b16 %v5879
    %v6722 = vunpack.c.h.b16 %v5879
    %v6723 = vunpack.c.l.b16 %v5880
    %v6724 = vunpack.c.h.b16 %v5880
    %v6725 = vunpack.c.l.b16 %v5881
    %v6726 = vunpack.c.l.b16 %v5882
    %v6727 = vunpack.c.h.b16 %v5882
    %v6728 = vunpack.c.l.b16 %v5883
    %v6729 = vunpack.c.h.b16 %v5883
    %v6730 = vunpack.c.l.b16 %v5884
    %v6731 = vunpack.c.h.b16 %v5884
    %v6732 = vunpack.c.l.b16 %v5885
    %v6733 = vunpack.c.l.b16 %v5886
    %v6734 = vunpack.c.h.b16 %v5886
    %v6735 = vunpack.c.l.b16 %v5887
    %v6736 = vunpack.c.h.b16 %v5887
    %v6737 = vunpack.c.l.b16 %v5888
    %v6738 = vunpack.c.h.b16 %v5888
    %v6739 = vunpack.c.l.b16 %v5889
    %v6740 = vunpack.c.l.b16 %v5890
    %v6741 = vunpack.c.h.b16 %v5890
    %v6742 = vunpack.c.l.b16 %v5891
    %v6743 = vunpack.c.h.b16 %v5891
    %v6744 = vunpack.c.l.b16 %v5892
    %v6745 = vunpack.c.h.b16 %v5892
    %v6746 = vunpack.c.l.b16 %v5893
    %v6747 = vunpack.c.l.b16 %v5894
    %v6748 = vunpack.c.h.b16 %v5894
    %v6749 = vunpack.c.l.b16 %v5895
    %v6750 = vunpack.c.h.b16 %v5895
    %v6751 = vunpack.c.l.b16 %v5896
    %v6752 = vunpack.c.h.b16 %v5896
    %v6753 = vunpack.c.l.b16 %v5897
    %v6754 = vunpack.c.l.b16 %v5898
    %v6755 = vunpack.c.h.b16 %v5898
    %v6756 = vunpack.c.l.b16 %v5899
    %v6757 = vunpack.c.h.b16 %v5899
    %v6758 = vunpack.c.l.b16 %v5900
    %v6759 = vunpack.c.h.b16 %v5900
    %v6760 = vunpack.c.l.b16 %v5901
    %v6761 = vunpack.c.l.b16 %v5902
    %v6762 = vunpack.c.h.b16 %v5902
    %v6763 = vunpack.c.l.b16 %v5903
    %v6764 = vunpack.c.h.b16 %v5903
    %v6765 = vunpack.c.l.b16 %v5904
    %v6766 = vunpack.c.h.b16 %v5904
    %v6767 = vunpack.c.l.b16 %v5905
    %v6768 = vunpack.c.l.b16 %v5906
    %v6769 = vunpack.c.h.b16 %v5906
    %v6770 = vunpack.c.l.b16 %v5907
    %v6771 = vunpack.c.h.b16 %v5907
    %v6772 = vunpack.c.l.b16 %v5908
    %v6773 = vunpack.c.h.b16 %v5908
    %v6774 = vunpack.c.l.b16 %v5909
    %v6775 = vunpack.c.l.b16 %v5910
    %v6776 = vunpack.c.h.b16 %v5910
    %v6777 = vunpack.c.l.b16 %v5911
    %v6778 = vunpack.c.h.b16 %v5911
    %v6779 = vunpack.c.l.b16 %v5912
    %v6780 = vunpack.c.h.b16 %v5912
    %v6781 = vunpack.c.l.b16 %v5913
    %v6782 = vunpack.c.l.b16 %v5914
    %v6783 = vunpack.c.h.b16 %v5914
    %v6784 = vunpack.c.l.b16 %v5915
    %v6785 = vunpack.c.h.b16 %v5915
    %v6786 = vunpack.c.l.b16 %v5916
    %v6787 = vunpack.c.h.b16 %v5916
    %v6788 = vunpack.c.l.b16 %v5917
    %v6789 = vunpack.c.l.b16 %v5918
    %v6790 = vunpack.c.h.b16 %v5918
    %v6791 = vunpack.c.l.b16 %v5919
    %v6792 = vunpack.c.h.b16 %v5919
    %v6793 = vunpack.c.l.b16 %v5920
    %v6794 = vunpack.c.h.b16 %v5920
    %v6795 = vunpack.c.l.b16 %v5921
    %v6796 = vunpack.c.l.b16 %v5922
    %v6797 = vunpack.c.h.b16 %v5922
    %v6798 = vunpack.c.l.b16 %v5923
    %v6799 = vunpack.c.h.b16 %v5923
    %v6800 = vunpack.c.l.b16 %v5924
    %v6801 = vunpack.c.h.b16 %v5924
    %v6802 = vunpack.c.l.b16 %v5925
    %v6803 = vunpack.c.l.b16 %v5926
    %v6804 = vunpack.c.h.b16 %v5926
    %v6805 = vunpack.c.l.b16 %v5927
    %v6806 = vunpack.c.h.b16 %v5927
    %v6807 = vunpack.c.l.b16 %v5928
    %v6808 = vunpack.c.h.b16 %v5928
    %v6809 = vunpack.c.l.b16 %v5929
    %v6810 = vunpack.c.l.b16 %v5930
    %v6811 = vunpack.c.h.b16 %v5930
    %v6812 = vunpack.c.l.b16 %v5931
    %v6813 = vunpack.c.h.b16 %v5931
    %v6814 = vunpack.c.l.b16 %v5932
    %v6815 = vunpack.c.h.b16 %v5932
    %v6816 = vunpack.c.l.b16 %v5933
    %v6817 = vunpack.c.l.b16 %v5934
    %v6818 = vunpack.c.h.b16 %v5934
    %v6819 = vunpack.c.l.b16 %v5935
    %v6820 = vunpack.c.h.b16 %v5935
    %v6821 = vunpack.c.l.b16 %v5936
    %v6822 = vunpack.c.h.b16 %v5936
    %v6823 = vunpack.c.l.b16 %v5937
    %v6824 = vunpack.c.l.b16 %v5938
    %v6825 = vunpack.c.h.b16 %v5938
    %v6826 = vunpack.c.l.b16 %v5939
    %v6827 = vunpack.c.h.b16 %v5939
    %v6828 = vunpack.c.l.b16 %v5940
    %v6829 = vunpack.c.h.b16 %v5940
    %v6830 = vunpack.c.l.b16 %v5941
    %v6831 = vunpack.c.l.b16 %v5942
    %v6832 = vunpack.c.h.b16 %v5942
    %v6833 = vunpack.c.l.b16 %v5943
    %v6834 = vunpack.c.h.b16 %v5943
    %v6835 = vunpack.c.l.b16 %v5944
    %v6836 = vunpack.c.h.b16 %v5944
    %v6837 = vunpack.c.l.b16 %v5945
    %v6838 = vunpack.c.l.b16 %v5946
    %v6839 = vunpack.c.h.b16 %v5946
    %v6840 = vunpack.c.l.b16 %v5947
    %v6841 = vunpack.c.h.b16 %v5947
    %v6842 = vunpack.c.l.b16 %v5948
    %v6843 = vunpack.c.h.b16 %v5948
    %v6844 = vunpack.c.l.b16 %v5949
    %v6845 = vunpack.c.l.b16 %v5950
    %v6846 = vunpack.c.h.b16 %v5950
    %v6847 = vunpack.c.l.b16 %v5951
    %v6848 = vunpack.c.h.b16 %v5951
    %v6849 = vunpack.c.l.b16 %v5952
    %v6850 = vunpack.c.h.b16 %v5952
    %v6851 = vunpack.c.l.b16 %v5953
    %v6852 = vunpack.c.l.b16 %v5954
    %v6853 = vunpack.c.h.b16 %v5954
    %v6854 = vunpack.c.l.b16 %v5955
    %v6855 = vunpack.c.h.b16 %v5955
    %v6856 = vunpack.c.l.b16 %v5956
    %v6857 = vunpack.c.h.b16 %v5956
    %v6858 = vunpack.c.l.b16 %v5957
    %v6859 = vunpack.c.l.b16 %v5958
    %v6860 = vunpack.c.h.b16 %v5958
    %v6861 = vunpack.c.l.b16 %v5959
    %v6862 = vunpack.c.h.b16 %v5959
    %v6863 = vunpack.c.l.b16 %v5960
    %v6864 = vunpack.c.h.b16 %v5960
    %v6865 = vunpack.c.l.b16 %v5961
    %v6866 = vunpack.c.l.b16 %v5962
    %v6867 = vunpack.c.h.b16 %v5962
    %v6868 = vunpack.c.l.b16 %v5963
    %v6869 = vunpack.c.h.b16 %v5963
    %v6870 = vunpack.c.l.b16 %v5964
    %v6871 = vunpack.c.h.b16 %v5964
    %v6872 = vunpack.c.l.b16 %v5965
    %v6873 = vunpack.c.l.b16 %v5966
    %v6874 = vunpack.c.h.b16 %v5966
    %v6875 = vunpack.c.l.b16 %v5967
    %v6876 = vunpack.c.h.b16 %v5967
    %v6877 = vunpack.c.l.b16 %v5968
    %v6878 = vunpack.c.h.b16 %v5968
    %v6879 = vunpack.c.l.b16 %v5969
    %v6880 = vunpack.c.l.b16 %v5970
    %v6881 = vunpack.c.h.b16 %v5970
    %v6882 = vunpack.c.l.b16 %v5971
    %v6883 = vunpack.c.h.b16 %v5971
    %v6884 = vunpack.c.l.b16 %v5972
    %v6885 = vunpack.c.h.b16 %v5972
    %v6886 = vunpack.c.l.b16 %v5973
    %v6887 = vunpack.c.l.b16 %v5974
    %v6888 = vunpack.c.h.b16 %v5974
    %v6889 = vunpack.c.l.b16 %v5975
    %v6890 = vunpack.c.h.b16 %v5975
    %v6891 = vunpack.c.l.b16 %v5976
    %v6892 = vunpack.c.h.b16 %v5976
    %v6893 = vunpack.c.l.b16 %v5977
    %v6894 = vunpack.c.l.b16 %v5978
    %v6895 = vunpack.c.h.b16 %v5978
    %v6896 = vunpack.c.l.b16 %v5979
    %v6897 = vunpack.c.h.b16 %v5979
    %v6898 = vunpack.c.l.b16 %v5980
    %v6899 = vunpack.c.h.b16 %v5980
    %v6900 = vunpack.c.l.b16 %v5981
    %v6901 = vunpack.c.l.b16 %v5982
    %v6902 = vunpack.c.h.b16 %v5982
    %v6903 = vunpack.c.l.b16 %v5983
    %v6904 = vunpack.c.h.b16 %v5983
    %v6905 = vunpack.c.l.b16 %v5984
    %v6906 = vunpack.c.h.b16 %v5984
    %v6907 = vunpack.c.l.b16 %v5985
    %v6908 = vunpack.c.l.b16 %v5986
    %v6909 = vunpack.c.h.b16 %v5986
    %v6910 = vunpack.c.l.b16 %v5987
    %v6911 = vunpack.c.h.b16 %v5987
    %v6912 = vunpack.c.l.b16 %v5988
    %v6913 = vunpack.c.h.b16 %v5988
    %v6914 = vunpack.c.l.b16 %v5989
    %v6915 = vunpack.c.l.b16 %v5990
    %v6916 = vunpack.c.h.b16 %v5990
    %v6917 = vunpack.c.l.b16 %v5991
    %v6918 = vunpack.c.h.b16 %v5991
    %v6919 = vunpack.c.l.b16 %v5992
    %v6920 = vunpack.c.h.b16 %v5992
    %v6921 = vunpack.c.l.b16 %v5993
    %v6922 = vunpack.c.l.b16 %v5994
    %v6923 = vunpack.c.h.b16 %v5994
    %v6924 = vunpack.c.l.b16 %v5995
    %v6925 = vunpack.c.h.b16 %v5995
    %v6926 = vunpack.c.l.b16 %v5996
    %v6927 = vunpack.c.h.b16 %v5996
    %v6928 = vunpack.c.l.b16 %v5997
    %v6929 = vunpack.c.l.b16 %v5998
    %v6930 = vunpack.c.h.b16 %v5998
    %v6931 = vunpack.c.l.b16 %v5999
    %v6932 = vunpack.c.h.b16 %v5999
    %v6933 = vunpack.c.l.b16 %v6000
    %v6934 = vunpack.c.h.b16 %v6000
    %v6935 = vunpack.c.l.b16 %v6001
    %v6936 = vunpack.c.l.b16 %v6002
    %v6937 = vunpack.c.h.b16 %v6002
    %v6938 = vunpack.c.l.b16 %v6003
    %v6939 = vunpack.c.h.b16 %v6003
    %v6940 = vunpack.c.l.b16 %v6004
    %v6941 = vunpack.c.h.b16 %v6004
    %v6942 = vunpack.c.l.b16 %v6005
    %v6943 = vunpack.c.l.b16 %v6006
    %v6944 = vunpack.c.h.b16 %v6006
    %v6945 = vunpack.c.l.b16 %v6007
    %v6946 = vunpack.c.h.b16 %v6007
    %v6947 = vunpack.c.l.b16 %v6008
    %v6948 = vunpack.c.h.b16 %v6008
    %v6949 = vunpack.c.l.b16 %v6009
    %v6950 = vunpack.c.l.b16 %v6010
    %v6951 = vunpack.c.h.b16 %v6010
    %v6952 = vunpack.c.l.b16 %v6011
    %v6953 = vunpack.c.h.b16 %v6011
    %v6954 = vunpack.c.l.b16 %v6012
    %v6955 = vunpack.c.h.b16 %v6012
    %v6956 = vunpack.c.l.b16 %v6013
    %v6957 = vunpack.c.l.b16 %v6014
    %v6958 = vunpack.c.h.b16 %v6014
    %v6959 = vunpack.c.l.b16 %v6015
    %v6960 = vunpack.c.h.b16 %v6015
    %v6961 = vunpack.c.l.b16 %v6016
    %v6962 = vunpack.c.h.b16 %v6016
    %v6963 = vunpack.c.l.b16 %v6017
    %v6964 = vunpack.c.l.b16 %v6018
    %v6965 = vunpack.c.h.b16 %v6018
    %v6966 = vunpack.c.l.b16 %v6019
    %v6967 = vunpack.c.h.b16 %v6019
    %v6968 = vunpack.c.l.b16 %v6020
    %v6969 = vunpack.c.h.b16 %v6020
    %v6970 = vunpack.c.l.b16 %v6021
    %v6971 = vunpack.c.l.b16 %v6022
    %v6972 = vunpack.c.h.b16 %v6022
    %v6973 = vunpack.c.l.b16 %v6023
    %v6974 = vunpack.c.h.b16 %v6023
    %v6975 = vunpack.c.l.b16 %v6024
    %v6976 = vunpack.c.h.b16 %v6024
    %v6977 = vunpack.c.l.b16 %v6025
    %v6978 = vunpack.c.l.b16 %v6026
    %v6979 = vunpack.c.h.b16 %v6026
    %v6980 = vunpack.c.l.b16 %v6027
    %v6981 = vunpack.c.h.b16 %v6027
    %v6982 = vunpack.c.l.b16 %v6028
    %v6983 = vunpack.c.h.b16 %v6028
    %v6984 = vunpack.c.l.b16 %v6029
    %v6985 = vunpack.c.l.b16 %v6030
    %v6986 = vunpack.c.h.b16 %v6030
    %v6987 = vunpack.c.l.b16 %v6031
    %v6988 = vunpack.c.h.b16 %v6031
    %v6989 = vunpack.c.l.b16 %v6032
    %v6990 = vunpack.c.h.b16 %v6032
    %v6991 = vunpack.c.l.b16 %v6033
    %v6992 = vunpack.c.l.b16 %v6034
    %v6993 = vunpack.c.h.b16 %v6034
    %v6994 = vunpack.c.l.b16 %v6035
    %v6995 = vunpack.c.h.b16 %v6035
    %v6996 = vunpack.c.l.b16 %v6036
    %v6997 = vunpack.c.h.b16 %v6036
    %v6998 = vunpack.c.l.b16 %v6037
    %v6999 = vunpack.c.l.b16 %v6038
    %v7000 = vunpack.c.h.b16 %v6038
    %v7001 = vunpack.c.l.b16 %v6039
    %v7002 = vunpack.c.h.b16 %v6039
    %v7003 = vunpack.c.l.b16 %v6040
    %v7004 = vunpack.c.h.b16 %v6040
    %v7005 = vunpack.c.l.b16 %v6041
    %v7006 = vunpack.c.l.b16 %v6042
    %v7007 = vunpack.c.h.b16 %v6042
    %v7008 = vunpack.c.l.b16 %v6043
    %v7009 = vunpack.c.h.b16 %v6043
    %v7010 = vunpack.c.l.b16 %v6044
    %v7011 = vunpack.c.h.b16 %v6044
    %v7012 = vunpack.c.l.b16 %v6045
    %v7013 = vunpack.c.l.b16 %v6046
    %v7014 = vunpack.c.h.b16 %v6046
    %v7015 = vunpack.c.l.b16 %v6047
    %v7016 = vunpack.c.h.b16 %v6047
    %v7017 = vunpack.c.l.b16 %v6048
    %v7018 = vunpack.c.h.b16 %v6048
    %v7019 = vunpack.c.l.b16 %v6049
    %v7020 = vunpack.c.l.b16 %v6050
    %v7021 = vunpack.c.h.b16 %v6050
    %v7022 = vunpack.c.l.b16 %v6051
    %v7023 = vunpack.c.h.b16 %v6051
    %v7024 = vunpack.c.l.b16 %v6052
    %v7025 = vunpack.c.h.b16 %v6052
    %v7026 = vunpack.c.l.b16 %v6053
    %v7027 = vunpack.c.l.b16 %v6054
    %v7028 = vunpack.c.h.b16 %v6054
    %v7029 = vunpack.c.l.b16 %v6055
    %v7030 = vunpack.c.h.b16 %v6055
    %v7031 = vunpack.c.l.b16 %v6056
    %v7032 = vunpack.c.h.b16 %v6056
    %v7033 = vunpack.c.l.b16 %v6057
    %v7034 = vunpack.c.l.b16 %v6058
    %v7035 = vunpack.c.h.b16 %v6058
    %v7036 = vunpack.c.l.b16 %v6059
    %v7037 = vunpack.c.h.b16 %v6059
    %v7038 = vunpack.c.l.b16 %v6060
    %v7039 = vunpack.c.h.b16 %v6060
    %v7040 = vunpack.c.l.b16 %v6061
    %v7041 = vunpack.c.l.b16 %v6062
    %v7042 = vunpack.c.h.b16 %v6062
    %v7043 = vunpack.c.l.b16 %v6063
    %v7044 = vunpack.c.h.b16 %v6063
    %v7045 = vunpack.c.l.b16 %v6064
    %v7046 = vunpack.c.h.b16 %v6064
    %v7047 = vunpack.c.l.b16 %v6065
    %v7048 = vunpack.c.l.b16 %v6066
    %v7049 = vunpack.c.h.b16 %v6066
    %v7050 = vunpack.c.l.b16 %v6067
    %v7051 = vunpack.c.h.b16 %v6067
    %v7052 = vunpack.c.l.b16 %v6068
    %v7053 = vunpack.c.h.b16 %v6068
    %v7054 = vunpack.c.l.b16 %v6069
    %v7055 = vunpack.c.l.b16 %v6070
    %v7056 = vunpack.c.h.b16 %v6070
    %v7057 = vunpack.c.l.b16 %v6071
    %v7058 = vunpack.c.h.b16 %v6071
    %v7059 = vunpack.c.l.b16 %v6072
    %v7060 = vunpack.c.h.b16 %v6072
    %v7061 = vunpack.c.l.b16 %v6073
    %v7062 = vunpack.c.l.b16 %v6074
    %v7063 = vunpack.c.h.b16 %v6074
    %v7064 = vunpack.c.l.b16 %v6075
    %v7065 = vunpack.c.h.b16 %v6075
    %v7066 = vunpack.c.l.b16 %v6076
    %v7067 = vunpack.c.h.b16 %v6076
    %v7068 = vunpack.c.l.b16 %v6077
    %v7069 = vunpack.c.l.b16 %v6078
    %v7070 = vunpack.c.h.b16 %v6078
    %v7071 = vunpack.c.l.b16 %v6079
    %v7072 = vunpack.c.h.b16 %v6079
    %v7073 = vunpack.c.l.b16 %v6080
    %v7074 = vunpack.c.h.b16 %v6080
    %v7075 = vunpack.c.l.b16 %v6081
    %v7076 = vunpack.c.l.b16 %v6082
    %v7077 = vunpack.c.h.b16 %v6082
    %v7078 = vunpack.c.l.b16 %v6083
    %v7079 = vunpack.c.h.b16 %v6083
    %v7080 = vunpack.c.l.b16 %v6084
    %v7081 = vunpack.c.h.b16 %v6084
    %v7082 = vunpack.c.l.b16 %v6085
    %v7083 = vunpack.c.l.b16 %v6086
    %v7084 = vunpack.c.h.b16 %v6086
    %v7085 = vunpack.c.l.b16 %v6087
    %v7086 = vunpack.c.h.b16 %v6087
    %v7087 = vunpack.c.l.b16 %v6088
    %v7088 = vunpack.c.h.b16 %v6088
    %v7089 = vunpack.c.l.b16 %v6089
    %v7090 = vunpack.c.l.b16 %v6090
    %v7091 = vunpack.c.h.b16 %v6090
    %v7092 = vunpack.c.l.b16 %v6091
    %v7093 = vunpack.c.h.b16 %v6091
    %v7094 = vunpack.c.l.b16 %v6092
    %v7095 = vunpack.c.h.b16 %v6092
    %v7096 = vunpack.c.l.b16 %v6093
    %v7097 = vunpack.c.l.b16 %v6094
    %v7098 = vunpack.c.h.b16 %v6094
    %v7099 = vunpack.c.l.b16 %v6095
    %v7100 = vunpack.c.h.b16 %v6095
    %v7101 = vunpack.c.l.b16 %v6096
    %v7102 = vunpack.c.h.b16 %v6096
    %v7103 = vunpack.c.l.b16 %v6097
    %v7104 = vunpack.c.l.b16 %v6098
    %v7105 = vunpack.c.h.b16 %v6098
    %v7106 = vunpack.c.l.b16 %v6099
    %v7107 = vunpack.c.h.b16 %v6099
    %v7108 = vunpack.c.l.b16 %v6100
    %v7109 = vunpack.c.h.b16 %v6100
    %v7110 = vunpack.c.l.b16 %v6101
    %v7111 = vunpack.c.l.b16 %v6102
    %v7112 = vunpack.c.h.b16 %v6102
    %v7113 = vunpack.c.l.b16 %v6103
    %v7114 = vunpack.c.h.b16 %v6103
    %v7115 = vunpack.c.l.b16 %v6104
    %v7116 = vunpack.c.h.b16 %v6104
    %v7117 = vunpack.c.l.b16 %v6105
    %v7118 = vunpack.c.l.b16 %v6106
    %v7119 = vunpack.c.h.b16 %v6106
    %v7120 = vunpack.c.l.b16 %v6107
    %v7121 = vunpack.c.h.b16 %v6107
    %v7122 = vunpack.c.l.b16 %v6108
    %v7123 = vunpack.c.h.b16 %v6108
    %v7124 = vunpack.c.l.b16 %v6109
    %v7125 = vunpack.c.l.b16 %v6110
    %v7126 = vunpack.c.h.b16 %v6110
    %v7127 = vunpack.c.l.b16 %v6111
    %v7128 = vunpack.c.h.b16 %v6111
    %v7129 = vunpack.c.l.b16 %v6112
    %v7130 = vunpack.c.h.b16 %v6112
    %v7131 = vunpack.c.l.b16 %v6113
    %v7132 = vunpack.c.l.b16 %v6114
    %v7133 = vunpack.c.h.b16 %v6114
    %v7134 = vunpack.c.l.b16 %v6115
    %v7135 = vunpack.c.h.b16 %v6115
    %v7136 = vunpack.c.l.b16 %v6116
    %v7137 = vunpack.c.h.b16 %v6116
    %v7138 = vunpack.c.l.b16 %v6117
    %v7139 = vunpack.c.l.b16 %v6118
    %v7140 = vunpack.c.h.b16 %v6118
    %v7141 = vunpack.c.l.b16 %v6119
    %v7142 = vunpack.c.h.b16 %v6119
    %v7143 = vunpack.c.l.b16 %v6120
    %v7144 = vunpack.c.h.b16 %v6120
    %v7145 = vunpack.c.l.b16 %v6121
    %v7146 = vunpack.c.l.b16 %v6122
    %v7147 = vunpack.c.h.b16 %v6122
    %v7148 = vunpack.c.l.b16 %v6123
    %v7149 = vunpack.c.h.b16 %v6123
    %v7150 = vunpack.c.l.b16 %v6124
    %v7151 = vunpack.c.h.b16 %v6124
    %v7152 = vunpack.c.l.b16 %v6125
    %v7153 = vunpack.c.l.b16 %v6126
    %v7154 = vunpack.c.h.b16 %v6126
    %v7155 = vunpack.c.l.b16 %v6127
    %v7156 = vunpack.c.h.b16 %v6127
    %v7157 = vunpack.c.l.b16 %v6128
    %v7158 = vunpack.c.h.b16 %v6128
    %v7159 = vunpack.c.l.b16 %v6129
    %v7160 = vunpack.c.l.b16 %v6130
    %v7161 = vunpack.c.h.b16 %v6130
    %v7162 = vunpack.c.l.b16 %v6131
    %v7163 = vunpack.c.h.b16 %v6131
    %v7164 = vunpack.c.l.b16 %v6132
    %v7165 = vunpack.c.h.b16 %v6132
    %v7166 = vunpack.c.l.b16 %v6133
    %v7167 = vunpack.c.l.b16 %v6134
    %v7168 = vunpack.c.h.b16 %v6134
    %v7169 = vunpack.c.l.b16 %v6135
    %v7170 = vunpack.c.h.b16 %v6135
    %v7171 = vunpack.c.l.b16 %v6136
    %v7172 = vunpack.c.h.b16 %v6136
    %v7173 = vunpack.c.l.b16 %v6137
    %v7174 = vunpack.c.l.b16 %v6138
    %v7175 = vunpack.c.h.b16 %v6138
    %v7176 = vunpack.c.l.b16 %v6139
    %v7177 = vunpack.c.h.b16 %v6139
    %v7178 = vunpack.c.l.b16 %v6140
    %v7179 = vunpack.c.h.b16 %v6140
    %v7180 = vunpack.c.l.b16 %v6141
    %v7181 = vunpack.c.l.b16 %v6142
    %v7182 = vunpack.c.h.b16 %v6142
    %v7183 = vunpack.c.l.b16 %v6143
    %v7184 = vunpack.c.h.b16 %v6143
    %v7185 = vunpack.c.l.b16 %v6144
    %v7186 = vunpack.c.h.b16 %v6144
    %v7187 = vunpack.c.l.b16 %v6145
    %v7188 = vunpack.c.l.b16 %v6146
    %v7189 = vunpack.c.h.b16 %v6146
    %v7190 = vunpack.c.l.b16 %v6147
    %v7191 = vunpack.c.h.b16 %v6147
    %v7192 = vunpack.c.l.b16 %v6148
    %v7193 = vunpack.c.h.b16 %v6148
    %v7194 = vunpack.c.l.b16 %v6149
    %v7195 = vunpack.c.l.b16 %v6150
    %v7196 = vunpack.c.h.b16 %v6150
    %v7197 = vunpack.c.l.b16 %v6151
    %v7198 = vunpack.c.h.b16 %v6151
    %v7199 = vunpack.c.l.b16 %v6152
    %v7200 = vunpack.c.h.b16 %v6152
    %v7201 = vunpack.c.l.b16 %v6153
    %v7202 = vunpack.c.l.b16 %v6154
    %v7203 = vunpack.c.h.b16 %v6154
    %v7204 = vunpack.c.l.b16 %v6155
    %v7205 = vunpack.c.h.b16 %v6155
    %v7206 = vunpack.c.l.b16 %v6156
    %v7207 = vunpack.c.h.b16 %v6156
    %v7208 = vunpack.c.l.b16 %v6157
    %v7209 = vunpack.c.l.b16 %v6158
    %v7210 = vunpack.c.h.b16 %v6158
    %v7211 = vunpack.c.l.b16 %v6159
    %v7212 = vunpack.c.h.b16 %v6159
    %v7213 = vunpack.c.l.b16 %v6160
    %v7214 = vunpack.c.h.b16 %v6160
    %v7215 = vunpack.c.l.b16 %v6161
    %v7216 = vunpack.c.l.b16 %v6162
    %v7217 = vunpack.c.h.b16 %v6162
    %v7218 = vunpack.c.l.b16 %v6163
    %v7219 = vunpack.c.h.b16 %v6163
    %v7220 = vunpack.c.l.b16 %v6164
    %v7221 = vunpack.c.h.b16 %v6164
    %v7222 = vunpack.c.l.b16 %v6165
    %v7223 = vunpack.c.l.b16 %v6166
    %v7224 = vunpack.c.h.b16 %v6166
    %v7225 = vunpack.c.l.b16 %v6167
    %v7226 = vunpack.c.h.b16 %v6167
    %v7227 = vunpack.c.l.b16 %v6168
    %v7228 = vunpack.c.h.b16 %v6168
    %v7229 = vunpack.c.l.b16 %v6169
    %v7230 = vunpack.c.l.b16 %v6170
    %v7231 = vunpack.c.h.b16 %v6170
    %v7232 = vunpack.c.l.b16 %v6171
    %v7233 = vunpack.c.h.b16 %v6171
    %v7234 = vunpack.c.l.b16 %v6172
    %v7235 = vunpack.c.h.b16 %v6172
    %v7236 = vunpack.c.l.b16 %v6173
    %v7237 = vunpack.c.l.b16 %v6174
    %v7238 = vunpack.c.h.b16 %v6174
    %v7239 = vunpack.c.l.b16 %v6175
    %v7240 = vunpack.c.h.b16 %v6175
    %v7241 = vunpack.c.l.b16 %v6176
    %v7242 = vunpack.c.h.b16 %v6176
    %v7243 = vunpack.c.l.b16 %v6177
    %v7244 = vunpack.c.l.b16 %v6178
    %v7245 = vunpack.c.h.b16 %v6178
    %v7246 = vunpack.c.l.b16 %v6179
    %v7247 = vunpack.c.h.b16 %v6179
    %v7248 = vunpack.c.l.b16 %v6180
    %v7249 = vunpack.c.h.b16 %v6180
    %v7250 = vunpack.c.l.b16 %v6181
    %v7251 = vunpack.c.l.b16 %v6182
    %v7252 = vunpack.c.h.b16 %v6182
    %v7253 = vunpack.c.l.b16 %v6183
    %v7254 = vunpack.c.h.b16 %v6183
    %v7255 = vunpack.c.l.b16 %v6184
    %v7256 = vunpack.c.h.b16 %v6184
    %v7257 = vunpack.c.l.b16 %v6185
    %v7258 = vunpack.c.l.b16 %v6186
    %v7259 = vunpack.c.h.b16 %v6186
    %v7260 = vunpack.c.l.b16 %v6187
    %v7261 = vunpack.c.h.b16 %v6187
    %v7262 = vunpack.c.l.b16 %v6188
    %v7263 = vunpack.c.h.b16 %v6188
    %v7264 = vunpack.c.l.b16 %v6189
    %v7265 = vunpack.c.l.b16 %v6190
    %v7266 = vunpack.c.h.b16 %v6190
    %v7267 = vunpack.c.l.b16 %v6191
    %v7268 = vunpack.c.h.b16 %v6191
    %v7269 = vunpack.c.l.b16 %v6192
    %v7270 = vunpack.c.h.b16 %v6192
    %v7271 = vunpack.c.l.b16 %v6193
    %v7272 = vpack.c.b16 %v6593, %v6586
    %v7273 = vpack.c.b16 %v6594, %v6587
    %v7274 = vpack.c.b16 %v6595, %v6588
    %v7275 = vpack.c.b16 %v6596, %v6589
    %v7276 = vpack.c.b16 %v6597, %v6590
    %v7277 = vpack.c.b16 %v6598, %v6591
    %v7278 = vpack.c.b16 %v6599, %v6592
    %v7279 = vpack.c.b16 %v6607, %v6600
    %v7280 = vpack.c.b16 %v6608, %v6601
    %v7281 = vpack.c.b16 %v6609, %v6602
    %v7282 = vpack.c.b16 %v6610, %v6603
    %v7283 = vpack.c.b16 %v6611, %v6604
    %v7284 = vpack.c.b16 %v6612, %v6605
    %v7285 = vpack.c.b16 %v6613, %v6606
    %v7286 = vpack.c.b16 %v6621, %v6614
    %v7287 = vpack.c.b16 %v6622, %v6615
    %v7288 = vpack.c.b16 %v6623, %v6616
    %v7289 = vpack.c.b16 %v6624, %v6617
    %v7290 = vpack.c.b16 %v6625, %v6618
    %v7291 = vpack.c.b16 %v6626, %v6619
    %v7292 = vpack.c.b16 %v6627, %v6620
    %v7293 = vpack.c.b16 %v6635, %v6628
    %v7294 = vpack.c.b16 %v6636, %v6629
    %v7295 = vpack.c.b16 %v6637, %v6630
    %v7296 = vpack.c.b16 %v6638, %v6631
    %v7297 = vpack.c.b16 %v6639, %v6632
    %v7298 = vpack.c.b16 %v6640, %v6633
    %v7299 = vpack.c.b16 %v6641, %v6634
    %v7300 = vpack.c.b16 %v6649, %v6642
    %v7301 = vpack.c.b16 %v6650, %v6643
    %v7302 = vpack.c.b16 %v6651, %v6644
    %v7303 = vpack.c.b16 %v6652, %v6645
    %v7304 = vpack.c.b16 %v6653, %v6646
    %v7305 = vpack.c.b16 %v6654, %v6647
    %v7306 = vpack.c.b16 %v6655, %v6648
    %v7307 = vpack.c.b16 %v6663, %v6656
    %v7308 = vpack.c.b16 %v6664, %v6657
    %v7309 = vpack.c.b16 %v6665, %v6658
    %v7310 = vpack.c.b16 %v6666, %v6659
    %v7311 = vpack.c.b16 %v6667, %v6660
    %v7312 = vpack.c.b16 %v6668, %v6661
    %v7313 = vpack.c.b16 %v6669, %v6662
    %v7314 = vpack.c.b16 %v6677, %v6670
    %v7315 = vpack.c.b16 %v6678, %v6671
    %v7316 = vpack.c.b16 %v6679, %v6672
    %v7317 = vpack.c.b16 %v6680, %v6673
    %v7318 = vpack.c.b16 %v6681, %v6674
    %v7319 = vpack.c.b16 %v6682, %v6675
    %v7320 = vpack.c.b16 %v6683, %v6676
    %v7321 = vpack.c.b16 %v6691, %v6684
    %v7322 = vpack.c.b16 %v6692, %v6685
    %v7323 = vpack.c.b16 %v6693, %v6686
    %v7324 = vpack.c.b16 %v6694, %v6687
    %v7325 = vpack.c.b16 %v6695, %v6688
    %v7326 = vpack.c.b16 %v6696, %v6689
    %v7327 = vpack.c.b16 %v6697, %v6690
    %v7328 = vpack.c.b16 %v6705, %v6698
    %v7329 = vpack.c.b16 %v6706, %v6699
    %v7330 = vpack.c.b16 %v6707, %v6700
    %v7331 = vpack.c.b16 %v6708, %v6701
    %v7332 = vpack.c.b16 %v6709, %v6702
    %v7333 = vpack.c.b16 %v6710, %v6703
    %v7334 = vpack.c.b16 %v6711, %v6704
    %v7335 = vpack.c.b16 %v6719, %v6712
    %v7336 = vpack.c.b16 %v6720, %v6713
    %v7337 = vpack.c.b16 %v6721, %v6714
    %v7338 = vpack.c.b16 %v6722, %v6715
    %v7339 = vpack.c.b16 %v6723, %v6716
    %v7340 = vpack.c.b16 %v6724, %v6717
    %v7341 = vpack.c.b16 %v6725, %v6718
    %v7342 = vpack.c.b16 %v6733, %v6726
    %v7343 = vpack.c.b16 %v6734, %v6727
    %v7344 = vpack.c.b16 %v6735, %v6728
    %v7345 = vpack.c.b16 %v6736, %v6729
    %v7346 = vpack.c.b16 %v6737, %v6730
    %v7347 = vpack.c.b16 %v6738, %v6731
    %v7348 = vpack.c.b16 %v6739, %v6732
    %v7349 = vpack.c.b16 %v6747, %v6740
    %v7350 = vpack.c.b16 %v6748, %v6741
    %v7351 = vpack.c.b16 %v6749, %v6742
    %v7352 = vpack.c.b16 %v6750, %v6743
    %v7353 = vpack.c.b16 %v6751, %v6744
    %v7354 = vpack.c.b16 %v6752, %v6745
    %v7355 = vpack.c.b16 %v6753, %v6746
    %v7356 = vpack.c.b16 %v6761, %v6754
    %v7357 = vpack.c.b16 %v6762, %v6755
    %v7358 = vpack.c.b16 %v6763, %v6756
    %v7359 = vpack.c.b16 %v6764, %v6757
    %v7360 = vpack.c.b16 %v6765, %v6758
    %v7361 = vpack.c.b16 %v6766, %v6759
    %v7362 = vpack.c.b16 %v6767, %v6760
    %v7363 = vpack.c.b16 %v6775, %v6768
    %v7364 = vpack.c.b16 %v6776, %v6769
    %v7365 = vpack.c.b16 %v6777, %v6770
    %v7366 = vpack.c.b16 %v6778, %v6771
    %v7367 = vpack.c.b16 %v6779, %v6772
    %v7368 = vpack.c.b16 %v6780, %v6773
    %v7369 = vpack.c.b16 %v6781, %v6774
    %v7370 = vpack.c.b16 %v6789, %v6782
    %v7371 = vpack.c.b16 %v6790, %v6783
    %v7372 = vpack.c.b16 %v6791, %v6784
    %v7373 = vpack.c.b16 %v6792, %v6785
    %v7374 = vpack.c.b16 %v6793, %v6786
    %v7375 = vpack.c.b16 %v6794, %v6787
    %v7376 = vpack.c.b16 %v6795, %v6788
    %v7377 = vpack.c.b16 %v6803, %v6796
    %v7378 = vpack.c.b16 %v6804, %v6797
    %v7379 = vpack.c.b16 %v6805, %v6798
    %v7380 = vpack.c.b16 %v6806, %v6799
    %v7381 = vpack.c.b16 %v6807, %v6800
    %v7382 = vpack.c.b16 %v6808, %v6801
    %v7383 = vpack.c.b16 %v6809, %v6802
    %v7384 = vpack.c.b16 %v6817, %v6810
    %v7385 = vpack.c.b16 %v6818, %v6811
    %v7386 = vpack.c.b16 %v6819, %v6812
    %v7387 = vpack.c.b16 %v6820, %v6813
    %v7388 = vpack.c.b16 %v6821, %v6814
    %v7389 = vpack.c.b16 %v6822, %v6815
    %v7390 = vpack.c.b16 %v6823, %v6816
    %v7391 = vpack.c.b16 %v6831, %v6824
    %v7392 = vpack.c.b16 %v6832, %v6825
    %v7393 = vpack.c.b16 %v6833, %v6826
    %v7394 = vpack.c.b16 %v6834, %v6827
    %v7395 = vpack.c.b16 %v6835, %v6828
    %v7396 = vpack.c.b16 %v6836, %v6829
    %v7397 = vpack.c.b16 %v6837, %v6830
    %v7398 = vpack.c.b16 %v6845, %v6838
    %v7399 = vpack.c.b16 %v6846, %v6839
    %v7400 = vpack.c.b16 %v6847, %v6840
    %v7401 = vpack.c.b16 %v6848, %v6841
    %v7402 = vpack.c.b16 %v6849, %v6842
    %v7403 = vpack.c.b16 %v6850, %v6843
    %v7404 = vpack.c.b16 %v6851, %v6844
    %v7405 = vpack.c.b16 %v6859, %v6852
    %v7406 = vpack.c.b16 %v6860, %v6853
    %v7407 = vpack.c.b16 %v6861, %v6854
    %v7408 = vpack.c.b16 %v6862, %v6855
    %v7409 = vpack.c.b16 %v6863, %v6856
    %v7410 = vpack.c.b16 %v6864, %v6857
    %v7411 = vpack.c.b16 %v6865, %v6858
    %v7412 = vpack.c.b16 %v6873, %v6866
    %v7413 = vpack.c.b16 %v6874, %v6867
    %v7414 = vpack.c.b16 %v6875, %v6868
    %v7415 = vpack.c.b16 %v6876, %v6869
    %v7416 = vpack.c.b16 %v6877, %v6870
    %v7417 = vpack.c.b16 %v6878, %v6871
    %v7418 = vpack.c.b16 %v6879, %v6872
    %v7419 = vpack.c.b16 %v6887, %v6880
    %v7420 = vpack.c.b16 %v6888, %v6881
    %v7421 = vpack.c.b16 %v6889, %v6882
    %v7422 = vpack.c.b16 %v6890, %v6883
    %v7423 = vpack.c.b16 %v6891, %v6884
    %v7424 = vpack.c.b16 %v6892, %v6885
    %v7425 = vpack.c.b16 %v6893, %v6886
    %v7426 = vpack.c.b16 %v6901, %v6894
    %v7427 = vpack.c.b16 %v6902, %v6895
    %v7428 = vpack.c.b16 %v6903, %v6896
    %v7429 = vpack.c.b16 %v6904, %v6897
    %v7430 = vpack.c.b16 %v6905, %v6898
    %v7431 = vpack.c.b16 %v6906, %v6899
    %v7432 = vpack.c.b16 %v6907, %v6900
    %v7433 = vpack.c.b16 %v6915, %v6908
    %v7434 = vpack.c.b16 %v6916, %v6909
    %v7435 = vpack.c.b16 %v6917, %v6910
    %v7436 = vpack.c.b16 %v6918, %v6911
    %v7437 = vpack.c.b16 %v6919, %v6912
    %v7438 = vpack.c.b16 %v6920, %v6913
    %v7439 = vpack.c.b16 %v6921, %v6914
    %v7440 = vpack.c.b16 %v6929, %v6922
    %v7441 = vpack.c.b16 %v6930, %v6923
    %v7442 = vpack.c.b16 %v6931, %v6924
    %v7443 = vpack.c.b16 %v6932, %v6925
    %v7444 = vpack.c.b16 %v6933, %v6926
    %v7445 = vpack.c.b16 %v6934, %v6927
    %v7446 = vpack.c.b16 %v6935, %v6928
    %v7447 = vpack.c.b16 %v6943, %v6936
    %v7448 = vpack.c.b16 %v6944, %v6937
    %v7449 = vpack.c.b16 %v6945, %v6938
    %v7450 = vpack.c.b16 %v6946, %v6939
    %v7451 = vpack.c.b16 %v6947, %v6940
    %v7452 = vpack.c.b16 %v6948, %v6941
    %v7453 = vpack.c.b16 %v6949, %v6942
    %v7454 = vpack.c.b16 %v6957, %v6950
    %v7455 = vpack.c.b16 %v6958, %v6951
    %v7456 = vpack.c.b16 %v6959, %v6952
    %v7457 = vpack.c.b16 %v6960, %v6953
    %v7458 = vpack.c.b16 %v6961, %v6954
    %v7459 = vpack.c.b16 %v6962, %v6955
    %v7460 = vpack.c.b16 %v6963, %v6956
    %v7461 = vpack.c.b16 %v6971, %v6964
    %v7462 = vpack.c.b16 %v6972, %v6965
    %v7463 = vpack.c.b16 %v6973, %v6966
    %v7464 = vpack.c.b16 %v6974, %v6967
    %v7465 = vpack.c.b16 %v6975, %v6968
    %v7466 = vpack.c.b16 %v6976, %v6969
    %v7467 = vpack.c.b16 %v6977, %v6970
    %v7468 = vpack.c.b16 %v6985, %v6978
    %v7469 = vpack.c.b16 %v6986, %v6979
    %v7470 = vpack.c.b16 %v6987, %v6980
    %v7471 = vpack.c.b16 %v6988, %v6981
    %v7472 = vpack.c.b16 %v6989, %v6982
    %v7473 = vpack.c.b16 %v6990, %v6983
    %v7474 = vpack.c.b16 %v6991, %v6984
    %v7475 = vpack.c.b16 %v6999, %v6992
    %v7476 = vpack.c.b16 %v7000, %v6993
    %v7477 = vpack.c.b16 %v7001, %v6994
    %v7478 = vpack.c.b16 %v7002, %v6995
    %v7479 = vpack.c.b16 %v7003, %v6996
    %v7480 = vpack.c.b16 %v7004, %v6997
    %v7481 = vpack.c.b16 %v7005, %v6998
    %v7482 = vpack.c.b16 %v7013, %v7006
    %v7483 = vpack.c.b16 %v7014, %v7007
    %v7484 = vpack.c.b16 %v7015, %v7008
    %v7485 = vpack.c.b16 %v7016, %v7009
    %v7486 = vpack.c.b16 %v7017, %v7010
    %v7487 = vpack.c.b16 %v7018, %v7011
    %v7488 = vpack.c.b16 %v7019, %v7012
    %v7489 = vpack.c.b16 %v7027, %v7020
    %v7490 = vpack.c.b16 %v7028, %v7021
    %v7491 = vpack.c.b16 %v7029, %v7022
    %v7492 = vpack.c.b16 %v7030, %v7023
    %v7493 = vpack.c.b16 %v7031, %v7024
    %v7494 = vpack.c.b16 %v7032, %v7025
    %v7495 = vpack.c.b16 %v7033, %v7026
    %v7496 = vpack.c.b16 %v7041, %v7034
    %v7497 = vpack.c.b16 %v7042, %v7035
    %v7498 = vpack.c.b16 %v7043, %v7036
    %v7499 = vpack.c.b16 %v7044, %v7037
    %v7500 = vpack.c.b16 %v7045, %v7038
    %v7501 = vpack.c.b16 %v7046, %v7039
    %v7502 = vpack.c.b16 %v7047, %v7040
    %v7503 = vpack.c.b16 %v7055, %v7048
    %v7504 = vpack.c.b16 %v7056, %v7049
    %v7505 = vpack.c.b16 %v7057, %v7050
    %v7506 = vpack.c.b16 %v7058, %v7051
    %v7507 = vpack.c.b16 %v7059, %v7052
    %v7508 = vpack.c.b16 %v7060, %v7053
    %v7509 = vpack.c.b16 %v7061, %v7054
    %v7510 = vpack.c.b16 %v7069, %v7062
    %v7511 = vpack.c.b16 %v7070, %v7063
    %v7512 = vpack.c.b16 %v7071, %v7064
    %v7513 = vpack.c.b16 %v7072, %v7065
    %v7514 = vpack.c.b16 %v7073, %v7066
    %v7515 = vpack.c.b16 %v7074, %v7067
    %v7516 = vpack.c.b16 %v7075, %v7068
    %v7517 = vpack.c.b16 %v7083, %v7076
    %v7518 = vpack.c.b16 %v7084, %v7077
    %v7519 = vpack.c.b16 %v7085, %v7078
    %v7520 = vpack.c.b16 %v7086, %v7079
    %v7521 = vpack.c.b16 %v7087, %v7080
    %v7522 = vpack.c.b16 %v7088, %v7081
    %v7523 = vpack.c.b16 %v7089, %v7082
    %v7524 = vpack.c.b16 %v7097, %v7090
    %v7525 = vpack.c.b16 %v7098, %v7091
    %v7526 = vpack.c.b16 %v7099, %v7092
    %v7527 = vpack.c.b16 %v7100, %v7093
    %v7528 = vpack.c.b16 %v7101, %v7094
    %v7529 = vpack.c.b16 %v7102, %v7095
    %v7530 = vpack.c.b16 %v7103, %v7096
    %v7531 = vpack.c.b16 %v7111, %v7104
    %v7532 = vpack.c.b16 %v7112, %v7105
    %v7533 = vpack.c.b16 %v7113, %v7106
    %v7534 = vpack.c.b16 %v7114, %v7107
    %v7535 = vpack.c.b16 %v7115, %v7108
    %v7536 = vpack.c.b16 %v7116, %v7109
    %v7537 = vpack.c.b16 %v7117, %v7110
    %v7538 = vpack.c.b16 %v7125, %v7118
    %v7539 = vpack.c.b16 %v7126, %v7119
    %v7540 = vpack.c.b16 %v7127, %v7120
    %v7541 = vpack.c.b16 %v7128, %v7121
    %v7542 = vpack.c.b16 %v7129, %v7122
    %v7543 = vpack.c.b16 %v7130, %v7123
    %v7544 = vpack.c.b16 %v7131, %v7124
    %v7545 = vpack.c.b16 %v7139, %v7132
    %v7546 = vpack.c.b16 %v7140, %v7133
    %v7547 = vpack.c.b16 %v7141, %v7134
    %v7548 = vpack.c.b16 %v7142, %v7135
    %v7549 = vpack.c.b16 %v7143, %v7136
    %v7550 = vpack.c.b16 %v7144, %v7137
    %v7551 = vpack.c.b16 %v7145, %v7138
    %v7552 = vpack.c.b16 %v7153, %v7146
    %v7553 = vpack.c.b16 %v7154, %v7147
    %v7554 = vpack.c.b16 %v7155, %v7148
    %v7555 = vpack.c.b16 %v7156, %v7149
    %v7556 = vpack.c.b16 %v7157, %v7150
    %v7557 = vpack.c.b16 %v7158, %v7151
    %v7558 = vpack.c.b16 %v7159, %v7152
    %v7559 = vpack.c.b16 %v7167, %v7160
    %v7560 = vpack.c.b16 %v7168, %v7161
    %v7561 = vpack.c.b16 %v7169, %v7162
    %v7562 = vpack.c.b16 %v7170, %v7163
    %v7563 = vpack.c.b16 %v7171, %v7164
    %v7564 = vpack.c.b16 %v7172, %v7165
    %v7565 = vpack.c.b16 %v7173, %v7166
    %v7566 = vpack.c.b16 %v7181, %v7174
    %v7567 = vpack.c.b16 %v7182, %v7175
    %v7568 = vpack.c.b16 %v7183, %v7176
    %v7569 = vpack.c.b16 %v7184, %v7177
    %v7570 = vpack.c.b16 %v7185, %v7178
    %v7571 = vpack.c.b16 %v7186, %v7179
    %v7572 = vpack.c.b16 %v7187, %v7180
    %v7573 = vpack.c.b16 %v7195, %v7188
    %v7574 = vpack.c.b16 %v7196, %v7189
    %v7575 = vpack.c.b16 %v7197, %v7190
    %v7576 = vpack.c.b16 %v7198, %v7191
    %v7577 = vpack.c.b16 %v7199, %v7192
    %v7578 = vpack.c.b16 %v7200, %v7193
    %v7579 = vpack.c.b16 %v7201, %v7194
    %v7580 = vpack.c.b16 %v7209, %v7202
    %v7581 = vpack.c.b16 %v7210, %v7203
    %v7582 = vpack.c.b16 %v7211, %v7204
    %v7583 = vpack.c.b16 %v7212, %v7205
    %v7584 = vpack.c.b16 %v7213, %v7206
    %v7585 = vpack.c.b16 %v7214, %v7207
    %v7586 = vpack.c.b16 %v7215, %v7208
    %v7587 = vpack.c.b16 %v7223, %v7216
    %v7588 = vpack.c.b16 %v7224, %v7217
    %v7589 = vpack.c.b16 %v7225, %v7218
    %v7590 = vpack.c.b16 %v7226, %v7219
    %v7591 = vpack.c.b16 %v7227, %v7220
    %v7592 = vpack.c.b16 %v7228, %v7221
    %v7593 = vpack.c.b16 %v7229, %v7222
    %v7594 = vpack.c.b16 %v7237, %v7230
    %v7595 = vpack.c.b16 %v7238, %v7231
    %v7596 = vpack.c.b16 %v7239, %v7232
    %v7597 = vpack.c.b16 %v7240, %v7233
    %v7598 = vpack.c.b16 %v7241, %v7234
    %v7599 = vpack.c.b16 %v7242, %v7235
    %v7600 = vpack.c.b16 %v7243, %v7236
    %v7601 = vpack.c.b16 %v7251, %v7244
    %v7602 = vpack.c.b16 %v7252, %v7245
    %v7603 = vpack.c.b16 %v7253, %v7246
    %v7604 = vpack.c.b16 %v7254, %v7247
    %v7605 = vpack.c.b16 %v7255, %v7248
    %v7606 = vpack.c.b16 %v7256, %v7249
    %v7607 = vpack.c.b16 %v7257, %v7250
    %v7608 = vpack.c.b16 %v7265, %v7258
    %v7609 = vpack.c.b16 %v7266, %v7259
    %v7610 = vpack.c.b16 %v7267, %v7260
    %v7611 = vpack.c.b16 %v7268, %v7261
    %v7612 = vpack.c.b16 %v7269, %v7262
    %v7613 = vpack.c.b16 %v7270, %v7263
    %v7614 = vpack.c.b16 %v7271, %v7264
    %7958 = vmatpush.bf16.msra.mxu0 %v7321
    %7959 = vmatpush.bf16.msra.mxu0 %v7314
    %7960 = vmatpush.bf16.msra.mxu0 %v7307
    %7961 = vmatpush.bf16.msra.mxu0 %v7300
    %7962 = vmatpush.bf16.msra.mxu0 %v7293
    %7963 = vmatpush.bf16.msra.mxu0 %v7286
    %7964 = vmatpush.bf16.msra.mxu0 %v7279
    %7965 = vmatpush.bf16.msra.mxu0 %v7272
    %7966 = vmatmul.bf16.gmra.mxu0 %v477
    %v7967 = vpop.f32.mrf.mxu0
    %v7968 = vadd.f32 0.0, %v7967
    %v7969 = vpop.f32.mrf.mxu0
    %v7970 = vadd.f32 0.0, %v7969
    %7971 = vdwg.mxu0
    %7972 = vmatpush.bf16.msra.mxu0 %v7377
    %7973 = vmatpush.bf16.msra.mxu0 %v7370
    %7974 = vmatpush.bf16.msra.mxu0 %v7363
    %7975 = vmatpush.bf16.msra.mxu0 %v7356
    %7976 = vmatpush.bf16.msra.mxu0 %v7349
    %7977 = vmatpush.bf16.msra.mxu0 %v7342
    %7978 = vmatpush.bf16.msra.mxu0 %v7335
    %7979 = vmatpush.bf16.msra.mxu0 %v7328
    %7980 = vmatmul.bf16.gmra.mxu0 %v478
    %v7981 = vpop.f32.mrf.mxu0
    %v7982 = vadd.f32 %v7968, %v7981
    %v7983 = vpop.f32.mrf.mxu0
    %v7984 = vadd.f32 %v7970, %v7983
    %7985 = vdwg.mxu0
    %7986 = vmatpush.bf16.msra.mxu0 %v7433
    %7987 = vmatpush.bf16.msra.mxu0 %v7426
    %7988 = vmatpush.bf16.msra.mxu0 %v7419
    %7989 = vmatpush.bf16.msra.mxu0 %v7412
    %7990 = vmatpush.bf16.msra.mxu0 %v7405
    %7991 = vmatpush.bf16.msra.mxu0 %v7398
    %7992 = vmatpush.bf16.msra.mxu0 %v7391
    %7993 = vmatpush.bf16.msra.mxu0 %v7384
    %7994 = vmatmul.bf16.gmra.mxu0 %v479
    %v7995 = vpop.f32.mrf.mxu0
    %v7996 = vadd.f32 %v7982, %v7995
    %v7997 = vpop.f32.mrf.mxu0
    %v7998 = vadd.f32 %v7984, %v7997
    %7999 = vdwg.mxu0
    %8000 = vmatpush.bf16.msra.mxu0 %v7489
    %8001 = vmatpush.bf16.msra.mxu0 %v7482
    %8002 = vmatpush.bf16.msra.mxu0 %v7475
    %8003 = vmatpush.bf16.msra.mxu0 %v7468
    %8004 = vmatpush.bf16.msra.mxu0 %v7461
    %8005 = vmatpush.bf16.msra.mxu0 %v7454
    %8006 = vmatpush.bf16.msra.mxu0 %v7447
    %8007 = vmatpush.bf16.msra.mxu0 %v7440
    %8008 = vmatmul.bf16.gmra.mxu0 %v480
    %v8009 = vpop.f32.mrf.mxu0
    %v8010 = vadd.f32 %v7996, %v8009
    %v8011 = vpop.f32.mrf.mxu0
    %v8012 = vadd.f32 %v7998, %v8011
    %8013 = vdwg.mxu0
    %8014 = vmatpush.bf16.msra.mxu0 %v7545
    %8015 = vmatpush.bf16.msra.mxu0 %v7538
    %8016 = vmatpush.bf16.msra.mxu0 %v7531
    %8017 = vmatpush.bf16.msra.mxu0 %v7524
    %8018 = vmatpush.bf16.msra.mxu0 %v7517
    %8019 = vmatpush.bf16.msra.mxu0 %v7510
    %8020 = vmatpush.bf16.msra.mxu0 %v7503
    %8021 = vmatpush.bf16.msra.mxu0 %v7496
    %8022 = vmatmul.bf16.gmra.mxu0 %v481
    %v8023 = vpop.f32.mrf.mxu0
    %v8024 = vadd.f32 %v8010, %v8023
    %v8025 = vpop.f32.mrf.mxu0
    %v8026 = vadd.f32 %v8012, %v8025
    %8027 = vdwg.mxu0
    %8028 = vmatpush.bf16.msra.mxu0 %v7601
    %8029 = vmatpush.bf16.msra.mxu0 %v7594
    %8030 = vmatpush.bf16.msra.mxu0 %v7587
    %8031 = vmatpush.bf16.msra.mxu0 %v7580
    %8032 = vmatpush.bf16.msra.mxu0 %v7573
    %8033 = vmatpush.bf16.msra.mxu0 %v7566
    %8034 = vmatpush.bf16.msra.mxu0 %v7559
    %8035 = vmatpush.bf16.msra.mxu0 %v7552
    %8036 = vmatmul.bf16.gmra.mxu0 %v482
    %v8037 = vpop.f32.mrf.mxu0
    %v8038 = vadd.f32 %v8024, %v8037
    %v8039 = vpop.f32.mrf.mxu0
    %v8040 = vadd.f32 %v8026, %v8039
    %8041 = vdwg.mxu0
    %8042 = vmatpush.bf16.msra.mxu0 0
    %8043 = vmatpush.bf16.msra.mxu0 0
    %8044 = vmatpush.bf16.msra.mxu0 0
    %8045 = vmatpush.bf16.msra.mxu0 0
    %8046 = vmatpush.bf16.msra.mxu0 0
    %8047 = vmatpush.bf16.msra.mxu0 0
    %8048 = vmatpush.bf16.msra.mxu0 0
    %8049 = vmatpush.bf16.msra.mxu0 %v7608
    %8050 = vmatmul.bf16.gmra.mxu0 %v2256
    %v8051 = vpop.f32.mrf.mxu0
    %v8052 = vadd.f32 %v8038, %v8051
    %v8053 = vpop.f32.mrf.mxu0
    %v8054 = vadd.f32 %v8040, %v8053
    %8055 = vdwg.mxu0
    %8056 = vmatpush.bf16.msra.mxu0 %v7322
    %8057 = vmatpush.bf16.msra.mxu0 %v7315
    %8058 = vmatpush.bf16.msra.mxu0 %v7308
    %8059 = vmatpush.bf16.msra.mxu0 %v7301
    %8060 = vmatpush.bf16.msra.mxu0 %v7294
    %8061 = vmatpush.bf16.msra.mxu0 %v7287
    %8062 = vmatpush.bf16.msra.mxu0 %v7280
    %8063 = vmatpush.bf16.msra.mxu0 %v7273
    %8064 = vmatmul.bf16.gmra.mxu0 %v477
    %v8065 = vpop.f32.mrf.mxu0
    %v8066 = vadd.f32 0.0, %v8065
    %v8067 = vpop.f32.mrf.mxu0
    %v8068 = vadd.f32 0.0, %v8067
    %8069 = vdwg.mxu0
    %8070 = vmatpush.bf16.msra.mxu0 %v7378
    %8071 = vmatpush.bf16.msra.mxu0 %v7371
    %8072 = vmatpush.bf16.msra.mxu0 %v7364
    %8073 = vmatpush.bf16.msra.mxu0 %v7357
    %8074 = vmatpush.bf16.msra.mxu0 %v7350
    %8075 = vmatpush.bf16.msra.mxu0 %v7343
    %8076 = vmatpush.bf16.msra.mxu0 %v7336
    %8077 = vmatpush.bf16.msra.mxu0 %v7329
    %8078 = vmatmul.bf16.gmra.mxu0 %v478
    %v8079 = vpop.f32.mrf.mxu0
    %v8080 = vadd.f32 %v8066, %v8079
    %v8081 = vpop.f32.mrf.mxu0
    %v8082 = vadd.f32 %v8068, %v8081
    %8083 = vdwg.mxu0
    %8084 = vmatpush.bf16.msra.mxu0 %v7434
    %8085 = vmatpush.bf16.msra.mxu0 %v7427
    %8086 = vmatpush.bf16.msra.mxu0 %v7420
    %8087 = vmatpush.bf16.msra.mxu0 %v7413
    %8088 = vmatpush.bf16.msra.mxu0 %v7406
    %8089 = vmatpush.bf16.msra.mxu0 %v7399
    %8090 = vmatpush.bf16.msra.mxu0 %v7392
    %8091 = vmatpush.bf16.msra.mxu0 %v7385
    %8092 = vmatmul.bf16.gmra.mxu0 %v479
    %v8093 = vpop.f32.mrf.mxu0
    %v8094 = vadd.f32 %v8080, %v8093
    %v8095 = vpop.f32.mrf.mxu0
    %v8096 = vadd.f32 %v8082, %v8095
    %8097 = vdwg.mxu0
    %8098 = vmatpush.bf16.msra.mxu0 %v7490
    %8099 = vmatpush.bf16.msra.mxu0 %v7483
    %8100 = vmatpush.bf16.msra.mxu0 %v7476
    %8101 = vmatpush.bf16.msra.mxu0 %v7469
    %8102 = vmatpush.bf16.msra.mxu0 %v7462
    %8103 = vmatpush.bf16.msra.mxu0 %v7455
    %8104 = vmatpush.bf16.msra.mxu0 %v7448
    %8105 = vmatpush.bf16.msra.mxu0 %v7441
    %8106 = vmatmul.bf16.gmra.mxu0 %v480
    %v8107 = vpop.f32.mrf.mxu0
    %v8108 = vadd.f32 %v8094, %v8107
    %v8109 = vpop.f32.mrf.mxu0
    %v8110 = vadd.f32 %v8096, %v8109
    %8111 = vdwg.mxu0
    %8112 = vmatpush.bf16.msra.mxu0 %v7546
    %8113 = vmatpush.bf16.msra.mxu0 %v7539
    %8114 = vmatpush.bf16.msra.mxu0 %v7532
    %8115 = vmatpush.bf16.msra.mxu0 %v7525
    %8116 = vmatpush.bf16.msra.mxu0 %v7518
    %8117 = vmatpush.bf16.msra.mxu0 %v7511
    %8118 = vmatpush.bf16.msra.mxu0 %v7504
    %8119 = vmatpush.bf16.msra.mxu0 %v7497
    %8120 = vmatmul.bf16.gmra.mxu0 %v481
    %v8121 = vpop.f32.mrf.mxu0
    %v8122 = vadd.f32 %v8108, %v8121
    %v8123 = vpop.f32.mrf.mxu0
    %v8124 = vadd.f32 %v8110, %v8123
    %8125 = vdwg.mxu0
    %8126 = vmatpush.bf16.msra.mxu0 %v7602
    %8127 = vmatpush.bf16.msra.mxu0 %v7595
    %8128 = vmatpush.bf16.msra.mxu0 %v7588
    %8129 = vmatpush.bf16.msra.mxu0 %v7581
    %8130 = vmatpush.bf16.msra.mxu0 %v7574
    %8131 = vmatpush.bf16.msra.mxu0 %v7567
    %8132 = vmatpush.bf16.msra.mxu0 %v7560
    %8133 = vmatpush.bf16.msra.mxu0 %v7553
    %8134 = vmatmul.bf16.gmra.mxu0 %v482
    %v8135 = vpop.f32.mrf.mxu0
    %v8136 = vadd.f32 %v8122, %v8135
    %v8137 = vpop.f32.mrf.mxu0
    %v8138 = vadd.f32 %v8124, %v8137
    %8139 = vdwg.mxu0
    %8140 = vmatpush.bf16.msra.mxu0 0
    %8141 = vmatpush.bf16.msra.mxu0 0
    %8142 = vmatpush.bf16.msra.mxu0 0
    %8143 = vmatpush.bf16.msra.mxu0 0
    %8144 = vmatpush.bf16.msra.mxu0 0
    %8145 = vmatpush.bf16.msra.mxu0 0
    %8146 = vmatpush.bf16.msra.mxu0 0
    %8147 = vmatpush.bf16.msra.mxu0 %v7609
    %8148 = vmatmul.bf16.gmra.mxu0 %v2256
    %v8149 = vpop.f32.mrf.mxu0
    %v8150 = vadd.f32 %v8136, %v8149
    %v8151 = vpop.f32.mrf.mxu0
    %v8152 = vadd.f32 %v8138, %v8151
    %8153 = vdwg.mxu0
    %8154 = vmatpush.bf16.msra.mxu0 %v7323
    %8155 = vmatpush.bf16.msra.mxu0 %v7316
    %8156 = vmatpush.bf16.msra.mxu0 %v7309
    %8157 = vmatpush.bf16.msra.mxu0 %v7302
    %8158 = vmatpush.bf16.msra.mxu0 %v7295
    %8159 = vmatpush.bf16.msra.mxu0 %v7288
    %8160 = vmatpush.bf16.msra.mxu0 %v7281
    %8161 = vmatpush.bf16.msra.mxu0 %v7274
    %8162 = vmatmul.bf16.gmra.mxu0 %v477
    %v8163 = vpop.f32.mrf.mxu0
    %v8164 = vadd.f32 0.0, %v8163
    %v8165 = vpop.f32.mrf.mxu0
    %v8166 = vadd.f32 0.0, %v8165
    %8167 = vdwg.mxu0
    %8168 = vmatpush.bf16.msra.mxu0 %v7379
    %8169 = vmatpush.bf16.msra.mxu0 %v7372
    %8170 = vmatpush.bf16.msra.mxu0 %v7365
    %8171 = vmatpush.bf16.msra.mxu0 %v7358
    %8172 = vmatpush.bf16.msra.mxu0 %v7351
    %8173 = vmatpush.bf16.msra.mxu0 %v7344
    %8174 = vmatpush.bf16.msra.mxu0 %v7337
    %8175 = vmatpush.bf16.msra.mxu0 %v7330
    %8176 = vmatmul.bf16.gmra.mxu0 %v478
    %v8177 = vpop.f32.mrf.mxu0
    %v8178 = vadd.f32 %v8164, %v8177
    %v8179 = vpop.f32.mrf.mxu0
    %v8180 = vadd.f32 %v8166, %v8179
    %8181 = vdwg.mxu0
    %8182 = vmatpush.bf16.msra.mxu0 %v7435
    %8183 = vmatpush.bf16.msra.mxu0 %v7428
    %8184 = vmatpush.bf16.msra.mxu0 %v7421
    %8185 = vmatpush.bf16.msra.mxu0 %v7414
    %8186 = vmatpush.bf16.msra.mxu0 %v7407
    %8187 = vmatpush.bf16.msra.mxu0 %v7400
    %8188 = vmatpush.bf16.msra.mxu0 %v7393
    %8189 = vmatpush.bf16.msra.mxu0 %v7386
    %8190 = vmatmul.bf16.gmra.mxu0 %v479
    %v8191 = vpop.f32.mrf.mxu0
    %v8192 = vadd.f32 %v8178, %v8191
    %v8193 = vpop.f32.mrf.mxu0
    %v8194 = vadd.f32 %v8180, %v8193
    %8195 = vdwg.mxu0
    %8196 = vmatpush.bf16.msra.mxu0 %v7491
    %8197 = vmatpush.bf16.msra.mxu0 %v7484
    %8198 = vmatpush.bf16.msra.mxu0 %v7477
    %8199 = vmatpush.bf16.msra.mxu0 %v7470
    %8200 = vmatpush.bf16.msra.mxu0 %v7463
    %8201 = vmatpush.bf16.msra.mxu0 %v7456
    %8202 = vmatpush.bf16.msra.mxu0 %v7449
    %8203 = vmatpush.bf16.msra.mxu0 %v7442
    %8204 = vmatmul.bf16.gmra.mxu0 %v480
    %v8205 = vpop.f32.mrf.mxu0
    %v8206 = vadd.f32 %v8192, %v8205
    %v8207 = vpop.f32.mrf.mxu0
    %v8208 = vadd.f32 %v8194, %v8207
    %8209 = vdwg.mxu0
    %8210 = vmatpush.bf16.msra.mxu0 %v7547
    %8211 = vmatpush.bf16.msra.mxu0 %v7540
    %8212 = vmatpush.bf16.msra.mxu0 %v7533
    %8213 = vmatpush.bf16.msra.mxu0 %v7526
    %8214 = vmatpush.bf16.msra.mxu0 %v7519
    %8215 = vmatpush.bf16.msra.mxu0 %v7512
    %8216 = vmatpush.bf16.msra.mxu0 %v7505
    %8217 = vmatpush.bf16.msra.mxu0 %v7498
    %8218 = vmatmul.bf16.gmra.mxu0 %v481
    %v8219 = vpop.f32.mrf.mxu0
    %v8220 = vadd.f32 %v8206, %v8219
    %v8221 = vpop.f32.mrf.mxu0
    %v8222 = vadd.f32 %v8208, %v8221
    %8223 = vdwg.mxu0
    %8224 = vmatpush.bf16.msra.mxu0 %v7603
    %8225 = vmatpush.bf16.msra.mxu0 %v7596
    %8226 = vmatpush.bf16.msra.mxu0 %v7589
    %8227 = vmatpush.bf16.msra.mxu0 %v7582
    %8228 = vmatpush.bf16.msra.mxu0 %v7575
    %8229 = vmatpush.bf16.msra.mxu0 %v7568
    %8230 = vmatpush.bf16.msra.mxu0 %v7561
    %8231 = vmatpush.bf16.msra.mxu0 %v7554
    %8232 = vmatmul.bf16.gmra.mxu0 %v482
    %v8233 = vpop.f32.mrf.mxu0
    %v8234 = vadd.f32 %v8220, %v8233
    %v8235 = vpop.f32.mrf.mxu0
    %v8236 = vadd.f32 %v8222, %v8235
    %8237 = vdwg.mxu0
    %8238 = vmatpush.bf16.msra.mxu0 0
    %8239 = vmatpush.bf16.msra.mxu0 0
    %8240 = vmatpush.bf16.msra.mxu0 0
    %8241 = vmatpush.bf16.msra.mxu0 0
    %8242 = vmatpush.bf16.msra.mxu0 0
    %8243 = vmatpush.bf16.msra.mxu0 0
    %8244 = vmatpush.bf16.msra.mxu0 0
    %8245 = vmatpush.bf16.msra.mxu0 %v7610
    %8246 = vmatmul.bf16.gmra.mxu0 %v2256
    %v8247 = vpop.f32.mrf.mxu0
    %v8248 = vadd.f32 %v8234, %v8247
    %v8249 = vpop.f32.mrf.mxu0
    %v8250 = vadd.f32 %v8236, %v8249
    %8251 = vdwg.mxu0
    %8252 = vmatpush.bf16.msra.mxu0 %v7324
    %8253 = vmatpush.bf16.msra.mxu0 %v7317
    %8254 = vmatpush.bf16.msra.mxu0 %v7310
    %8255 = vmatpush.bf16.msra.mxu0 %v7303
    %8256 = vmatpush.bf16.msra.mxu0 %v7296
    %8257 = vmatpush.bf16.msra.mxu0 %v7289
    %8258 = vmatpush.bf16.msra.mxu0 %v7282
    %8259 = vmatpush.bf16.msra.mxu0 %v7275
    %8260 = vmatmul.bf16.gmra.mxu0 %v477
    %v8261 = vpop.f32.mrf.mxu0
    %v8262 = vadd.f32 0.0, %v8261
    %v8263 = vpop.f32.mrf.mxu0
    %v8264 = vadd.f32 0.0, %v8263
    %8265 = vdwg.mxu0
    %8266 = vmatpush.bf16.msra.mxu0 %v7380
    %8267 = vmatpush.bf16.msra.mxu0 %v7373
    %8268 = vmatpush.bf16.msra.mxu0 %v7366
    %8269 = vmatpush.bf16.msra.mxu0 %v7359
    %8270 = vmatpush.bf16.msra.mxu0 %v7352
    %8271 = vmatpush.bf16.msra.mxu0 %v7345
    %8272 = vmatpush.bf16.msra.mxu0 %v7338
    %8273 = vmatpush.bf16.msra.mxu0 %v7331
    %8274 = vmatmul.bf16.gmra.mxu0 %v478
    %v8275 = vpop.f32.mrf.mxu0
    %v8276 = vadd.f32 %v8262, %v8275
    %v8277 = vpop.f32.mrf.mxu0
    %v8278 = vadd.f32 %v8264, %v8277
    %8279 = vdwg.mxu0
    %8280 = vmatpush.bf16.msra.mxu0 %v7436
    %8281 = vmatpush.bf16.msra.mxu0 %v7429
    %8282 = vmatpush.bf16.msra.mxu0 %v7422
    %8283 = vmatpush.bf16.msra.mxu0 %v7415
    %8284 = vmatpush.bf16.msra.mxu0 %v7408
    %8285 = vmatpush.bf16.msra.mxu0 %v7401
    %8286 = vmatpush.bf16.msra.mxu0 %v7394
    %8287 = vmatpush.bf16.msra.mxu0 %v7387
    %8288 = vmatmul.bf16.gmra.mxu0 %v479
    %v8289 = vpop.f32.mrf.mxu0
    %v8290 = vadd.f32 %v8276, %v8289
    %v8291 = vpop.f32.mrf.mxu0
    %v8292 = vadd.f32 %v8278, %v8291
    %8293 = vdwg.mxu0
    %8294 = vmatpush.bf16.msra.mxu0 %v7492
    %8295 = vmatpush.bf16.msra.mxu0 %v7485
    %8296 = vmatpush.bf16.msra.mxu0 %v7478
    %8297 = vmatpush.bf16.msra.mxu0 %v7471
    %8298 = vmatpush.bf16.msra.mxu0 %v7464
    %8299 = vmatpush.bf16.msra.mxu0 %v7457
    %8300 = vmatpush.bf16.msra.mxu0 %v7450
    %8301 = vmatpush.bf16.msra.mxu0 %v7443
    %8302 = vmatmul.bf16.gmra.mxu0 %v480
    %v8303 = vpop.f32.mrf.mxu0
    %v8304 = vadd.f32 %v8290, %v8303
    %v8305 = vpop.f32.mrf.mxu0
    %v8306 = vadd.f32 %v8292, %v8305
    %8307 = vdwg.mxu0
    %8308 = vmatpush.bf16.msra.mxu0 %v7548
    %8309 = vmatpush.bf16.msra.mxu0 %v7541
    %8310 = vmatpush.bf16.msra.mxu0 %v7534
    %8311 = vmatpush.bf16.msra.mxu0 %v7527
    %8312 = vmatpush.bf16.msra.mxu0 %v7520
    %8313 = vmatpush.bf16.msra.mxu0 %v7513
    %8314 = vmatpush.bf16.msra.mxu0 %v7506
    %8315 = vmatpush.bf16.msra.mxu0 %v7499
    %8316 = vmatmul.bf16.gmra.mxu0 %v481
    %v8317 = vpop.f32.mrf.mxu0
    %v8318 = vadd.f32 %v8304, %v8317
    %v8319 = vpop.f32.mrf.mxu0
    %v8320 = vadd.f32 %v8306, %v8319
    %8321 = vdwg.mxu0
    %8322 = vmatpush.bf16.msra.mxu0 %v7604
    %8323 = vmatpush.bf16.msra.mxu0 %v7597
    %8324 = vmatpush.bf16.msra.mxu0 %v7590
    %8325 = vmatpush.bf16.msra.mxu0 %v7583
    %8326 = vmatpush.bf16.msra.mxu0 %v7576
    %8327 = vmatpush.bf16.msra.mxu0 %v7569
    %8328 = vmatpush.bf16.msra.mxu0 %v7562
    %8329 = vmatpush.bf16.msra.mxu0 %v7555
    %8330 = vmatmul.bf16.gmra.mxu0 %v482
    %v8331 = vpop.f32.mrf.mxu0
    %v8332 = vadd.f32 %v8318, %v8331
    %v8333 = vpop.f32.mrf.mxu0
    %v8334 = vadd.f32 %v8320, %v8333
    %8335 = vdwg.mxu0
    %8336 = vmatpush.bf16.msra.mxu0 0
    %8337 = vmatpush.bf16.msra.mxu0 0
    %8338 = vmatpush.bf16.msra.mxu0 0
    %8339 = vmatpush.bf16.msra.mxu0 0
    %8340 = vmatpush.bf16.msra.mxu0 0
    %8341 = vmatpush.bf16.msra.mxu0 0
    %8342 = vmatpush.bf16.msra.mxu0 0
    %8343 = vmatpush.bf16.msra.mxu0 %v7611
    %8344 = vmatmul.bf16.gmra.mxu0 %v2256
    %v8345 = vpop.f32.mrf.mxu0
    %v8346 = vadd.f32 %v8332, %v8345
    %v8347 = vpop.f32.mrf.mxu0
    %v8348 = vadd.f32 %v8334, %v8347
    %8349 = vdwg.mxu0
    %8350 = vmatpush.bf16.msra.mxu0 %v7325
    %8351 = vmatpush.bf16.msra.mxu0 %v7318
    %8352 = vmatpush.bf16.msra.mxu0 %v7311
    %8353 = vmatpush.bf16.msra.mxu0 %v7304
    %8354 = vmatpush.bf16.msra.mxu0 %v7297
    %8355 = vmatpush.bf16.msra.mxu0 %v7290
    %8356 = vmatpush.bf16.msra.mxu0 %v7283
    %8357 = vmatpush.bf16.msra.mxu0 %v7276
    %8358 = vmatmul.bf16.gmra.mxu0 %v477
    %v8359 = vpop.f32.mrf.mxu0
    %v8360 = vadd.f32 0.0, %v8359
    %v8361 = vpop.f32.mrf.mxu0
    %v8362 = vadd.f32 0.0, %v8361
    %8363 = vdwg.mxu0
    %8364 = vmatpush.bf16.msra.mxu0 %v7381
    %8365 = vmatpush.bf16.msra.mxu0 %v7374
    %8366 = vmatpush.bf16.msra.mxu0 %v7367
    %8367 = vmatpush.bf16.msra.mxu0 %v7360
    %8368 = vmatpush.bf16.msra.mxu0 %v7353
    %8369 = vmatpush.bf16.msra.mxu0 %v7346
    %8370 = vmatpush.bf16.msra.mxu0 %v7339
    %8371 = vmatpush.bf16.msra.mxu0 %v7332
    %8372 = vmatmul.bf16.gmra.mxu0 %v478
    %v8373 = vpop.f32.mrf.mxu0
    %v8374 = vadd.f32 %v8360, %v8373
    %v8375 = vpop.f32.mrf.mxu0
    %v8376 = vadd.f32 %v8362, %v8375
    %8377 = vdwg.mxu0
    %8378 = vmatpush.bf16.msra.mxu0 %v7437
    %8379 = vmatpush.bf16.msra.mxu0 %v7430
    %8380 = vmatpush.bf16.msra.mxu0 %v7423
    %8381 = vmatpush.bf16.msra.mxu0 %v7416
    %8382 = vmatpush.bf16.msra.mxu0 %v7409
    %8383 = vmatpush.bf16.msra.mxu0 %v7402
    %8384 = vmatpush.bf16.msra.mxu0 %v7395
    %8385 = vmatpush.bf16.msra.mxu0 %v7388
    %8386 = vmatmul.bf16.gmra.mxu0 %v479
    %v8387 = vpop.f32.mrf.mxu0
    %v8388 = vadd.f32 %v8374, %v8387
    %v8389 = vpop.f32.mrf.mxu0
    %v8390 = vadd.f32 %v8376, %v8389
    %8391 = vdwg.mxu0
    %8392 = vmatpush.bf16.msra.mxu0 %v7493
    %8393 = vmatpush.bf16.msra.mxu0 %v7486
    %8394 = vmatpush.bf16.msra.mxu0 %v7479
    %8395 = vmatpush.bf16.msra.mxu0 %v7472
    %8396 = vmatpush.bf16.msra.mxu0 %v7465
    %8397 = vmatpush.bf16.msra.mxu0 %v7458
    %8398 = vmatpush.bf16.msra.mxu0 %v7451
    %8399 = vmatpush.bf16.msra.mxu0 %v7444
    %8400 = vmatmul.bf16.gmra.mxu0 %v480
    %v8401 = vpop.f32.mrf.mxu0
    %v8402 = vadd.f32 %v8388, %v8401
    %v8403 = vpop.f32.mrf.mxu0
    %v8404 = vadd.f32 %v8390, %v8403
    %8405 = vdwg.mxu0
    %8406 = vmatpush.bf16.msra.mxu0 %v7549
    %8407 = vmatpush.bf16.msra.mxu0 %v7542
    %8408 = vmatpush.bf16.msra.mxu0 %v7535
    %8409 = vmatpush.bf16.msra.mxu0 %v7528
    %8410 = vmatpush.bf16.msra.mxu0 %v7521
    %8411 = vmatpush.bf16.msra.mxu0 %v7514
    %8412 = vmatpush.bf16.msra.mxu0 %v7507
    %8413 = vmatpush.bf16.msra.mxu0 %v7500
    %8414 = vmatmul.bf16.gmra.mxu0 %v481
    %v8415 = vpop.f32.mrf.mxu0
    %v8416 = vadd.f32 %v8402, %v8415
    %v8417 = vpop.f32.mrf.mxu0
    %v8418 = vadd.f32 %v8404, %v8417
    %8419 = vdwg.mxu0
    %8420 = vmatpush.bf16.msra.mxu0 %v7605
    %8421 = vmatpush.bf16.msra.mxu0 %v7598
    %8422 = vmatpush.bf16.msra.mxu0 %v7591
    %8423 = vmatpush.bf16.msra.mxu0 %v7584
    %8424 = vmatpush.bf16.msra.mxu0 %v7577
    %8425 = vmatpush.bf16.msra.mxu0 %v7570
    %8426 = vmatpush.bf16.msra.mxu0 %v7563
    %8427 = vmatpush.bf16.msra.mxu0 %v7556
    %8428 = vmatmul.bf16.gmra.mxu0 %v482
    %v8429 = vpop.f32.mrf.mxu0
    %v8430 = vadd.f32 %v8416, %v8429
    %v8431 = vpop.f32.mrf.mxu0
    %v8432 = vadd.f32 %v8418, %v8431
    %8433 = vdwg.mxu0
    %8434 = vmatpush.bf16.msra.mxu0 0
    %8435 = vmatpush.bf16.msra.mxu0 0
    %8436 = vmatpush.bf16.msra.mxu0 0
    %8437 = vmatpush.bf16.msra.mxu0 0
    %8438 = vmatpush.bf16.msra.mxu0 0
    %8439 = vmatpush.bf16.msra.mxu0 0
    %8440 = vmatpush.bf16.msra.mxu0 0
    %8441 = vmatpush.bf16.msra.mxu0 %v7612
    %8442 = vmatmul.bf16.gmra.mxu0 %v2256
    %v8443 = vpop.f32.mrf.mxu0
    %v8444 = vadd.f32 %v8430, %v8443
    %v8445 = vpop.f32.mrf.mxu0
    %v8446 = vadd.f32 %v8432, %v8445
    %8447 = vdwg.mxu0
    %8448 = vmatpush.bf16.msra.mxu0 %v7326
    %8449 = vmatpush.bf16.msra.mxu0 %v7319
    %8450 = vmatpush.bf16.msra.mxu0 %v7312
    %8451 = vmatpush.bf16.msra.mxu0 %v7305
    %8452 = vmatpush.bf16.msra.mxu0 %v7298
    %8453 = vmatpush.bf16.msra.mxu0 %v7291
    %8454 = vmatpush.bf16.msra.mxu0 %v7284
    %8455 = vmatpush.bf16.msra.mxu0 %v7277
    %8456 = vmatmul.bf16.gmra.mxu0 %v477
    %v8457 = vpop.f32.mrf.mxu0
    %v8458 = vadd.f32 0.0, %v8457
    %v8459 = vpop.f32.mrf.mxu0
    %v8460 = vadd.f32 0.0, %v8459
    %8461 = vdwg.mxu0
    %8462 = vmatpush.bf16.msra.mxu0 %v7382
    %8463 = vmatpush.bf16.msra.mxu0 %v7375
    %8464 = vmatpush.bf16.msra.mxu0 %v7368
    %8465 = vmatpush.bf16.msra.mxu0 %v7361
    %8466 = vmatpush.bf16.msra.mxu0 %v7354
    %8467 = vmatpush.bf16.msra.mxu0 %v7347
    %8468 = vmatpush.bf16.msra.mxu0 %v7340
    %8469 = vmatpush.bf16.msra.mxu0 %v7333
    %8470 = vmatmul.bf16.gmra.mxu0 %v478
    %v8471 = vpop.f32.mrf.mxu0
    %v8472 = vadd.f32 %v8458, %v8471
    %v8473 = vpop.f32.mrf.mxu0
    %v8474 = vadd.f32 %v8460, %v8473
    %8475 = vdwg.mxu0
    %8476 = vmatpush.bf16.msra.mxu0 %v7438
    %8477 = vmatpush.bf16.msra.mxu0 %v7431
    %8478 = vmatpush.bf16.msra.mxu0 %v7424
    %8479 = vmatpush.bf16.msra.mxu0 %v7417
    %8480 = vmatpush.bf16.msra.mxu0 %v7410
    %8481 = vmatpush.bf16.msra.mxu0 %v7403
    %8482 = vmatpush.bf16.msra.mxu0 %v7396
    %8483 = vmatpush.bf16.msra.mxu0 %v7389
    %8484 = vmatmul.bf16.gmra.mxu0 %v479
    %v8485 = vpop.f32.mrf.mxu0
    %v8486 = vadd.f32 %v8472, %v8485
    %v8487 = vpop.f32.mrf.mxu0
    %v8488 = vadd.f32 %v8474, %v8487
    %8489 = vdwg.mxu0
    %8490 = vmatpush.bf16.msra.mxu0 %v7494
    %8491 = vmatpush.bf16.msra.mxu0 %v7487
    %8492 = vmatpush.bf16.msra.mxu0 %v7480
    %8493 = vmatpush.bf16.msra.mxu0 %v7473
    %8494 = vmatpush.bf16.msra.mxu0 %v7466
    %8495 = vmatpush.bf16.msra.mxu0 %v7459
    %8496 = vmatpush.bf16.msra.mxu0 %v7452
    %8497 = vmatpush.bf16.msra.mxu0 %v7445
    %8498 = vmatmul.bf16.gmra.mxu0 %v480
    %v8499 = vpop.f32.mrf.mxu0
    %v8500 = vadd.f32 %v8486, %v8499
    %v8501 = vpop.f32.mrf.mxu0
    %v8502 = vadd.f32 %v8488, %v8501
    %8503 = vdwg.mxu0
    %8504 = vmatpush.bf16.msra.mxu0 %v7550
    %8505 = vmatpush.bf16.msra.mxu0 %v7543
    %8506 = vmatpush.bf16.msra.mxu0 %v7536
    %8507 = vmatpush.bf16.msra.mxu0 %v7529
    %8508 = vmatpush.bf16.msra.mxu0 %v7522
    %8509 = vmatpush.bf16.msra.mxu0 %v7515
    %8510 = vmatpush.bf16.msra.mxu0 %v7508
    %8511 = vmatpush.bf16.msra.mxu0 %v7501
    %8512 = vmatmul.bf16.gmra.mxu0 %v481
    %v8513 = vpop.f32.mrf.mxu0
    %v8514 = vadd.f32 %v8500, %v8513
    %v8515 = vpop.f32.mrf.mxu0
    %v8516 = vadd.f32 %v8502, %v8515
    %8517 = vdwg.mxu0
    %8518 = vmatpush.bf16.msra.mxu0 %v7606
    %8519 = vmatpush.bf16.msra.mxu0 %v7599
    %8520 = vmatpush.bf16.msra.mxu0 %v7592
    %8521 = vmatpush.bf16.msra.mxu0 %v7585
    %8522 = vmatpush.bf16.msra.mxu0 %v7578
    %8523 = vmatpush.bf16.msra.mxu0 %v7571
    %8524 = vmatpush.bf16.msra.mxu0 %v7564
    %8525 = vmatpush.bf16.msra.mxu0 %v7557
    %8526 = vmatmul.bf16.gmra.mxu0 %v482
    %v8527 = vpop.f32.mrf.mxu0
    %v8528 = vadd.f32 %v8514, %v8527
    %v8529 = vpop.f32.mrf.mxu0
    %v8530 = vadd.f32 %v8516, %v8529
    %8531 = vdwg.mxu0
    %8532 = vmatpush.bf16.msra.mxu0 0
    %8533 = vmatpush.bf16.msra.mxu0 0
    %8534 = vmatpush.bf16.msra.mxu0 0
    %8535 = vmatpush.bf16.msra.mxu0 0
    %8536 = vmatpush.bf16.msra.mxu0 0
    %8537 = vmatpush.bf16.msra.mxu0 0
    %8538 = vmatpush.bf16.msra.mxu0 0
    %8539 = vmatpush.bf16.msra.mxu0 %v7613
    %8540 = vmatmul.bf16.gmra.mxu0 %v2256
    %v8541 = vpop.f32.mrf.mxu0
    %v8542 = vadd.f32 %v8528, %v8541
    %v8543 = vpop.f32.mrf.mxu0
    %v8544 = vadd.f32 %v8530, %v8543
    %8545 = vdwg.mxu0
    %8546 = vmatpush.bf16.msra.mxu0 %v7327
    %8547 = vmatpush.bf16.msra.mxu0 %v7320
    %8548 = vmatpush.bf16.msra.mxu0 %v7313
    %8549 = vmatpush.bf16.msra.mxu0 %v7306
    %8550 = vmatpush.bf16.msra.mxu0 %v7299
    %8551 = vmatpush.bf16.msra.mxu0 %v7292
    %8552 = vmatpush.bf16.msra.mxu0 %v7285
    %8553 = vmatpush.bf16.msra.mxu0 %v7278
    %8554 = vmatmul.bf16.gmra.mxu0 %v477
    %v8555 = vpop.f32.mrf.mxu0
    %v8556 = vadd.f32 0.0, %v8555
    %v8557 = vpop.f32.mrf.mxu0
    %v8558 = vadd.f32 0.0, %v8557
    %8559 = vdwg.mxu0
    %8560 = vmatpush.bf16.msra.mxu0 %v7383
    %8561 = vmatpush.bf16.msra.mxu0 %v7376
    %8562 = vmatpush.bf16.msra.mxu0 %v7369
    %8563 = vmatpush.bf16.msra.mxu0 %v7362
    %8564 = vmatpush.bf16.msra.mxu0 %v7355
    %8565 = vmatpush.bf16.msra.mxu0 %v7348
    %8566 = vmatpush.bf16.msra.mxu0 %v7341
    %8567 = vmatpush.bf16.msra.mxu0 %v7334
    %8568 = vmatmul.bf16.gmra.mxu0 %v478
    %v8569 = vpop.f32.mrf.mxu0
    %v8570 = vadd.f32 %v8556, %v8569
    %v8571 = vpop.f32.mrf.mxu0
    %v8572 = vadd.f32 %v8558, %v8571
    %8573 = vdwg.mxu0
    %8574 = vmatpush.bf16.msra.mxu0 %v7439
    %8575 = vmatpush.bf16.msra.mxu0 %v7432
    %8576 = vmatpush.bf16.msra.mxu0 %v7425
    %8577 = vmatpush.bf16.msra.mxu0 %v7418
    %8578 = vmatpush.bf16.msra.mxu0 %v7411
    %8579 = vmatpush.bf16.msra.mxu0 %v7404
    %8580 = vmatpush.bf16.msra.mxu0 %v7397
    %8581 = vmatpush.bf16.msra.mxu0 %v7390
    %8582 = vmatmul.bf16.gmra.mxu0 %v479
    %v8583 = vpop.f32.mrf.mxu0
    %v8584 = vadd.f32 %v8570, %v8583
    %v8585 = vpop.f32.mrf.mxu0
    %v8586 = vadd.f32 %v8572, %v8585
    %8587 = vdwg.mxu0
    %8588 = vmatpush.bf16.msra.mxu0 %v7495
    %8589 = vmatpush.bf16.msra.mxu0 %v7488
    %8590 = vmatpush.bf16.msra.mxu0 %v7481
    %8591 = vmatpush.bf16.msra.mxu0 %v7474
    %8592 = vmatpush.bf16.msra.mxu0 %v7467
    %8593 = vmatpush.bf16.msra.mxu0 %v7460
    %8594 = vmatpush.bf16.msra.mxu0 %v7453
    %8595 = vmatpush.bf16.msra.mxu0 %v7446
    %8596 = vmatmul.bf16.gmra.mxu0 %v480
    %v8597 = vpop.f32.mrf.mxu0
    %v8598 = vadd.f32 %v8584, %v8597
    %v8599 = vpop.f32.mrf.mxu0
    %v8600 = vadd.f32 %v8586, %v8599
    %8601 = vdwg.mxu0
    %8602 = vmatpush.bf16.msra.mxu0 %v7551
    %8603 = vmatpush.bf16.msra.mxu0 %v7544
    %8604 = vmatpush.bf16.msra.mxu0 %v7537
    %8605 = vmatpush.bf16.msra.mxu0 %v7530
    %8606 = vmatpush.bf16.msra.mxu0 %v7523
    %8607 = vmatpush.bf16.msra.mxu0 %v7516
    %8608 = vmatpush.bf16.msra.mxu0 %v7509
    %8609 = vmatpush.bf16.msra.mxu0 %v7502
    %8610 = vmatmul.bf16.gmra.mxu0 %v481
    %v8611 = vpop.f32.mrf.mxu0
    %v8612 = vadd.f32 %v8598, %v8611
    %v8613 = vpop.f32.mrf.mxu0
    %v8614 = vadd.f32 %v8600, %v8613
    %8615 = vdwg.mxu0
    %8616 = vmatpush.bf16.msra.mxu0 %v7607
    %8617 = vmatpush.bf16.msra.mxu0 %v7600
    %8618 = vmatpush.bf16.msra.mxu0 %v7593
    %8619 = vmatpush.bf16.msra.mxu0 %v7586
    %8620 = vmatpush.bf16.msra.mxu0 %v7579
    %8621 = vmatpush.bf16.msra.mxu0 %v7572
    %8622 = vmatpush.bf16.msra.mxu0 %v7565
    %8623 = vmatpush.bf16.msra.mxu0 %v7558
    %8624 = vmatmul.bf16.gmra.mxu0 %v482
    %v8625 = vpop.f32.mrf.mxu0
    %v8626 = vadd.f32 %v8612, %v8625
    %v8627 = vpop.f32.mrf.mxu0
    %v8628 = vadd.f32 %v8614, %v8627
    %8629 = vdwg.mxu0
    %8630 = vmatpush.bf16.msra.mxu0 0
    %8631 = vmatpush.bf16.msra.mxu0 0
    %8632 = vmatpush.bf16.msra.mxu0 0
    %8633 = vmatpush.bf16.msra.mxu0 0
    %8634 = vmatpush.bf16.msra.mxu0 0
    %8635 = vmatpush.bf16.msra.mxu0 0
    %8636 = vmatpush.bf16.msra.mxu0 0
    %8637 = vmatpush.bf16.msra.mxu0 %v7614
    %8638 = vmatmul.bf16.gmra.mxu0 %v2256
    %v8639 = vpop.f32.mrf.mxu0
    %v8640 = vadd.f32 %v8626, %v8639
    %v8641 = vpop.f32.mrf.mxu0
    %v8642 = vadd.f32 %v8628, %v8641
    %8643 = vdwg.mxu0
    %v8644 = vmax.f32 %v5787, %v8052
    %v8645 = vmax.f32 %v5788, %v8150
    %v8646 = vmax.f32 %v5789, %v8248
    %v8647 = vmax.f32 %v5790, %v8346
    %v8648 = vmax.f32 %v5791, %v8444
    %v8649 = vmax.f32 %v5792, %v8542
    %v8650 = vmax.f32 %v5793, %v8640
    %v8651 = vmax.f32 %v5794, %v8054
    %v8652 = vmax.f32 %v5795, %v8152
    %v8653 = vmax.f32 %v5796, %v8250
    %v8654 = vmax.f32 %v5797, %v8348
    %v8655 = vmax.f32 %v5798, %v8446
    %v8656 = vmax.f32 %v5799, %v8544
    %v8657 = vmax.f32 %v5800, %v8642
    %s8658 = scalar_lea.vmem [#allocation2], 8232
    %v8659 = vld [vmem:[%s8658] sm:$0xff]
    %v8660 = vld [vmem:[%s8658 + $0x8] sm:$0xff]
    %v8661 = vld [vmem:[%s8658 + $0x10] sm:$0xff]
    %v8662 = vld [vmem:[%s8658 + $0x18] sm:$0xf]
    %v8663 = vld [vmem:[%s8658 + $0x1c] sm:$0xff]
    %v8664 = vld [vmem:[%s8658 + $0x24] sm:$0xff]
    %v8665 = vld [vmem:[%s8658 + $0x2c] sm:$0xff]
    %v8666 = vld [vmem:[%s8658 + $0x34] sm:$0xf]
    %v8667 = vld [vmem:[%s8658 + $0x38] sm:$0xff]
    %v8668 = vld [vmem:[%s8658 + $0x40] sm:$0xff]
    %v8669 = vld [vmem:[%s8658 + $0x48] sm:$0xff]
    %v8670 = vld [vmem:[%s8658 + $0x50] sm:$0xf]
    %v8671 = vld [vmem:[%s8658 + $0x54] sm:$0xff]
    %v8672 = vld [vmem:[%s8658 + $0x5c] sm:$0xff]
    %v8673 = vld [vmem:[%s8658 + $0x64] sm:$0xff]
    %v8674 = vld [vmem:[%s8658 + $0x6c] sm:$0xf]
    %v8675 = vld [vmem:[%s8658 + $0x70] sm:$0xff]
    %v8676 = vld [vmem:[%s8658 + $0x78] sm:$0xff]
    %v8677 = vld [vmem:[%s8658 + $0x80] sm:$0xff]
    %v8678 = vld [vmem:[%s8658 + $0x88] sm:$0xf]
    %v8679 = vld [vmem:[%s8658 + $0x8c] sm:$0xff]
    %v8680 = vld [vmem:[%s8658 + $0x94] sm:$0xff]
    %v8681 = vld [vmem:[%s8658 + $0x9c] sm:$0xff]
    %v8682 = vld [vmem:[%s8658 + $0xa4] sm:$0xf]
    %v8683 = vld [vmem:[%s8658 + $0xa8] sm:$0xff]
    %v8684 = vld [vmem:[%s8658 + $0xb0] sm:$0xff]
    %v8685 = vld [vmem:[%s8658 + $0xb8] sm:$0xff]
    %v8686 = vld [vmem:[%s8658 + $0xc0] sm:$0xf]
    %v8687 = vld [vmem:[%s8658 + $0xc4] sm:$0xff]
    %v8688 = vld [vmem:[%s8658 + $0xcc] sm:$0xff]
    %v8689 = vld [vmem:[%s8658 + $0xd4] sm:$0xff]
    %v8690 = vld [vmem:[%s8658 + $0xdc] sm:$0xf]
    %v8691 = vld [vmem:[%s8658 + $0xe0] sm:$0xff]
    %v8692 = vld [vmem:[%s8658 + $0xe8] sm:$0xff]
    %v8693 = vld [vmem:[%s8658 + $0xf0] sm:$0xff]
    %v8694 = vld [vmem:[%s8658 + $0xf8] sm:$0xf]
    %v8695 = vld [vmem:[%s8658 + $0xfc] sm:$0xff]
    %v8696 = vld [vmem:[%s8658 + $0x104] sm:$0xff]
    %v8697 = vld [vmem:[%s8658 + $0x10c] sm:$0xff]
    %v8698 = vld [vmem:[%s8658 + $0x114] sm:$0xf]
    %v8699 = vld [vmem:[%s8658 + $0x118] sm:$0xff]
    %v8700 = vld [vmem:[%s8658 + $0x120] sm:$0xff]
    %v8701 = vld [vmem:[%s8658 + $0x128] sm:$0xff]
    %v8702 = vld [vmem:[%s8658 + $0x130] sm:$0xf]
    %v8703 = vld [vmem:[%s8658 + $0x134] sm:$0xff]
    %v8704 = vld [vmem:[%s8658 + $0x13c] sm:$0xff]
    %v8705 = vld [vmem:[%s8658 + $0x144] sm:$0xff]
    %v8706 = vld [vmem:[%s8658 + $0x14c] sm:$0xf]
    %v8707 = vld [vmem:[%s8658 + $0x150] sm:$0xff]
    %v8708 = vld [vmem:[%s8658 + $0x158] sm:$0xff]
    %v8709 = vld [vmem:[%s8658 + $0x160] sm:$0xff]
    %v8710 = vld [vmem:[%s8658 + $0x168] sm:$0xf]
    %v8711 = vld [vmem:[%s8658 + $0x16c] sm:$0xff]
    %v8712 = vld [vmem:[%s8658 + $0x174] sm:$0xff]
    %v8713 = vld [vmem:[%s8658 + $0x17c] sm:$0xff]
    %v8714 = vld [vmem:[%s8658 + $0x184] sm:$0xf]
    %v8715 = vld [vmem:[%s8658 + $0x188] sm:$0xff]
    %v8716 = vld [vmem:[%s8658 + $0x190] sm:$0xff]
    %v8717 = vld [vmem:[%s8658 + $0x198] sm:$0xff]
    %v8718 = vld [vmem:[%s8658 + $0x1a0] sm:$0xf]
    %v8719 = vld [vmem:[%s8658 + $0x1a4] sm:$0xff]
    %v8720 = vld [vmem:[%s8658 + $0x1ac] sm:$0xff]
    %v8721 = vld [vmem:[%s8658 + $0x1b4] sm:$0xff]
    %v8722 = vld [vmem:[%s8658 + $0x1bc] sm:$0xf]
    %v8723 = vld [vmem:[%s8658 + $0x1c0] sm:$0xff]
    %v8724 = vld [vmem:[%s8658 + $0x1c8] sm:$0xff]
    %v8725 = vld [vmem:[%s8658 + $0x1d0] sm:$0xff]
    %v8726 = vld [vmem:[%s8658 + $0x1d8] sm:$0xf]
    %v8727 = vld [vmem:[%s8658 + $0x1dc] sm:$0xff]
    %v8728 = vld [vmem:[%s8658 + $0x1e4] sm:$0xff]
    %v8729 = vld [vmem:[%s8658 + $0x1ec] sm:$0xff]
    %v8730 = vld [vmem:[%s8658 + $0x1f4] sm:$0xf]
    %v8731 = vld [vmem:[%s8658 + $0x1f8] sm:$0xff]
    %v8732 = vld [vmem:[%s8658 + $0x200] sm:$0xff]
    %v8733 = vld [vmem:[%s8658 + $0x208] sm:$0xff]
    %v8734 = vld [vmem:[%s8658 + $0x210] sm:$0xf]
    %v8735 = vld [vmem:[%s8658 + $0x214] sm:$0xff]
    %v8736 = vld [vmem:[%s8658 + $0x21c] sm:$0xff]
    %v8737 = vld [vmem:[%s8658 + $0x224] sm:$0xff]
    %v8738 = vld [vmem:[%s8658 + $0x22c] sm:$0xf]
    %v8739 = vld [vmem:[%s8658 + $0x230] sm:$0xff]
    %v8740 = vld [vmem:[%s8658 + $0x238] sm:$0xff]
    %v8741 = vld [vmem:[%s8658 + $0x240] sm:$0xff]
    %v8742 = vld [vmem:[%s8658 + $0x248] sm:$0xf]
    %v8743 = vld [vmem:[%s8658 + $0x24c] sm:$0xff]
    %v8744 = vld [vmem:[%s8658 + $0x254] sm:$0xff]
    %v8745 = vld [vmem:[%s8658 + $0x25c] sm:$0xff]
    %v8746 = vld [vmem:[%s8658 + $0x264] sm:$0xf]
    %v8747 = vld [vmem:[%s8658 + $0x268] sm:$0xff]
    %v8748 = vld [vmem:[%s8658 + $0x270] sm:$0xff]
    %v8749 = vld [vmem:[%s8658 + $0x278] sm:$0xff]
    %v8750 = vld [vmem:[%s8658 + $0x280] sm:$0xf]
    %v8751 = vld [vmem:[%s8658 + $0x284] sm:$0xff]
    %v8752 = vld [vmem:[%s8658 + $0x28c] sm:$0xff]
    %v8753 = vld [vmem:[%s8658 + $0x294] sm:$0xff]
    %v8754 = vld [vmem:[%s8658 + $0x29c] sm:$0xf]
    %v8755 = vld [vmem:[%s8658 + $0x2a0] sm:$0xff]
    %v8756 = vld [vmem:[%s8658 + $0x2a8] sm:$0xff]
    %v8757 = vld [vmem:[%s8658 + $0x2b0] sm:$0xff]
    %v8758 = vld [vmem:[%s8658 + $0x2b8] sm:$0xf]
    %v8759 = vld [vmem:[%s8658 + $0x2bc] sm:$0xff]
    %v8760 = vld [vmem:[%s8658 + $0x2c4] sm:$0xff]
    %v8761 = vld [vmem:[%s8658 + $0x2cc] sm:$0xff]
    %v8762 = vld [vmem:[%s8658 + $0x2d4] sm:$0xf]
    %v8763 = vld [vmem:[%s8658 + $0x2d8] sm:$0xff]
    %v8764 = vld [vmem:[%s8658 + $0x2e0] sm:$0xff]
    %v8765 = vld [vmem:[%s8658 + $0x2e8] sm:$0xff]
    %v8766 = vld [vmem:[%s8658 + $0x2f0] sm:$0xf]
    %v8767 = vld [vmem:[%s8658 + $0x2f4] sm:$0xff]
    %v8768 = vld [vmem:[%s8658 + $0x2fc] sm:$0xff]
    %v8769 = vld [vmem:[%s8658 + $0x304] sm:$0xff]
    %v8770 = vld [vmem:[%s8658 + $0x30c] sm:$0xf]
    %v8771 = vld [vmem:[%s8658 + $0x310] sm:$0xff]
    %v8772 = vld [vmem:[%s8658 + $0x318] sm:$0xff]
    %v8773 = vld [vmem:[%s8658 + $0x320] sm:$0xff]
    %v8774 = vld [vmem:[%s8658 + $0x328] sm:$0xf]
    %v8775 = vld [vmem:[%s8658 + $0x32c] sm:$0xff]
    %v8776 = vld [vmem:[%s8658 + $0x334] sm:$0xff]
    %v8777 = vld [vmem:[%s8658 + $0x33c] sm:$0xff]
    %v8778 = vld [vmem:[%s8658 + $0x344] sm:$0xf]
    %v8779 = vld [vmem:[%s8658 + $0x348] sm:$0xff]
    %v8780 = vld [vmem:[%s8658 + $0x350] sm:$0xff]
    %v8781 = vld [vmem:[%s8658 + $0x358] sm:$0xff]
    %v8782 = vld [vmem:[%s8658 + $0x360] sm:$0xf]
    %v8783 = vld [vmem:[%s8658 + $0x364] sm:$0xff]
    %v8784 = vld [vmem:[%s8658 + $0x36c] sm:$0xff]
    %v8785 = vld [vmem:[%s8658 + $0x374] sm:$0xff]
    %v8786 = vld [vmem:[%s8658 + $0x37c] sm:$0xf]
    %v8787 = vld [vmem:[%s8658 + $0x380] sm:$0xff]
    %v8788 = vld [vmem:[%s8658 + $0x388] sm:$0xff]
    %v8789 = vld [vmem:[%s8658 + $0x390] sm:$0xff]
    %v8790 = vld [vmem:[%s8658 + $0x398] sm:$0xf]
    %v8791 = vld [vmem:[%s8658 + $0x39c] sm:$0xff]
    %v8792 = vld [vmem:[%s8658 + $0x3a4] sm:$0xff]
    %v8793 = vld [vmem:[%s8658 + $0x3ac] sm:$0xff]
    %v8794 = vld [vmem:[%s8658 + $0x3b4] sm:$0xf]
    %v8795 = vld [vmem:[%s8658 + $0x3b8] sm:$0xff]
    %v8796 = vld [vmem:[%s8658 + $0x3c0] sm:$0xff]
    %v8797 = vld [vmem:[%s8658 + $0x3c8] sm:$0xff]
    %v8798 = vld [vmem:[%s8658 + $0x3d0] sm:$0xf]
    %v8799 = vld [vmem:[%s8658 + $0x3d4] sm:$0xff]
    %v8800 = vld [vmem:[%s8658 + $0x3dc] sm:$0xff]
    %v8801 = vld [vmem:[%s8658 + $0x3e4] sm:$0xff]
    %v8802 = vld [vmem:[%s8658 + $0x3ec] sm:$0xf]
    %v8803 = vld [vmem:[%s8658 + $0x3f0] sm:$0xff]
    %v8804 = vld [vmem:[%s8658 + $0x3f8] sm:$0xff]
    %v8805 = vld [vmem:[%s8658 + $0x400] sm:$0xff]
    %v8806 = vld [vmem:[%s8658 + $0x408] sm:$0xf]
    %v8807 = vld [vmem:[%s8658 + $0x40c] sm:$0xff]
    %v8808 = vld [vmem:[%s8658 + $0x414] sm:$0xff]
    %v8809 = vld [vmem:[%s8658 + $0x41c] sm:$0xff]
    %v8810 = vld [vmem:[%s8658 + $0x424] sm:$0xf]
    %v8811 = vld [vmem:[%s8658 + $0x428] sm:$0xff]
    %v8812 = vld [vmem:[%s8658 + $0x430] sm:$0xff]
    %v8813 = vld [vmem:[%s8658 + $0x438] sm:$0xff]
    %v8814 = vld [vmem:[%s8658 + $0x440] sm:$0xf]
    %v8815 = vld [vmem:[%s8658 + $0x444] sm:$0xff]
    %v8816 = vld [vmem:[%s8658 + $0x44c] sm:$0xff]
    %v8817 = vld [vmem:[%s8658 + $0x454] sm:$0xff]
    %v8818 = vld [vmem:[%s8658 + $0x45c] sm:$0xf]
    %v8819 = vld [vmem:[%s8658 + $0x460] sm:$0xff]
    %v8820 = vld [vmem:[%s8658 + $0x468] sm:$0xff]
    %v8821 = vld [vmem:[%s8658 + $0x470] sm:$0xff]
    %v8822 = vld [vmem:[%s8658 + $0x478] sm:$0xf]
    %v8823 = vld [vmem:[%s8658 + $0x47c] sm:$0xff]
    %v8824 = vld [vmem:[%s8658 + $0x484] sm:$0xff]
    %v8825 = vld [vmem:[%s8658 + $0x48c] sm:$0xff]
    %v8826 = vld [vmem:[%s8658 + $0x494] sm:$0xf]
    %v8827 = vld [vmem:[%s8658 + $0x498] sm:$0xff]
    %v8828 = vld [vmem:[%s8658 + $0x4a0] sm:$0xff]
    %v8829 = vld [vmem:[%s8658 + $0x4a8] sm:$0xff]
    %v8830 = vld [vmem:[%s8658 + $0x4b0] sm:$0xf]
    %v8831 = vld [vmem:[%s8658 + $0x4b4] sm:$0xff]
    %v8832 = vld [vmem:[%s8658 + $0x4bc] sm:$0xff]
    %v8833 = vld [vmem:[%s8658 + $0x4c4] sm:$0xff]
    %v8834 = vld [vmem:[%s8658 + $0x4cc] sm:$0xf]
    %v8835 = vld [vmem:[%s8658 + $0x4d0] sm:$0xff]
    %v8836 = vld [vmem:[%s8658 + $0x4d8] sm:$0xff]
    %v8837 = vld [vmem:[%s8658 + $0x4e0] sm:$0xff]
    %v8838 = vld [vmem:[%s8658 + $0x4e8] sm:$0xf]
    %v8839 = vld [vmem:[%s8658 + $0x4ec] sm:$0xff]
    %v8840 = vld [vmem:[%s8658 + $0x4f4] sm:$0xff]
    %v8841 = vld [vmem:[%s8658 + $0x4fc] sm:$0xff]
    %v8842 = vld [vmem:[%s8658 + $0x504] sm:$0xf]
    %v8843 = vld [vmem:[%s8658 + $0x508] sm:$0xff]
    %v8844 = vld [vmem:[%s8658 + $0x510] sm:$0xff]
    %v8845 = vld [vmem:[%s8658 + $0x518] sm:$0xff]
    %v8846 = vld [vmem:[%s8658 + $0x520] sm:$0xf]
    %v8847 = vld [vmem:[%s8658 + $0x524] sm:$0xff]
    %v8848 = vld [vmem:[%s8658 + $0x52c] sm:$0xff]
    %v8849 = vld [vmem:[%s8658 + $0x534] sm:$0xff]
    %v8850 = vld [vmem:[%s8658 + $0x53c] sm:$0xf]
    %v8851 = vld [vmem:[%s8658 + $0x540] sm:$0xff]
    %v8852 = vld [vmem:[%s8658 + $0x548] sm:$0xff]
    %v8853 = vld [vmem:[%s8658 + $0x550] sm:$0xff]
    %v8854 = vld [vmem:[%s8658 + $0x558] sm:$0xf]
    %v8855 = vld [vmem:[%s8658 + $0x55c] sm:$0xff]
    %v8856 = vld [vmem:[%s8658 + $0x564] sm:$0xff]
    %v8857 = vld [vmem:[%s8658 + $0x56c] sm:$0xff]
    %v8858 = vld [vmem:[%s8658 + $0x574] sm:$0xf]
    %v8859 = vld [vmem:[%s8658 + $0x578] sm:$0xff]
    %v8860 = vld [vmem:[%s8658 + $0x580] sm:$0xff]
    %v8861 = vld [vmem:[%s8658 + $0x588] sm:$0xff]
    %v8862 = vld [vmem:[%s8658 + $0x590] sm:$0xf]
    %v8863 = vld [vmem:[%s8658 + $0x594] sm:$0xff]
    %v8864 = vld [vmem:[%s8658 + $0x59c] sm:$0xff]
    %v8865 = vld [vmem:[%s8658 + $0x5a4] sm:$0xff]
    %v8866 = vld [vmem:[%s8658 + $0x5ac] sm:$0xf]
    %v8867 = vld [vmem:[%s8658 + $0x5b0] sm:$0xff]
    %v8868 = vld [vmem:[%s8658 + $0x5b8] sm:$0xff]
    %v8869 = vld [vmem:[%s8658 + $0x5c0] sm:$0xff]
    %v8870 = vld [vmem:[%s8658 + $0x5c8] sm:$0xf]
    %v8871 = vld [vmem:[%s8658 + $0x5cc] sm:$0xff]
    %v8872 = vld [vmem:[%s8658 + $0x5d4] sm:$0xff]
    %v8873 = vld [vmem:[%s8658 + $0x5dc] sm:$0xff]
    %v8874 = vld [vmem:[%s8658 + $0x5e4] sm:$0xf]
    %v8875 = vld [vmem:[%s8658 + $0x5e8] sm:$0xff]
    %v8876 = vld [vmem:[%s8658 + $0x5f0] sm:$0xff]
    %v8877 = vld [vmem:[%s8658 + $0x5f8] sm:$0xff]
    %v8878 = vld [vmem:[%s8658 + $0x600] sm:$0xf]
    %v8879 = vld [vmem:[%s8658 + $0x604] sm:$0xff]
    %v8880 = vld [vmem:[%s8658 + $0x60c] sm:$0xff]
    %v8881 = vld [vmem:[%s8658 + $0x614] sm:$0xff]
    %v8882 = vld [vmem:[%s8658 + $0x61c] sm:$0xf]
    %v8883 = vld [vmem:[%s8658 + $0x620] sm:$0xff]
    %v8884 = vld [vmem:[%s8658 + $0x628] sm:$0xff]
    %v8885 = vld [vmem:[%s8658 + $0x630] sm:$0xff]
    %v8886 = vld [vmem:[%s8658 + $0x638] sm:$0xf]
    %v8887 = vld [vmem:[%s8658 + $0x63c] sm:$0xff]
    %v8888 = vld [vmem:[%s8658 + $0x644] sm:$0xff]
    %v8889 = vld [vmem:[%s8658 + $0x64c] sm:$0xff]
    %v8890 = vld [vmem:[%s8658 + $0x654] sm:$0xf]
    %v8891 = vld [vmem:[%s8658 + $0x658] sm:$0xff]
    %v8892 = vld [vmem:[%s8658 + $0x660] sm:$0xff]
    %v8893 = vld [vmem:[%s8658 + $0x668] sm:$0xff]
    %v8894 = vld [vmem:[%s8658 + $0x670] sm:$0xf]
    %v8895 = vld [vmem:[%s8658 + $0x674] sm:$0xff]
    %v8896 = vld [vmem:[%s8658 + $0x67c] sm:$0xff]
    %v8897 = vld [vmem:[%s8658 + $0x684] sm:$0xff]
    %v8898 = vld [vmem:[%s8658 + $0x68c] sm:$0xf]
    %v8899 = vld [vmem:[%s8658 + $0x690] sm:$0xff]
    %v8900 = vld [vmem:[%s8658 + $0x698] sm:$0xff]
    %v8901 = vld [vmem:[%s8658 + $0x6a0] sm:$0xff]
    %v8902 = vld [vmem:[%s8658 + $0x6a8] sm:$0xf]
    %v8903 = vld [vmem:[%s8658 + $0x6ac] sm:$0xff]
    %v8904 = vld [vmem:[%s8658 + $0x6b4] sm:$0xff]
    %v8905 = vld [vmem:[%s8658 + $0x6bc] sm:$0xff]
    %v8906 = vld [vmem:[%s8658 + $0x6c4] sm:$0xf]
    %v8907 = vld [vmem:[%s8658 + $0x6c8] sm:$0xff]
    %v8908 = vld [vmem:[%s8658 + $0x6d0] sm:$0xff]
    %v8909 = vld [vmem:[%s8658 + $0x6d8] sm:$0xff]
    %v8910 = vld [vmem:[%s8658 + $0x6e0] sm:$0xf]
    %v8911 = vld [vmem:[%s8658 + $0x6e4] sm:$0xff]
    %v8912 = vld [vmem:[%s8658 + $0x6ec] sm:$0xff]
    %v8913 = vld [vmem:[%s8658 + $0x6f4] sm:$0xff]
    %v8914 = vld [vmem:[%s8658 + $0x6fc] sm:$0xf]
    %v8915 = vld [vmem:[%s8658 + $0x700] sm:$0xff]
    %v8916 = vld [vmem:[%s8658 + $0x708] sm:$0xff]
    %v8917 = vld [vmem:[%s8658 + $0x710] sm:$0xff]
    %v8918 = vld [vmem:[%s8658 + $0x718] sm:$0xf]
    %v8919 = vld [vmem:[%s8658 + $0x71c] sm:$0xff]
    %v8920 = vld [vmem:[%s8658 + $0x724] sm:$0xff]
    %v8921 = vld [vmem:[%s8658 + $0x72c] sm:$0xff]
    %v8922 = vld [vmem:[%s8658 + $0x734] sm:$0xf]
    %v8923 = vld [vmem:[%s8658 + $0x738] sm:$0xff]
    %v8924 = vld [vmem:[%s8658 + $0x740] sm:$0xff]
    %v8925 = vld [vmem:[%s8658 + $0x748] sm:$0xff]
    %v8926 = vld [vmem:[%s8658 + $0x750] sm:$0xf]
    %v8927 = vld [vmem:[%s8658 + $0x754] sm:$0xff]
    %v8928 = vld [vmem:[%s8658 + $0x75c] sm:$0xff]
    %v8929 = vld [vmem:[%s8658 + $0x764] sm:$0xff]
    %v8930 = vld [vmem:[%s8658 + $0x76c] sm:$0xf]
    %v8931 = vld [vmem:[%s8658 + $0x770] sm:$0xff]
    %v8932 = vld [vmem:[%s8658 + $0x778] sm:$0xff]
    %v8933 = vld [vmem:[%s8658 + $0x780] sm:$0xff]
    %v8934 = vld [vmem:[%s8658 + $0x788] sm:$0xf]
    %v8935 = vld [vmem:[%s8658 + $0x78c] sm:$0xff]
    %v8936 = vld [vmem:[%s8658 + $0x794] sm:$0xff]
    %v8937 = vld [vmem:[%s8658 + $0x79c] sm:$0xff]
    %v8938 = vld [vmem:[%s8658 + $0x7a4] sm:$0xf]
    %v8939 = vld [vmem:[%s8658 + $0x7a8] sm:$0xff]
    %v8940 = vld [vmem:[%s8658 + $0x7b0] sm:$0xff]
    %v8941 = vld [vmem:[%s8658 + $0x7b8] sm:$0xff]
    %v8942 = vld [vmem:[%s8658 + $0x7c0] sm:$0xf]
    %v8943 = vld [vmem:[%s8658 + $0x7c4] sm:$0xff]
    %v8944 = vld [vmem:[%s8658 + $0x7cc] sm:$0xff]
    %v8945 = vld [vmem:[%s8658 + $0x7d4] sm:$0xff]
    %v8946 = vld [vmem:[%s8658 + $0x7dc] sm:$0xf]
    %v8947 = vld [vmem:[%s8658 + $0x7e0] sm:$0xff]
    %v8948 = vld [vmem:[%s8658 + $0x7e8] sm:$0xff]
    %v8949 = vld [vmem:[%s8658 + $0x7f0] sm:$0xff]
    %v8950 = vld [vmem:[%s8658 + $0x7f8] sm:$0xf]
    %v8951 = vld [vmem:[%s8658 + $0x7fc] sm:$0xff]
    %v8952 = vld [vmem:[%s8658 + $0x804] sm:$0xff]
    %v8953 = vld [vmem:[%s8658 + $0x80c] sm:$0xff]
    %v8954 = vld [vmem:[%s8658 + $0x814] sm:$0xf]
    %v8955 = vld [vmem:[%s8658 + $0x818] sm:$0xff]
    %v8956 = vld [vmem:[%s8658 + $0x820] sm:$0xff]
    %v8957 = vld [vmem:[%s8658 + $0x828] sm:$0xff]
    %v8958 = vld [vmem:[%s8658 + $0x830] sm:$0xf]
    %v8959 = vld [vmem:[%s8658 + $0x834] sm:$0xff]
    %v8960 = vld [vmem:[%s8658 + $0x83c] sm:$0xff]
    %v8961 = vld [vmem:[%s8658 + $0x844] sm:$0xff]
    %v8962 = vld [vmem:[%s8658 + $0x84c] sm:$0xf]
    %v8963 = vld [vmem:[%s8658 + $0x850] sm:$0xff]
    %v8964 = vld [vmem:[%s8658 + $0x858] sm:$0xff]
    %v8965 = vld [vmem:[%s8658 + $0x860] sm:$0xff]
    %v8966 = vld [vmem:[%s8658 + $0x868] sm:$0xf]
    %v8967 = vld [vmem:[%s8658 + $0x86c] sm:$0xff]
    %v8968 = vld [vmem:[%s8658 + $0x874] sm:$0xff]
    %v8969 = vld [vmem:[%s8658 + $0x87c] sm:$0xff]
    %v8970 = vld [vmem:[%s8658 + $0x884] sm:$0xf]
    %v8971 = vld [vmem:[%s8658 + $0x888] sm:$0xff]
    %v8972 = vld [vmem:[%s8658 + $0x890] sm:$0xff]
    %v8973 = vld [vmem:[%s8658 + $0x898] sm:$0xff]
    %v8974 = vld [vmem:[%s8658 + $0x8a0] sm:$0xf]
    %v8975 = vld [vmem:[%s8658 + $0x8a4] sm:$0xff]
    %v8976 = vld [vmem:[%s8658 + $0x8ac] sm:$0xff]
    %v8977 = vld [vmem:[%s8658 + $0x8b4] sm:$0xff]
    %v8978 = vld [vmem:[%s8658 + $0x8bc] sm:$0xf]
    %v8979 = vld [vmem:[%s8658 + $0x8c0] sm:$0xff]
    %v8980 = vld [vmem:[%s8658 + $0x8c8] sm:$0xff]
    %v8981 = vld [vmem:[%s8658 + $0x8d0] sm:$0xff]
    %v8982 = vld [vmem:[%s8658 + $0x8d8] sm:$0xf]
    %v8983 = vld [vmem:[%s8658 + $0x8dc] sm:$0xff]
    %v8984 = vld [vmem:[%s8658 + $0x8e4] sm:$0xff]
    %v8985 = vld [vmem:[%s8658 + $0x8ec] sm:$0xff]
    %v8986 = vld [vmem:[%s8658 + $0x8f4] sm:$0xf]
    %v8987 = vld [vmem:[%s8658 + $0x8f8] sm:$0xff]
    %v8988 = vld [vmem:[%s8658 + $0x900] sm:$0xff]
    %v8989 = vld [vmem:[%s8658 + $0x908] sm:$0xff]
    %v8990 = vld [vmem:[%s8658 + $0x910] sm:$0xf]
    %v8991 = vld [vmem:[%s8658 + $0x914] sm:$0xff]
    %v8992 = vld [vmem:[%s8658 + $0x91c] sm:$0xff]
    %v8993 = vld [vmem:[%s8658 + $0x924] sm:$0xff]
    %v8994 = vld [vmem:[%s8658 + $0x92c] sm:$0xf]
    %v8995 = vld [vmem:[%s8658 + $0x930] sm:$0xff]
    %v8996 = vld [vmem:[%s8658 + $0x938] sm:$0xff]
    %v8997 = vld [vmem:[%s8658 + $0x940] sm:$0xff]
    %v8998 = vld [vmem:[%s8658 + $0x948] sm:$0xf]
    %v8999 = vld [vmem:[%s8658 + $0x94c] sm:$0xff]
    %v9000 = vld [vmem:[%s8658 + $0x954] sm:$0xff]
    %v9001 = vld [vmem:[%s8658 + $0x95c] sm:$0xff]
    %v9002 = vld [vmem:[%s8658 + $0x964] sm:$0xf]
    %v9003 = vld [vmem:[%s8658 + $0x968] sm:$0xff]
    %v9004 = vld [vmem:[%s8658 + $0x970] sm:$0xff]
    %v9005 = vld [vmem:[%s8658 + $0x978] sm:$0xff]
    %v9006 = vld [vmem:[%s8658 + $0x980] sm:$0xf]
    %v9007 = vld [vmem:[%s8658 + $0x984] sm:$0xff]
    %v9008 = vld [vmem:[%s8658 + $0x98c] sm:$0xff]
    %v9009 = vld [vmem:[%s8658 + $0x994] sm:$0xff]
    %v9010 = vld [vmem:[%s8658 + $0x99c] sm:$0xf]
    %v9011 = vld [vmem:[%s8658 + $0x9a0] sm:$0xff]
    %v9012 = vld [vmem:[%s8658 + $0x9a8] sm:$0xff]
    %v9013 = vld [vmem:[%s8658 + $0x9b0] sm:$0xff]
    %v9014 = vld [vmem:[%s8658 + $0x9b8] sm:$0xf]
    %v9015 = vld [vmem:[%s8658 + $0x9bc] sm:$0xff]
    %v9016 = vld [vmem:[%s8658 + $0x9c4] sm:$0xff]
    %v9017 = vld [vmem:[%s8658 + $0x9cc] sm:$0xff]
    %v9018 = vld [vmem:[%s8658 + $0x9d4] sm:$0xf]
    %v9019 = vld [vmem:[%s8658 + $0x9d8] sm:$0xff]
    %v9020 = vld [vmem:[%s8658 + $0x9e0] sm:$0xff]
    %v9021 = vld [vmem:[%s8658 + $0x9e8] sm:$0xff]
    %v9022 = vld [vmem:[%s8658 + $0x9f0] sm:$0xf]
    %v9023 = vld [vmem:[%s8658 + $0x9f4] sm:$0xff]
    %v9024 = vld [vmem:[%s8658 + $0x9fc] sm:$0xff]
    %v9025 = vld [vmem:[%s8658 + $0xa04] sm:$0xff]
    %v9026 = vld [vmem:[%s8658 + $0xa0c] sm:$0xf]
    %v9027 = vld [vmem:[%s8658 + $0xa10] sm:$0xff]
    %v9028 = vld [vmem:[%s8658 + $0xa18] sm:$0xff]
    %v9029 = vld [vmem:[%s8658 + $0xa20] sm:$0xff]
    %v9030 = vld [vmem:[%s8658 + $0xa28] sm:$0xf]
    %v9031 = vld [vmem:[%s8658 + $0xa2c] sm:$0xff]
    %v9032 = vld [vmem:[%s8658 + $0xa34] sm:$0xff]
    %v9033 = vld [vmem:[%s8658 + $0xa3c] sm:$0xff]
    %v9034 = vld [vmem:[%s8658 + $0xa44] sm:$0xf]
    %v9035 = vld [vmem:[%s8658 + $0xa48] sm:$0xff]
    %v9036 = vld [vmem:[%s8658 + $0xa50] sm:$0xff]
    %v9037 = vld [vmem:[%s8658 + $0xa58] sm:$0xff]
    %v9038 = vld [vmem:[%s8658 + $0xa60] sm:$0xf]
    %v9039 = vld [vmem:[%s8658 + $0xa64] sm:$0xff]
    %v9040 = vld [vmem:[%s8658 + $0xa6c] sm:$0xff]
    %v9041 = vld [vmem:[%s8658 + $0xa74] sm:$0xff]
    %v9042 = vld [vmem:[%s8658 + $0xa7c] sm:$0xf]
    %v9043 = vld [vmem:[%s8658 + $0xa80] sm:$0xff]
    %v9044 = vld [vmem:[%s8658 + $0xa88] sm:$0xff]
    %v9045 = vld [vmem:[%s8658 + $0xa90] sm:$0xff]
    %v9046 = vld [vmem:[%s8658 + $0xa98] sm:$0xf]
    %v9047 = vld [vmem:[%s8658 + $0xa9c] sm:$0xff]
    %v9048 = vld [vmem:[%s8658 + $0xaa4] sm:$0xff]
    %v9049 = vld [vmem:[%s8658 + $0xaac] sm:$0xff]
    %v9050 = vld [vmem:[%s8658 + $0xab4] sm:$0xf]
    %v9443 = vunpack.c.l.b16 %v8659
    %v9444 = vunpack.c.h.b16 %v8659
    %v9445 = vunpack.c.l.b16 %v8660
    %v9446 = vunpack.c.h.b16 %v8660
    %v9447 = vunpack.c.l.b16 %v8661
    %v9448 = vunpack.c.h.b16 %v8661
    %v9449 = vunpack.c.l.b16 %v8662
    %v9450 = vunpack.c.l.b16 %v8663
    %v9451 = vunpack.c.h.b16 %v8663
    %v9452 = vunpack.c.l.b16 %v8664
    %v9453 = vunpack.c.h.b16 %v8664
    %v9454 = vunpack.c.l.b16 %v8665
    %v9455 = vunpack.c.h.b16 %v8665
    %v9456 = vunpack.c.l.b16 %v8666
    %v9457 = vunpack.c.l.b16 %v8667
    %v9458 = vunpack.c.h.b16 %v8667
    %v9459 = vunpack.c.l.b16 %v8668
    %v9460 = vunpack.c.h.b16 %v8668
    %v9461 = vunpack.c.l.b16 %v8669
    %v9462 = vunpack.c.h.b16 %v8669
    %v9463 = vunpack.c.l.b16 %v8670
    %v9464 = vunpack.c.l.b16 %v8671
    %v9465 = vunpack.c.h.b16 %v8671
    %v9466 = vunpack.c.l.b16 %v8672
    %v9467 = vunpack.c.h.b16 %v8672
    %v9468 = vunpack.c.l.b16 %v8673
    %v9469 = vunpack.c.h.b16 %v8673
    %v9470 = vunpack.c.l.b16 %v8674
    %v9471 = vunpack.c.l.b16 %v8675
    %v9472 = vunpack.c.h.b16 %v8675
    %v9473 = vunpack.c.l.b16 %v8676
    %v9474 = vunpack.c.h.b16 %v8676
    %v9475 = vunpack.c.l.b16 %v8677
    %v9476 = vunpack.c.h.b16 %v8677
    %v9477 = vunpack.c.l.b16 %v8678
    %v9478 = vunpack.c.l.b16 %v8679
    %v9479 = vunpack.c.h.b16 %v8679
    %v9480 = vunpack.c.l.b16 %v8680
    %v9481 = vunpack.c.h.b16 %v8680
    %v9482 = vunpack.c.l.b16 %v8681
    %v9483 = vunpack.c.h.b16 %v8681
    %v9484 = vunpack.c.l.b16 %v8682
    %v9485 = vunpack.c.l.b16 %v8683
    %v9486 = vunpack.c.h.b16 %v8683
    %v9487 = vunpack.c.l.b16 %v8684
    %v9488 = vunpack.c.h.b16 %v8684
    %v9489 = vunpack.c.l.b16 %v8685
    %v9490 = vunpack.c.h.b16 %v8685
    %v9491 = vunpack.c.l.b16 %v8686
    %v9492 = vunpack.c.l.b16 %v8687
    %v9493 = vunpack.c.h.b16 %v8687
    %v9494 = vunpack.c.l.b16 %v8688
    %v9495 = vunpack.c.h.b16 %v8688
    %v9496 = vunpack.c.l.b16 %v8689
    %v9497 = vunpack.c.h.b16 %v8689
    %v9498 = vunpack.c.l.b16 %v8690
    %v9499 = vunpack.c.l.b16 %v8691
    %v9500 = vunpack.c.h.b16 %v8691
    %v9501 = vunpack.c.l.b16 %v8692
    %v9502 = vunpack.c.h.b16 %v8692
    %v9503 = vunpack.c.l.b16 %v8693
    %v9504 = vunpack.c.h.b16 %v8693
    %v9505 = vunpack.c.l.b16 %v8694
    %v9506 = vunpack.c.l.b16 %v8695
    %v9507 = vunpack.c.h.b16 %v8695
    %v9508 = vunpack.c.l.b16 %v8696
    %v9509 = vunpack.c.h.b16 %v8696
    %v9510 = vunpack.c.l.b16 %v8697
    %v9511 = vunpack.c.h.b16 %v8697
    %v9512 = vunpack.c.l.b16 %v8698
    %v9513 = vunpack.c.l.b16 %v8699
    %v9514 = vunpack.c.h.b16 %v8699
    %v9515 = vunpack.c.l.b16 %v8700
    %v9516 = vunpack.c.h.b16 %v8700
    %v9517 = vunpack.c.l.b16 %v8701
    %v9518 = vunpack.c.h.b16 %v8701
    %v9519 = vunpack.c.l.b16 %v8702
    %v9520 = vunpack.c.l.b16 %v8703
    %v9521 = vunpack.c.h.b16 %v8703
    %v9522 = vunpack.c.l.b16 %v8704
    %v9523 = vunpack.c.h.b16 %v8704
    %v9524 = vunpack.c.l.b16 %v8705
    %v9525 = vunpack.c.h.b16 %v8705
    %v9526 = vunpack.c.l.b16 %v8706
    %v9527 = vunpack.c.l.b16 %v8707
    %v9528 = vunpack.c.h.b16 %v8707
    %v9529 = vunpack.c.l.b16 %v8708
    %v9530 = vunpack.c.h.b16 %v8708
    %v9531 = vunpack.c.l.b16 %v8709
    %v9532 = vunpack.c.h.b16 %v8709
    %v9533 = vunpack.c.l.b16 %v8710
    %v9534 = vunpack.c.l.b16 %v8711
    %v9535 = vunpack.c.h.b16 %v8711
    %v9536 = vunpack.c.l.b16 %v8712
    %v9537 = vunpack.c.h.b16 %v8712
    %v9538 = vunpack.c.l.b16 %v8713
    %v9539 = vunpack.c.h.b16 %v8713
    %v9540 = vunpack.c.l.b16 %v8714
    %v9541 = vunpack.c.l.b16 %v8715
    %v9542 = vunpack.c.h.b16 %v8715
    %v9543 = vunpack.c.l.b16 %v8716
    %v9544 = vunpack.c.h.b16 %v8716
    %v9545 = vunpack.c.l.b16 %v8717
    %v9546 = vunpack.c.h.b16 %v8717
    %v9547 = vunpack.c.l.b16 %v8718
    %v9548 = vunpack.c.l.b16 %v8719
    %v9549 = vunpack.c.h.b16 %v8719
    %v9550 = vunpack.c.l.b16 %v8720
    %v9551 = vunpack.c.h.b16 %v8720
    %v9552 = vunpack.c.l.b16 %v8721
    %v9553 = vunpack.c.h.b16 %v8721
    %v9554 = vunpack.c.l.b16 %v8722
    %v9555 = vunpack.c.l.b16 %v8723
    %v9556 = vunpack.c.h.b16 %v8723
    %v9557 = vunpack.c.l.b16 %v8724
    %v9558 = vunpack.c.h.b16 %v8724
    %v9559 = vunpack.c.l.b16 %v8725
    %v9560 = vunpack.c.h.b16 %v8725
    %v9561 = vunpack.c.l.b16 %v8726
    %v9562 = vunpack.c.l.b16 %v8727
    %v9563 = vunpack.c.h.b16 %v8727
    %v9564 = vunpack.c.l.b16 %v8728
    %v9565 = vunpack.c.h.b16 %v8728
    %v9566 = vunpack.c.l.b16 %v8729
    %v9567 = vunpack.c.h.b16 %v8729
    %v9568 = vunpack.c.l.b16 %v8730
    %v9569 = vunpack.c.l.b16 %v8731
    %v9570 = vunpack.c.h.b16 %v8731
    %v9571 = vunpack.c.l.b16 %v8732
    %v9572 = vunpack.c.h.b16 %v8732
    %v9573 = vunpack.c.l.b16 %v8733
    %v9574 = vunpack.c.h.b16 %v8733
    %v9575 = vunpack.c.l.b16 %v8734
    %v9576 = vunpack.c.l.b16 %v8735
    %v9577 = vunpack.c.h.b16 %v8735
    %v9578 = vunpack.c.l.b16 %v8736
    %v9579 = vunpack.c.h.b16 %v8736
    %v9580 = vunpack.c.l.b16 %v8737
    %v9581 = vunpack.c.h.b16 %v8737
    %v9582 = vunpack.c.l.b16 %v8738
    %v9583 = vunpack.c.l.b16 %v8739
    %v9584 = vunpack.c.h.b16 %v8739
    %v9585 = vunpack.c.l.b16 %v8740
    %v9586 = vunpack.c.h.b16 %v8740
    %v9587 = vunpack.c.l.b16 %v8741
    %v9588 = vunpack.c.h.b16 %v8741
    %v9589 = vunpack.c.l.b16 %v8742
    %v9590 = vunpack.c.l.b16 %v8743
    %v9591 = vunpack.c.h.b16 %v8743
    %v9592 = vunpack.c.l.b16 %v8744
    %v9593 = vunpack.c.h.b16 %v8744
    %v9594 = vunpack.c.l.b16 %v8745
    %v9595 = vunpack.c.h.b16 %v8745
    %v9596 = vunpack.c.l.b16 %v8746
    %v9597 = vunpack.c.l.b16 %v8747
    %v9598 = vunpack.c.h.b16 %v8747
    %v9599 = vunpack.c.l.b16 %v8748
    %v9600 = vunpack.c.h.b16 %v8748
    %v9601 = vunpack.c.l.b16 %v8749
    %v9602 = vunpack.c.h.b16 %v8749
    %v9603 = vunpack.c.l.b16 %v8750
    %v9604 = vunpack.c.l.b16 %v8751
    %v9605 = vunpack.c.h.b16 %v8751
    %v9606 = vunpack.c.l.b16 %v8752
    %v9607 = vunpack.c.h.b16 %v8752
    %v9608 = vunpack.c.l.b16 %v8753
    %v9609 = vunpack.c.h.b16 %v8753
    %v9610 = vunpack.c.l.b16 %v8754
    %v9611 = vunpack.c.l.b16 %v8755
    %v9612 = vunpack.c.h.b16 %v8755
    %v9613 = vunpack.c.l.b16 %v8756
    %v9614 = vunpack.c.h.b16 %v8756
    %v9615 = vunpack.c.l.b16 %v8757
    %v9616 = vunpack.c.h.b16 %v8757
    %v9617 = vunpack.c.l.b16 %v8758
    %v9618 = vunpack.c.l.b16 %v8759
    %v9619 = vunpack.c.h.b16 %v8759
    %v9620 = vunpack.c.l.b16 %v8760
    %v9621 = vunpack.c.h.b16 %v8760
    %v9622 = vunpack.c.l.b16 %v8761
    %v9623 = vunpack.c.h.b16 %v8761
    %v9624 = vunpack.c.l.b16 %v8762
    %v9625 = vunpack.c.l.b16 %v8763
    %v9626 = vunpack.c.h.b16 %v8763
    %v9627 = vunpack.c.l.b16 %v8764
    %v9628 = vunpack.c.h.b16 %v8764
    %v9629 = vunpack.c.l.b16 %v8765
    %v9630 = vunpack.c.h.b16 %v8765
    %v9631 = vunpack.c.l.b16 %v8766
    %v9632 = vunpack.c.l.b16 %v8767
    %v9633 = vunpack.c.h.b16 %v8767
    %v9634 = vunpack.c.l.b16 %v8768
    %v9635 = vunpack.c.h.b16 %v8768
    %v9636 = vunpack.c.l.b16 %v8769
    %v9637 = vunpack.c.h.b16 %v8769
    %v9638 = vunpack.c.l.b16 %v8770
    %v9639 = vunpack.c.l.b16 %v8771
    %v9640 = vunpack.c.h.b16 %v8771
    %v9641 = vunpack.c.l.b16 %v8772
    %v9642 = vunpack.c.h.b16 %v8772
    %v9643 = vunpack.c.l.b16 %v8773
    %v9644 = vunpack.c.h.b16 %v8773
    %v9645 = vunpack.c.l.b16 %v8774
    %v9646 = vunpack.c.l.b16 %v8775
    %v9647 = vunpack.c.h.b16 %v8775
    %v9648 = vunpack.c.l.b16 %v8776
    %v9649 = vunpack.c.h.b16 %v8776
    %v9650 = vunpack.c.l.b16 %v8777
    %v9651 = vunpack.c.h.b16 %v8777
    %v9652 = vunpack.c.l.b16 %v8778
    %v9653 = vunpack.c.l.b16 %v8779
    %v9654 = vunpack.c.h.b16 %v8779
    %v9655 = vunpack.c.l.b16 %v8780
    %v9656 = vunpack.c.h.b16 %v8780
    %v9657 = vunpack.c.l.b16 %v8781
    %v9658 = vunpack.c.h.b16 %v8781
    %v9659 = vunpack.c.l.b16 %v8782
    %v9660 = vunpack.c.l.b16 %v8783
    %v9661 = vunpack.c.h.b16 %v8783
    %v9662 = vunpack.c.l.b16 %v8784
    %v9663 = vunpack.c.h.b16 %v8784
    %v9664 = vunpack.c.l.b16 %v8785
    %v9665 = vunpack.c.h.b16 %v8785
    %v9666 = vunpack.c.l.b16 %v8786
    %v9667 = vunpack.c.l.b16 %v8787
    %v9668 = vunpack.c.h.b16 %v8787
    %v9669 = vunpack.c.l.b16 %v8788
    %v9670 = vunpack.c.h.b16 %v8788
    %v9671 = vunpack.c.l.b16 %v8789
    %v9672 = vunpack.c.h.b16 %v8789
    %v9673 = vunpack.c.l.b16 %v8790
    %v9674 = vunpack.c.l.b16 %v8791
    %v9675 = vunpack.c.h.b16 %v8791
    %v9676 = vunpack.c.l.b16 %v8792
    %v9677 = vunpack.c.h.b16 %v8792
    %v9678 = vunpack.c.l.b16 %v8793
    %v9679 = vunpack.c.h.b16 %v8793
    %v9680 = vunpack.c.l.b16 %v8794
    %v9681 = vunpack.c.l.b16 %v8795
    %v9682 = vunpack.c.h.b16 %v8795
    %v9683 = vunpack.c.l.b16 %v8796
    %v9684 = vunpack.c.h.b16 %v8796
    %v9685 = vunpack.c.l.b16 %v8797
    %v9686 = vunpack.c.h.b16 %v8797
    %v9687 = vunpack.c.l.b16 %v8798
    %v9688 = vunpack.c.l.b16 %v8799
    %v9689 = vunpack.c.h.b16 %v8799
    %v9690 = vunpack.c.l.b16 %v8800
    %v9691 = vunpack.c.h.b16 %v8800
    %v9692 = vunpack.c.l.b16 %v8801
    %v9693 = vunpack.c.h.b16 %v8801
    %v9694 = vunpack.c.l.b16 %v8802
    %v9695 = vunpack.c.l.b16 %v8803
    %v9696 = vunpack.c.h.b16 %v8803
    %v9697 = vunpack.c.l.b16 %v8804
    %v9698 = vunpack.c.h.b16 %v8804
    %v9699 = vunpack.c.l.b16 %v8805
    %v9700 = vunpack.c.h.b16 %v8805
    %v9701 = vunpack.c.l.b16 %v8806
    %v9702 = vunpack.c.l.b16 %v8807
    %v9703 = vunpack.c.h.b16 %v8807
    %v9704 = vunpack.c.l.b16 %v8808
    %v9705 = vunpack.c.h.b16 %v8808
    %v9706 = vunpack.c.l.b16 %v8809
    %v9707 = vunpack.c.h.b16 %v8809
    %v9708 = vunpack.c.l.b16 %v8810
    %v9709 = vunpack.c.l.b16 %v8811
    %v9710 = vunpack.c.h.b16 %v8811
    %v9711 = vunpack.c.l.b16 %v8812
    %v9712 = vunpack.c.h.b16 %v8812
    %v9713 = vunpack.c.l.b16 %v8813
    %v9714 = vunpack.c.h.b16 %v8813
    %v9715 = vunpack.c.l.b16 %v8814
    %v9716 = vunpack.c.l.b16 %v8815
    %v9717 = vunpack.c.h.b16 %v8815
    %v9718 = vunpack.c.l.b16 %v8816
    %v9719 = vunpack.c.h.b16 %v8816
    %v9720 = vunpack.c.l.b16 %v8817
    %v9721 = vunpack.c.h.b16 %v8817
    %v9722 = vunpack.c.l.b16 %v8818
    %v9723 = vunpack.c.l.b16 %v8819
    %v9724 = vunpack.c.h.b16 %v8819
    %v9725 = vunpack.c.l.b16 %v8820
    %v9726 = vunpack.c.h.b16 %v8820
    %v9727 = vunpack.c.l.b16 %v8821
    %v9728 = vunpack.c.h.b16 %v8821
    %v9729 = vunpack.c.l.b16 %v8822
    %v9730 = vunpack.c.l.b16 %v8823
    %v9731 = vunpack.c.h.b16 %v8823
    %v9732 = vunpack.c.l.b16 %v8824
    %v9733 = vunpack.c.h.b16 %v8824
    %v9734 = vunpack.c.l.b16 %v8825
    %v9735 = vunpack.c.h.b16 %v8825
    %v9736 = vunpack.c.l.b16 %v8826
    %v9737 = vunpack.c.l.b16 %v8827
    %v9738 = vunpack.c.h.b16 %v8827
    %v9739 = vunpack.c.l.b16 %v8828
    %v9740 = vunpack.c.h.b16 %v8828
    %v9741 = vunpack.c.l.b16 %v8829
    %v9742 = vunpack.c.h.b16 %v8829
    %v9743 = vunpack.c.l.b16 %v8830
    %v9744 = vunpack.c.l.b16 %v8831
    %v9745 = vunpack.c.h.b16 %v8831
    %v9746 = vunpack.c.l.b16 %v8832
    %v9747 = vunpack.c.h.b16 %v8832
    %v9748 = vunpack.c.l.b16 %v8833
    %v9749 = vunpack.c.h.b16 %v8833
    %v9750 = vunpack.c.l.b16 %v8834
    %v9751 = vunpack.c.l.b16 %v8835
    %v9752 = vunpack.c.h.b16 %v8835
    %v9753 = vunpack.c.l.b16 %v8836
    %v9754 = vunpack.c.h.b16 %v8836
    %v9755 = vunpack.c.l.b16 %v8837
    %v9756 = vunpack.c.h.b16 %v8837
    %v9757 = vunpack.c.l.b16 %v8838
    %v9758 = vunpack.c.l.b16 %v8839
    %v9759 = vunpack.c.h.b16 %v8839
    %v9760 = vunpack.c.l.b16 %v8840
    %v9761 = vunpack.c.h.b16 %v8840
    %v9762 = vunpack.c.l.b16 %v8841
    %v9763 = vunpack.c.h.b16 %v8841
    %v9764 = vunpack.c.l.b16 %v8842
    %v9765 = vunpack.c.l.b16 %v8843
    %v9766 = vunpack.c.h.b16 %v8843
    %v9767 = vunpack.c.l.b16 %v8844
    %v9768 = vunpack.c.h.b16 %v8844
    %v9769 = vunpack.c.l.b16 %v8845
    %v9770 = vunpack.c.h.b16 %v8845
    %v9771 = vunpack.c.l.b16 %v8846
    %v9772 = vunpack.c.l.b16 %v8847
    %v9773 = vunpack.c.h.b16 %v8847
    %v9774 = vunpack.c.l.b16 %v8848
    %v9775 = vunpack.c.h.b16 %v8848
    %v9776 = vunpack.c.l.b16 %v8849
    %v9777 = vunpack.c.h.b16 %v8849
    %v9778 = vunpack.c.l.b16 %v8850
    %v9779 = vunpack.c.l.b16 %v8851
    %v9780 = vunpack.c.h.b16 %v8851
    %v9781 = vunpack.c.l.b16 %v8852
    %v9782 = vunpack.c.h.b16 %v8852
    %v9783 = vunpack.c.l.b16 %v8853
    %v9784 = vunpack.c.h.b16 %v8853
    %v9785 = vunpack.c.l.b16 %v8854
    %v9786 = vunpack.c.l.b16 %v8855
    %v9787 = vunpack.c.h.b16 %v8855
    %v9788 = vunpack.c.l.b16 %v8856
    %v9789 = vunpack.c.h.b16 %v8856
    %v9790 = vunpack.c.l.b16 %v8857
    %v9791 = vunpack.c.h.b16 %v8857
    %v9792 = vunpack.c.l.b16 %v8858
    %v9793 = vunpack.c.l.b16 %v8859
    %v9794 = vunpack.c.h.b16 %v8859
    %v9795 = vunpack.c.l.b16 %v8860
    %v9796 = vunpack.c.h.b16 %v8860
    %v9797 = vunpack.c.l.b16 %v8861
    %v9798 = vunpack.c.h.b16 %v8861
    %v9799 = vunpack.c.l.b16 %v8862
    %v9800 = vunpack.c.l.b16 %v8863
    %v9801 = vunpack.c.h.b16 %v8863
    %v9802 = vunpack.c.l.b16 %v8864
    %v9803 = vunpack.c.h.b16 %v8864
    %v9804 = vunpack.c.l.b16 %v8865
    %v9805 = vunpack.c.h.b16 %v8865
    %v9806 = vunpack.c.l.b16 %v8866
    %v9807 = vunpack.c.l.b16 %v8867
    %v9808 = vunpack.c.h.b16 %v8867
    %v9809 = vunpack.c.l.b16 %v8868
    %v9810 = vunpack.c.h.b16 %v8868
    %v9811 = vunpack.c.l.b16 %v8869
    %v9812 = vunpack.c.h.b16 %v8869
    %v9813 = vunpack.c.l.b16 %v8870
    %v9814 = vunpack.c.l.b16 %v8871
    %v9815 = vunpack.c.h.b16 %v8871
    %v9816 = vunpack.c.l.b16 %v8872
    %v9817 = vunpack.c.h.b16 %v8872
    %v9818 = vunpack.c.l.b16 %v8873
    %v9819 = vunpack.c.h.b16 %v8873
    %v9820 = vunpack.c.l.b16 %v8874
    %v9821 = vunpack.c.l.b16 %v8875
    %v9822 = vunpack.c.h.b16 %v8875
    %v9823 = vunpack.c.l.b16 %v8876
    %v9824 = vunpack.c.h.b16 %v8876
    %v9825 = vunpack.c.l.b16 %v8877
    %v9826 = vunpack.c.h.b16 %v8877
    %v9827 = vunpack.c.l.b16 %v8878
    %v9828 = vunpack.c.l.b16 %v8879
    %v9829 = vunpack.c.h.b16 %v8879
    %v9830 = vunpack.c.l.b16 %v8880
    %v9831 = vunpack.c.h.b16 %v8880
    %v9832 = vunpack.c.l.b16 %v8881
    %v9833 = vunpack.c.h.b16 %v8881
    %v9834 = vunpack.c.l.b16 %v8882
    %v9835 = vunpack.c.l.b16 %v8883
    %v9836 = vunpack.c.h.b16 %v8883
    %v9837 = vunpack.c.l.b16 %v8884
    %v9838 = vunpack.c.h.b16 %v8884
    %v9839 = vunpack.c.l.b16 %v8885
    %v9840 = vunpack.c.h.b16 %v8885
    %v9841 = vunpack.c.l.b16 %v8886
    %v9842 = vunpack.c.l.b16 %v8887
    %v9843 = vunpack.c.h.b16 %v8887
    %v9844 = vunpack.c.l.b16 %v8888
    %v9845 = vunpack.c.h.b16 %v8888
    %v9846 = vunpack.c.l.b16 %v8889
    %v9847 = vunpack.c.h.b16 %v8889
    %v9848 = vunpack.c.l.b16 %v8890
    %v9849 = vunpack.c.l.b16 %v8891
    %v9850 = vunpack.c.h.b16 %v8891
    %v9851 = vunpack.c.l.b16 %v8892
    %v9852 = vunpack.c.h.b16 %v8892
    %v9853 = vunpack.c.l.b16 %v8893
    %v9854 = vunpack.c.h.b16 %v8893
    %v9855 = vunpack.c.l.b16 %v8894
    %v9856 = vunpack.c.l.b16 %v8895
    %v9857 = vunpack.c.h.b16 %v8895
    %v9858 = vunpack.c.l.b16 %v8896
    %v9859 = vunpack.c.h.b16 %v8896
    %v9860 = vunpack.c.l.b16 %v8897
    %v9861 = vunpack.c.h.b16 %v8897
    %v9862 = vunpack.c.l.b16 %v8898
    %v9863 = vunpack.c.l.b16 %v8899
    %v9864 = vunpack.c.h.b16 %v8899
    %v9865 = vunpack.c.l.b16 %v8900
    %v9866 = vunpack.c.h.b16 %v8900
    %v9867 = vunpack.c.l.b16 %v8901
    %v9868 = vunpack.c.h.b16 %v8901
    %v9869 = vunpack.c.l.b16 %v8902
    %v9870 = vunpack.c.l.b16 %v8903
    %v9871 = vunpack.c.h.b16 %v8903
    %v9872 = vunpack.c.l.b16 %v8904
    %v9873 = vunpack.c.h.b16 %v8904
    %v9874 = vunpack.c.l.b16 %v8905
    %v9875 = vunpack.c.h.b16 %v8905
    %v9876 = vunpack.c.l.b16 %v8906
    %v9877 = vunpack.c.l.b16 %v8907
    %v9878 = vunpack.c.h.b16 %v8907
    %v9879 = vunpack.c.l.b16 %v8908
    %v9880 = vunpack.c.h.b16 %v8908
    %v9881 = vunpack.c.l.b16 %v8909
    %v9882 = vunpack.c.h.b16 %v8909
    %v9883 = vunpack.c.l.b16 %v8910
    %v9884 = vunpack.c.l.b16 %v8911
    %v9885 = vunpack.c.h.b16 %v8911
    %v9886 = vunpack.c.l.b16 %v8912
    %v9887 = vunpack.c.h.b16 %v8912
    %v9888 = vunpack.c.l.b16 %v8913
    %v9889 = vunpack.c.h.b16 %v8913
    %v9890 = vunpack.c.l.b16 %v8914
    %v9891 = vunpack.c.l.b16 %v8915
    %v9892 = vunpack.c.h.b16 %v8915
    %v9893 = vunpack.c.l.b16 %v8916
    %v9894 = vunpack.c.h.b16 %v8916
    %v9895 = vunpack.c.l.b16 %v8917
    %v9896 = vunpack.c.h.b16 %v8917
    %v9897 = vunpack.c.l.b16 %v8918
    %v9898 = vunpack.c.l.b16 %v8919
    %v9899 = vunpack.c.h.b16 %v8919
    %v9900 = vunpack.c.l.b16 %v8920
    %v9901 = vunpack.c.h.b16 %v8920
    %v9902 = vunpack.c.l.b16 %v8921
    %v9903 = vunpack.c.h.b16 %v8921
    %v9904 = vunpack.c.l.b16 %v8922
    %v9905 = vunpack.c.l.b16 %v8923
    %v9906 = vunpack.c.h.b16 %v8923
    %v9907 = vunpack.c.l.b16 %v8924
    %v9908 = vunpack.c.h.b16 %v8924
    %v9909 = vunpack.c.l.b16 %v8925
    %v9910 = vunpack.c.h.b16 %v8925
    %v9911 = vunpack.c.l.b16 %v8926
    %v9912 = vunpack.c.l.b16 %v8927
    %v9913 = vunpack.c.h.b16 %v8927
    %v9914 = vunpack.c.l.b16 %v8928
    %v9915 = vunpack.c.h.b16 %v8928
    %v9916 = vunpack.c.l.b16 %v8929
    %v9917 = vunpack.c.h.b16 %v8929
    %v9918 = vunpack.c.l.b16 %v8930
    %v9919 = vunpack.c.l.b16 %v8931
    %v9920 = vunpack.c.h.b16 %v8931
    %v9921 = vunpack.c.l.b16 %v8932
    %v9922 = vunpack.c.h.b16 %v8932
    %v9923 = vunpack.c.l.b16 %v8933
    %v9924 = vunpack.c.h.b16 %v8933
    %v9925 = vunpack.c.l.b16 %v8934
    %v9926 = vunpack.c.l.b16 %v8935
    %v9927 = vunpack.c.h.b16 %v8935
    %v9928 = vunpack.c.l.b16 %v8936
    %v9929 = vunpack.c.h.b16 %v8936
    %v9930 = vunpack.c.l.b16 %v8937
    %v9931 = vunpack.c.h.b16 %v8937
    %v9932 = vunpack.c.l.b16 %v8938
    %v9933 = vunpack.c.l.b16 %v8939
    %v9934 = vunpack.c.h.b16 %v8939
    %v9935 = vunpack.c.l.b16 %v8940
    %v9936 = vunpack.c.h.b16 %v8940
    %v9937 = vunpack.c.l.b16 %v8941
    %v9938 = vunpack.c.h.b16 %v8941
    %v9939 = vunpack.c.l.b16 %v8942
    %v9940 = vunpack.c.l.b16 %v8943
    %v9941 = vunpack.c.h.b16 %v8943
    %v9942 = vunpack.c.l.b16 %v8944
    %v9943 = vunpack.c.h.b16 %v8944
    %v9944 = vunpack.c.l.b16 %v8945
    %v9945 = vunpack.c.h.b16 %v8945
    %v9946 = vunpack.c.l.b16 %v8946
    %v9947 = vunpack.c.l.b16 %v8947
    %v9948 = vunpack.c.h.b16 %v8947
    %v9949 = vunpack.c.l.b16 %v8948
    %v9950 = vunpack.c.h.b16 %v8948
    %v9951 = vunpack.c.l.b16 %v8949
    %v9952 = vunpack.c.h.b16 %v8949
    %v9953 = vunpack.c.l.b16 %v8950
    %v9954 = vunpack.c.l.b16 %v8951
    %v9955 = vunpack.c.h.b16 %v8951
    %v9956 = vunpack.c.l.b16 %v8952
    %v9957 = vunpack.c.h.b16 %v8952
    %v9958 = vunpack.c.l.b16 %v8953
    %v9959 = vunpack.c.h.b16 %v8953
    %v9960 = vunpack.c.l.b16 %v8954
    %v9961 = vunpack.c.l.b16 %v8955
    %v9962 = vunpack.c.h.b16 %v8955
    %v9963 = vunpack.c.l.b16 %v8956
    %v9964 = vunpack.c.h.b16 %v8956
    %v9965 = vunpack.c.l.b16 %v8957
    %v9966 = vunpack.c.h.b16 %v8957
    %v9967 = vunpack.c.l.b16 %v8958
    %v9968 = vunpack.c.l.b16 %v8959
    %v9969 = vunpack.c.h.b16 %v8959
    %v9970 = vunpack.c.l.b16 %v8960
    %v9971 = vunpack.c.h.b16 %v8960
    %v9972 = vunpack.c.l.b16 %v8961
    %v9973 = vunpack.c.h.b16 %v8961
    %v9974 = vunpack.c.l.b16 %v8962
    %v9975 = vunpack.c.l.b16 %v8963
    %v9976 = vunpack.c.h.b16 %v8963
    %v9977 = vunpack.c.l.b16 %v8964
    %v9978 = vunpack.c.h.b16 %v8964
    %v9979 = vunpack.c.l.b16 %v8965
    %v9980 = vunpack.c.h.b16 %v8965
    %v9981 = vunpack.c.l.b16 %v8966
    %v9982 = vunpack.c.l.b16 %v8967
    %v9983 = vunpack.c.h.b16 %v8967
    %v9984 = vunpack.c.l.b16 %v8968
    %v9985 = vunpack.c.h.b16 %v8968
    %v9986 = vunpack.c.l.b16 %v8969
    %v9987 = vunpack.c.h.b16 %v8969
    %v9988 = vunpack.c.l.b16 %v8970
    %v9989 = vunpack.c.l.b16 %v8971
    %v9990 = vunpack.c.h.b16 %v8971
    %v9991 = vunpack.c.l.b16 %v8972
    %v9992 = vunpack.c.h.b16 %v8972
    %v9993 = vunpack.c.l.b16 %v8973
    %v9994 = vunpack.c.h.b16 %v8973
    %v9995 = vunpack.c.l.b16 %v8974
    %v9996 = vunpack.c.l.b16 %v8975
    %v9997 = vunpack.c.h.b16 %v8975
    %v9998 = vunpack.c.l.b16 %v8976
    %v9999 = vunpack.c.h.b16 %v8976
    %v10000 = vunpack.c.l.b16 %v8977
    %v10001 = vunpack.c.h.b16 %v8977
    %v10002 = vunpack.c.l.b16 %v8978
    %v10003 = vunpack.c.l.b16 %v8979
    %v10004 = vunpack.c.h.b16 %v8979
    %v10005 = vunpack.c.l.b16 %v8980
    %v10006 = vunpack.c.h.b16 %v8980
    %v10007 = vunpack.c.l.b16 %v8981
    %v10008 = vunpack.c.h.b16 %v8981
    %v10009 = vunpack.c.l.b16 %v8982
    %v10010 = vunpack.c.l.b16 %v8983
    %v10011 = vunpack.c.h.b16 %v8983
    %v10012 = vunpack.c.l.b16 %v8984
    %v10013 = vunpack.c.h.b16 %v8984
    %v10014 = vunpack.c.l.b16 %v8985
    %v10015 = vunpack.c.h.b16 %v8985
    %v10016 = vunpack.c.l.b16 %v8986
    %v10017 = vunpack.c.l.b16 %v8987
    %v10018 = vunpack.c.h.b16 %v8987
    %v10019 = vunpack.c.l.b16 %v8988
    %v10020 = vunpack.c.h.b16 %v8988
    %v10021 = vunpack.c.l.b16 %v8989
    %v10022 = vunpack.c.h.b16 %v8989
    %v10023 = vunpack.c.l.b16 %v8990
    %v10024 = vunpack.c.l.b16 %v8991
    %v10025 = vunpack.c.h.b16 %v8991
    %v10026 = vunpack.c.l.b16 %v8992
    %v10027 = vunpack.c.h.b16 %v8992
    %v10028 = vunpack.c.l.b16 %v8993
    %v10029 = vunpack.c.h.b16 %v8993
    %v10030 = vunpack.c.l.b16 %v8994
    %v10031 = vunpack.c.l.b16 %v8995
    %v10032 = vunpack.c.h.b16 %v8995
    %v10033 = vunpack.c.l.b16 %v8996
    %v10034 = vunpack.c.h.b16 %v8996
    %v10035 = vunpack.c.l.b16 %v8997
    %v10036 = vunpack.c.h.b16 %v8997
    %v10037 = vunpack.c.l.b16 %v8998
    %v10038 = vunpack.c.l.b16 %v8999
    %v10039 = vunpack.c.h.b16 %v8999
    %v10040 = vunpack.c.l.b16 %v9000
    %v10041 = vunpack.c.h.b16 %v9000
    %v10042 = vunpack.c.l.b16 %v9001
    %v10043 = vunpack.c.h.b16 %v9001
    %v10044 = vunpack.c.l.b16 %v9002
    %v10045 = vunpack.c.l.b16 %v9003
    %v10046 = vunpack.c.h.b16 %v9003
    %v10047 = vunpack.c.l.b16 %v9004
    %v10048 = vunpack.c.h.b16 %v9004
    %v10049 = vunpack.c.l.b16 %v9005
    %v10050 = vunpack.c.h.b16 %v9005
    %v10051 = vunpack.c.l.b16 %v9006
    %v10052 = vunpack.c.l.b16 %v9007
    %v10053 = vunpack.c.h.b16 %v9007
    %v10054 = vunpack.c.l.b16 %v9008
    %v10055 = vunpack.c.h.b16 %v9008
    %v10056 = vunpack.c.l.b16 %v9009
    %v10057 = vunpack.c.h.b16 %v9009
    %v10058 = vunpack.c.l.b16 %v9010
    %v10059 = vunpack.c.l.b16 %v9011
    %v10060 = vunpack.c.h.b16 %v9011
    %v10061 = vunpack.c.l.b16 %v9012
    %v10062 = vunpack.c.h.b16 %v9012
    %v10063 = vunpack.c.l.b16 %v9013
    %v10064 = vunpack.c.h.b16 %v9013
    %v10065 = vunpack.c.l.b16 %v9014
    %v10066 = vunpack.c.l.b16 %v9015
    %v10067 = vunpack.c.h.b16 %v9015
    %v10068 = vunpack.c.l.b16 %v9016
    %v10069 = vunpack.c.h.b16 %v9016
    %v10070 = vunpack.c.l.b16 %v9017
    %v10071 = vunpack.c.h.b16 %v9017
    %v10072 = vunpack.c.l.b16 %v9018
    %v10073 = vunpack.c.l.b16 %v9019
    %v10074 = vunpack.c.h.b16 %v9019
    %v10075 = vunpack.c.l.b16 %v9020
    %v10076 = vunpack.c.h.b16 %v9020
    %v10077 = vunpack.c.l.b16 %v9021
    %v10078 = vunpack.c.h.b16 %v9021
    %v10079 = vunpack.c.l.b16 %v9022
    %v10080 = vunpack.c.l.b16 %v9023
    %v10081 = vunpack.c.h.b16 %v9023
    %v10082 = vunpack.c.l.b16 %v9024
    %v10083 = vunpack.c.h.b16 %v9024
    %v10084 = vunpack.c.l.b16 %v9025
    %v10085 = vunpack.c.h.b16 %v9025
    %v10086 = vunpack.c.l.b16 %v9026
    %v10087 = vunpack.c.l.b16 %v9027
    %v10088 = vunpack.c.h.b16 %v9027
    %v10089 = vunpack.c.l.b16 %v9028
    %v10090 = vunpack.c.h.b16 %v9028
    %v10091 = vunpack.c.l.b16 %v9029
    %v10092 = vunpack.c.h.b16 %v9029
    %v10093 = vunpack.c.l.b16 %v9030
    %v10094 = vunpack.c.l.b16 %v9031
    %v10095 = vunpack.c.h.b16 %v9031
    %v10096 = vunpack.c.l.b16 %v9032
    %v10097 = vunpack.c.h.b16 %v9032
    %v10098 = vunpack.c.l.b16 %v9033
    %v10099 = vunpack.c.h.b16 %v9033
    %v10100 = vunpack.c.l.b16 %v9034
    %v10101 = vunpack.c.l.b16 %v9035
    %v10102 = vunpack.c.h.b16 %v9035
    %v10103 = vunpack.c.l.b16 %v9036
    %v10104 = vunpack.c.h.b16 %v9036
    %v10105 = vunpack.c.l.b16 %v9037
    %v10106 = vunpack.c.h.b16 %v9037
    %v10107 = vunpack.c.l.b16 %v9038
    %v10108 = vunpack.c.l.b16 %v9039
    %v10109 = vunpack.c.h.b16 %v9039
    %v10110 = vunpack.c.l.b16 %v9040
    %v10111 = vunpack.c.h.b16 %v9040
    %v10112 = vunpack.c.l.b16 %v9041
    %v10113 = vunpack.c.h.b16 %v9041
    %v10114 = vunpack.c.l.b16 %v9042
    %v10115 = vunpack.c.l.b16 %v9043
    %v10116 = vunpack.c.h.b16 %v9043
    %v10117 = vunpack.c.l.b16 %v9044
    %v10118 = vunpack.c.h.b16 %v9044
    %v10119 = vunpack.c.l.b16 %v9045
    %v10120 = vunpack.c.h.b16 %v9045
    %v10121 = vunpack.c.l.b16 %v9046
    %v10122 = vunpack.c.l.b16 %v9047
    %v10123 = vunpack.c.h.b16 %v9047
    %v10124 = vunpack.c.l.b16 %v9048
    %v10125 = vunpack.c.h.b16 %v9048
    %v10126 = vunpack.c.l.b16 %v9049
    %v10127 = vunpack.c.h.b16 %v9049
    %v10128 = vunpack.c.l.b16 %v9050
    %v10129 = vpack.c.b16 %v9450, %v9443
    %v10130 = vpack.c.b16 %v9451, %v9444
    %v10131 = vpack.c.b16 %v9452, %v9445
    %v10132 = vpack.c.b16 %v9453, %v9446
    %v10133 = vpack.c.b16 %v9454, %v9447
    %v10134 = vpack.c.b16 %v9455, %v9448
    %v10135 = vpack.c.b16 %v9456, %v9449
    %v10136 = vpack.c.b16 %v9464, %v9457
    %v10137 = vpack.c.b16 %v9465, %v9458
    %v10138 = vpack.c.b16 %v9466, %v9459
    %v10139 = vpack.c.b16 %v9467, %v9460
    %v10140 = vpack.c.b16 %v9468, %v9461
    %v10141 = vpack.c.b16 %v9469, %v9462
    %v10142 = vpack.c.b16 %v9470, %v9463
    %v10143 = vpack.c.b16 %v9478, %v9471
    %v10144 = vpack.c.b16 %v9479, %v9472
    %v10145 = vpack.c.b16 %v9480, %v9473
    %v10146 = vpack.c.b16 %v9481, %v9474
    %v10147 = vpack.c.b16 %v9482, %v9475
    %v10148 = vpack.c.b16 %v9483, %v9476
    %v10149 = vpack.c.b16 %v9484, %v9477
    %v10150 = vpack.c.b16 %v9492, %v9485
    %v10151 = vpack.c.b16 %v9493, %v9486
    %v10152 = vpack.c.b16 %v9494, %v9487
    %v10153 = vpack.c.b16 %v9495, %v9488
    %v10154 = vpack.c.b16 %v9496, %v9489
    %v10155 = vpack.c.b16 %v9497, %v9490
    %v10156 = vpack.c.b16 %v9498, %v9491
    %v10157 = vpack.c.b16 %v9506, %v9499
    %v10158 = vpack.c.b16 %v9507, %v9500
    %v10159 = vpack.c.b16 %v9508, %v9501
    %v10160 = vpack.c.b16 %v9509, %v9502
    %v10161 = vpack.c.b16 %v9510, %v9503
    %v10162 = vpack.c.b16 %v9511, %v9504
    %v10163 = vpack.c.b16 %v9512, %v9505
    %v10164 = vpack.c.b16 %v9520, %v9513
    %v10165 = vpack.c.b16 %v9521, %v9514
    %v10166 = vpack.c.b16 %v9522, %v9515
    %v10167 = vpack.c.b16 %v9523, %v9516
    %v10168 = vpack.c.b16 %v9524, %v9517
    %v10169 = vpack.c.b16 %v9525, %v9518
    %v10170 = vpack.c.b16 %v9526, %v9519
    %v10171 = vpack.c.b16 %v9534, %v9527
    %v10172 = vpack.c.b16 %v9535, %v9528
    %v10173 = vpack.c.b16 %v9536, %v9529
    %v10174 = vpack.c.b16 %v9537, %v9530
    %v10175 = vpack.c.b16 %v9538, %v9531
    %v10176 = vpack.c.b16 %v9539, %v9532
    %v10177 = vpack.c.b16 %v9540, %v9533
    %v10178 = vpack.c.b16 %v9548, %v9541
    %v10179 = vpack.c.b16 %v9549, %v9542
    %v10180 = vpack.c.b16 %v9550, %v9543
    %v10181 = vpack.c.b16 %v9551, %v9544
    %v10182 = vpack.c.b16 %v9552, %v9545
    %v10183 = vpack.c.b16 %v9553, %v9546
    %v10184 = vpack.c.b16 %v9554, %v9547
    %v10185 = vpack.c.b16 %v9562, %v9555
    %v10186 = vpack.c.b16 %v9563, %v9556
    %v10187 = vpack.c.b16 %v9564, %v9557
    %v10188 = vpack.c.b16 %v9565, %v9558
    %v10189 = vpack.c.b16 %v9566, %v9559
    %v10190 = vpack.c.b16 %v9567, %v9560
    %v10191 = vpack.c.b16 %v9568, %v9561
    %v10192 = vpack.c.b16 %v9576, %v9569
    %v10193 = vpack.c.b16 %v9577, %v9570
    %v10194 = vpack.c.b16 %v9578, %v9571
    %v10195 = vpack.c.b16 %v9579, %v9572
    %v10196 = vpack.c.b16 %v9580, %v9573
    %v10197 = vpack.c.b16 %v9581, %v9574
    %v10198 = vpack.c.b16 %v9582, %v9575
    %v10199 = vpack.c.b16 %v9590, %v9583
    %v10200 = vpack.c.b16 %v9591, %v9584
    %v10201 = vpack.c.b16 %v9592, %v9585
    %v10202 = vpack.c.b16 %v9593, %v9586
    %v10203 = vpack.c.b16 %v9594, %v9587
    %v10204 = vpack.c.b16 %v9595, %v9588
    %v10205 = vpack.c.b16 %v9596, %v9589
    %v10206 = vpack.c.b16 %v9604, %v9597
    %v10207 = vpack.c.b16 %v9605, %v9598
    %v10208 = vpack.c.b16 %v9606, %v9599
    %v10209 = vpack.c.b16 %v9607, %v9600
    %v10210 = vpack.c.b16 %v9608, %v9601
    %v10211 = vpack.c.b16 %v9609, %v9602
    %v10212 = vpack.c.b16 %v9610, %v9603
    %v10213 = vpack.c.b16 %v9618, %v9611
    %v10214 = vpack.c.b16 %v9619, %v9612
    %v10215 = vpack.c.b16 %v9620, %v9613
    %v10216 = vpack.c.b16 %v9621, %v9614
    %v10217 = vpack.c.b16 %v9622, %v9615
    %v10218 = vpack.c.b16 %v9623, %v9616
    %v10219 = vpack.c.b16 %v9624, %v9617
    %v10220 = vpack.c.b16 %v9632, %v9625
    %v10221 = vpack.c.b16 %v9633, %v9626
    %v10222 = vpack.c.b16 %v9634, %v9627
    %v10223 = vpack.c.b16 %v9635, %v9628
    %v10224 = vpack.c.b16 %v9636, %v9629
    %v10225 = vpack.c.b16 %v9637, %v9630
    %v10226 = vpack.c.b16 %v9638, %v9631
    %v10227 = vpack.c.b16 %v9646, %v9639
    %v10228 = vpack.c.b16 %v9647, %v9640
    %v10229 = vpack.c.b16 %v9648, %v9641
    %v10230 = vpack.c.b16 %v9649, %v9642
    %v10231 = vpack.c.b16 %v9650, %v9643
    %v10232 = vpack.c.b16 %v9651, %v9644
    %v10233 = vpack.c.b16 %v9652, %v9645
    %v10234 = vpack.c.b16 %v9660, %v9653
    %v10235 = vpack.c.b16 %v9661, %v9654
    %v10236 = vpack.c.b16 %v9662, %v9655
    %v10237 = vpack.c.b16 %v9663, %v9656
    %v10238 = vpack.c.b16 %v9664, %v9657
    %v10239 = vpack.c.b16 %v9665, %v9658
    %v10240 = vpack.c.b16 %v9666, %v9659
    %v10241 = vpack.c.b16 %v9674, %v9667
    %v10242 = vpack.c.b16 %v9675, %v9668
    %v10243 = vpack.c.b16 %v9676, %v9669
    %v10244 = vpack.c.b16 %v9677, %v9670
    %v10245 = vpack.c.b16 %v9678, %v9671
    %v10246 = vpack.c.b16 %v9679, %v9672
    %v10247 = vpack.c.b16 %v9680, %v9673
    %v10248 = vpack.c.b16 %v9688, %v9681
    %v10249 = vpack.c.b16 %v9689, %v9682
    %v10250 = vpack.c.b16 %v9690, %v9683
    %v10251 = vpack.c.b16 %v9691, %v9684
    %v10252 = vpack.c.b16 %v9692, %v9685
    %v10253 = vpack.c.b16 %v9693, %v9686
    %v10254 = vpack.c.b16 %v9694, %v9687
    %v10255 = vpack.c.b16 %v9702, %v9695
    %v10256 = vpack.c.b16 %v9703, %v9696
    %v10257 = vpack.c.b16 %v9704, %v9697
    %v10258 = vpack.c.b16 %v9705, %v9698
    %v10259 = vpack.c.b16 %v9706, %v9699
    %v10260 = vpack.c.b16 %v9707, %v9700
    %v10261 = vpack.c.b16 %v9708, %v9701
    %v10262 = vpack.c.b16 %v9716, %v9709
    %v10263 = vpack.c.b16 %v9717, %v9710
    %v10264 = vpack.c.b16 %v9718, %v9711
    %v10265 = vpack.c.b16 %v9719, %v9712
    %v10266 = vpack.c.b16 %v9720, %v9713
    %v10267 = vpack.c.b16 %v9721, %v9714
    %v10268 = vpack.c.b16 %v9722, %v9715
    %v10269 = vpack.c.b16 %v9730, %v9723
    %v10270 = vpack.c.b16 %v9731, %v9724
    %v10271 = vpack.c.b16 %v9732, %v9725
    %v10272 = vpack.c.b16 %v9733, %v9726
    %v10273 = vpack.c.b16 %v9734, %v9727
    %v10274 = vpack.c.b16 %v9735, %v9728
    %v10275 = vpack.c.b16 %v9736, %v9729
    %v10276 = vpack.c.b16 %v9744, %v9737
    %v10277 = vpack.c.b16 %v9745, %v9738
    %v10278 = vpack.c.b16 %v9746, %v9739
    %v10279 = vpack.c.b16 %v9747, %v9740
    %v10280 = vpack.c.b16 %v9748, %v9741
    %v10281 = vpack.c.b16 %v9749, %v9742
    %v10282 = vpack.c.b16 %v9750, %v9743
    %v10283 = vpack.c.b16 %v9758, %v9751
    %v10284 = vpack.c.b16 %v9759, %v9752
    %v10285 = vpack.c.b16 %v9760, %v9753
    %v10286 = vpack.c.b16 %v9761, %v9754
    %v10287 = vpack.c.b16 %v9762, %v9755
    %v10288 = vpack.c.b16 %v9763, %v9756
    %v10289 = vpack.c.b16 %v9764, %v9757
    %v10290 = vpack.c.b16 %v9772, %v9765
    %v10291 = vpack.c.b16 %v9773, %v9766
    %v10292 = vpack.c.b16 %v9774, %v9767
    %v10293 = vpack.c.b16 %v9775, %v9768
    %v10294 = vpack.c.b16 %v9776, %v9769
    %v10295 = vpack.c.b16 %v9777, %v9770
    %v10296 = vpack.c.b16 %v9778, %v9771
    %v10297 = vpack.c.b16 %v9786, %v9779
    %v10298 = vpack.c.b16 %v9787, %v9780
    %v10299 = vpack.c.b16 %v9788, %v9781
    %v10300 = vpack.c.b16 %v9789, %v9782
    %v10301 = vpack.c.b16 %v9790, %v9783
    %v10302 = vpack.c.b16 %v9791, %v9784
    %v10303 = vpack.c.b16 %v9792, %v9785
    %v10304 = vpack.c.b16 %v9800, %v9793
    %v10305 = vpack.c.b16 %v9801, %v9794
    %v10306 = vpack.c.b16 %v9802, %v9795
    %v10307 = vpack.c.b16 %v9803, %v9796
    %v10308 = vpack.c.b16 %v9804, %v9797
    %v10309 = vpack.c.b16 %v9805, %v9798
    %v10310 = vpack.c.b16 %v9806, %v9799
    %v10311 = vpack.c.b16 %v9814, %v9807
    %v10312 = vpack.c.b16 %v9815, %v9808
    %v10313 = vpack.c.b16 %v9816, %v9809
    %v10314 = vpack.c.b16 %v9817, %v9810
    %v10315 = vpack.c.b16 %v9818, %v9811
    %v10316 = vpack.c.b16 %v9819, %v9812
    %v10317 = vpack.c.b16 %v9820, %v9813
    %v10318 = vpack.c.b16 %v9828, %v9821
    %v10319 = vpack.c.b16 %v9829, %v9822
    %v10320 = vpack.c.b16 %v9830, %v9823
    %v10321 = vpack.c.b16 %v9831, %v9824
    %v10322 = vpack.c.b16 %v9832, %v9825
    %v10323 = vpack.c.b16 %v9833, %v9826
    %v10324 = vpack.c.b16 %v9834, %v9827
    %v10325 = vpack.c.b16 %v9842, %v9835
    %v10326 = vpack.c.b16 %v9843, %v9836
    %v10327 = vpack.c.b16 %v9844, %v9837
    %v10328 = vpack.c.b16 %v9845, %v9838
    %v10329 = vpack.c.b16 %v9846, %v9839
    %v10330 = vpack.c.b16 %v9847, %v9840
    %v10331 = vpack.c.b16 %v9848, %v9841
    %v10332 = vpack.c.b16 %v9856, %v9849
    %v10333 = vpack.c.b16 %v9857, %v9850
    %v10334 = vpack.c.b16 %v9858, %v9851
    %v10335 = vpack.c.b16 %v9859, %v9852
    %v10336 = vpack.c.b16 %v9860, %v9853
    %v10337 = vpack.c.b16 %v9861, %v9854
    %v10338 = vpack.c.b16 %v9862, %v9855
    %v10339 = vpack.c.b16 %v9870, %v9863
    %v10340 = vpack.c.b16 %v9871, %v9864
    %v10341 = vpack.c.b16 %v9872, %v9865
    %v10342 = vpack.c.b16 %v9873, %v9866
    %v10343 = vpack.c.b16 %v9874, %v9867
    %v10344 = vpack.c.b16 %v9875, %v9868
    %v10345 = vpack.c.b16 %v9876, %v9869
    %v10346 = vpack.c.b16 %v9884, %v9877
    %v10347 = vpack.c.b16 %v9885, %v9878
    %v10348 = vpack.c.b16 %v9886, %v9879
    %v10349 = vpack.c.b16 %v9887, %v9880
    %v10350 = vpack.c.b16 %v9888, %v9881
    %v10351 = vpack.c.b16 %v9889, %v9882
    %v10352 = vpack.c.b16 %v9890, %v9883
    %v10353 = vpack.c.b16 %v9898, %v9891
    %v10354 = vpack.c.b16 %v9899, %v9892
    %v10355 = vpack.c.b16 %v9900, %v9893
    %v10356 = vpack.c.b16 %v9901, %v9894
    %v10357 = vpack.c.b16 %v9902, %v9895
    %v10358 = vpack.c.b16 %v9903, %v9896
    %v10359 = vpack.c.b16 %v9904, %v9897
    %v10360 = vpack.c.b16 %v9912, %v9905
    %v10361 = vpack.c.b16 %v9913, %v9906
    %v10362 = vpack.c.b16 %v9914, %v9907
    %v10363 = vpack.c.b16 %v9915, %v9908
    %v10364 = vpack.c.b16 %v9916, %v9909
    %v10365 = vpack.c.b16 %v9917, %v9910
    %v10366 = vpack.c.b16 %v9918, %v9911
    %v10367 = vpack.c.b16 %v9926, %v9919
    %v10368 = vpack.c.b16 %v9927, %v9920
    %v10369 = vpack.c.b16 %v9928, %v9921
    %v10370 = vpack.c.b16 %v9929, %v9922
    %v10371 = vpack.c.b16 %v9930, %v9923
    %v10372 = vpack.c.b16 %v9931, %v9924
    %v10373 = vpack.c.b16 %v9932, %v9925
    %v10374 = vpack.c.b16 %v9940, %v9933
    %v10375 = vpack.c.b16 %v9941, %v9934
    %v10376 = vpack.c.b16 %v9942, %v9935
    %v10377 = vpack.c.b16 %v9943, %v9936
    %v10378 = vpack.c.b16 %v9944, %v9937
    %v10379 = vpack.c.b16 %v9945, %v9938
    %v10380 = vpack.c.b16 %v9946, %v9939
    %v10381 = vpack.c.b16 %v9954, %v9947
    %v10382 = vpack.c.b16 %v9955, %v9948
    %v10383 = vpack.c.b16 %v9956, %v9949
    %v10384 = vpack.c.b16 %v9957, %v9950
    %v10385 = vpack.c.b16 %v9958, %v9951
    %v10386 = vpack.c.b16 %v9959, %v9952
    %v10387 = vpack.c.b16 %v9960, %v9953
    %v10388 = vpack.c.b16 %v9968, %v9961
    %v10389 = vpack.c.b16 %v9969, %v9962
    %v10390 = vpack.c.b16 %v9970, %v9963
    %v10391 = vpack.c.b16 %v9971, %v9964
    %v10392 = vpack.c.b16 %v9972, %v9965
    %v10393 = vpack.c.b16 %v9973, %v9966
    %v10394 = vpack.c.b16 %v9974, %v9967
    %v10395 = vpack.c.b16 %v9982, %v9975
    %v10396 = vpack.c.b16 %v9983, %v9976
    %v10397 = vpack.c.b16 %v9984, %v9977
    %v10398 = vpack.c.b16 %v9985, %v9978
    %v10399 = vpack.c.b16 %v9986, %v9979
    %v10400 = vpack.c.b16 %v9987, %v9980
    %v10401 = vpack.c.b16 %v9988, %v9981
    %v10402 = vpack.c.b16 %v9996, %v9989
    %v10403 = vpack.c.b16 %v9997, %v9990
    %v10404 = vpack.c.b16 %v9998, %v9991
    %v10405 = vpack.c.b16 %v9999, %v9992
    %v10406 = vpack.c.b16 %v10000, %v9993
    %v10407 = vpack.c.b16 %v10001, %v9994
    %v10408 = vpack.c.b16 %v10002, %v9995
    %v10409 = vpack.c.b16 %v10010, %v10003
    %v10410 = vpack.c.b16 %v10011, %v10004
    %v10411 = vpack.c.b16 %v10012, %v10005
    %v10412 = vpack.c.b16 %v10013, %v10006
    %v10413 = vpack.c.b16 %v10014, %v10007
    %v10414 = vpack.c.b16 %v10015, %v10008
    %v10415 = vpack.c.b16 %v10016, %v10009
    %v10416 = vpack.c.b16 %v10024, %v10017
    %v10417 = vpack.c.b16 %v10025, %v10018
    %v10418 = vpack.c.b16 %v10026, %v10019
    %v10419 = vpack.c.b16 %v10027, %v10020
    %v10420 = vpack.c.b16 %v10028, %v10021
    %v10421 = vpack.c.b16 %v10029, %v10022
    %v10422 = vpack.c.b16 %v10030, %v10023
    %v10423 = vpack.c.b16 %v10038, %v10031
    %v10424 = vpack.c.b16 %v10039, %v10032
    %v10425 = vpack.c.b16 %v10040, %v10033
    %v10426 = vpack.c.b16 %v10041, %v10034
    %v10427 = vpack.c.b16 %v10042, %v10035
    %v10428 = vpack.c.b16 %v10043, %v10036
    %v10429 = vpack.c.b16 %v10044, %v10037
    %v10430 = vpack.c.b16 %v10052, %v10045
    %v10431 = vpack.c.b16 %v10053, %v10046
    %v10432 = vpack.c.b16 %v10054, %v10047
    %v10433 = vpack.c.b16 %v10055, %v10048
    %v10434 = vpack.c.b16 %v10056, %v10049
    %v10435 = vpack.c.b16 %v10057, %v10050
    %v10436 = vpack.c.b16 %v10058, %v10051
    %v10437 = vpack.c.b16 %v10066, %v10059
    %v10438 = vpack.c.b16 %v10067, %v10060
    %v10439 = vpack.c.b16 %v10068, %v10061
    %v10440 = vpack.c.b16 %v10069, %v10062
    %v10441 = vpack.c.b16 %v10070, %v10063
    %v10442 = vpack.c.b16 %v10071, %v10064
    %v10443 = vpack.c.b16 %v10072, %v10065
    %v10444 = vpack.c.b16 %v10080, %v10073
    %v10445 = vpack.c.b16 %v10081, %v10074
    %v10446 = vpack.c.b16 %v10082, %v10075
    %v10447 = vpack.c.b16 %v10083, %v10076
    %v10448 = vpack.c.b16 %v10084, %v10077
    %v10449 = vpack.c.b16 %v10085, %v10078
    %v10450 = vpack.c.b16 %v10086, %v10079
    %v10451 = vpack.c.b16 %v10094, %v10087
    %v10452 = vpack.c.b16 %v10095, %v10088
    %v10453 = vpack.c.b16 %v10096, %v10089
    %v10454 = vpack.c.b16 %v10097, %v10090
    %v10455 = vpack.c.b16 %v10098, %v10091
    %v10456 = vpack.c.b16 %v10099, %v10092
    %v10457 = vpack.c.b16 %v10100, %v10093
    %v10458 = vpack.c.b16 %v10108, %v10101
    %v10459 = vpack.c.b16 %v10109, %v10102
    %v10460 = vpack.c.b16 %v10110, %v10103
    %v10461 = vpack.c.b16 %v10111, %v10104
    %v10462 = vpack.c.b16 %v10112, %v10105
    %v10463 = vpack.c.b16 %v10113, %v10106
    %v10464 = vpack.c.b16 %v10114, %v10107
    %v10465 = vpack.c.b16 %v10122, %v10115
    %v10466 = vpack.c.b16 %v10123, %v10116
    %v10467 = vpack.c.b16 %v10124, %v10117
    %v10468 = vpack.c.b16 %v10125, %v10118
    %v10469 = vpack.c.b16 %v10126, %v10119
    %v10470 = vpack.c.b16 %v10127, %v10120
    %v10471 = vpack.c.b16 %v10128, %v10121
    %10815 = vmatpush.bf16.msra.mxu0 %v10178
    %10816 = vmatpush.bf16.msra.mxu0 %v10171
    %10817 = vmatpush.bf16.msra.mxu0 %v10164
    %10818 = vmatpush.bf16.msra.mxu0 %v10157
    %10819 = vmatpush.bf16.msra.mxu0 %v10150
    %10820 = vmatpush.bf16.msra.mxu0 %v10143
    %10821 = vmatpush.bf16.msra.mxu0 %v10136
    %10822 = vmatpush.bf16.msra.mxu0 %v10129
    %10823 = vmatmul.bf16.gmra.mxu0 %v477
    %v10824 = vpop.f32.mrf.mxu0
    %v10825 = vadd.f32 0.0, %v10824
    %v10826 = vpop.f32.mrf.mxu0
    %v10827 = vadd.f32 0.0, %v10826
    %10828 = vdwg.mxu0
    %10829 = vmatpush.bf16.msra.mxu0 %v10234
    %10830 = vmatpush.bf16.msra.mxu0 %v10227
    %10831 = vmatpush.bf16.msra.mxu0 %v10220
    %10832 = vmatpush.bf16.msra.mxu0 %v10213
    %10833 = vmatpush.bf16.msra.mxu0 %v10206
    %10834 = vmatpush.bf16.msra.mxu0 %v10199
    %10835 = vmatpush.bf16.msra.mxu0 %v10192
    %10836 = vmatpush.bf16.msra.mxu0 %v10185
    %10837 = vmatmul.bf16.gmra.mxu0 %v478
    %v10838 = vpop.f32.mrf.mxu0
    %v10839 = vadd.f32 %v10825, %v10838
    %v10840 = vpop.f32.mrf.mxu0
    %v10841 = vadd.f32 %v10827, %v10840
    %10842 = vdwg.mxu0
    %10843 = vmatpush.bf16.msra.mxu0 %v10290
    %10844 = vmatpush.bf16.msra.mxu0 %v10283
    %10845 = vmatpush.bf16.msra.mxu0 %v10276
    %10846 = vmatpush.bf16.msra.mxu0 %v10269
    %10847 = vmatpush.bf16.msra.mxu0 %v10262
    %10848 = vmatpush.bf16.msra.mxu0 %v10255
    %10849 = vmatpush.bf16.msra.mxu0 %v10248
    %10850 = vmatpush.bf16.msra.mxu0 %v10241
    %10851 = vmatmul.bf16.gmra.mxu0 %v479
    %v10852 = vpop.f32.mrf.mxu0
    %v10853 = vadd.f32 %v10839, %v10852
    %v10854 = vpop.f32.mrf.mxu0
    %v10855 = vadd.f32 %v10841, %v10854
    %10856 = vdwg.mxu0
    %10857 = vmatpush.bf16.msra.mxu0 %v10346
    %10858 = vmatpush.bf16.msra.mxu0 %v10339
    %10859 = vmatpush.bf16.msra.mxu0 %v10332
    %10860 = vmatpush.bf16.msra.mxu0 %v10325
    %10861 = vmatpush.bf16.msra.mxu0 %v10318
    %10862 = vmatpush.bf16.msra.mxu0 %v10311
    %10863 = vmatpush.bf16.msra.mxu0 %v10304
    %10864 = vmatpush.bf16.msra.mxu0 %v10297
    %10865 = vmatmul.bf16.gmra.mxu0 %v480
    %v10866 = vpop.f32.mrf.mxu0
    %v10867 = vadd.f32 %v10853, %v10866
    %v10868 = vpop.f32.mrf.mxu0
    %v10869 = vadd.f32 %v10855, %v10868
    %10870 = vdwg.mxu0
    %10871 = vmatpush.bf16.msra.mxu0 %v10402
    %10872 = vmatpush.bf16.msra.mxu0 %v10395
    %10873 = vmatpush.bf16.msra.mxu0 %v10388
    %10874 = vmatpush.bf16.msra.mxu0 %v10381
    %10875 = vmatpush.bf16.msra.mxu0 %v10374
    %10876 = vmatpush.bf16.msra.mxu0 %v10367
    %10877 = vmatpush.bf16.msra.mxu0 %v10360
    %10878 = vmatpush.bf16.msra.mxu0 %v10353
    %10879 = vmatmul.bf16.gmra.mxu0 %v481
    %v10880 = vpop.f32.mrf.mxu0
    %v10881 = vadd.f32 %v10867, %v10880
    %v10882 = vpop.f32.mrf.mxu0
    %v10883 = vadd.f32 %v10869, %v10882
    %10884 = vdwg.mxu0
    %10885 = vmatpush.bf16.msra.mxu0 %v10458
    %10886 = vmatpush.bf16.msra.mxu0 %v10451
    %10887 = vmatpush.bf16.msra.mxu0 %v10444
    %10888 = vmatpush.bf16.msra.mxu0 %v10437
    %10889 = vmatpush.bf16.msra.mxu0 %v10430
    %10890 = vmatpush.bf16.msra.mxu0 %v10423
    %10891 = vmatpush.bf16.msra.mxu0 %v10416
    %10892 = vmatpush.bf16.msra.mxu0 %v10409
    %10893 = vmatmul.bf16.gmra.mxu0 %v482
    %v10894 = vpop.f32.mrf.mxu0
    %v10895 = vadd.f32 %v10881, %v10894
    %v10896 = vpop.f32.mrf.mxu0
    %v10897 = vadd.f32 %v10883, %v10896
    %10898 = vdwg.mxu0
    %10899 = vmatpush.bf16.msra.mxu0 0
    %10900 = vmatpush.bf16.msra.mxu0 0
    %10901 = vmatpush.bf16.msra.mxu0 0
    %10902 = vmatpush.bf16.msra.mxu0 0
    %10903 = vmatpush.bf16.msra.mxu0 0
    %10904 = vmatpush.bf16.msra.mxu0 0
    %10905 = vmatpush.bf16.msra.mxu0 0
    %10906 = vmatpush.bf16.msra.mxu0 %v10465
    %10907 = vmatmul.bf16.gmra.mxu0 %v2256
    %v10908 = vpop.f32.mrf.mxu0
    %v10909 = vadd.f32 %v10895, %v10908
    %v10910 = vpop.f32.mrf.mxu0
    %v10911 = vadd.f32 %v10897, %v10910
    %10912 = vdwg.mxu0
    %10913 = vmatpush.bf16.msra.mxu0 %v10179
    %10914 = vmatpush.bf16.msra.mxu0 %v10172
    %10915 = vmatpush.bf16.msra.mxu0 %v10165
    %10916 = vmatpush.bf16.msra.mxu0 %v10158
    %10917 = vmatpush.bf16.msra.mxu0 %v10151
    %10918 = vmatpush.bf16.msra.mxu0 %v10144
    %10919 = vmatpush.bf16.msra.mxu0 %v10137
    %10920 = vmatpush.bf16.msra.mxu0 %v10130
    %10921 = vmatmul.bf16.gmra.mxu0 %v477
    %v10922 = vpop.f32.mrf.mxu0
    %v10923 = vadd.f32 0.0, %v10922
    %v10924 = vpop.f32.mrf.mxu0
    %v10925 = vadd.f32 0.0, %v10924
    %10926 = vdwg.mxu0
    %10927 = vmatpush.bf16.msra.mxu0 %v10235
    %10928 = vmatpush.bf16.msra.mxu0 %v10228
    %10929 = vmatpush.bf16.msra.mxu0 %v10221
    %10930 = vmatpush.bf16.msra.mxu0 %v10214
    %10931 = vmatpush.bf16.msra.mxu0 %v10207
    %10932 = vmatpush.bf16.msra.mxu0 %v10200
    %10933 = vmatpush.bf16.msra.mxu0 %v10193
    %10934 = vmatpush.bf16.msra.mxu0 %v10186
    %10935 = vmatmul.bf16.gmra.mxu0 %v478
    %v10936 = vpop.f32.mrf.mxu0
    %v10937 = vadd.f32 %v10923, %v10936
    %v10938 = vpop.f32.mrf.mxu0
    %v10939 = vadd.f32 %v10925, %v10938
    %10940 = vdwg.mxu0
    %10941 = vmatpush.bf16.msra.mxu0 %v10291
    %10942 = vmatpush.bf16.msra.mxu0 %v10284
    %10943 = vmatpush.bf16.msra.mxu0 %v10277
    %10944 = vmatpush.bf16.msra.mxu0 %v10270
    %10945 = vmatpush.bf16.msra.mxu0 %v10263
    %10946 = vmatpush.bf16.msra.mxu0 %v10256
    %10947 = vmatpush.bf16.msra.mxu0 %v10249
    %10948 = vmatpush.bf16.msra.mxu0 %v10242
    %10949 = vmatmul.bf16.gmra.mxu0 %v479
    %v10950 = vpop.f32.mrf.mxu0
    %v10951 = vadd.f32 %v10937, %v10950
    %v10952 = vpop.f32.mrf.mxu0
    %v10953 = vadd.f32 %v10939, %v10952
    %10954 = vdwg.mxu0
    %10955 = vmatpush.bf16.msra.mxu0 %v10347
    %10956 = vmatpush.bf16.msra.mxu0 %v10340
    %10957 = vmatpush.bf16.msra.mxu0 %v10333
    %10958 = vmatpush.bf16.msra.mxu0 %v10326
    %10959 = vmatpush.bf16.msra.mxu0 %v10319
    %10960 = vmatpush.bf16.msra.mxu0 %v10312
    %10961 = vmatpush.bf16.msra.mxu0 %v10305
    %10962 = vmatpush.bf16.msra.mxu0 %v10298
    %10963 = vmatmul.bf16.gmra.mxu0 %v480
    %v10964 = vpop.f32.mrf.mxu0
    %v10965 = vadd.f32 %v10951, %v10964
    %v10966 = vpop.f32.mrf.mxu0
    %v10967 = vadd.f32 %v10953, %v10966
    %10968 = vdwg.mxu0
    %10969 = vmatpush.bf16.msra.mxu0 %v10403
    %10970 = vmatpush.bf16.msra.mxu0 %v10396
    %10971 = vmatpush.bf16.msra.mxu0 %v10389
    %10972 = vmatpush.bf16.msra.mxu0 %v10382
    %10973 = vmatpush.bf16.msra.mxu0 %v10375
    %10974 = vmatpush.bf16.msra.mxu0 %v10368
    %10975 = vmatpush.bf16.msra.mxu0 %v10361
    %10976 = vmatpush.bf16.msra.mxu0 %v10354
    %10977 = vmatmul.bf16.gmra.mxu0 %v481
    %v10978 = vpop.f32.mrf.mxu0
    %v10979 = vadd.f32 %v10965, %v10978
    %v10980 = vpop.f32.mrf.mxu0
    %v10981 = vadd.f32 %v10967, %v10980
    %10982 = vdwg.mxu0
    %10983 = vmatpush.bf16.msra.mxu0 %v10459
    %10984 = vmatpush.bf16.msra.mxu0 %v10452
    %10985 = vmatpush.bf16.msra.mxu0 %v10445
    %10986 = vmatpush.bf16.msra.mxu0 %v10438
    %10987 = vmatpush.bf16.msra.mxu0 %v10431
    %10988 = vmatpush.bf16.msra.mxu0 %v10424
    %10989 = vmatpush.bf16.msra.mxu0 %v10417
    %10990 = vmatpush.bf16.msra.mxu0 %v10410
    %10991 = vmatmul.bf16.gmra.mxu0 %v482
    %v10992 = vpop.f32.mrf.mxu0
    %v10993 = vadd.f32 %v10979, %v10992
    %v10994 = vpop.f32.mrf.mxu0
    %v10995 = vadd.f32 %v10981, %v10994
    %10996 = vdwg.mxu0
    %10997 = vmatpush.bf16.msra.mxu0 0
    %10998 = vmatpush.bf16.msra.mxu0 0
    %10999 = vmatpush.bf16.msra.mxu0 0
    %11000 = vmatpush.bf16.msra.mxu0 0
    %11001 = vmatpush.bf16.msra.mxu0 0
    %11002 = vmatpush.bf16.msra.mxu0 0
    %11003 = vmatpush.bf16.msra.mxu0 0
    %11004 = vmatpush.bf16.msra.mxu0 %v10466
    %11005 = vmatmul.bf16.gmra.mxu0 %v2256
    %v11006 = vpop.f32.mrf.mxu0
    %v11007 = vadd.f32 %v10993, %v11006
    %v11008 = vpop.f32.mrf.mxu0
    %v11009 = vadd.f32 %v10995, %v11008
    %11010 = vdwg.mxu0
    %11011 = vmatpush.bf16.msra.mxu0 %v10180
    %11012 = vmatpush.bf16.msra.mxu0 %v10173
    %11013 = vmatpush.bf16.msra.mxu0 %v10166
    %11014 = vmatpush.bf16.msra.mxu0 %v10159
    %11015 = vmatpush.bf16.msra.mxu0 %v10152
    %11016 = vmatpush.bf16.msra.mxu0 %v10145
    %11017 = vmatpush.bf16.msra.mxu0 %v10138
    %11018 = vmatpush.bf16.msra.mxu0 %v10131
    %11019 = vmatmul.bf16.gmra.mxu0 %v477
    %v11020 = vpop.f32.mrf.mxu0
    %v11021 = vadd.f32 0.0, %v11020
    %v11022 = vpop.f32.mrf.mxu0
    %v11023 = vadd.f32 0.0, %v11022
    %11024 = vdwg.mxu0
    %11025 = vmatpush.bf16.msra.mxu0 %v10236
    %11026 = vmatpush.bf16.msra.mxu0 %v10229
    %11027 = vmatpush.bf16.msra.mxu0 %v10222
    %11028 = vmatpush.bf16.msra.mxu0 %v10215
    %11029 = vmatpush.bf16.msra.mxu0 %v10208
    %11030 = vmatpush.bf16.msra.mxu0 %v10201
    %11031 = vmatpush.bf16.msra.mxu0 %v10194
    %11032 = vmatpush.bf16.msra.mxu0 %v10187
    %11033 = vmatmul.bf16.gmra.mxu0 %v478
    %v11034 = vpop.f32.mrf.mxu0
    %v11035 = vadd.f32 %v11021, %v11034
    %v11036 = vpop.f32.mrf.mxu0
    %v11037 = vadd.f32 %v11023, %v11036
    %11038 = vdwg.mxu0
    %11039 = vmatpush.bf16.msra.mxu0 %v10292
    %11040 = vmatpush.bf16.msra.mxu0 %v10285
    %11041 = vmatpush.bf16.msra.mxu0 %v10278
    %11042 = vmatpush.bf16.msra.mxu0 %v10271
    %11043 = vmatpush.bf16.msra.mxu0 %v10264
    %11044 = vmatpush.bf16.msra.mxu0 %v10257
    %11045 = vmatpush.bf16.msra.mxu0 %v10250
    %11046 = vmatpush.bf16.msra.mxu0 %v10243
    %11047 = vmatmul.bf16.gmra.mxu0 %v479
    %v11048 = vpop.f32.mrf.mxu0
    %v11049 = vadd.f32 %v11035, %v11048
    %v11050 = vpop.f32.mrf.mxu0
    %v11051 = vadd.f32 %v11037, %v11050
    %11052 = vdwg.mxu0
    %11053 = vmatpush.bf16.msra.mxu0 %v10348
    %11054 = vmatpush.bf16.msra.mxu0 %v10341
    %11055 = vmatpush.bf16.msra.mxu0 %v10334
    %11056 = vmatpush.bf16.msra.mxu0 %v10327
    %11057 = vmatpush.bf16.msra.mxu0 %v10320
    %11058 = vmatpush.bf16.msra.mxu0 %v10313
    %11059 = vmatpush.bf16.msra.mxu0 %v10306
    %11060 = vmatpush.bf16.msra.mxu0 %v10299
    %11061 = vmatmul.bf16.gmra.mxu0 %v480
    %v11062 = vpop.f32.mrf.mxu0
    %v11063 = vadd.f32 %v11049, %v11062
    %v11064 = vpop.f32.mrf.mxu0
    %v11065 = vadd.f32 %v11051, %v11064
    %11066 = vdwg.mxu0
    %11067 = vmatpush.bf16.msra.mxu0 %v10404
    %11068 = vmatpush.bf16.msra.mxu0 %v10397
    %11069 = vmatpush.bf16.msra.mxu0 %v10390
    %11070 = vmatpush.bf16.msra.mxu0 %v10383
    %11071 = vmatpush.bf16.msra.mxu0 %v10376
    %11072 = vmatpush.bf16.msra.mxu0 %v10369
    %11073 = vmatpush.bf16.msra.mxu0 %v10362
    %11074 = vmatpush.bf16.msra.mxu0 %v10355
    %11075 = vmatmul.bf16.gmra.mxu0 %v481
    %v11076 = vpop.f32.mrf.mxu0
    %v11077 = vadd.f32 %v11063, %v11076
    %v11078 = vpop.f32.mrf.mxu0
    %v11079 = vadd.f32 %v11065, %v11078
    %11080 = vdwg.mxu0
    %11081 = vmatpush.bf16.msra.mxu0 %v10460
    %11082 = vmatpush.bf16.msra.mxu0 %v10453
    %11083 = vmatpush.bf16.msra.mxu0 %v10446
    %11084 = vmatpush.bf16.msra.mxu0 %v10439
    %11085 = vmatpush.bf16.msra.mxu0 %v10432
    %11086 = vmatpush.bf16.msra.mxu0 %v10425
    %11087 = vmatpush.bf16.msra.mxu0 %v10418
    %11088 = vmatpush.bf16.msra.mxu0 %v10411
    %11089 = vmatmul.bf16.gmra.mxu0 %v482
    %v11090 = vpop.f32.mrf.mxu0
    %v11091 = vadd.f32 %v11077, %v11090
    %v11092 = vpop.f32.mrf.mxu0
    %v11093 = vadd.f32 %v11079, %v11092
    %11094 = vdwg.mxu0
    %11095 = vmatpush.bf16.msra.mxu0 0
    %11096 = vmatpush.bf16.msra.mxu0 0
    %11097 = vmatpush.bf16.msra.mxu0 0
    %11098 = vmatpush.bf16.msra.mxu0 0
    %11099 = vmatpush.bf16.msra.mxu0 0
    %11100 = vmatpush.bf16.msra.mxu0 0
    %11101 = vmatpush.bf16.msra.mxu0 0
    %11102 = vmatpush.bf16.msra.mxu0 %v10467
    %11103 = vmatmul.bf16.gmra.mxu0 %v2256
    %v11104 = vpop.f32.mrf.mxu0
    %v11105 = vadd.f32 %v11091, %v11104
    %v11106 = vpop.f32.mrf.mxu0
    %v11107 = vadd.f32 %v11093, %v11106
    %11108 = vdwg.mxu0
    %11109 = vmatpush.bf16.msra.mxu0 %v10181
    %11110 = vmatpush.bf16.msra.mxu0 %v10174
    %11111 = vmatpush.bf16.msra.mxu0 %v10167
    %11112 = vmatpush.bf16.msra.mxu0 %v10160
    %11113 = vmatpush.bf16.msra.mxu0 %v10153
    %11114 = vmatpush.bf16.msra.mxu0 %v10146
    %11115 = vmatpush.bf16.msra.mxu0 %v10139
    %11116 = vmatpush.bf16.msra.mxu0 %v10132
    %11117 = vmatmul.bf16.gmra.mxu0 %v477
    %v11118 = vpop.f32.mrf.mxu0
    %v11119 = vadd.f32 0.0, %v11118
    %v11120 = vpop.f32.mrf.mxu0
    %v11121 = vadd.f32 0.0, %v11120
    %11122 = vdwg.mxu0
    %11123 = vmatpush.bf16.msra.mxu0 %v10237
    %11124 = vmatpush.bf16.msra.mxu0 %v10230
    %11125 = vmatpush.bf16.msra.mxu0 %v10223
    %11126 = vmatpush.bf16.msra.mxu0 %v10216
    %11127 = vmatpush.bf16.msra.mxu0 %v10209
    %11128 = vmatpush.bf16.msra.mxu0 %v10202
    %11129 = vmatpush.bf16.msra.mxu0 %v10195
    %11130 = vmatpush.bf16.msra.mxu0 %v10188
    %11131 = vmatmul.bf16.gmra.mxu0 %v478
    %v11132 = vpop.f32.mrf.mxu0
    %v11133 = vadd.f32 %v11119, %v11132
    %v11134 = vpop.f32.mrf.mxu0
    %v11135 = vadd.f32 %v11121, %v11134
    %11136 = vdwg.mxu0
    %11137 = vmatpush.bf16.msra.mxu0 %v10293
    %11138 = vmatpush.bf16.msra.mxu0 %v10286
    %11139 = vmatpush.bf16.msra.mxu0 %v10279
    %11140 = vmatpush.bf16.msra.mxu0 %v10272
    %11141 = vmatpush.bf16.msra.mxu0 %v10265
    %11142 = vmatpush.bf16.msra.mxu0 %v10258
    %11143 = vmatpush.bf16.msra.mxu0 %v10251
    %11144 = vmatpush.bf16.msra.mxu0 %v10244
    %11145 = vmatmul.bf16.gmra.mxu0 %v479
    %v11146 = vpop.f32.mrf.mxu0
    %v11147 = vadd.f32 %v11133, %v11146
    %v11148 = vpop.f32.mrf.mxu0
    %v11149 = vadd.f32 %v11135, %v11148
    %11150 = vdwg.mxu0
    %11151 = vmatpush.bf16.msra.mxu0 %v10349
    %11152 = vmatpush.bf16.msra.mxu0 %v10342
    %11153 = vmatpush.bf16.msra.mxu0 %v10335
    %11154 = vmatpush.bf16.msra.mxu0 %v10328
    %11155 = vmatpush.bf16.msra.mxu0 %v10321
    %11156 = vmatpush.bf16.msra.mxu0 %v10314
    %11157 = vmatpush.bf16.msra.mxu0 %v10307
    %11158 = vmatpush.bf16.msra.mxu0 %v10300
    %11159 = vmatmul.bf16.gmra.mxu0 %v480
    %v11160 = vpop.f32.mrf.mxu0
    %v11161 = vadd.f32 %v11147, %v11160
    %v11162 = vpop.f32.mrf.mxu0
    %v11163 = vadd.f32 %v11149, %v11162
    %11164 = vdwg.mxu0
    %11165 = vmatpush.bf16.msra.mxu0 %v10405
    %11166 = vmatpush.bf16.msra.mxu0 %v10398
    %11167 = vmatpush.bf16.msra.mxu0 %v10391
    %11168 = vmatpush.bf16.msra.mxu0 %v10384
    %11169 = vmatpush.bf16.msra.mxu0 %v10377
    %11170 = vmatpush.bf16.msra.mxu0 %v10370
    %11171 = vmatpush.bf16.msra.mxu0 %v10363
    %11172 = vmatpush.bf16.msra.mxu0 %v10356
    %11173 = vmatmul.bf16.gmra.mxu0 %v481
    %v11174 = vpop.f32.mrf.mxu0
    %v11175 = vadd.f32 %v11161, %v11174
    %v11176 = vpop.f32.mrf.mxu0
    %v11177 = vadd.f32 %v11163, %v11176
    %11178 = vdwg.mxu0
    %11179 = vmatpush.bf16.msra.mxu0 %v10461
    %11180 = vmatpush.bf16.msra.mxu0 %v10454
    %11181 = vmatpush.bf16.msra.mxu0 %v10447
    %11182 = vmatpush.bf16.msra.mxu0 %v10440
    %11183 = vmatpush.bf16.msra.mxu0 %v10433
    %11184 = vmatpush.bf16.msra.mxu0 %v10426
    %11185 = vmatpush.bf16.msra.mxu0 %v10419
    %11186 = vmatpush.bf16.msra.mxu0 %v10412
    %11187 = vmatmul.bf16.gmra.mxu0 %v482
    %v11188 = vpop.f32.mrf.mxu0
    %v11189 = vadd.f32 %v11175, %v11188
    %v11190 = vpop.f32.mrf.mxu0
    %v11191 = vadd.f32 %v11177, %v11190
    %11192 = vdwg.mxu0
    %11193 = vmatpush.bf16.msra.mxu0 0
    %11194 = vmatpush.bf16.msra.mxu0 0
    %11195 = vmatpush.bf16.msra.mxu0 0
    %11196 = vmatpush.bf16.msra.mxu0 0
    %11197 = vmatpush.bf16.msra.mxu0 0
    %11198 = vmatpush.bf16.msra.mxu0 0
    %11199 = vmatpush.bf16.msra.mxu0 0
    %11200 = vmatpush.bf16.msra.mxu0 %v10468
    %11201 = vmatmul.bf16.gmra.mxu0 %v2256
    %v11202 = vpop.f32.mrf.mxu0
    %v11203 = vadd.f32 %v11189, %v11202
    %v11204 = vpop.f32.mrf.mxu0
    %v11205 = vadd.f32 %v11191, %v11204
    %11206 = vdwg.mxu0
    %11207 = vmatpush.bf16.msra.mxu0 %v10182
    %11208 = vmatpush.bf16.msra.mxu0 %v10175
    %11209 = vmatpush.bf16.msra.mxu0 %v10168
    %11210 = vmatpush.bf16.msra.mxu0 %v10161
    %11211 = vmatpush.bf16.msra.mxu0 %v10154
    %11212 = vmatpush.bf16.msra.mxu0 %v10147
    %11213 = vmatpush.bf16.msra.mxu0 %v10140
    %11214 = vmatpush.bf16.msra.mxu0 %v10133
    %11215 = vmatmul.bf16.gmra.mxu0 %v477
    %v11216 = vpop.f32.mrf.mxu0
    %v11217 = vadd.f32 0.0, %v11216
    %v11218 = vpop.f32.mrf.mxu0
    %v11219 = vadd.f32 0.0, %v11218
    %11220 = vdwg.mxu0
    %11221 = vmatpush.bf16.msra.mxu0 %v10238
    %11222 = vmatpush.bf16.msra.mxu0 %v10231
    %11223 = vmatpush.bf16.msra.mxu0 %v10224
    %11224 = vmatpush.bf16.msra.mxu0 %v10217
    %11225 = vmatpush.bf16.msra.mxu0 %v10210
    %11226 = vmatpush.bf16.msra.mxu0 %v10203
    %11227 = vmatpush.bf16.msra.mxu0 %v10196
    %11228 = vmatpush.bf16.msra.mxu0 %v10189
    %11229 = vmatmul.bf16.gmra.mxu0 %v478
    %v11230 = vpop.f32.mrf.mxu0
    %v11231 = vadd.f32 %v11217, %v11230
    %v11232 = vpop.f32.mrf.mxu0
    %v11233 = vadd.f32 %v11219, %v11232
    %11234 = vdwg.mxu0
    %11235 = vmatpush.bf16.msra.mxu0 %v10294
    %11236 = vmatpush.bf16.msra.mxu0 %v10287
    %11237 = vmatpush.bf16.msra.mxu0 %v10280
    %11238 = vmatpush.bf16.msra.mxu0 %v10273
    %11239 = vmatpush.bf16.msra.mxu0 %v10266
    %11240 = vmatpush.bf16.msra.mxu0 %v10259
    %11241 = vmatpush.bf16.msra.mxu0 %v10252
    %11242 = vmatpush.bf16.msra.mxu0 %v10245
    %11243 = vmatmul.bf16.gmra.mxu0 %v479
    %v11244 = vpop.f32.mrf.mxu0
    %v11245 = vadd.f32 %v11231, %v11244
    %v11246 = vpop.f32.mrf.mxu0
    %v11247 = vadd.f32 %v11233, %v11246
    %11248 = vdwg.mxu0
    %11249 = vmatpush.bf16.msra.mxu0 %v10350
    %11250 = vmatpush.bf16.msra.mxu0 %v10343
    %11251 = vmatpush.bf16.msra.mxu0 %v10336
    %11252 = vmatpush.bf16.msra.mxu0 %v10329
    %11253 = vmatpush.bf16.msra.mxu0 %v10322
    %11254 = vmatpush.bf16.msra.mxu0 %v10315
    %11255 = vmatpush.bf16.msra.mxu0 %v10308
    %11256 = vmatpush.bf16.msra.mxu0 %v10301
    %11257 = vmatmul.bf16.gmra.mxu0 %v480
    %v11258 = vpop.f32.mrf.mxu0
    %v11259 = vadd.f32 %v11245, %v11258
    %v11260 = vpop.f32.mrf.mxu0
    %v11261 = vadd.f32 %v11247, %v11260
    %11262 = vdwg.mxu0
    %11263 = vmatpush.bf16.msra.mxu0 %v10406
    %11264 = vmatpush.bf16.msra.mxu0 %v10399
    %11265 = vmatpush.bf16.msra.mxu0 %v10392
    %11266 = vmatpush.bf16.msra.mxu0 %v10385
    %11267 = vmatpush.bf16.msra.mxu0 %v10378
    %11268 = vmatpush.bf16.msra.mxu0 %v10371
    %11269 = vmatpush.bf16.msra.mxu0 %v10364
    %11270 = vmatpush.bf16.msra.mxu0 %v10357
    %11271 = vmatmul.bf16.gmra.mxu0 %v481
    %v11272 = vpop.f32.mrf.mxu0
    %v11273 = vadd.f32 %v11259, %v11272
    %v11274 = vpop.f32.mrf.mxu0
    %v11275 = vadd.f32 %v11261, %v11274
    %11276 = vdwg.mxu0
    %11277 = vmatpush.bf16.msra.mxu0 %v10462
    %11278 = vmatpush.bf16.msra.mxu0 %v10455
    %11279 = vmatpush.bf16.msra.mxu0 %v10448
    %11280 = vmatpush.bf16.msra.mxu0 %v10441
    %11281 = vmatpush.bf16.msra.mxu0 %v10434
    %11282 = vmatpush.bf16.msra.mxu0 %v10427
    %11283 = vmatpush.bf16.msra.mxu0 %v10420
    %11284 = vmatpush.bf16.msra.mxu0 %v10413
    %11285 = vmatmul.bf16.gmra.mxu0 %v482
    %v11286 = vpop.f32.mrf.mxu0
    %v11287 = vadd.f32 %v11273, %v11286
    %v11288 = vpop.f32.mrf.mxu0
    %v11289 = vadd.f32 %v11275, %v11288
    %11290 = vdwg.mxu0
    %11291 = vmatpush.bf16.msra.mxu0 0
    %11292 = vmatpush.bf16.msra.mxu0 0
    %11293 = vmatpush.bf16.msra.mxu0 0
    %11294 = vmatpush.bf16.msra.mxu0 0
    %11295 = vmatpush.bf16.msra.mxu0 0
    %11296 = vmatpush.bf16.msra.mxu0 0
    %11297 = vmatpush.bf16.msra.mxu0 0
    %11298 = vmatpush.bf16.msra.mxu0 %v10469
    %11299 = vmatmul.bf16.gmra.mxu0 %v2256
    %v11300 = vpop.f32.mrf.mxu0
    %v11301 = vadd.f32 %v11287, %v11300
    %v11302 = vpop.f32.mrf.mxu0
    %v11303 = vadd.f32 %v11289, %v11302
    %11304 = vdwg.mxu0
    %11305 = vmatpush.bf16.msra.mxu0 %v10183
    %11306 = vmatpush.bf16.msra.mxu0 %v10176
    %11307 = vmatpush.bf16.msra.mxu0 %v10169
    %11308 = vmatpush.bf16.msra.mxu0 %v10162
    %11309 = vmatpush.bf16.msra.mxu0 %v10155
    %11310 = vmatpush.bf16.msra.mxu0 %v10148
    %11311 = vmatpush.bf16.msra.mxu0 %v10141
    %11312 = vmatpush.bf16.msra.mxu0 %v10134
    %11313 = vmatmul.bf16.gmra.mxu0 %v477
    %v11314 = vpop.f32.mrf.mxu0
    %v11315 = vadd.f32 0.0, %v11314
    %v11316 = vpop.f32.mrf.mxu0
    %v11317 = vadd.f32 0.0, %v11316
    %11318 = vdwg.mxu0
    %11319 = vmatpush.bf16.msra.mxu0 %v10239
    %11320 = vmatpush.bf16.msra.mxu0 %v10232
    %11321 = vmatpush.bf16.msra.mxu0 %v10225
    %11322 = vmatpush.bf16.msra.mxu0 %v10218
    %11323 = vmatpush.bf16.msra.mxu0 %v10211
    %11324 = vmatpush.bf16.msra.mxu0 %v10204
    %11325 = vmatpush.bf16.msra.mxu0 %v10197
    %11326 = vmatpush.bf16.msra.mxu0 %v10190
    %11327 = vmatmul.bf16.gmra.mxu0 %v478
    %v11328 = vpop.f32.mrf.mxu0
    %v11329 = vadd.f32 %v11315, %v11328
    %v11330 = vpop.f32.mrf.mxu0
    %v11331 = vadd.f32 %v11317, %v11330
    %11332 = vdwg.mxu0
    %11333 = vmatpush.bf16.msra.mxu0 %v10295
    %11334 = vmatpush.bf16.msra.mxu0 %v10288
    %11335 = vmatpush.bf16.msra.mxu0 %v10281
    %11336 = vmatpush.bf16.msra.mxu0 %v10274
    %11337 = vmatpush.bf16.msra.mxu0 %v10267
    %11338 = vmatpush.bf16.msra.mxu0 %v10260
    %11339 = vmatpush.bf16.msra.mxu0 %v10253
    %11340 = vmatpush.bf16.msra.mxu0 %v10246
    %11341 = vmatmul.bf16.gmra.mxu0 %v479
    %v11342 = vpop.f32.mrf.mxu0
    %v11343 = vadd.f32 %v11329, %v11342
    %v11344 = vpop.f32.mrf.mxu0
    %v11345 = vadd.f32 %v11331, %v11344
    %11346 = vdwg.mxu0
    %11347 = vmatpush.bf16.msra.mxu0 %v10351
    %11348 = vmatpush.bf16.msra.mxu0 %v10344
    %11349 = vmatpush.bf16.msra.mxu0 %v10337
    %11350 = vmatpush.bf16.msra.mxu0 %v10330
    %11351 = vmatpush.bf16.msra.mxu0 %v10323
    %11352 = vmatpush.bf16.msra.mxu0 %v10316
    %11353 = vmatpush.bf16.msra.mxu0 %v10309
    %11354 = vmatpush.bf16.msra.mxu0 %v10302
    %11355 = vmatmul.bf16.gmra.mxu0 %v480
    %v11356 = vpop.f32.mrf.mxu0
    %v11357 = vadd.f32 %v11343, %v11356
    %v11358 = vpop.f32.mrf.mxu0
    %v11359 = vadd.f32 %v11345, %v11358
    %11360 = vdwg.mxu0
    %11361 = vmatpush.bf16.msra.mxu0 %v10407
    %11362 = vmatpush.bf16.msra.mxu0 %v10400
    %11363 = vmatpush.bf16.msra.mxu0 %v10393
    %11364 = vmatpush.bf16.msra.mxu0 %v10386
    %11365 = vmatpush.bf16.msra.mxu0 %v10379
    %11366 = vmatpush.bf16.msra.mxu0 %v10372
    %11367 = vmatpush.bf16.msra.mxu0 %v10365
    %11368 = vmatpush.bf16.msra.mxu0 %v10358
    %11369 = vmatmul.bf16.gmra.mxu0 %v481
    %v11370 = vpop.f32.mrf.mxu0
    %v11371 = vadd.f32 %v11357, %v11370
    %v11372 = vpop.f32.mrf.mxu0
    %v11373 = vadd.f32 %v11359, %v11372
    %11374 = vdwg.mxu0
    %11375 = vmatpush.bf16.msra.mxu0 %v10463
    %11376 = vmatpush.bf16.msra.mxu0 %v10456
    %11377 = vmatpush.bf16.msra.mxu0 %v10449
    %11378 = vmatpush.bf16.msra.mxu0 %v10442
    %11379 = vmatpush.bf16.msra.mxu0 %v10435
    %11380 = vmatpush.bf16.msra.mxu0 %v10428
    %11381 = vmatpush.bf16.msra.mxu0 %v10421
    %11382 = vmatpush.bf16.msra.mxu0 %v10414
    %11383 = vmatmul.bf16.gmra.mxu0 %v482
    %v11384 = vpop.f32.mrf.mxu0
    %v11385 = vadd.f32 %v11371, %v11384
    %v11386 = vpop.f32.mrf.mxu0
    %v11387 = vadd.f32 %v11373, %v11386
    %11388 = vdwg.mxu0
    %11389 = vmatpush.bf16.msra.mxu0 0
    %11390 = vmatpush.bf16.msra.mxu0 0
    %11391 = vmatpush.bf16.msra.mxu0 0
    %11392 = vmatpush.bf16.msra.mxu0 0
    %11393 = vmatpush.bf16.msra.mxu0 0
    %11394 = vmatpush.bf16.msra.mxu0 0
    %11395 = vmatpush.bf16.msra.mxu0 0
    %11396 = vmatpush.bf16.msra.mxu0 %v10470
    %11397 = vmatmul.bf16.gmra.mxu0 %v2256
    %v11398 = vpop.f32.mrf.mxu0
    %v11399 = vadd.f32 %v11385, %v11398
    %v11400 = vpop.f32.mrf.mxu0
    %v11401 = vadd.f32 %v11387, %v11400
    %11402 = vdwg.mxu0
    %11403 = vmatpush.bf16.msra.mxu0 %v10184
    %11404 = vmatpush.bf16.msra.mxu0 %v10177
    %11405 = vmatpush.bf16.msra.mxu0 %v10170
    %11406 = vmatpush.bf16.msra.mxu0 %v10163
    %11407 = vmatpush.bf16.msra.mxu0 %v10156
    %11408 = vmatpush.bf16.msra.mxu0 %v10149
    %11409 = vmatpush.bf16.msra.mxu0 %v10142
    %11410 = vmatpush.bf16.msra.mxu0 %v10135
    %11411 = vmatmul.bf16.gmra.mxu0 %v477
    %v11412 = vpop.f32.mrf.mxu0
    %v11413 = vadd.f32 0.0, %v11412
    %v11414 = vpop.f32.mrf.mxu0
    %v11415 = vadd.f32 0.0, %v11414
    %11416 = vdwg.mxu0
    %11417 = vmatpush.bf16.msra.mxu0 %v10240
    %11418 = vmatpush.bf16.msra.mxu0 %v10233
    %11419 = vmatpush.bf16.msra.mxu0 %v10226
    %11420 = vmatpush.bf16.msra.mxu0 %v10219
    %11421 = vmatpush.bf16.msra.mxu0 %v10212
    %11422 = vmatpush.bf16.msra.mxu0 %v10205
    %11423 = vmatpush.bf16.msra.mxu0 %v10198
    %11424 = vmatpush.bf16.msra.mxu0 %v10191
    %11425 = vmatmul.bf16.gmra.mxu0 %v478
    %v11426 = vpop.f32.mrf.mxu0
    %v11427 = vadd.f32 %v11413, %v11426
    %v11428 = vpop.f32.mrf.mxu0
    %v11429 = vadd.f32 %v11415, %v11428
    %11430 = vdwg.mxu0
    %11431 = vmatpush.bf16.msra.mxu0 %v10296
    %11432 = vmatpush.bf16.msra.mxu0 %v10289
    %11433 = vmatpush.bf16.msra.mxu0 %v10282
    %11434 = vmatpush.bf16.msra.mxu0 %v10275
    %11435 = vmatpush.bf16.msra.mxu0 %v10268
    %11436 = vmatpush.bf16.msra.mxu0 %v10261
    %11437 = vmatpush.bf16.msra.mxu0 %v10254
    %11438 = vmatpush.bf16.msra.mxu0 %v10247
    %11439 = vmatmul.bf16.gmra.mxu0 %v479
    %v11440 = vpop.f32.mrf.mxu0
    %v11441 = vadd.f32 %v11427, %v11440
    %v11442 = vpop.f32.mrf.mxu0
    %v11443 = vadd.f32 %v11429, %v11442
    %11444 = vdwg.mxu0
    %11445 = vmatpush.bf16.msra.mxu0 %v10352
    %11446 = vmatpush.bf16.msra.mxu0 %v10345
    %11447 = vmatpush.bf16.msra.mxu0 %v10338
    %11448 = vmatpush.bf16.msra.mxu0 %v10331
    %11449 = vmatpush.bf16.msra.mxu0 %v10324
    %11450 = vmatpush.bf16.msra.mxu0 %v10317
    %11451 = vmatpush.bf16.msra.mxu0 %v10310
    %11452 = vmatpush.bf16.msra.mxu0 %v10303
    %11453 = vmatmul.bf16.gmra.mxu0 %v480
    %v11454 = vpop.f32.mrf.mxu0
    %v11455 = vadd.f32 %v11441, %v11454
    %v11456 = vpop.f32.mrf.mxu0
    %v11457 = vadd.f32 %v11443, %v11456
    %11458 = vdwg.mxu0
    %11459 = vmatpush.bf16.msra.mxu0 %v10408
    %11460 = vmatpush.bf16.msra.mxu0 %v10401
    %11461 = vmatpush.bf16.msra.mxu0 %v10394
    %11462 = vmatpush.bf16.msra.mxu0 %v10387
    %11463 = vmatpush.bf16.msra.mxu0 %v10380
    %11464 = vmatpush.bf16.msra.mxu0 %v10373
    %11465 = vmatpush.bf16.msra.mxu0 %v10366
    %11466 = vmatpush.bf16.msra.mxu0 %v10359
    %11467 = vmatmul.bf16.gmra.mxu0 %v481
    %v11468 = vpop.f32.mrf.mxu0
    %v11469 = vadd.f32 %v11455, %v11468
    %v11470 = vpop.f32.mrf.mxu0
    %v11471 = vadd.f32 %v11457, %v11470
    %11472 = vdwg.mxu0
    %11473 = vmatpush.bf16.msra.mxu0 %v10464
    %11474 = vmatpush.bf16.msra.mxu0 %v10457
    %11475 = vmatpush.bf16.msra.mxu0 %v10450
    %11476 = vmatpush.bf16.msra.mxu0 %v10443
    %11477 = vmatpush.bf16.msra.mxu0 %v10436
    %11478 = vmatpush.bf16.msra.mxu0 %v10429
    %11479 = vmatpush.bf16.msra.mxu0 %v10422
    %11480 = vmatpush.bf16.msra.mxu0 %v10415
    %11481 = vmatmul.bf16.gmra.mxu0 %v482
    %v11482 = vpop.f32.mrf.mxu0
    %v11483 = vadd.f32 %v11469, %v11482
    %v11484 = vpop.f32.mrf.mxu0
    %v11485 = vadd.f32 %v11471, %v11484
    %11486 = vdwg.mxu0
    %11487 = vmatpush.bf16.msra.mxu0 0
    %11488 = vmatpush.bf16.msra.mxu0 0
    %11489 = vmatpush.bf16.msra.mxu0 0
    %11490 = vmatpush.bf16.msra.mxu0 0
    %11491 = vmatpush.bf16.msra.mxu0 0
    %11492 = vmatpush.bf16.msra.mxu0 0
    %11493 = vmatpush.bf16.msra.mxu0 0
    %11494 = vmatpush.bf16.msra.mxu0 %v10471
    %11495 = vmatmul.bf16.gmra.mxu0 %v2256
    %v11496 = vpop.f32.mrf.mxu0
    %v11497 = vadd.f32 %v11483, %v11496
    %v11498 = vpop.f32.mrf.mxu0
    %v11499 = vadd.f32 %v11485, %v11498
    %11500 = vdwg.mxu0
    %v11501 = vmax.f32 %v8644, %v10909
    %v11502 = vmax.f32 %v8645, %v11007
    %v11503 = vmax.f32 %v8646, %v11105
    %v11504 = vmax.f32 %v8647, %v11203
    %v11505 = vmax.f32 %v8648, %v11301
    %v11506 = vmax.f32 %v8649, %v11399
    %v11507 = vmax.f32 %v8650, %v11497
    %v11508 = vmax.f32 %v8651, %v10911
    %v11509 = vmax.f32 %v8652, %v11009
    %v11510 = vmax.f32 %v8653, %v11107
    %v11511 = vmax.f32 %v8654, %v11205
    %v11512 = vmax.f32 %v8655, %v11303
    %v11513 = vmax.f32 %v8656, %v11401
    %v11514 = vmax.f32 %v8657, %v11499
    %v11515 = vld [vmem:[%s2] sm:$0x7f]
    %v11517 = vperm.slane %v11515, 0
    %v11518 = vperm.slane %v11515, 1
    %v11519 = vperm.slane %v11515, 2
    %v11520 = vperm.slane %v11515, 3
    %v11521 = vperm.slane %v11515, 4
    %v11522 = vperm.slane %v11515, 5
    %v11523 = vperm.slane %v11515, 6
    %v11531 = vadd.f32 %v11501, %v11517
    %v11532 = vadd.f32 %v11502, %v11518
    %v11533 = vadd.f32 %v11503, %v11519
    %v11534 = vadd.f32 %v11504, %v11520
    %v11535 = vadd.f32 %v11505, %v11521
    %v11536 = vadd.f32 %v11506, %v11522
    %v11537 = vadd.f32 %v11507, %v11523
    %v11538 = vadd.f32 %v11508, %v11517
    %v11539 = vadd.f32 %v11509, %v11518
    %v11540 = vadd.f32 %v11510, %v11519
    %v11541 = vadd.f32 %v11511, %v11520
    %v11542 = vadd.f32 %v11512, %v11521
    %v11543 = vadd.f32 %v11513, %v11522
    %v11544 = vadd.f32 %v11514, %v11523
    %v11545 = vmax.f32 %v11531, 0.0
    %v11546 = vmax.f32 %v11532, 0.0
    %v11547 = vmax.f32 %v11533, 0.0
    %v11548 = vmax.f32 %v11534, 0.0
    %v11549 = vmax.f32 %v11535, 0.0
    %v11550 = vmax.f32 %v11536, 0.0
    %v11551 = vmax.f32 %v11537, 0.0
    %v11552 = vmax.f32 %v11538, 0.0
    %v11553 = vmax.f32 %v11539, 0.0
    %v11554 = vmax.f32 %v11540, 0.0
    %v11555 = vmax.f32 %v11541, 0.0
    %v11556 = vmax.f32 %v11542, 0.0
    %v11557 = vmax.f32 %v11543, 0.0
    %v11558 = vmax.f32 %v11544, 0.0
    %v11559 = vpack.c.bf16 %v11552, %v11545
    %v11560 = vpack.c.bf16 %v11553, %v11546
    %v11561 = vpack.c.bf16 %v11554, %v11547
    %v11562 = vpack.c.bf16 %v11555, %v11548
    %v11563 = vpack.c.bf16 %v11556, %v11549
    %v11564 = vpack.c.bf16 %v11557, %v11550
    %v11565 = vpack.c.bf16 %v11558, %v11551
    %v11566 = vld [vmem:[%s3] sm:$0xff]
    %v11567 = vld [vmem:[%s3 + $0x8] sm:$0xff]
    %v11568 = vld [vmem:[%s3 + $0x10] sm:$0xff]
    %v11569 = vld [vmem:[%s3 + $0x18] sm:$0xff]
    %v11570 = vld [vmem:[%s3 + $0x20] sm:$0xff]
    %v11571 = vld [vmem:[%s3 + $0x28] sm:$0xff]
    %v11572 = vld [vmem:[%s3 + $0x30] sm:$0xff]
    %v11573 = vld [vmem:[%s3 + $0x38] sm:$0xff]
    %v11574 = vld [vmem:[%s3 + $0x40] sm:$0xff]
    %v11575 = vld [vmem:[%s3 + $0x48] sm:$0xff]
    %v11576 = vld [vmem:[%s3 + $0x50] sm:$0xff]
    %v11577 = vld [vmem:[%s3 + $0x58] sm:$0xff]
    %v11578 = vld [vmem:[%s3 + $0x60] sm:$0xff]
    %v11579 = vld [vmem:[%s3 + $0x68] sm:$0xff]
    %v11580 = vld [vmem:[%s3 + $0x70] sm:$0xff]
    %v11581 = vld [vmem:[%s3 + $0x78] sm:$0xff]
    %v11582 = vld [vmem:[%s3 + $0x80] sm:$0xff]
    %v11583 = vld [vmem:[%s3 + $0x88] sm:$0xff]
    %v11584 = vld [vmem:[%s3 + $0x90] sm:$0xff]
    %v11585 = vld [vmem:[%s3 + $0x98] sm:$0xff]
    %v11586 = vld [vmem:[%s3 + $0xa0] sm:$0xff]
    %v11587 = vld [vmem:[%s3 + $0xa8] sm:$0xff]
    %v11588 = vld [vmem:[%s3 + $0xb0] sm:$0xff]
    %v11589 = vld [vmem:[%s3 + $0xb8] sm:$0xff]
    %v11590 = vld [vmem:[%s3 + $0xc0] sm:$0xff]
    %v11591 = vld [vmem:[%s3 + $0xc8] sm:$0xff]
    %v11592 = vld [vmem:[%s3 + $0xd0] sm:$0xff]
    %v11593 = vld [vmem:[%s3 + $0xd8] sm:$0xff]
    %v11594 = vld [vmem:[%s3 + $0xe0] sm:$0xff]
    %v11595 = vld [vmem:[%s3 + $0xe8] sm:$0xff]
    %v11596 = vld [vmem:[%s3 + $0xf0] sm:$0xff]
    %v11597 = vld [vmem:[%s3 + $0xf8] sm:$0xff]
    %v11598 = vld [vmem:[%s3 + $0x100] sm:$0xff]
    %v11599 = vld [vmem:[%s3 + $0x108] sm:$0xff]
    %v11600 = vld [vmem:[%s3 + $0x110] sm:$0xff]
    %v11601 = vld [vmem:[%s3 + $0x118] sm:$0xff]
    %v11602 = vld [vmem:[%s3 + $0x120] sm:$0xff]
    %v11603 = vld [vmem:[%s3 + $0x128] sm:$0xff]
    %v11604 = vld [vmem:[%s3 + $0x130] sm:$0xff]
    %v11605 = vld [vmem:[%s3 + $0x138] sm:$0xff]
    %v11606 = vld [vmem:[%s3 + $0x140] sm:$0xff]
    %v11607 = vld [vmem:[%s3 + $0x148] sm:$0xff]
    %v11608 = vld [vmem:[%s3 + $0x150] sm:$0xff]
    %v11609 = vld [vmem:[%s3 + $0x158] sm:$0xff]
    %v11610 = vld [vmem:[%s3 + $0x160] sm:$0xff]
    %v11611 = vld [vmem:[%s3 + $0x168] sm:$0xff]
    %v11612 = vld [vmem:[%s3 + $0x170] sm:$0xff]
    %v11613 = vld [vmem:[%s3 + $0x178] sm:$0xff]
    %v11614 = vld [vmem:[%s3 + $0x180] sm:$0xff]
    %v11615 = vld [vmem:[%s3 + $0x188] sm:$0xff]
    %v11616 = vld [vmem:[%s3 + $0x190] sm:$0xff]
    %v11617 = vld [vmem:[%s3 + $0x198] sm:$0xff]
    %v11618 = vld [vmem:[%s3 + $0x1a0] sm:$0xff]
    %v11619 = vld [vmem:[%s3 + $0x1a8] sm:$0xff]
    %v11620 = vld [vmem:[%s3 + $0x1b0] sm:$0xff]
    %v11621 = vld [vmem:[%s3 + $0x1b8] sm:$0xff]
    %v11622 = vld [vmem:[%s3 + $0x1c0] sm:$0xff]
    %v11623 = vld [vmem:[%s3 + $0x1c8] sm:$0xff]
    %v11624 = vld [vmem:[%s3 + $0x1d0] sm:$0xff]
    %v11625 = vld [vmem:[%s3 + $0x1d8] sm:$0xff]
    %v11626 = vld [vmem:[%s3 + $0x1e0] sm:$0xff]
    %v11627 = vld [vmem:[%s3 + $0x1e8] sm:$0xff]
    %v11628 = vld [vmem:[%s3 + $0x1f0] sm:$0xff]
    %v11629 = vld [vmem:[%s3 + $0x1f8] sm:$0xff]
    %v11630 = vld [vmem:[%s3 + $0x200] sm:$0xff]
    %v11631 = vld [vmem:[%s3 + $0x208] sm:$0xff]
    %v11632 = vld [vmem:[%s3 + $0x210] sm:$0xff]
    %v11633 = vld [vmem:[%s3 + $0x218] sm:$0xff]
    %v11634 = vld [vmem:[%s3 + $0x220] sm:$0xff]
    %v11635 = vld [vmem:[%s3 + $0x228] sm:$0xff]
    %v11636 = vld [vmem:[%s3 + $0x230] sm:$0xff]
    %v11637 = vld [vmem:[%s3 + $0x238] sm:$0xff]
    %v11638 = vld [vmem:[%s3 + $0x240] sm:$0xff]
    %v11639 = vld [vmem:[%s3 + $0x248] sm:$0xff]
    %v11640 = vld [vmem:[%s3 + $0x250] sm:$0xff]
    %v11641 = vld [vmem:[%s3 + $0x258] sm:$0xff]
    %v11642 = vld [vmem:[%s3 + $0x260] sm:$0xff]
    %v11643 = vld [vmem:[%s3 + $0x268] sm:$0xff]
    %v11644 = vld [vmem:[%s3 + $0x270] sm:$0xff]
    %v11645 = vld [vmem:[%s3 + $0x278] sm:$0xff]
    %v11646 = vld [vmem:[%s3 + $0x280] sm:$0xff]
    %v11647 = vld [vmem:[%s3 + $0x288] sm:$0xff]
    %v11648 = vld [vmem:[%s3 + $0x290] sm:$0xff]
    %v11649 = vld [vmem:[%s3 + $0x298] sm:$0xff]
    %v11650 = vld [vmem:[%s3 + $0x2a0] sm:$0xff]
    %v11651 = vld [vmem:[%s3 + $0x2a8] sm:$0xff]
    %v11652 = vld [vmem:[%s3 + $0x2b0] sm:$0xff]
    %v11653 = vld [vmem:[%s3 + $0x2b8] sm:$0xff]
    %v11654 = vld [vmem:[%s3 + $0x2c0] sm:$0xff]
    %v11655 = vld [vmem:[%s3 + $0x2c8] sm:$0xff]
    %v11656 = vld [vmem:[%s3 + $0x2d0] sm:$0xff]
    %v11657 = vld [vmem:[%s3 + $0x2d8] sm:$0xff]
    %v11658 = vld [vmem:[%s3 + $0x2e0] sm:$0xff]
    %v11659 = vld [vmem:[%s3 + $0x2e8] sm:$0xff]
    %v11660 = vld [vmem:[%s3 + $0x2f0] sm:$0xff]
    %v11661 = vld [vmem:[%s3 + $0x2f8] sm:$0xff]
    %v11662 = vld [vmem:[%s3 + $0x300] sm:$0xff]
    %v11663 = vld [vmem:[%s3 + $0x308] sm:$0xff]
    %v11664 = vld [vmem:[%s3 + $0x310] sm:$0xff]
    %v11665 = vld [vmem:[%s3 + $0x318] sm:$0xff]
    %v11666 = vld [vmem:[%s3 + $0x320] sm:$0xff]
    %v11667 = vld [vmem:[%s3 + $0x328] sm:$0xff]
    %v11668 = vld [vmem:[%s3 + $0x330] sm:$0xff]
    %v11669 = vld [vmem:[%s3 + $0x338] sm:$0xff]
    %v11670 = vld [vmem:[%s3 + $0x340] sm:$0xff]
    %v11671 = vld [vmem:[%s3 + $0x348] sm:$0xff]
    %v11672 = vld [vmem:[%s3 + $0x350] sm:$0xff]
    %v11673 = vld [vmem:[%s3 + $0x358] sm:$0xff]
    %v11782 = vunpack.c.l.b16 %v11566
    %v11783 = vunpack.c.h.b16 %v11566
    %v11784 = vunpack.c.l.b16 %v11567
    %v11785 = vunpack.c.h.b16 %v11567
    %v11786 = vunpack.c.l.b16 %v11568
    %v11787 = vunpack.c.h.b16 %v11568
    %v11788 = vunpack.c.l.b16 %v11569
    %v11789 = vunpack.c.h.b16 %v11569
    %v11790 = vunpack.c.l.b16 %v11570
    %v11791 = vunpack.c.h.b16 %v11570
    %v11792 = vunpack.c.l.b16 %v11571
    %v11793 = vunpack.c.h.b16 %v11571
    %v11794 = vunpack.c.l.b16 %v11572
    %v11795 = vunpack.c.h.b16 %v11572
    %v11796 = vunpack.c.l.b16 %v11573
    %v11797 = vunpack.c.h.b16 %v11573
    %v11798 = vunpack.c.l.b16 %v11574
    %v11799 = vunpack.c.h.b16 %v11574
    %v11800 = vunpack.c.l.b16 %v11575
    %v11801 = vunpack.c.h.b16 %v11575
    %v11802 = vunpack.c.l.b16 %v11576
    %v11803 = vunpack.c.h.b16 %v11576
    %v11804 = vunpack.c.l.b16 %v11577
    %v11805 = vunpack.c.h.b16 %v11577
    %v11806 = vunpack.c.l.b16 %v11578
    %v11807 = vunpack.c.h.b16 %v11578
    %v11808 = vunpack.c.l.b16 %v11579
    %v11809 = vunpack.c.h.b16 %v11579
    %v11810 = vunpack.c.l.b16 %v11580
    %v11811 = vunpack.c.h.b16 %v11580
    %v11812 = vunpack.c.l.b16 %v11581
    %v11813 = vunpack.c.h.b16 %v11581
    %v11814 = vunpack.c.l.b16 %v11582
    %v11815 = vunpack.c.h.b16 %v11582
    %v11816 = vunpack.c.l.b16 %v11583
    %v11817 = vunpack.c.h.b16 %v11583
    %v11818 = vunpack.c.l.b16 %v11584
    %v11819 = vunpack.c.h.b16 %v11584
    %v11820 = vunpack.c.l.b16 %v11585
    %v11821 = vunpack.c.h.b16 %v11585
    %v11822 = vunpack.c.l.b16 %v11586
    %v11823 = vunpack.c.h.b16 %v11586
    %v11824 = vunpack.c.l.b16 %v11587
    %v11825 = vunpack.c.h.b16 %v11587
    %v11826 = vunpack.c.l.b16 %v11588
    %v11827 = vunpack.c.h.b16 %v11588
    %v11828 = vunpack.c.l.b16 %v11589
    %v11829 = vunpack.c.h.b16 %v11589
    %v11830 = vunpack.c.l.b16 %v11590
    %v11831 = vunpack.c.h.b16 %v11590
    %v11832 = vunpack.c.l.b16 %v11591
    %v11833 = vunpack.c.h.b16 %v11591
    %v11834 = vunpack.c.l.b16 %v11592
    %v11835 = vunpack.c.h.b16 %v11592
    %v11836 = vunpack.c.l.b16 %v11593
    %v11837 = vunpack.c.h.b16 %v11593
    %v11838 = vunpack.c.l.b16 %v11594
    %v11839 = vunpack.c.h.b16 %v11594
    %v11840 = vunpack.c.l.b16 %v11595
    %v11841 = vunpack.c.h.b16 %v11595
    %v11842 = vunpack.c.l.b16 %v11596
    %v11843 = vunpack.c.h.b16 %v11596
    %v11844 = vunpack.c.l.b16 %v11597
    %v11845 = vunpack.c.h.b16 %v11597
    %v11846 = vunpack.c.l.b16 %v11598
    %v11847 = vunpack.c.h.b16 %v11598
    %v11848 = vunpack.c.l.b16 %v11599
    %v11849 = vunpack.c.h.b16 %v11599
    %v11850 = vunpack.c.l.b16 %v11600
    %v11851 = vunpack.c.h.b16 %v11600
    %v11852 = vunpack.c.l.b16 %v11601
    %v11853 = vunpack.c.h.b16 %v11601
    %v11854 = vunpack.c.l.b16 %v11602
    %v11855 = vunpack.c.h.b16 %v11602
    %v11856 = vunpack.c.l.b16 %v11603
    %v11857 = vunpack.c.h.b16 %v11603
    %v11858 = vunpack.c.l.b16 %v11604
    %v11859 = vunpack.c.h.b16 %v11604
    %v11860 = vunpack.c.l.b16 %v11605
    %v11861 = vunpack.c.h.b16 %v11605
    %v11862 = vunpack.c.l.b16 %v11606
    %v11863 = vunpack.c.h.b16 %v11606
    %v11864 = vunpack.c.l.b16 %v11607
    %v11865 = vunpack.c.h.b16 %v11607
    %v11866 = vunpack.c.l.b16 %v11608
    %v11867 = vunpack.c.h.b16 %v11608
    %v11868 = vunpack.c.l.b16 %v11609
    %v11869 = vunpack.c.h.b16 %v11609
    %v11870 = vunpack.c.l.b16 %v11610
    %v11871 = vunpack.c.h.b16 %v11610
    %v11872 = vunpack.c.l.b16 %v11611
    %v11873 = vunpack.c.h.b16 %v11611
    %v11874 = vunpack.c.l.b16 %v11612
    %v11875 = vunpack.c.h.b16 %v11612
    %v11876 = vunpack.c.l.b16 %v11613
    %v11877 = vunpack.c.h.b16 %v11613
    %v11878 = vunpack.c.l.b16 %v11614
    %v11879 = vunpack.c.h.b16 %v11614
    %v11880 = vunpack.c.l.b16 %v11615
    %v11881 = vunpack.c.h.b16 %v11615
    %v11882 = vunpack.c.l.b16 %v11616
    %v11883 = vunpack.c.h.b16 %v11616
    %v11884 = vunpack.c.l.b16 %v11617
    %v11885 = vunpack.c.h.b16 %v11617
    %v11886 = vunpack.c.l.b16 %v11618
    %v11887 = vunpack.c.h.b16 %v11618
    %v11888 = vunpack.c.l.b16 %v11619
    %v11889 = vunpack.c.h.b16 %v11619
    %v11890 = vunpack.c.l.b16 %v11620
    %v11891 = vunpack.c.h.b16 %v11620
    %v11892 = vunpack.c.l.b16 %v11621
    %v11893 = vunpack.c.h.b16 %v11621
    %v11894 = vunpack.c.l.b16 %v11622
    %v11895 = vunpack.c.h.b16 %v11622
    %v11896 = vunpack.c.l.b16 %v11623
    %v11897 = vunpack.c.h.b16 %v11623
    %v11898 = vunpack.c.l.b16 %v11624
    %v11899 = vunpack.c.h.b16 %v11624
    %v11900 = vunpack.c.l.b16 %v11625
    %v11901 = vunpack.c.h.b16 %v11625
    %v11902 = vunpack.c.l.b16 %v11626
    %v11903 = vunpack.c.h.b16 %v11626
    %v11904 = vunpack.c.l.b16 %v11627
    %v11905 = vunpack.c.h.b16 %v11627
    %v11906 = vunpack.c.l.b16 %v11628
    %v11907 = vunpack.c.h.b16 %v11628
    %v11908 = vunpack.c.l.b16 %v11629
    %v11909 = vunpack.c.h.b16 %v11629
    %v11910 = vunpack.c.l.b16 %v11630
    %v11911 = vunpack.c.h.b16 %v11630
    %v11912 = vunpack.c.l.b16 %v11631
    %v11913 = vunpack.c.h.b16 %v11631
    %v11914 = vunpack.c.l.b16 %v11632
    %v11915 = vunpack.c.h.b16 %v11632
    %v11916 = vunpack.c.l.b16 %v11633
    %v11917 = vunpack.c.h.b16 %v11633
    %v11918 = vunpack.c.l.b16 %v11634
    %v11919 = vunpack.c.h.b16 %v11634
    %v11920 = vunpack.c.l.b16 %v11635
    %v11921 = vunpack.c.h.b16 %v11635
    %v11922 = vunpack.c.l.b16 %v11636
    %v11923 = vunpack.c.h.b16 %v11636
    %v11924 = vunpack.c.l.b16 %v11637
    %v11925 = vunpack.c.h.b16 %v11637
    %v11926 = vunpack.c.l.b16 %v11638
    %v11927 = vunpack.c.h.b16 %v11638
    %v11928 = vunpack.c.l.b16 %v11639
    %v11929 = vunpack.c.h.b16 %v11639
    %v11930 = vunpack.c.l.b16 %v11640
    %v11931 = vunpack.c.h.b16 %v11640
    %v11932 = vunpack.c.l.b16 %v11641
    %v11933 = vunpack.c.h.b16 %v11641
    %v11934 = vunpack.c.l.b16 %v11642
    %v11935 = vunpack.c.h.b16 %v11642
    %v11936 = vunpack.c.l.b16 %v11643
    %v11937 = vunpack.c.h.b16 %v11643
    %v11938 = vunpack.c.l.b16 %v11644
    %v11939 = vunpack.c.h.b16 %v11644
    %v11940 = vunpack.c.l.b16 %v11645
    %v11941 = vunpack.c.h.b16 %v11645
    %v11942 = vunpack.c.l.b16 %v11646
    %v11943 = vunpack.c.h.b16 %v11646
    %v11944 = vunpack.c.l.b16 %v11647
    %v11945 = vunpack.c.h.b16 %v11647
    %v11946 = vunpack.c.l.b16 %v11648
    %v11947 = vunpack.c.h.b16 %v11648
    %v11948 = vunpack.c.l.b16 %v11649
    %v11949 = vunpack.c.h.b16 %v11649
    %v11950 = vunpack.c.l.b16 %v11650
    %v11951 = vunpack.c.h.b16 %v11650
    %v11952 = vunpack.c.l.b16 %v11651
    %v11953 = vunpack.c.h.b16 %v11651
    %v11954 = vunpack.c.l.b16 %v11652
    %v11955 = vunpack.c.h.b16 %v11652
    %v11956 = vunpack.c.l.b16 %v11653
    %v11957 = vunpack.c.h.b16 %v11653
    %v11958 = vunpack.c.l.b16 %v11654
    %v11959 = vunpack.c.h.b16 %v11654
    %v11960 = vunpack.c.l.b16 %v11655
    %v11961 = vunpack.c.h.b16 %v11655
    %v11962 = vunpack.c.l.b16 %v11656
    %v11963 = vunpack.c.h.b16 %v11656
    %v11964 = vunpack.c.l.b16 %v11657
    %v11965 = vunpack.c.h.b16 %v11657
    %v11966 = vunpack.c.l.b16 %v11658
    %v11967 = vunpack.c.h.b16 %v11658
    %v11968 = vunpack.c.l.b16 %v11659
    %v11969 = vunpack.c.h.b16 %v11659
    %v11970 = vunpack.c.l.b16 %v11660
    %v11971 = vunpack.c.h.b16 %v11660
    %v11972 = vunpack.c.l.b16 %v11661
    %v11973 = vunpack.c.h.b16 %v11661
    %v11974 = vunpack.c.l.b16 %v11662
    %v11975 = vunpack.c.h.b16 %v11662
    %v11976 = vunpack.c.l.b16 %v11663
    %v11977 = vunpack.c.h.b16 %v11663
    %v11978 = vunpack.c.l.b16 %v11664
    %v11979 = vunpack.c.h.b16 %v11664
    %v11980 = vunpack.c.l.b16 %v11665
    %v11981 = vunpack.c.h.b16 %v11665
    %v11982 = vunpack.c.l.b16 %v11666
    %v11983 = vunpack.c.h.b16 %v11666
    %v11984 = vunpack.c.l.b16 %v11667
    %v11985 = vunpack.c.h.b16 %v11667
    %v11986 = vunpack.c.l.b16 %v11668
    %v11987 = vunpack.c.h.b16 %v11668
    %v11988 = vunpack.c.l.b16 %v11669
    %v11989 = vunpack.c.h.b16 %v11669
    %v11990 = vunpack.c.l.b16 %v11670
    %v11991 = vunpack.c.h.b16 %v11670
    %v11992 = vunpack.c.l.b16 %v11671
    %v11993 = vunpack.c.h.b16 %v11671
    %v11994 = vunpack.c.l.b16 %v11672
    %v11995 = vunpack.c.h.b16 %v11672
    %v11996 = vunpack.c.l.b16 %v11673
    %v11997 = vunpack.c.h.b16 %v11673
    %v11998 = vpack.c.b16 %v11784, %v11782
    %v11999 = vpack.c.b16 %v11785, %v11783
    %v12000 = vpack.c.b16 %v11788, %v11786
    %v12001 = vpack.c.b16 %v11789, %v11787
    %v12002 = vpack.c.b16 %v11792, %v11790
    %v12003 = vpack.c.b16 %v11793, %v11791
    %v12004 = vpack.c.b16 %v11796, %v11794
    %v12005 = vpack.c.b16 %v11797, %v11795
    %v12006 = vpack.c.b16 %v11800, %v11798
    %v12007 = vpack.c.b16 %v11801, %v11799
    %v12008 = vpack.c.b16 %v11804, %v11802
    %v12009 = vpack.c.b16 %v11805, %v11803
    %v12010 = vpack.c.b16 %v11808, %v11806
    %v12011 = vpack.c.b16 %v11809, %v11807
    %v12012 = vpack.c.b16 %v11812, %v11810
    %v12013 = vpack.c.b16 %v11813, %v11811
    %v12014 = vpack.c.b16 %v11816, %v11814
    %v12015 = vpack.c.b16 %v11817, %v11815
    %v12016 = vpack.c.b16 %v11820, %v11818
    %v12017 = vpack.c.b16 %v11821, %v11819
    %v12018 = vpack.c.b16 %v11824, %v11822
    %v12019 = vpack.c.b16 %v11825, %v11823
    %v12020 = vpack.c.b16 %v11828, %v11826
    %v12021 = vpack.c.b16 %v11829, %v11827
    %v12022 = vpack.c.b16 %v11832, %v11830
    %v12023 = vpack.c.b16 %v11833, %v11831
    %v12024 = vpack.c.b16 %v11836, %v11834
    %v12025 = vpack.c.b16 %v11837, %v11835
    %v12026 = vpack.c.b16 %v11840, %v11838
    %v12027 = vpack.c.b16 %v11841, %v11839
    %v12028 = vpack.c.b16 %v11844, %v11842
    %v12029 = vpack.c.b16 %v11845, %v11843
    %v12030 = vpack.c.b16 %v11848, %v11846
    %v12031 = vpack.c.b16 %v11849, %v11847
    %v12032 = vpack.c.b16 %v11852, %v11850
    %v12033 = vpack.c.b16 %v11853, %v11851
    %v12034 = vpack.c.b16 %v11856, %v11854
    %v12035 = vpack.c.b16 %v11857, %v11855
    %v12036 = vpack.c.b16 %v11860, %v11858
    %v12037 = vpack.c.b16 %v11861, %v11859
    %v12038 = vpack.c.b16 %v11864, %v11862
    %v12039 = vpack.c.b16 %v11865, %v11863
    %v12040 = vpack.c.b16 %v11868, %v11866
    %v12041 = vpack.c.b16 %v11869, %v11867
    %v12042 = vpack.c.b16 %v11872, %v11870
    %v12043 = vpack.c.b16 %v11873, %v11871
    %v12044 = vpack.c.b16 %v11876, %v11874
    %v12045 = vpack.c.b16 %v11877, %v11875
    %v12046 = vpack.c.b16 %v11880, %v11878
    %v12047 = vpack.c.b16 %v11881, %v11879
    %v12048 = vpack.c.b16 %v11884, %v11882
    %v12049 = vpack.c.b16 %v11885, %v11883
    %v12050 = vpack.c.b16 %v11888, %v11886
    %v12051 = vpack.c.b16 %v11889, %v11887
    %v12052 = vpack.c.b16 %v11892, %v11890
    %v12053 = vpack.c.b16 %v11893, %v11891
    %v12054 = vpack.c.b16 %v11896, %v11894
    %v12055 = vpack.c.b16 %v11897, %v11895
    %v12056 = vpack.c.b16 %v11900, %v11898
    %v12057 = vpack.c.b16 %v11901, %v11899
    %v12058 = vpack.c.b16 %v11904, %v11902
    %v12059 = vpack.c.b16 %v11905, %v11903
    %v12060 = vpack.c.b16 %v11908, %v11906
    %v12061 = vpack.c.b16 %v11909, %v11907
    %v12062 = vpack.c.b16 %v11912, %v11910
    %v12063 = vpack.c.b16 %v11913, %v11911
    %v12064 = vpack.c.b16 %v11916, %v11914
    %v12065 = vpack.c.b16 %v11917, %v11915
    %v12066 = vpack.c.b16 %v11920, %v11918
    %v12067 = vpack.c.b16 %v11921, %v11919
    %v12068 = vpack.c.b16 %v11924, %v11922
    %v12069 = vpack.c.b16 %v11925, %v11923
    %v12070 = vpack.c.b16 %v11928, %v11926
    %v12071 = vpack.c.b16 %v11929, %v11927
    %v12072 = vpack.c.b16 %v11932, %v11930
    %v12073 = vpack.c.b16 %v11933, %v11931
    %v12074 = vpack.c.b16 %v11936, %v11934
    %v12075 = vpack.c.b16 %v11937, %v11935
    %v12076 = vpack.c.b16 %v11940, %v11938
    %v12077 = vpack.c.b16 %v11941, %v11939
    %v12078 = vpack.c.b16 %v11944, %v11942
    %v12079 = vpack.c.b16 %v11945, %v11943
    %v12080 = vpack.c.b16 %v11948, %v11946
    %v12081 = vpack.c.b16 %v11949, %v11947
    %v12082 = vpack.c.b16 %v11952, %v11950
    %v12083 = vpack.c.b16 %v11953, %v11951
    %v12084 = vpack.c.b16 %v11956, %v11954
    %v12085 = vpack.c.b16 %v11957, %v11955
    %v12086 = vpack.c.b16 %v11960, %v11958
    %v12087 = vpack.c.b16 %v11961, %v11959
    %v12088 = vpack.c.b16 %v11964, %v11962
    %v12089 = vpack.c.b16 %v11965, %v11963
    %v12090 = vpack.c.b16 %v11968, %v11966
    %v12091 = vpack.c.b16 %v11969, %v11967
    %v12092 = vpack.c.b16 %v11972, %v11970
    %v12093 = vpack.c.b16 %v11973, %v11971
    %v12094 = vpack.c.b16 %v11976, %v11974
    %v12095 = vpack.c.b16 %v11977, %v11975
    %v12096 = vpack.c.b16 %v11980, %v11978
    %v12097 = vpack.c.b16 %v11981, %v11979
    %v12098 = vpack.c.b16 %v11984, %v11982
    %v12099 = vpack.c.b16 %v11985, %v11983
    %v12100 = vpack.c.b16 %v11988, %v11986
    %v12101 = vpack.c.b16 %v11989, %v11987
    %v12102 = vpack.c.b16 %v11992, %v11990
    %v12103 = vpack.c.b16 %v11993, %v11991
    %v12104 = vpack.c.b16 %v11996, %v11994
    %v12105 = vpack.c.b16 %v11997, %v11995
    %vm12214 = vcmask 785408
    %v12216 = vsel %vm12214, %v11565, 0
    %12218 = vmatpush.bf16.msra.mxu0 %v12012
    %12219 = vmatpush.bf16.msra.mxu0 %v12010
    %12220 = vmatpush.bf16.msra.mxu0 %v12008
    %12221 = vmatpush.bf16.msra.mxu0 %v12006
    %12222 = vmatpush.bf16.msra.mxu0 %v12004
    %12223 = vmatpush.bf16.msra.mxu0 %v12002
    %12224 = vmatpush.bf16.msra.mxu0 %v12000
    %12225 = vmatpush.bf16.msra.mxu0 %v11998
    %12226 = vmatmul.bf16.gmra.mxu0 %v11559
    %v12227 = vpop.f32.mrf.mxu0
    %v12228 = vadd.f32 0.0, %v12227
    %v12229 = vpop.f32.mrf.mxu0
    %v12230 = vadd.f32 0.0, %v12229
    %12231 = vdwg.mxu0
    %12232 = vmatpush.bf16.msra.mxu0 %v12028
    %12233 = vmatpush.bf16.msra.mxu0 %v12026
    %12234 = vmatpush.bf16.msra.mxu0 %v12024
    %12235 = vmatpush.bf16.msra.mxu0 %v12022
    %12236 = vmatpush.bf16.msra.mxu0 %v12020
    %12237 = vmatpush.bf16.msra.mxu0 %v12018
    %12238 = vmatpush.bf16.msra.mxu0 %v12016
    %12239 = vmatpush.bf16.msra.mxu0 %v12014
    %12240 = vmatmul.bf16.gmra.mxu0 %v11560
    %v12241 = vpop.f32.mrf.mxu0
    %v12242 = vadd.f32 %v12228, %v12241
    %v12243 = vpop.f32.mrf.mxu0
    %v12244 = vadd.f32 %v12230, %v12243
    %12245 = vdwg.mxu0
    %12246 = vmatpush.bf16.msra.mxu0 %v12044
    %12247 = vmatpush.bf16.msra.mxu0 %v12042
    %12248 = vmatpush.bf16.msra.mxu0 %v12040
    %12249 = vmatpush.bf16.msra.mxu0 %v12038
    %12250 = vmatpush.bf16.msra.mxu0 %v12036
    %12251 = vmatpush.bf16.msra.mxu0 %v12034
    %12252 = vmatpush.bf16.msra.mxu0 %v12032
    %12253 = vmatpush.bf16.msra.mxu0 %v12030
    %12254 = vmatmul.bf16.gmra.mxu0 %v11561
    %v12255 = vpop.f32.mrf.mxu0
    %v12256 = vadd.f32 %v12242, %v12255
    %v12257 = vpop.f32.mrf.mxu0
    %v12258 = vadd.f32 %v12244, %v12257
    %12259 = vdwg.mxu0
    %12260 = vmatpush.bf16.msra.mxu0 %v12060
    %12261 = vmatpush.bf16.msra.mxu0 %v12058
    %12262 = vmatpush.bf16.msra.mxu0 %v12056
    %12263 = vmatpush.bf16.msra.mxu0 %v12054
    %12264 = vmatpush.bf16.msra.mxu0 %v12052
    %12265 = vmatpush.bf16.msra.mxu0 %v12050
    %12266 = vmatpush.bf16.msra.mxu0 %v12048
    %12267 = vmatpush.bf16.msra.mxu0 %v12046
    %12268 = vmatmul.bf16.gmra.mxu0 %v11562
    %v12269 = vpop.f32.mrf.mxu0
    %v12270 = vadd.f32 %v12256, %v12269
    %v12271 = vpop.f32.mrf.mxu0
    %v12272 = vadd.f32 %v12258, %v12271
    %12273 = vdwg.mxu0
    %12274 = vmatpush.bf16.msra.mxu0 %v12076
    %12275 = vmatpush.bf16.msra.mxu0 %v12074
    %12276 = vmatpush.bf16.msra.mxu0 %v12072
    %12277 = vmatpush.bf16.msra.mxu0 %v12070
    %12278 = vmatpush.bf16.msra.mxu0 %v12068
    %12279 = vmatpush.bf16.msra.mxu0 %v12066
    %12280 = vmatpush.bf16.msra.mxu0 %v12064
    %12281 = vmatpush.bf16.msra.mxu0 %v12062
    %12282 = vmatmul.bf16.gmra.mxu0 %v11563
    %v12283 = vpop.f32.mrf.mxu0
    %v12284 = vadd.f32 %v12270, %v12283
    %v12285 = vpop.f32.mrf.mxu0
    %v12286 = vadd.f32 %v12272, %v12285
    %12287 = vdwg.mxu0
    %12288 = vmatpush.bf16.msra.mxu0 %v12092
    %12289 = vmatpush.bf16.msra.mxu0 %v12090
    %12290 = vmatpush.bf16.msra.mxu0 %v12088
    %12291 = vmatpush.bf16.msra.mxu0 %v12086
    %12292 = vmatpush.bf16.msra.mxu0 %v12084
    %12293 = vmatpush.bf16.msra.mxu0 %v12082
    %12294 = vmatpush.bf16.msra.mxu0 %v12080
    %12295 = vmatpush.bf16.msra.mxu0 %v12078
    %12296 = vmatmul.bf16.gmra.mxu0 %v11564
    %v12297 = vpop.f32.mrf.mxu0
    %v12298 = vadd.f32 %v12284, %v12297
    %v12299 = vpop.f32.mrf.mxu0
    %v12300 = vadd.f32 %v12286, %v12299
    %12301 = vdwg.mxu0
    %12302 = vmatpush.bf16.msra.mxu0 0
    %12303 = vmatpush.bf16.msra.mxu0 0
    %12304 = vmatpush.bf16.msra.mxu0 %v12104
    %12305 = vmatpush.bf16.msra.mxu0 %v12102
    %12306 = vmatpush.bf16.msra.mxu0 %v12100
    %12307 = vmatpush.bf16.msra.mxu0 %v12098
    %12308 = vmatpush.bf16.msra.mxu0 %v12096
    %12309 = vmatpush.bf16.msra.mxu0 %v12094
    %12310 = vmatmul.bf16.gmra.mxu0 %v12216
    %v12311 = vpop.f32.mrf.mxu0
    %v12312 = vadd.f32 %v12298, %v12311
    %v12313 = vpop.f32.mrf.mxu0
    %v12314 = vadd.f32 %v12300, %v12313
    %12315 = vdwg.mxu0
    %12316 = vmatpush.bf16.msra.mxu0 %v12013
    %12317 = vmatpush.bf16.msra.mxu0 %v12011
    %12318 = vmatpush.bf16.msra.mxu0 %v12009
    %12319 = vmatpush.bf16.msra.mxu0 %v12007
    %12320 = vmatpush.bf16.msra.mxu0 %v12005
    %12321 = vmatpush.bf16.msra.mxu0 %v12003
    %12322 = vmatpush.bf16.msra.mxu0 %v12001
    %12323 = vmatpush.bf16.msra.mxu0 %v11999
    %12324 = vmatmul.bf16.gmra.mxu0 %v11559
    %v12325 = vpop.f32.mrf.mxu0
    %v12326 = vadd.f32 0.0, %v12325
    %v12327 = vpop.f32.mrf.mxu0
    %v12328 = vadd.f32 0.0, %v12327
    %12329 = vdwg.mxu0
    %12330 = vmatpush.bf16.msra.mxu0 %v12029
    %12331 = vmatpush.bf16.msra.mxu0 %v12027
    %12332 = vmatpush.bf16.msra.mxu0 %v12025
    %12333 = vmatpush.bf16.msra.mxu0 %v12023
    %12334 = vmatpush.bf16.msra.mxu0 %v12021
    %12335 = vmatpush.bf16.msra.mxu0 %v12019
    %12336 = vmatpush.bf16.msra.mxu0 %v12017
    %12337 = vmatpush.bf16.msra.mxu0 %v12015
    %12338 = vmatmul.bf16.gmra.mxu0 %v11560
    %v12339 = vpop.f32.mrf.mxu0
    %v12340 = vadd.f32 %v12326, %v12339
    %v12341 = vpop.f32.mrf.mxu0
    %v12342 = vadd.f32 %v12328, %v12341
    %12343 = vdwg.mxu0
    %12344 = vmatpush.bf16.msra.mxu0 %v12045
    %12345 = vmatpush.bf16.msra.mxu0 %v12043
    %12346 = vmatpush.bf16.msra.mxu0 %v12041
    %12347 = vmatpush.bf16.msra.mxu0 %v12039
    %12348 = vmatpush.bf16.msra.mxu0 %v12037
    %12349 = vmatpush.bf16.msra.mxu0 %v12035
    %12350 = vmatpush.bf16.msra.mxu0 %v12033
    %12351 = vmatpush.bf16.msra.mxu0 %v12031
    %12352 = vmatmul.bf16.gmra.mxu0 %v11561
    %v12353 = vpop.f32.mrf.mxu0
    %v12354 = vadd.f32 %v12340, %v12353
    %v12355 = vpop.f32.mrf.mxu0
    %v12356 = vadd.f32 %v12342, %v12355
    %12357 = vdwg.mxu0
    %12358 = vmatpush.bf16.msra.mxu0 %v12061
    %12359 = vmatpush.bf16.msra.mxu0 %v12059
    %12360 = vmatpush.bf16.msra.mxu0 %v12057
    %12361 = vmatpush.bf16.msra.mxu0 %v12055
    %12362 = vmatpush.bf16.msra.mxu0 %v12053
    %12363 = vmatpush.bf16.msra.mxu0 %v12051
    %12364 = vmatpush.bf16.msra.mxu0 %v12049
    %12365 = vmatpush.bf16.msra.mxu0 %v12047
    %12366 = vmatmul.bf16.gmra.mxu0 %v11562
    %v12367 = vpop.f32.mrf.mxu0
    %v12368 = vadd.f32 %v12354, %v12367
    %v12369 = vpop.f32.mrf.mxu0
    %v12370 = vadd.f32 %v12356, %v12369
    %12371 = vdwg.mxu0
    %12372 = vmatpush.bf16.msra.mxu0 %v12077
    %12373 = vmatpush.bf16.msra.mxu0 %v12075
    %12374 = vmatpush.bf16.msra.mxu0 %v12073
    %12375 = vmatpush.bf16.msra.mxu0 %v12071
    %12376 = vmatpush.bf16.msra.mxu0 %v12069
    %12377 = vmatpush.bf16.msra.mxu0 %v12067
    %12378 = vmatpush.bf16.msra.mxu0 %v12065
    %12379 = vmatpush.bf16.msra.mxu0 %v12063
    %12380 = vmatmul.bf16.gmra.mxu0 %v11563
    %v12381 = vpop.f32.mrf.mxu0
    %v12382 = vadd.f32 %v12368, %v12381
    %v12383 = vpop.f32.mrf.mxu0
    %v12384 = vadd.f32 %v12370, %v12383
    %12385 = vdwg.mxu0
    %12386 = vmatpush.bf16.msra.mxu0 %v12093
    %12387 = vmatpush.bf16.msra.mxu0 %v12091
    %12388 = vmatpush.bf16.msra.mxu0 %v12089
    %12389 = vmatpush.bf16.msra.mxu0 %v12087
    %12390 = vmatpush.bf16.msra.mxu0 %v12085
    %12391 = vmatpush.bf16.msra.mxu0 %v12083
    %12392 = vmatpush.bf16.msra.mxu0 %v12081
    %12393 = vmatpush.bf16.msra.mxu0 %v12079
    %12394 = vmatmul.bf16.gmra.mxu0 %v11564
    %v12395 = vpop.f32.mrf.mxu0
    %v12396 = vadd.f32 %v12382, %v12395
    %v12397 = vpop.f32.mrf.mxu0
    %v12398 = vadd.f32 %v12384, %v12397
    %12399 = vdwg.mxu0
    %12400 = vmatpush.bf16.msra.mxu0 0
    %12401 = vmatpush.bf16.msra.mxu0 0
    %12402 = vmatpush.bf16.msra.mxu0 %v12105
    %12403 = vmatpush.bf16.msra.mxu0 %v12103
    %12404 = vmatpush.bf16.msra.mxu0 %v12101
    %12405 = vmatpush.bf16.msra.mxu0 %v12099
    %12406 = vmatpush.bf16.msra.mxu0 %v12097
    %12407 = vmatpush.bf16.msra.mxu0 %v12095
    %12408 = vmatmul.bf16.gmra.mxu0 %v12216
    %v12409 = vpop.f32.mrf.mxu0
    %v12410 = vadd.f32 %v12396, %v12409
    %v12411 = vpop.f32.mrf.mxu0
    %v12412 = vadd.f32 %v12398, %v12411
    %12413 = vdwg.mxu0
    %s12414 = scalar_lea.vmem %s3, 864
    %v12415 = vld [vmem:[%s12414] sm:$0xff]
    %v12416 = vld [vmem:[%s12414 + $0x8] sm:$0xff]
    %v12417 = vld [vmem:[%s12414 + $0x10] sm:$0xff]
    %v12418 = vld [vmem:[%s12414 + $0x18] sm:$0xff]
    %v12419 = vld [vmem:[%s12414 + $0x20] sm:$0xff]
    %v12420 = vld [vmem:[%s12414 + $0x28] sm:$0xff]
    %v12421 = vld [vmem:[%s12414 + $0x30] sm:$0xff]
    %v12422 = vld [vmem:[%s12414 + $0x38] sm:$0xff]
    %v12423 = vld [vmem:[%s12414 + $0x40] sm:$0xff]
    %v12424 = vld [vmem:[%s12414 + $0x48] sm:$0xff]
    %v12425 = vld [vmem:[%s12414 + $0x50] sm:$0xff]
    %v12426 = vld [vmem:[%s12414 + $0x58] sm:$0xff]
    %v12427 = vld [vmem:[%s12414 + $0x60] sm:$0xff]
    %v12428 = vld [vmem:[%s12414 + $0x68] sm:$0xff]
    %v12429 = vld [vmem:[%s12414 + $0x70] sm:$0xff]
    %v12430 = vld [vmem:[%s12414 + $0x78] sm:$0xff]
    %v12431 = vld [vmem:[%s12414 + $0x80] sm:$0xff]
    %v12432 = vld [vmem:[%s12414 + $0x88] sm:$0xff]
    %v12433 = vld [vmem:[%s12414 + $0x90] sm:$0xff]
    %v12434 = vld [vmem:[%s12414 + $0x98] sm:$0xff]
    %v12435 = vld [vmem:[%s12414 + $0xa0] sm:$0xff]
    %v12436 = vld [vmem:[%s12414 + $0xa8] sm:$0xff]
    %v12437 = vld [vmem:[%s12414 + $0xb0] sm:$0xff]
    %v12438 = vld [vmem:[%s12414 + $0xb8] sm:$0xff]
    %v12439 = vld [vmem:[%s12414 + $0xc0] sm:$0xff]
    %v12440 = vld [vmem:[%s12414 + $0xc8] sm:$0xff]
    %v12441 = vld [vmem:[%s12414 + $0xd0] sm:$0xff]
    %v12442 = vld [vmem:[%s12414 + $0xd8] sm:$0xff]
    %v12443 = vld [vmem:[%s12414 + $0xe0] sm:$0xff]
    %v12444 = vld [vmem:[%s12414 + $0xe8] sm:$0xff]
    %v12445 = vld [vmem:[%s12414 + $0xf0] sm:$0xff]
    %v12446 = vld [vmem:[%s12414 + $0xf8] sm:$0xff]
    %v12447 = vld [vmem:[%s12414 + $0x100] sm:$0xff]
    %v12448 = vld [vmem:[%s12414 + $0x108] sm:$0xff]
    %v12449 = vld [vmem:[%s12414 + $0x110] sm:$0xff]
    %v12450 = vld [vmem:[%s12414 + $0x118] sm:$0xff]
    %v12451 = vld [vmem:[%s12414 + $0x120] sm:$0xff]
    %v12452 = vld [vmem:[%s12414 + $0x128] sm:$0xff]
    %v12453 = vld [vmem:[%s12414 + $0x130] sm:$0xff]
    %v12454 = vld [vmem:[%s12414 + $0x138] sm:$0xff]
    %v12455 = vld [vmem:[%s12414 + $0x140] sm:$0xff]
    %v12456 = vld [vmem:[%s12414 + $0x148] sm:$0xff]
    %v12457 = vld [vmem:[%s12414 + $0x150] sm:$0xff]
    %v12458 = vld [vmem:[%s12414 + $0x158] sm:$0xff]
    %v12459 = vld [vmem:[%s12414 + $0x160] sm:$0xff]
    %v12460 = vld [vmem:[%s12414 + $0x168] sm:$0xff]
    %v12461 = vld [vmem:[%s12414 + $0x170] sm:$0xff]
    %v12462 = vld [vmem:[%s12414 + $0x178] sm:$0xff]
    %v12463 = vld [vmem:[%s12414 + $0x180] sm:$0xff]
    %v12464 = vld [vmem:[%s12414 + $0x188] sm:$0xff]
    %v12465 = vld [vmem:[%s12414 + $0x190] sm:$0xff]
    %v12466 = vld [vmem:[%s12414 + $0x198] sm:$0xff]
    %v12467 = vld [vmem:[%s12414 + $0x1a0] sm:$0xff]
    %v12468 = vld [vmem:[%s12414 + $0x1a8] sm:$0xff]
    %v12469 = vld [vmem:[%s12414 + $0x1b0] sm:$0xff]
    %v12470 = vld [vmem:[%s12414 + $0x1b8] sm:$0xff]
    %v12471 = vld [vmem:[%s12414 + $0x1c0] sm:$0xff]
    %v12472 = vld [vmem:[%s12414 + $0x1c8] sm:$0xff]
    %v12473 = vld [vmem:[%s12414 + $0x1d0] sm:$0xff]
    %v12474 = vld [vmem:[%s12414 + $0x1d8] sm:$0xff]
    %v12475 = vld [vmem:[%s12414 + $0x1e0] sm:$0xff]
    %v12476 = vld [vmem:[%s12414 + $0x1e8] sm:$0xff]
    %v12477 = vld [vmem:[%s12414 + $0x1f0] sm:$0xff]
    %v12478 = vld [vmem:[%s12414 + $0x1f8] sm:$0xff]
    %v12479 = vld [vmem:[%s12414 + $0x200] sm:$0xff]
    %v12480 = vld [vmem:[%s12414 + $0x208] sm:$0xff]
    %v12481 = vld [vmem:[%s12414 + $0x210] sm:$0xff]
    %v12482 = vld [vmem:[%s12414 + $0x218] sm:$0xff]
    %v12483 = vld [vmem:[%s12414 + $0x220] sm:$0xff]
    %v12484 = vld [vmem:[%s12414 + $0x228] sm:$0xff]
    %v12485 = vld [vmem:[%s12414 + $0x230] sm:$0xff]
    %v12486 = vld [vmem:[%s12414 + $0x238] sm:$0xff]
    %v12487 = vld [vmem:[%s12414 + $0x240] sm:$0xff]
    %v12488 = vld [vmem:[%s12414 + $0x248] sm:$0xff]
    %v12489 = vld [vmem:[%s12414 + $0x250] sm:$0xff]
    %v12490 = vld [vmem:[%s12414 + $0x258] sm:$0xff]
    %v12491 = vld [vmem:[%s12414 + $0x260] sm:$0xff]
    %v12492 = vld [vmem:[%s12414 + $0x268] sm:$0xff]
    %v12493 = vld [vmem:[%s12414 + $0x270] sm:$0xff]
    %v12494 = vld [vmem:[%s12414 + $0x278] sm:$0xff]
    %v12495 = vld [vmem:[%s12414 + $0x280] sm:$0xff]
    %v12496 = vld [vmem:[%s12414 + $0x288] sm:$0xff]
    %v12497 = vld [vmem:[%s12414 + $0x290] sm:$0xff]
    %v12498 = vld [vmem:[%s12414 + $0x298] sm:$0xff]
    %v12499 = vld [vmem:[%s12414 + $0x2a0] sm:$0xff]
    %v12500 = vld [vmem:[%s12414 + $0x2a8] sm:$0xff]
    %v12501 = vld [vmem:[%s12414 + $0x2b0] sm:$0xff]
    %v12502 = vld [vmem:[%s12414 + $0x2b8] sm:$0xff]
    %v12503 = vld [vmem:[%s12414 + $0x2c0] sm:$0xff]
    %v12504 = vld [vmem:[%s12414 + $0x2c8] sm:$0xff]
    %v12505 = vld [vmem:[%s12414 + $0x2d0] sm:$0xff]
    %v12506 = vld [vmem:[%s12414 + $0x2d8] sm:$0xff]
    %v12507 = vld [vmem:[%s12414 + $0x2e0] sm:$0xff]
    %v12508 = vld [vmem:[%s12414 + $0x2e8] sm:$0xff]
    %v12509 = vld [vmem:[%s12414 + $0x2f0] sm:$0xff]
    %v12510 = vld [vmem:[%s12414 + $0x2f8] sm:$0xff]
    %v12511 = vld [vmem:[%s12414 + $0x300] sm:$0xff]
    %v12512 = vld [vmem:[%s12414 + $0x308] sm:$0xff]
    %v12513 = vld [vmem:[%s12414 + $0x310] sm:$0xff]
    %v12514 = vld [vmem:[%s12414 + $0x318] sm:$0xff]
    %v12515 = vld [vmem:[%s12414 + $0x320] sm:$0xff]
    %v12516 = vld [vmem:[%s12414 + $0x328] sm:$0xff]
    %v12517 = vld [vmem:[%s12414 + $0x330] sm:$0xff]
    %v12518 = vld [vmem:[%s12414 + $0x338] sm:$0xff]
    %v12519 = vld [vmem:[%s12414 + $0x340] sm:$0xff]
    %v12520 = vld [vmem:[%s12414 + $0x348] sm:$0xff]
    %v12521 = vld [vmem:[%s12414 + $0x350] sm:$0xff]
    %v12522 = vld [vmem:[%s12414 + $0x358] sm:$0xff]
    %v12631 = vunpack.c.l.b16 %v12415
    %v12632 = vunpack.c.h.b16 %v12415
    %v12633 = vunpack.c.l.b16 %v12416
    %v12634 = vunpack.c.h.b16 %v12416
    %v12635 = vunpack.c.l.b16 %v12417
    %v12636 = vunpack.c.h.b16 %v12417
    %v12637 = vunpack.c.l.b16 %v12418
    %v12638 = vunpack.c.h.b16 %v12418
    %v12639 = vunpack.c.l.b16 %v12419
    %v12640 = vunpack.c.h.b16 %v12419
    %v12641 = vunpack.c.l.b16 %v12420
    %v12642 = vunpack.c.h.b16 %v12420
    %v12643 = vunpack.c.l.b16 %v12421
    %v12644 = vunpack.c.h.b16 %v12421
    %v12645 = vunpack.c.l.b16 %v12422
    %v12646 = vunpack.c.h.b16 %v12422
    %v12647 = vunpack.c.l.b16 %v12423
    %v12648 = vunpack.c.h.b16 %v12423
    %v12649 = vunpack.c.l.b16 %v12424
    %v12650 = vunpack.c.h.b16 %v12424
    %v12651 = vunpack.c.l.b16 %v12425
    %v12652 = vunpack.c.h.b16 %v12425
    %v12653 = vunpack.c.l.b16 %v12426
    %v12654 = vunpack.c.h.b16 %v12426
    %v12655 = vunpack.c.l.b16 %v12427
    %v12656 = vunpack.c.h.b16 %v12427
    %v12657 = vunpack.c.l.b16 %v12428
    %v12658 = vunpack.c.h.b16 %v12428
    %v12659 = vunpack.c.l.b16 %v12429
    %v12660 = vunpack.c.h.b16 %v12429
    %v12661 = vunpack.c.l.b16 %v12430
    %v12662 = vunpack.c.h.b16 %v12430
    %v12663 = vunpack.c.l.b16 %v12431
    %v12664 = vunpack.c.h.b16 %v12431
    %v12665 = vunpack.c.l.b16 %v12432
    %v12666 = vunpack.c.h.b16 %v12432
    %v12667 = vunpack.c.l.b16 %v12433
    %v12668 = vunpack.c.h.b16 %v12433
    %v12669 = vunpack.c.l.b16 %v12434
    %v12670 = vunpack.c.h.b16 %v12434
    %v12671 = vunpack.c.l.b16 %v12435
    %v12672 = vunpack.c.h.b16 %v12435
    %v12673 = vunpack.c.l.b16 %v12436
    %v12674 = vunpack.c.h.b16 %v12436
    %v12675 = vunpack.c.l.b16 %v12437
    %v12676 = vunpack.c.h.b16 %v12437
    %v12677 = vunpack.c.l.b16 %v12438
    %v12678 = vunpack.c.h.b16 %v12438
    %v12679 = vunpack.c.l.b16 %v12439
    %v12680 = vunpack.c.h.b16 %v12439
    %v12681 = vunpack.c.l.b16 %v12440
    %v12682 = vunpack.c.h.b16 %v12440
    %v12683 = vunpack.c.l.b16 %v12441
    %v12684 = vunpack.c.h.b16 %v12441
    %v12685 = vunpack.c.l.b16 %v12442
    %v12686 = vunpack.c.h.b16 %v12442
    %v12687 = vunpack.c.l.b16 %v12443
    %v12688 = vunpack.c.h.b16 %v12443
    %v12689 = vunpack.c.l.b16 %v12444
    %v12690 = vunpack.c.h.b16 %v12444
    %v12691 = vunpack.c.l.b16 %v12445
    %v12692 = vunpack.c.h.b16 %v12445
    %v12693 = vunpack.c.l.b16 %v12446
    %v12694 = vunpack.c.h.b16 %v12446
    %v12695 = vunpack.c.l.b16 %v12447
    %v12696 = vunpack.c.h.b16 %v12447
    %v12697 = vunpack.c.l.b16 %v12448
    %v12698 = vunpack.c.h.b16 %v12448
    %v12699 = vunpack.c.l.b16 %v12449
    %v12700 = vunpack.c.h.b16 %v12449
    %v12701 = vunpack.c.l.b16 %v12450
    %v12702 = vunpack.c.h.b16 %v12450
    %v12703 = vunpack.c.l.b16 %v12451
    %v12704 = vunpack.c.h.b16 %v12451
    %v12705 = vunpack.c.l.b16 %v12452
    %v12706 = vunpack.c.h.b16 %v12452
    %v12707 = vunpack.c.l.b16 %v12453
    %v12708 = vunpack.c.h.b16 %v12453
    %v12709 = vunpack.c.l.b16 %v12454
    %v12710 = vunpack.c.h.b16 %v12454
    %v12711 = vunpack.c.l.b16 %v12455
    %v12712 = vunpack.c.h.b16 %v12455
    %v12713 = vunpack.c.l.b16 %v12456
    %v12714 = vunpack.c.h.b16 %v12456
    %v12715 = vunpack.c.l.b16 %v12457
    %v12716 = vunpack.c.h.b16 %v12457
    %v12717 = vunpack.c.l.b16 %v12458
    %v12718 = vunpack.c.h.b16 %v12458
    %v12719 = vunpack.c.l.b16 %v12459
    %v12720 = vunpack.c.h.b16 %v12459
    %v12721 = vunpack.c.l.b16 %v12460
    %v12722 = vunpack.c.h.b16 %v12460
    %v12723 = vunpack.c.l.b16 %v12461
    %v12724 = vunpack.c.h.b16 %v12461
    %v12725 = vunpack.c.l.b16 %v12462
    %v12726 = vunpack.c.h.b16 %v12462
    %v12727 = vunpack.c.l.b16 %v12463
    %v12728 = vunpack.c.h.b16 %v12463
    %v12729 = vunpack.c.l.b16 %v12464
    %v12730 = vunpack.c.h.b16 %v12464
    %v12731 = vunpack.c.l.b16 %v12465
    %v12732 = vunpack.c.h.b16 %v12465
    %v12733 = vunpack.c.l.b16 %v12466
    %v12734 = vunpack.c.h.b16 %v12466
    %v12735 = vunpack.c.l.b16 %v12467
    %v12736 = vunpack.c.h.b16 %v12467
    %v12737 = vunpack.c.l.b16 %v12468
    %v12738 = vunpack.c.h.b16 %v12468
    %v12739 = vunpack.c.l.b16 %v12469
    %v12740 = vunpack.c.h.b16 %v12469
    %v12741 = vunpack.c.l.b16 %v12470
    %v12742 = vunpack.c.h.b16 %v12470
    %v12743 = vunpack.c.l.b16 %v12471
    %v12744 = vunpack.c.h.b16 %v12471
    %v12745 = vunpack.c.l.b16 %v12472
    %v12746 = vunpack.c.h.b16 %v12472
    %v12747 = vunpack.c.l.b16 %v12473
    %v12748 = vunpack.c.h.b16 %v12473
    %v12749 = vunpack.c.l.b16 %v12474
    %v12750 = vunpack.c.h.b16 %v12474
    %v12751 = vunpack.c.l.b16 %v12475
    %v12752 = vunpack.c.h.b16 %v12475
    %v12753 = vunpack.c.l.b16 %v12476
    %v12754 = vunpack.c.h.b16 %v12476
    %v12755 = vunpack.c.l.b16 %v12477
    %v12756 = vunpack.c.h.b16 %v12477
    %v12757 = vunpack.c.l.b16 %v12478
    %v12758 = vunpack.c.h.b16 %v12478
    %v12759 = vunpack.c.l.b16 %v12479
    %v12760 = vunpack.c.h.b16 %v12479
    %v12761 = vunpack.c.l.b16 %v12480
    %v12762 = vunpack.c.h.b16 %v12480
    %v12763 = vunpack.c.l.b16 %v12481
    %v12764 = vunpack.c.h.b16 %v12481
    %v12765 = vunpack.c.l.b16 %v12482
    %v12766 = vunpack.c.h.b16 %v12482
    %v12767 = vunpack.c.l.b16 %v12483
    %v12768 = vunpack.c.h.b16 %v12483
    %v12769 = vunpack.c.l.b16 %v12484
    %v12770 = vunpack.c.h.b16 %v12484
    %v12771 = vunpack.c.l.b16 %v12485
    %v12772 = vunpack.c.h.b16 %v12485
    %v12773 = vunpack.c.l.b16 %v12486
    %v12774 = vunpack.c.h.b16 %v12486
    %v12775 = vunpack.c.l.b16 %v12487
    %v12776 = vunpack.c.h.b16 %v12487
    %v12777 = vunpack.c.l.b16 %v12488
    %v12778 = vunpack.c.h.b16 %v12488
    %v12779 = vunpack.c.l.b16 %v12489
    %v12780 = vunpack.c.h.b16 %v12489
    %v12781 = vunpack.c.l.b16 %v12490
    %v12782 = vunpack.c.h.b16 %v12490
    %v12783 = vunpack.c.l.b16 %v12491
    %v12784 = vunpack.c.h.b16 %v12491
    %v12785 = vunpack.c.l.b16 %v12492
    %v12786 = vunpack.c.h.b16 %v12492
    %v12787 = vunpack.c.l.b16 %v12493
    %v12788 = vunpack.c.h.b16 %v12493
    %v12789 = vunpack.c.l.b16 %v12494
    %v12790 = vunpack.c.h.b16 %v12494
    %v12791 = vunpack.c.l.b16 %v12495
    %v12792 = vunpack.c.h.b16 %v12495
    %v12793 = vunpack.c.l.b16 %v12496
    %v12794 = vunpack.c.h.b16 %v12496
    %v12795 = vunpack.c.l.b16 %v12497
    %v12796 = vunpack.c.h.b16 %v12497
    %v12797 = vunpack.c.l.b16 %v12498
    %v12798 = vunpack.c.h.b16 %v12498
    %v12799 = vunpack.c.l.b16 %v12499
    %v12800 = vunpack.c.h.b16 %v12499
    %v12801 = vunpack.c.l.b16 %v12500
    %v12802 = vunpack.c.h.b16 %v12500
    %v12803 = vunpack.c.l.b16 %v12501
    %v12804 = vunpack.c.h.b16 %v12501
    %v12805 = vunpack.c.l.b16 %v12502
    %v12806 = vunpack.c.h.b16 %v12502
    %v12807 = vunpack.c.l.b16 %v12503
    %v12808 = vunpack.c.h.b16 %v12503
    %v12809 = vunpack.c.l.b16 %v12504
    %v12810 = vunpack.c.h.b16 %v12504
    %v12811 = vunpack.c.l.b16 %v12505
    %v12812 = vunpack.c.h.b16 %v12505
    %v12813 = vunpack.c.l.b16 %v12506
    %v12814 = vunpack.c.h.b16 %v12506
    %v12815 = vunpack.c.l.b16 %v12507
    %v12816 = vunpack.c.h.b16 %v12507
    %v12817 = vunpack.c.l.b16 %v12508
    %v12818 = vunpack.c.h.b16 %v12508
    %v12819 = vunpack.c.l.b16 %v12509
    %v12820 = vunpack.c.h.b16 %v12509
    %v12821 = vunpack.c.l.b16 %v12510
    %v12822 = vunpack.c.h.b16 %v12510
    %v12823 = vunpack.c.l.b16 %v12511
    %v12824 = vunpack.c.h.b16 %v12511
    %v12825 = vunpack.c.l.b16 %v12512
    %v12826 = vunpack.c.h.b16 %v12512
    %v12827 = vunpack.c.l.b16 %v12513
    %v12828 = vunpack.c.h.b16 %v12513
    %v12829 = vunpack.c.l.b16 %v12514
    %v12830 = vunpack.c.h.b16 %v12514
    %v12831 = vunpack.c.l.b16 %v12515
    %v12832 = vunpack.c.h.b16 %v12515
    %v12833 = vunpack.c.l.b16 %v12516
    %v12834 = vunpack.c.h.b16 %v12516
    %v12835 = vunpack.c.l.b16 %v12517
    %v12836 = vunpack.c.h.b16 %v12517
    %v12837 = vunpack.c.l.b16 %v12518
    %v12838 = vunpack.c.h.b16 %v12518
    %v12839 = vunpack.c.l.b16 %v12519
    %v12840 = vunpack.c.h.b16 %v12519
    %v12841 = vunpack.c.l.b16 %v12520
    %v12842 = vunpack.c.h.b16 %v12520
    %v12843 = vunpack.c.l.b16 %v12521
    %v12844 = vunpack.c.h.b16 %v12521
    %v12845 = vunpack.c.l.b16 %v12522
    %v12846 = vunpack.c.h.b16 %v12522
    %v12847 = vpack.c.b16 %v12633, %v12631
    %v12848 = vpack.c.b16 %v12634, %v12632
    %v12849 = vpack.c.b16 %v12637, %v12635
    %v12850 = vpack.c.b16 %v12638, %v12636
    %v12851 = vpack.c.b16 %v12641, %v12639
    %v12852 = vpack.c.b16 %v12642, %v12640
    %v12853 = vpack.c.b16 %v12645, %v12643
    %v12854 = vpack.c.b16 %v12646, %v12644
    %v12855 = vpack.c.b16 %v12649, %v12647
    %v12856 = vpack.c.b16 %v12650, %v12648
    %v12857 = vpack.c.b16 %v12653, %v12651
    %v12858 = vpack.c.b16 %v12654, %v12652
    %v12859 = vpack.c.b16 %v12657, %v12655
    %v12860 = vpack.c.b16 %v12658, %v12656
    %v12861 = vpack.c.b16 %v12661, %v12659
    %v12862 = vpack.c.b16 %v12662, %v12660
    %v12863 = vpack.c.b16 %v12665, %v12663
    %v12864 = vpack.c.b16 %v12666, %v12664
    %v12865 = vpack.c.b16 %v12669, %v12667
    %v12866 = vpack.c.b16 %v12670, %v12668
    %v12867 = vpack.c.b16 %v12673, %v12671
    %v12868 = vpack.c.b16 %v12674, %v12672
    %v12869 = vpack.c.b16 %v12677, %v12675
    %v12870 = vpack.c.b16 %v12678, %v12676
    %v12871 = vpack.c.b16 %v12681, %v12679
    %v12872 = vpack.c.b16 %v12682, %v12680
    %v12873 = vpack.c.b16 %v12685, %v12683
    %v12874 = vpack.c.b16 %v12686, %v12684
    %v12875 = vpack.c.b16 %v12689, %v12687
    %v12876 = vpack.c.b16 %v12690, %v12688
    %v12877 = vpack.c.b16 %v12693, %v12691
    %v12878 = vpack.c.b16 %v12694, %v12692
    %v12879 = vpack.c.b16 %v12697, %v12695
    %v12880 = vpack.c.b16 %v12698, %v12696
    %v12881 = vpack.c.b16 %v12701, %v12699
    %v12882 = vpack.c.b16 %v12702, %v12700
    %v12883 = vpack.c.b16 %v12705, %v12703
    %v12884 = vpack.c.b16 %v12706, %v12704
    %v12885 = vpack.c.b16 %v12709, %v12707
    %v12886 = vpack.c.b16 %v12710, %v12708
    %v12887 = vpack.c.b16 %v12713, %v12711
    %v12888 = vpack.c.b16 %v12714, %v12712
    %v12889 = vpack.c.b16 %v12717, %v12715
    %v12890 = vpack.c.b16 %v12718, %v12716
    %v12891 = vpack.c.b16 %v12721, %v12719
    %v12892 = vpack.c.b16 %v12722, %v12720
    %v12893 = vpack.c.b16 %v12725, %v12723
    %v12894 = vpack.c.b16 %v12726, %v12724
    %v12895 = vpack.c.b16 %v12729, %v12727
    %v12896 = vpack.c.b16 %v12730, %v12728
    %v12897 = vpack.c.b16 %v12733, %v12731
    %v12898 = vpack.c.b16 %v12734, %v12732
    %v12899 = vpack.c.b16 %v12737, %v12735
    %v12900 = vpack.c.b16 %v12738, %v12736
    %v12901 = vpack.c.b16 %v12741, %v12739
    %v12902 = vpack.c.b16 %v12742, %v12740
    %v12903 = vpack.c.b16 %v12745, %v12743
    %v12904 = vpack.c.b16 %v12746, %v12744
    %v12905 = vpack.c.b16 %v12749, %v12747
    %v12906 = vpack.c.b16 %v12750, %v12748
    %v12907 = vpack.c.b16 %v12753, %v12751
    %v12908 = vpack.c.b16 %v12754, %v12752
    %v12909 = vpack.c.b16 %v12757, %v12755
    %v12910 = vpack.c.b16 %v12758, %v12756
    %v12911 = vpack.c.b16 %v12761, %v12759
    %v12912 = vpack.c.b16 %v12762, %v12760
    %v12913 = vpack.c.b16 %v12765, %v12763
    %v12914 = vpack.c.b16 %v12766, %v12764
    %v12915 = vpack.c.b16 %v12769, %v12767
    %v12916 = vpack.c.b16 %v12770, %v12768
    %v12917 = vpack.c.b16 %v12773, %v12771
    %v12918 = vpack.c.b16 %v12774, %v12772
    %v12919 = vpack.c.b16 %v12777, %v12775
    %v12920 = vpack.c.b16 %v12778, %v12776
    %v12921 = vpack.c.b16 %v12781, %v12779
    %v12922 = vpack.c.b16 %v12782, %v12780
    %v12923 = vpack.c.b16 %v12785, %v12783
    %v12924 = vpack.c.b16 %v12786, %v12784
    %v12925 = vpack.c.b16 %v12789, %v12787
    %v12926 = vpack.c.b16 %v12790, %v12788
    %v12927 = vpack.c.b16 %v12793, %v12791
    %v12928 = vpack.c.b16 %v12794, %v12792
    %v12929 = vpack.c.b16 %v12797, %v12795
    %v12930 = vpack.c.b16 %v12798, %v12796
    %v12931 = vpack.c.b16 %v12801, %v12799
    %v12932 = vpack.c.b16 %v12802, %v12800
    %v12933 = vpack.c.b16 %v12805, %v12803
    %v12934 = vpack.c.b16 %v12806, %v12804
    %v12935 = vpack.c.b16 %v12809, %v12807
    %v12936 = vpack.c.b16 %v12810, %v12808
    %v12937 = vpack.c.b16 %v12813, %v12811
    %v12938 = vpack.c.b16 %v12814, %v12812
    %v12939 = vpack.c.b16 %v12817, %v12815
    %v12940 = vpack.c.b16 %v12818, %v12816
    %v12941 = vpack.c.b16 %v12821, %v12819
    %v12942 = vpack.c.b16 %v12822, %v12820
    %v12943 = vpack.c.b16 %v12825, %v12823
    %v12944 = vpack.c.b16 %v12826, %v12824
    %v12945 = vpack.c.b16 %v12829, %v12827
    %v12946 = vpack.c.b16 %v12830, %v12828
    %v12947 = vpack.c.b16 %v12833, %v12831
    %v12948 = vpack.c.b16 %v12834, %v12832
    %v12949 = vpack.c.b16 %v12837, %v12835
    %v12950 = vpack.c.b16 %v12838, %v12836
    %v12951 = vpack.c.b16 %v12841, %v12839
    %v12952 = vpack.c.b16 %v12842, %v12840
    %v12953 = vpack.c.b16 %v12845, %v12843
    %v12954 = vpack.c.b16 %v12846, %v12844
    %13063 = vmatpush.bf16.msra.mxu0 %v12861
    %13064 = vmatpush.bf16.msra.mxu0 %v12859
    %13065 = vmatpush.bf16.msra.mxu0 %v12857
    %13066 = vmatpush.bf16.msra.mxu0 %v12855
    %13067 = vmatpush.bf16.msra.mxu0 %v12853
    %13068 = vmatpush.bf16.msra.mxu0 %v12851
    %13069 = vmatpush.bf16.msra.mxu0 %v12849
    %13070 = vmatpush.bf16.msra.mxu0 %v12847
    %13071 = vmatmul.bf16.gmra.mxu0 %v11559
    %v13072 = vpop.f32.mrf.mxu0
    %v13073 = vadd.f32 0.0, %v13072
    %v13074 = vpop.f32.mrf.mxu0
    %v13075 = vadd.f32 0.0, %v13074
    %13076 = vdwg.mxu0
    %13077 = vmatpush.bf16.msra.mxu0 %v12877
    %13078 = vmatpush.bf16.msra.mxu0 %v12875
    %13079 = vmatpush.bf16.msra.mxu0 %v12873
    %13080 = vmatpush.bf16.msra.mxu0 %v12871
    %13081 = vmatpush.bf16.msra.mxu0 %v12869
    %13082 = vmatpush.bf16.msra.mxu0 %v12867
    %13083 = vmatpush.bf16.msra.mxu0 %v12865
    %13084 = vmatpush.bf16.msra.mxu0 %v12863
    %13085 = vmatmul.bf16.gmra.mxu0 %v11560
    %v13086 = vpop.f32.mrf.mxu0
    %v13087 = vadd.f32 %v13073, %v13086
    %v13088 = vpop.f32.mrf.mxu0
    %v13089 = vadd.f32 %v13075, %v13088
    %13090 = vdwg.mxu0
    %13091 = vmatpush.bf16.msra.mxu0 %v12893
    %13092 = vmatpush.bf16.msra.mxu0 %v12891
    %13093 = vmatpush.bf16.msra.mxu0 %v12889
    %13094 = vmatpush.bf16.msra.mxu0 %v12887
    %13095 = vmatpush.bf16.msra.mxu0 %v12885
    %13096 = vmatpush.bf16.msra.mxu0 %v12883
    %13097 = vmatpush.bf16.msra.mxu0 %v12881
    %13098 = vmatpush.bf16.msra.mxu0 %v12879
    %13099 = vmatmul.bf16.gmra.mxu0 %v11561
    %v13100 = vpop.f32.mrf.mxu0
    %v13101 = vadd.f32 %v13087, %v13100
    %v13102 = vpop.f32.mrf.mxu0
    %v13103 = vadd.f32 %v13089, %v13102
    %13104 = vdwg.mxu0
    %13105 = vmatpush.bf16.msra.mxu0 %v12909
    %13106 = vmatpush.bf16.msra.mxu0 %v12907
    %13107 = vmatpush.bf16.msra.mxu0 %v12905
    %13108 = vmatpush.bf16.msra.mxu0 %v12903
    %13109 = vmatpush.bf16.msra.mxu0 %v12901
    %13110 = vmatpush.bf16.msra.mxu0 %v12899
    %13111 = vmatpush.bf16.msra.mxu0 %v12897
    %13112 = vmatpush.bf16.msra.mxu0 %v12895
    %13113 = vmatmul.bf16.gmra.mxu0 %v11562
    %v13114 = vpop.f32.mrf.mxu0
    %v13115 = vadd.f32 %v13101, %v13114
    %v13116 = vpop.f32.mrf.mxu0
    %v13117 = vadd.f32 %v13103, %v13116
    %13118 = vdwg.mxu0
    %13119 = vmatpush.bf16.msra.mxu0 %v12925
    %13120 = vmatpush.bf16.msra.mxu0 %v12923
    %13121 = vmatpush.bf16.msra.mxu0 %v12921
    %13122 = vmatpush.bf16.msra.mxu0 %v12919
    %13123 = vmatpush.bf16.msra.mxu0 %v12917
    %13124 = vmatpush.bf16.msra.mxu0 %v12915
    %13125 = vmatpush.bf16.msra.mxu0 %v12913
    %13126 = vmatpush.bf16.msra.mxu0 %v12911
    %13127 = vmatmul.bf16.gmra.mxu0 %v11563
    %v13128 = vpop.f32.mrf.mxu0
    %v13129 = vadd.f32 %v13115, %v13128
    %v13130 = vpop.f32.mrf.mxu0
    %v13131 = vadd.f32 %v13117, %v13130
    %13132 = vdwg.mxu0
    %13133 = vmatpush.bf16.msra.mxu0 %v12941
    %13134 = vmatpush.bf16.msra.mxu0 %v12939
    %13135 = vmatpush.bf16.msra.mxu0 %v12937
    %13136 = vmatpush.bf16.msra.mxu0 %v12935
    %13137 = vmatpush.bf16.msra.mxu0 %v12933
    %13138 = vmatpush.bf16.msra.mxu0 %v12931
    %13139 = vmatpush.bf16.msra.mxu0 %v12929
    %13140 = vmatpush.bf16.msra.mxu0 %v12927
    %13141 = vmatmul.bf16.gmra.mxu0 %v11564
    %v13142 = vpop.f32.mrf.mxu0
    %v13143 = vadd.f32 %v13129, %v13142
    %v13144 = vpop.f32.mrf.mxu0
    %v13145 = vadd.f32 %v13131, %v13144
    %13146 = vdwg.mxu0
    %13147 = vmatpush.bf16.msra.mxu0 0
    %13148 = vmatpush.bf16.msra.mxu0 0
    %13149 = vmatpush.bf16.msra.mxu0 %v12953
    %13150 = vmatpush.bf16.msra.mxu0 %v12951
    %13151 = vmatpush.bf16.msra.mxu0 %v12949
    %13152 = vmatpush.bf16.msra.mxu0 %v12947
    %13153 = vmatpush.bf16.msra.mxu0 %v12945
    %13154 = vmatpush.bf16.msra.mxu0 %v12943
    %13155 = vmatmul.bf16.gmra.mxu0 %v12216
    %v13156 = vpop.f32.mrf.mxu0
    %v13157 = vadd.f32 %v13143, %v13156
    %v13158 = vpop.f32.mrf.mxu0
    %v13159 = vadd.f32 %v13145, %v13158
    %13160 = vdwg.mxu0
    %13161 = vmatpush.bf16.msra.mxu0 %v12862
    %13162 = vmatpush.bf16.msra.mxu0 %v12860
    %13163 = vmatpush.bf16.msra.mxu0 %v12858
    %13164 = vmatpush.bf16.msra.mxu0 %v12856
    %13165 = vmatpush.bf16.msra.mxu0 %v12854
    %13166 = vmatpush.bf16.msra.mxu0 %v12852
    %13167 = vmatpush.bf16.msra.mxu0 %v12850
    %13168 = vmatpush.bf16.msra.mxu0 %v12848
    %13169 = vmatmul.bf16.gmra.mxu0 %v11559
    %v13170 = vpop.f32.mrf.mxu0
    %v13171 = vadd.f32 0.0, %v13170
    %v13172 = vpop.f32.mrf.mxu0
    %v13173 = vadd.f32 0.0, %v13172
    %13174 = vdwg.mxu0
    %13175 = vmatpush.bf16.msra.mxu0 %v12878
    %13176 = vmatpush.bf16.msra.mxu0 %v12876
    %13177 = vmatpush.bf16.msra.mxu0 %v12874
    %13178 = vmatpush.bf16.msra.mxu0 %v12872
    %13179 = vmatpush.bf16.msra.mxu0 %v12870
    %13180 = vmatpush.bf16.msra.mxu0 %v12868
    %13181 = vmatpush.bf16.msra.mxu0 %v12866
    %13182 = vmatpush.bf16.msra.mxu0 %v12864
    %13183 = vmatmul.bf16.gmra.mxu0 %v11560
    %v13184 = vpop.f32.mrf.mxu0
    %v13185 = vadd.f32 %v13171, %v13184
    %v13186 = vpop.f32.mrf.mxu0
    %v13187 = vadd.f32 %v13173, %v13186
    %13188 = vdwg.mxu0
    %13189 = vmatpush.bf16.msra.mxu0 %v12894
    %13190 = vmatpush.bf16.msra.mxu0 %v12892
    %13191 = vmatpush.bf16.msra.mxu0 %v12890
    %13192 = vmatpush.bf16.msra.mxu0 %v12888
    %13193 = vmatpush.bf16.msra.mxu0 %v12886
    %13194 = vmatpush.bf16.msra.mxu0 %v12884
    %13195 = vmatpush.bf16.msra.mxu0 %v12882
    %13196 = vmatpush.bf16.msra.mxu0 %v12880
    %13197 = vmatmul.bf16.gmra.mxu0 %v11561
    %v13198 = vpop.f32.mrf.mxu0
    %v13199 = vadd.f32 %v13185, %v13198
    %v13200 = vpop.f32.mrf.mxu0
    %v13201 = vadd.f32 %v13187, %v13200
    %13202 = vdwg.mxu0
    %13203 = vmatpush.bf16.msra.mxu0 %v12910
    %13204 = vmatpush.bf16.msra.mxu0 %v12908
    %13205 = vmatpush.bf16.msra.mxu0 %v12906
    %13206 = vmatpush.bf16.msra.mxu0 %v12904
    %13207 = vmatpush.bf16.msra.mxu0 %v12902
    %13208 = vmatpush.bf16.msra.mxu0 %v12900
    %13209 = vmatpush.bf16.msra.mxu0 %v12898
    %13210 = vmatpush.bf16.msra.mxu0 %v12896
    %13211 = vmatmul.bf16.gmra.mxu0 %v11562
    %v13212 = vpop.f32.mrf.mxu0
    %v13213 = vadd.f32 %v13199, %v13212
    %v13214 = vpop.f32.mrf.mxu0
    %v13215 = vadd.f32 %v13201, %v13214
    %13216 = vdwg.mxu0
    %13217 = vmatpush.bf16.msra.mxu0 %v12926
    %13218 = vmatpush.bf16.msra.mxu0 %v12924
    %13219 = vmatpush.bf16.msra.mxu0 %v12922
    %13220 = vmatpush.bf16.msra.mxu0 %v12920
    %13221 = vmatpush.bf16.msra.mxu0 %v12918
    %13222 = vmatpush.bf16.msra.mxu0 %v12916
    %13223 = vmatpush.bf16.msra.mxu0 %v12914
    %13224 = vmatpush.bf16.msra.mxu0 %v12912
    %13225 = vmatmul.bf16.gmra.mxu0 %v11563
    %v13226 = vpop.f32.mrf.mxu0
    %v13227 = vadd.f32 %v13213, %v13226
    %v13228 = vpop.f32.mrf.mxu0
    %v13229 = vadd.f32 %v13215, %v13228
    %13230 = vdwg.mxu0
    %13231 = vmatpush.bf16.msra.mxu0 %v12942
    %13232 = vmatpush.bf16.msra.mxu0 %v12940
    %13233 = vmatpush.bf16.msra.mxu0 %v12938
    %13234 = vmatpush.bf16.msra.mxu0 %v12936
    %13235 = vmatpush.bf16.msra.mxu0 %v12934
    %13236 = vmatpush.bf16.msra.mxu0 %v12932
    %13237 = vmatpush.bf16.msra.mxu0 %v12930
    %13238 = vmatpush.bf16.msra.mxu0 %v12928
    %13239 = vmatmul.bf16.gmra.mxu0 %v11564
    %v13240 = vpop.f32.mrf.mxu0
    %v13241 = vadd.f32 %v13227, %v13240
    %v13242 = vpop.f32.mrf.mxu0
    %v13243 = vadd.f32 %v13229, %v13242
    %13244 = vdwg.mxu0
    %13245 = vmatpush.bf16.msra.mxu0 0
    %13246 = vmatpush.bf16.msra.mxu0 0
    %13247 = vmatpush.bf16.msra.mxu0 %v12954
    %13248 = vmatpush.bf16.msra.mxu0 %v12952
    %13249 = vmatpush.bf16.msra.mxu0 %v12950
    %13250 = vmatpush.bf16.msra.mxu0 %v12948
    %13251 = vmatpush.bf16.msra.mxu0 %v12946
    %13252 = vmatpush.bf16.msra.mxu0 %v12944
    %13253 = vmatmul.bf16.gmra.mxu0 %v12216
    %v13254 = vpop.f32.mrf.mxu0
    %v13255 = vadd.f32 %v13241, %v13254
    %v13256 = vpop.f32.mrf.mxu0
    %v13257 = vadd.f32 %v13243, %v13256
    %13258 = vdwg.mxu0
    %v13259 = vmax.f32 %v12312, %v13157
    %v13260 = vmax.f32 %v12410, %v13255
    %v13261 = vmax.f32 %v12314, %v13159
    %v13262 = vmax.f32 %v12412, %v13257
    %s13263 = scalar_lea.vmem %s3, 1728
    %v13264 = vld [vmem:[%s13263] sm:$0xff]
    %v13265 = vld [vmem:[%s13263 + $0x8] sm:$0xff]
    %v13266 = vld [vmem:[%s13263 + $0x10] sm:$0xff]
    %v13267 = vld [vmem:[%s13263 + $0x18] sm:$0xff]
    %v13268 = vld [vmem:[%s13263 + $0x20] sm:$0xff]
    %v13269 = vld [vmem:[%s13263 + $0x28] sm:$0xff]
    %v13270 = vld [vmem:[%s13263 + $0x30] sm:$0xff]
    %v13271 = vld [vmem:[%s13263 + $0x38] sm:$0xff]
    %v13272 = vld [vmem:[%s13263 + $0x40] sm:$0xff]
    %v13273 = vld [vmem:[%s13263 + $0x48] sm:$0xff]
    %v13274 = vld [vmem:[%s13263 + $0x50] sm:$0xff]
    %v13275 = vld [vmem:[%s13263 + $0x58] sm:$0xff]
    %v13276 = vld [vmem:[%s13263 + $0x60] sm:$0xff]
    %v13277 = vld [vmem:[%s13263 + $0x68] sm:$0xff]
    %v13278 = vld [vmem:[%s13263 + $0x70] sm:$0xff]
    %v13279 = vld [vmem:[%s13263 + $0x78] sm:$0xff]
    %v13280 = vld [vmem:[%s13263 + $0x80] sm:$0xff]
    %v13281 = vld [vmem:[%s13263 + $0x88] sm:$0xff]
    %v13282 = vld [vmem:[%s13263 + $0x90] sm:$0xff]
    %v13283 = vld [vmem:[%s13263 + $0x98] sm:$0xff]
    %v13284 = vld [vmem:[%s13263 + $0xa0] sm:$0xff]
    %v13285 = vld [vmem:[%s13263 + $0xa8] sm:$0xff]
    %v13286 = vld [vmem:[%s13263 + $0xb0] sm:$0xff]
    %v13287 = vld [vmem:[%s13263 + $0xb8] sm:$0xff]
    %v13288 = vld [vmem:[%s13263 + $0xc0] sm:$0xff]
    %v13289 = vld [vmem:[%s13263 + $0xc8] sm:$0xff]
    %v13290 = vld [vmem:[%s13263 + $0xd0] sm:$0xff]
    %v13291 = vld [vmem:[%s13263 + $0xd8] sm:$0xff]
    %v13292 = vld [vmem:[%s13263 + $0xe0] sm:$0xff]
    %v13293 = vld [vmem:[%s13263 + $0xe8] sm:$0xff]
    %v13294 = vld [vmem:[%s13263 + $0xf0] sm:$0xff]
    %v13295 = vld [vmem:[%s13263 + $0xf8] sm:$0xff]
    %v13296 = vld [vmem:[%s13263 + $0x100] sm:$0xff]
    %v13297 = vld [vmem:[%s13263 + $0x108] sm:$0xff]
    %v13298 = vld [vmem:[%s13263 + $0x110] sm:$0xff]
    %v13299 = vld [vmem:[%s13263 + $0x118] sm:$0xff]
    %v13300 = vld [vmem:[%s13263 + $0x120] sm:$0xff]
    %v13301 = vld [vmem:[%s13263 + $0x128] sm:$0xff]
    %v13302 = vld [vmem:[%s13263 + $0x130] sm:$0xff]
    %v13303 = vld [vmem:[%s13263 + $0x138] sm:$0xff]
    %v13304 = vld [vmem:[%s13263 + $0x140] sm:$0xff]
    %v13305 = vld [vmem:[%s13263 + $0x148] sm:$0xff]
    %v13306 = vld [vmem:[%s13263 + $0x150] sm:$0xff]
    %v13307 = vld [vmem:[%s13263 + $0x158] sm:$0xff]
    %v13308 = vld [vmem:[%s13263 + $0x160] sm:$0xff]
    %v13309 = vld [vmem:[%s13263 + $0x168] sm:$0xff]
    %v13310 = vld [vmem:[%s13263 + $0x170] sm:$0xff]
    %v13311 = vld [vmem:[%s13263 + $0x178] sm:$0xff]
    %v13312 = vld [vmem:[%s13263 + $0x180] sm:$0xff]
    %v13313 = vld [vmem:[%s13263 + $0x188] sm:$0xff]
    %v13314 = vld [vmem:[%s13263 + $0x190] sm:$0xff]
    %v13315 = vld [vmem:[%s13263 + $0x198] sm:$0xff]
    %v13316 = vld [vmem:[%s13263 + $0x1a0] sm:$0xff]
    %v13317 = vld [vmem:[%s13263 + $0x1a8] sm:$0xff]
    %v13318 = vld [vmem:[%s13263 + $0x1b0] sm:$0xff]
    %v13319 = vld [vmem:[%s13263 + $0x1b8] sm:$0xff]
    %v13320 = vld [vmem:[%s13263 + $0x1c0] sm:$0xff]
    %v13321 = vld [vmem:[%s13263 + $0x1c8] sm:$0xff]
    %v13322 = vld [vmem:[%s13263 + $0x1d0] sm:$0xff]
    %v13323 = vld [vmem:[%s13263 + $0x1d8] sm:$0xff]
    %v13324 = vld [vmem:[%s13263 + $0x1e0] sm:$0xff]
    %v13325 = vld [vmem:[%s13263 + $0x1e8] sm:$0xff]
    %v13326 = vld [vmem:[%s13263 + $0x1f0] sm:$0xff]
    %v13327 = vld [vmem:[%s13263 + $0x1f8] sm:$0xff]
    %v13328 = vld [vmem:[%s13263 + $0x200] sm:$0xff]
    %v13329 = vld [vmem:[%s13263 + $0x208] sm:$0xff]
    %v13330 = vld [vmem:[%s13263 + $0x210] sm:$0xff]
    %v13331 = vld [vmem:[%s13263 + $0x218] sm:$0xff]
    %v13332 = vld [vmem:[%s13263 + $0x220] sm:$0xff]
    %v13333 = vld [vmem:[%s13263 + $0x228] sm:$0xff]
    %v13334 = vld [vmem:[%s13263 + $0x230] sm:$0xff]
    %v13335 = vld [vmem:[%s13263 + $0x238] sm:$0xff]
    %v13336 = vld [vmem:[%s13263 + $0x240] sm:$0xff]
    %v13337 = vld [vmem:[%s13263 + $0x248] sm:$0xff]
    %v13338 = vld [vmem:[%s13263 + $0x250] sm:$0xff]
    %v13339 = vld [vmem:[%s13263 + $0x258] sm:$0xff]
    %v13340 = vld [vmem:[%s13263 + $0x260] sm:$0xff]
    %v13341 = vld [vmem:[%s13263 + $0x268] sm:$0xff]
    %v13342 = vld [vmem:[%s13263 + $0x270] sm:$0xff]
    %v13343 = vld [vmem:[%s13263 + $0x278] sm:$0xff]
    %v13344 = vld [vmem:[%s13263 + $0x280] sm:$0xff]
    %v13345 = vld [vmem:[%s13263 + $0x288] sm:$0xff]
    %v13346 = vld [vmem:[%s13263 + $0x290] sm:$0xff]
    %v13347 = vld [vmem:[%s13263 + $0x298] sm:$0xff]
    %v13348 = vld [vmem:[%s13263 + $0x2a0] sm:$0xff]
    %v13349 = vld [vmem:[%s13263 + $0x2a8] sm:$0xff]
    %v13350 = vld [vmem:[%s13263 + $0x2b0] sm:$0xff]
    %v13351 = vld [vmem:[%s13263 + $0x2b8] sm:$0xff]
    %v13352 = vld [vmem:[%s13263 + $0x2c0] sm:$0xff]
    %v13353 = vld [vmem:[%s13263 + $0x2c8] sm:$0xff]
    %v13354 = vld [vmem:[%s13263 + $0x2d0] sm:$0xff]
    %v13355 = vld [vmem:[%s13263 + $0x2d8] sm:$0xff]
    %v13356 = vld [vmem:[%s13263 + $0x2e0] sm:$0xff]
    %v13357 = vld [vmem:[%s13263 + $0x2e8] sm:$0xff]
    %v13358 = vld [vmem:[%s13263 + $0x2f0] sm:$0xff]
    %v13359 = vld [vmem:[%s13263 + $0x2f8] sm:$0xff]
    %v13360 = vld [vmem:[%s13263 + $0x300] sm:$0xff]
    %v13361 = vld [vmem:[%s13263 + $0x308] sm:$0xff]
    %v13362 = vld [vmem:[%s13263 + $0x310] sm:$0xff]
    %v13363 = vld [vmem:[%s13263 + $0x318] sm:$0xff]
    %v13364 = vld [vmem:[%s13263 + $0x320] sm:$0xff]
    %v13365 = vld [vmem:[%s13263 + $0x328] sm:$0xff]
    %v13366 = vld [vmem:[%s13263 + $0x330] sm:$0xff]
    %v13367 = vld [vmem:[%s13263 + $0x338] sm:$0xff]
    %v13368 = vld [vmem:[%s13263 + $0x340] sm:$0xff]
    %v13369 = vld [vmem:[%s13263 + $0x348] sm:$0xff]
    %v13370 = vld [vmem:[%s13263 + $0x350] sm:$0xff]
    %v13371 = vld [vmem:[%s13263 + $0x358] sm:$0xff]
    %v13480 = vunpack.c.l.b16 %v13264
    %v13481 = vunpack.c.h.b16 %v13264
    %v13482 = vunpack.c.l.b16 %v13265
    %v13483 = vunpack.c.h.b16 %v13265
    %v13484 = vunpack.c.l.b16 %v13266
    %v13485 = vunpack.c.h.b16 %v13266
    %v13486 = vunpack.c.l.b16 %v13267
    %v13487 = vunpack.c.h.b16 %v13267
    %v13488 = vunpack.c.l.b16 %v13268
    %v13489 = vunpack.c.h.b16 %v13268
    %v13490 = vunpack.c.l.b16 %v13269
    %v13491 = vunpack.c.h.b16 %v13269
    %v13492 = vunpack.c.l.b16 %v13270
    %v13493 = vunpack.c.h.b16 %v13270
    %v13494 = vunpack.c.l.b16 %v13271
    %v13495 = vunpack.c.h.b16 %v13271
    %v13496 = vunpack.c.l.b16 %v13272
    %v13497 = vunpack.c.h.b16 %v13272
    %v13498 = vunpack.c.l.b16 %v13273
    %v13499 = vunpack.c.h.b16 %v13273
    %v13500 = vunpack.c.l.b16 %v13274
    %v13501 = vunpack.c.h.b16 %v13274
    %v13502 = vunpack.c.l.b16 %v13275
    %v13503 = vunpack.c.h.b16 %v13275
    %v13504 = vunpack.c.l.b16 %v13276
    %v13505 = vunpack.c.h.b16 %v13276
    %v13506 = vunpack.c.l.b16 %v13277
    %v13507 = vunpack.c.h.b16 %v13277
    %v13508 = vunpack.c.l.b16 %v13278
    %v13509 = vunpack.c.h.b16 %v13278
    %v13510 = vunpack.c.l.b16 %v13279
    %v13511 = vunpack.c.h.b16 %v13279
    %v13512 = vunpack.c.l.b16 %v13280
    %v13513 = vunpack.c.h.b16 %v13280
    %v13514 = vunpack.c.l.b16 %v13281
    %v13515 = vunpack.c.h.b16 %v13281
    %v13516 = vunpack.c.l.b16 %v13282
    %v13517 = vunpack.c.h.b16 %v13282
    %v13518 = vunpack.c.l.b16 %v13283
    %v13519 = vunpack.c.h.b16 %v13283
    %v13520 = vunpack.c.l.b16 %v13284
    %v13521 = vunpack.c.h.b16 %v13284
    %v13522 = vunpack.c.l.b16 %v13285
    %v13523 = vunpack.c.h.b16 %v13285
    %v13524 = vunpack.c.l.b16 %v13286
    %v13525 = vunpack.c.h.b16 %v13286
    %v13526 = vunpack.c.l.b16 %v13287
    %v13527 = vunpack.c.h.b16 %v13287
    %v13528 = vunpack.c.l.b16 %v13288
    %v13529 = vunpack.c.h.b16 %v13288
    %v13530 = vunpack.c.l.b16 %v13289
    %v13531 = vunpack.c.h.b16 %v13289
    %v13532 = vunpack.c.l.b16 %v13290
    %v13533 = vunpack.c.h.b16 %v13290
    %v13534 = vunpack.c.l.b16 %v13291
    %v13535 = vunpack.c.h.b16 %v13291
    %v13536 = vunpack.c.l.b16 %v13292
    %v13537 = vunpack.c.h.b16 %v13292
    %v13538 = vunpack.c.l.b16 %v13293
    %v13539 = vunpack.c.h.b16 %v13293
    %v13540 = vunpack.c.l.b16 %v13294
    %v13541 = vunpack.c.h.b16 %v13294
    %v13542 = vunpack.c.l.b16 %v13295
    %v13543 = vunpack.c.h.b16 %v13295
    %v13544 = vunpack.c.l.b16 %v13296
    %v13545 = vunpack.c.h.b16 %v13296
    %v13546 = vunpack.c.l.b16 %v13297
    %v13547 = vunpack.c.h.b16 %v13297
    %v13548 = vunpack.c.l.b16 %v13298
    %v13549 = vunpack.c.h.b16 %v13298
    %v13550 = vunpack.c.l.b16 %v13299
    %v13551 = vunpack.c.h.b16 %v13299
    %v13552 = vunpack.c.l.b16 %v13300
    %v13553 = vunpack.c.h.b16 %v13300
    %v13554 = vunpack.c.l.b16 %v13301
    %v13555 = vunpack.c.h.b16 %v13301
    %v13556 = vunpack.c.l.b16 %v13302
    %v13557 = vunpack.c.h.b16 %v13302
    %v13558 = vunpack.c.l.b16 %v13303
    %v13559 = vunpack.c.h.b16 %v13303
    %v13560 = vunpack.c.l.b16 %v13304
    %v13561 = vunpack.c.h.b16 %v13304
    %v13562 = vunpack.c.l.b16 %v13305
    %v13563 = vunpack.c.h.b16 %v13305
    %v13564 = vunpack.c.l.b16 %v13306
    %v13565 = vunpack.c.h.b16 %v13306
    %v13566 = vunpack.c.l.b16 %v13307
    %v13567 = vunpack.c.h.b16 %v13307
    %v13568 = vunpack.c.l.b16 %v13308
    %v13569 = vunpack.c.h.b16 %v13308
    %v13570 = vunpack.c.l.b16 %v13309
    %v13571 = vunpack.c.h.b16 %v13309
    %v13572 = vunpack.c.l.b16 %v13310
    %v13573 = vunpack.c.h.b16 %v13310
    %v13574 = vunpack.c.l.b16 %v13311
    %v13575 = vunpack.c.h.b16 %v13311
    %v13576 = vunpack.c.l.b16 %v13312
    %v13577 = vunpack.c.h.b16 %v13312
    %v13578 = vunpack.c.l.b16 %v13313
    %v13579 = vunpack.c.h.b16 %v13313
    %v13580 = vunpack.c.l.b16 %v13314
    %v13581 = vunpack.c.h.b16 %v13314
    %v13582 = vunpack.c.l.b16 %v13315
    %v13583 = vunpack.c.h.b16 %v13315
    %v13584 = vunpack.c.l.b16 %v13316
    %v13585 = vunpack.c.h.b16 %v13316
    %v13586 = vunpack.c.l.b16 %v13317
    %v13587 = vunpack.c.h.b16 %v13317
    %v13588 = vunpack.c.l.b16 %v13318
    %v13589 = vunpack.c.h.b16 %v13318
    %v13590 = vunpack.c.l.b16 %v13319
    %v13591 = vunpack.c.h.b16 %v13319
    %v13592 = vunpack.c.l.b16 %v13320
    %v13593 = vunpack.c.h.b16 %v13320
    %v13594 = vunpack.c.l.b16 %v13321
    %v13595 = vunpack.c.h.b16 %v13321
    %v13596 = vunpack.c.l.b16 %v13322
    %v13597 = vunpack.c.h.b16 %v13322
    %v13598 = vunpack.c.l.b16 %v13323
    %v13599 = vunpack.c.h.b16 %v13323
    %v13600 = vunpack.c.l.b16 %v13324
    %v13601 = vunpack.c.h.b16 %v13324
    %v13602 = vunpack.c.l.b16 %v13325
    %v13603 = vunpack.c.h.b16 %v13325
    %v13604 = vunpack.c.l.b16 %v13326
    %v13605 = vunpack.c.h.b16 %v13326
    %v13606 = vunpack.c.l.b16 %v13327
    %v13607 = vunpack.c.h.b16 %v13327
    %v13608 = vunpack.c.l.b16 %v13328
    %v13609 = vunpack.c.h.b16 %v13328
    %v13610 = vunpack.c.l.b16 %v13329
    %v13611 = vunpack.c.h.b16 %v13329
    %v13612 = vunpack.c.l.b16 %v13330
    %v13613 = vunpack.c.h.b16 %v13330
    %v13614 = vunpack.c.l.b16 %v13331
    %v13615 = vunpack.c.h.b16 %v13331
    %v13616 = vunpack.c.l.b16 %v13332
    %v13617 = vunpack.c.h.b16 %v13332
    %v13618 = vunpack.c.l.b16 %v13333
    %v13619 = vunpack.c.h.b16 %v13333
    %v13620 = vunpack.c.l.b16 %v13334
    %v13621 = vunpack.c.h.b16 %v13334
    %v13622 = vunpack.c.l.b16 %v13335
    %v13623 = vunpack.c.h.b16 %v13335
    %v13624 = vunpack.c.l.b16 %v13336
    %v13625 = vunpack.c.h.b16 %v13336
    %v13626 = vunpack.c.l.b16 %v13337
    %v13627 = vunpack.c.h.b16 %v13337
    %v13628 = vunpack.c.l.b16 %v13338
    %v13629 = vunpack.c.h.b16 %v13338
    %v13630 = vunpack.c.l.b16 %v13339
    %v13631 = vunpack.c.h.b16 %v13339
    %v13632 = vunpack.c.l.b16 %v13340
    %v13633 = vunpack.c.h.b16 %v13340
    %v13634 = vunpack.c.l.b16 %v13341
    %v13635 = vunpack.c.h.b16 %v13341
    %v13636 = vunpack.c.l.b16 %v13342
    %v13637 = vunpack.c.h.b16 %v13342
    %v13638 = vunpack.c.l.b16 %v13343
    %v13639 = vunpack.c.h.b16 %v13343
    %v13640 = vunpack.c.l.b16 %v13344
    %v13641 = vunpack.c.h.b16 %v13344
    %v13642 = vunpack.c.l.b16 %v13345
    %v13643 = vunpack.c.h.b16 %v13345
    %v13644 = vunpack.c.l.b16 %v13346
    %v13645 = vunpack.c.h.b16 %v13346
    %v13646 = vunpack.c.l.b16 %v13347
    %v13647 = vunpack.c.h.b16 %v13347
    %v13648 = vunpack.c.l.b16 %v13348
    %v13649 = vunpack.c.h.b16 %v13348
    %v13650 = vunpack.c.l.b16 %v13349
    %v13651 = vunpack.c.h.b16 %v13349
    %v13652 = vunpack.c.l.b16 %v13350
    %v13653 = vunpack.c.h.b16 %v13350
    %v13654 = vunpack.c.l.b16 %v13351
    %v13655 = vunpack.c.h.b16 %v13351
    %v13656 = vunpack.c.l.b16 %v13352
    %v13657 = vunpack.c.h.b16 %v13352
    %v13658 = vunpack.c.l.b16 %v13353
    %v13659 = vunpack.c.h.b16 %v13353
    %v13660 = vunpack.c.l.b16 %v13354
    %v13661 = vunpack.c.h.b16 %v13354
    %v13662 = vunpack.c.l.b16 %v13355
    %v13663 = vunpack.c.h.b16 %v13355
    %v13664 = vunpack.c.l.b16 %v13356
    %v13665 = vunpack.c.h.b16 %v13356
    %v13666 = vunpack.c.l.b16 %v13357
    %v13667 = vunpack.c.h.b16 %v13357
    %v13668 = vunpack.c.l.b16 %v13358
    %v13669 = vunpack.c.h.b16 %v13358
    %v13670 = vunpack.c.l.b16 %v13359
    %v13671 = vunpack.c.h.b16 %v13359
    %v13672 = vunpack.c.l.b16 %v13360
    %v13673 = vunpack.c.h.b16 %v13360
    %v13674 = vunpack.c.l.b16 %v13361
    %v13675 = vunpack.c.h.b16 %v13361
    %v13676 = vunpack.c.l.b16 %v13362
    %v13677 = vunpack.c.h.b16 %v13362
    %v13678 = vunpack.c.l.b16 %v13363
    %v13679 = vunpack.c.h.b16 %v13363
    %v13680 = vunpack.c.l.b16 %v13364
    %v13681 = vunpack.c.h.b16 %v13364
    %v13682 = vunpack.c.l.b16 %v13365
    %v13683 = vunpack.c.h.b16 %v13365
    %v13684 = vunpack.c.l.b16 %v13366
    %v13685 = vunpack.c.h.b16 %v13366
    %v13686 = vunpack.c.l.b16 %v13367
    %v13687 = vunpack.c.h.b16 %v13367
    %v13688 = vunpack.c.l.b16 %v13368
    %v13689 = vunpack.c.h.b16 %v13368
    %v13690 = vunpack.c.l.b16 %v13369
    %v13691 = vunpack.c.h.b16 %v13369
    %v13692 = vunpack.c.l.b16 %v13370
    %v13693 = vunpack.c.h.b16 %v13370
    %v13694 = vunpack.c.l.b16 %v13371
    %v13695 = vunpack.c.h.b16 %v13371
    %v13696 = vpack.c.b16 %v13482, %v13480
    %v13697 = vpack.c.b16 %v13483, %v13481
    %v13698 = vpack.c.b16 %v13486, %v13484
    %v13699 = vpack.c.b16 %v13487, %v13485
    %v13700 = vpack.c.b16 %v13490, %v13488
    %v13701 = vpack.c.b16 %v13491, %v13489
    %v13702 = vpack.c.b16 %v13494, %v13492
    %v13703 = vpack.c.b16 %v13495, %v13493
    %v13704 = vpack.c.b16 %v13498, %v13496
    %v13705 = vpack.c.b16 %v13499, %v13497
    %v13706 = vpack.c.b16 %v13502, %v13500
    %v13707 = vpack.c.b16 %v13503, %v13501
    %v13708 = vpack.c.b16 %v13506, %v13504
    %v13709 = vpack.c.b16 %v13507, %v13505
    %v13710 = vpack.c.b16 %v13510, %v13508
    %v13711 = vpack.c.b16 %v13511, %v13509
    %v13712 = vpack.c.b16 %v13514, %v13512
    %v13713 = vpack.c.b16 %v13515, %v13513
    %v13714 = vpack.c.b16 %v13518, %v13516
    %v13715 = vpack.c.b16 %v13519, %v13517
    %v13716 = vpack.c.b16 %v13522, %v13520
    %v13717 = vpack.c.b16 %v13523, %v13521
    %v13718 = vpack.c.b16 %v13526, %v13524
    %v13719 = vpack.c.b16 %v13527, %v13525
    %v13720 = vpack.c.b16 %v13530, %v13528
    %v13721 = vpack.c.b16 %v13531, %v13529
    %v13722 = vpack.c.b16 %v13534, %v13532
    %v13723 = vpack.c.b16 %v13535, %v13533
    %v13724 = vpack.c.b16 %v13538, %v13536
    %v13725 = vpack.c.b16 %v13539, %v13537
    %v13726 = vpack.c.b16 %v13542, %v13540
    %v13727 = vpack.c.b16 %v13543, %v13541
    %v13728 = vpack.c.b16 %v13546, %v13544
    %v13729 = vpack.c.b16 %v13547, %v13545
    %v13730 = vpack.c.b16 %v13550, %v13548
    %v13731 = vpack.c.b16 %v13551, %v13549
    %v13732 = vpack.c.b16 %v13554, %v13552
    %v13733 = vpack.c.b16 %v13555, %v13553
    %v13734 = vpack.c.b16 %v13558, %v13556
    %v13735 = vpack.c.b16 %v13559, %v13557
    %v13736 = vpack.c.b16 %v13562, %v13560
    %v13737 = vpack.c.b16 %v13563, %v13561
    %v13738 = vpack.c.b16 %v13566, %v13564
    %v13739 = vpack.c.b16 %v13567, %v13565
    %v13740 = vpack.c.b16 %v13570, %v13568
    %v13741 = vpack.c.b16 %v13571, %v13569
    %v13742 = vpack.c.b16 %v13574, %v13572
    %v13743 = vpack.c.b16 %v13575, %v13573
    %v13744 = vpack.c.b16 %v13578, %v13576
    %v13745 = vpack.c.b16 %v13579, %v13577
    %v13746 = vpack.c.b16 %v13582, %v13580
    %v13747 = vpack.c.b16 %v13583, %v13581
    %v13748 = vpack.c.b16 %v13586, %v13584
    %v13749 = vpack.c.b16 %v13587, %v13585
    %v13750 = vpack.c.b16 %v13590, %v13588
    %v13751 = vpack.c.b16 %v13591, %v13589
    %v13752 = vpack.c.b16 %v13594, %v13592
    %v13753 = vpack.c.b16 %v13595, %v13593
    %v13754 = vpack.c.b16 %v13598, %v13596
    %v13755 = vpack.c.b16 %v13599, %v13597
    %v13756 = vpack.c.b16 %v13602, %v13600
    %v13757 = vpack.c.b16 %v13603, %v13601
    %v13758 = vpack.c.b16 %v13606, %v13604
    %v13759 = vpack.c.b16 %v13607, %v13605
    %v13760 = vpack.c.b16 %v13610, %v13608
    %v13761 = vpack.c.b16 %v13611, %v13609
    %v13762 = vpack.c.b16 %v13614, %v13612
    %v13763 = vpack.c.b16 %v13615, %v13613
    %v13764 = vpack.c.b16 %v13618, %v13616
    %v13765 = vpack.c.b16 %v13619, %v13617
    %v13766 = vpack.c.b16 %v13622, %v13620
    %v13767 = vpack.c.b16 %v13623, %v13621
    %v13768 = vpack.c.b16 %v13626, %v13624
    %v13769 = vpack.c.b16 %v13627, %v13625
    %v13770 = vpack.c.b16 %v13630, %v13628
    %v13771 = vpack.c.b16 %v13631, %v13629
    %v13772 = vpack.c.b16 %v13634, %v13632
    %v13773 = vpack.c.b16 %v13635, %v13633
    %v13774 = vpack.c.b16 %v13638, %v13636
    %v13775 = vpack.c.b16 %v13639, %v13637
    %v13776 = vpack.c.b16 %v13642, %v13640
    %v13777 = vpack.c.b16 %v13643, %v13641
    %v13778 = vpack.c.b16 %v13646, %v13644
    %v13779 = vpack.c.b16 %v13647, %v13645
    %v13780 = vpack.c.b16 %v13650, %v13648
    %v13781 = vpack.c.b16 %v13651, %v13649
    %v13782 = vpack.c.b16 %v13654, %v13652
    %v13783 = vpack.c.b16 %v13655, %v13653
    %v13784 = vpack.c.b16 %v13658, %v13656
    %v13785 = vpack.c.b16 %v13659, %v13657
    %v13786 = vpack.c.b16 %v13662, %v13660
    %v13787 = vpack.c.b16 %v13663, %v13661
    %v13788 = vpack.c.b16 %v13666, %v13664
    %v13789 = vpack.c.b16 %v13667, %v13665
    %v13790 = vpack.c.b16 %v13670, %v13668
    %v13791 = vpack.c.b16 %v13671, %v13669
    %v13792 = vpack.c.b16 %v13674, %v13672
    %v13793 = vpack.c.b16 %v13675, %v13673
    %v13794 = vpack.c.b16 %v13678, %v13676
    %v13795 = vpack.c.b16 %v13679, %v13677
    %v13796 = vpack.c.b16 %v13682, %v13680
    %v13797 = vpack.c.b16 %v13683, %v13681
    %v13798 = vpack.c.b16 %v13686, %v13684
    %v13799 = vpack.c.b16 %v13687, %v13685
    %v13800 = vpack.c.b16 %v13690, %v13688
    %v13801 = vpack.c.b16 %v13691, %v13689
    %v13802 = vpack.c.b16 %v13694, %v13692
    %v13803 = vpack.c.b16 %v13695, %v13693
    %13912 = vmatpush.bf16.msra.mxu0 %v13710
    %13913 = vmatpush.bf16.msra.mxu0 %v13708
    %13914 = vmatpush.bf16.msra.mxu0 %v13706
    %13915 = vmatpush.bf16.msra.mxu0 %v13704
    %13916 = vmatpush.bf16.msra.mxu0 %v13702
    %13917 = vmatpush.bf16.msra.mxu0 %v13700
    %13918 = vmatpush.bf16.msra.mxu0 %v13698
    %13919 = vmatpush.bf16.msra.mxu0 %v13696
    %13920 = vmatmul.bf16.gmra.mxu0 %v11559
    %v13921 = vpop.f32.mrf.mxu0
    %v13922 = vadd.f32 0.0, %v13921
    %v13923 = vpop.f32.mrf.mxu0
    %v13924 = vadd.f32 0.0, %v13923
    %13925 = vdwg.mxu0
    %13926 = vmatpush.bf16.msra.mxu0 %v13726
    %13927 = vmatpush.bf16.msra.mxu0 %v13724
    %13928 = vmatpush.bf16.msra.mxu0 %v13722
    %13929 = vmatpush.bf16.msra.mxu0 %v13720
    %13930 = vmatpush.bf16.msra.mxu0 %v13718
    %13931 = vmatpush.bf16.msra.mxu0 %v13716
    %13932 = vmatpush.bf16.msra.mxu0 %v13714
    %13933 = vmatpush.bf16.msra.mxu0 %v13712
    %13934 = vmatmul.bf16.gmra.mxu0 %v11560
    %v13935 = vpop.f32.mrf.mxu0
    %v13936 = vadd.f32 %v13922, %v13935
    %v13937 = vpop.f32.mrf.mxu0
    %v13938 = vadd.f32 %v13924, %v13937
    %13939 = vdwg.mxu0
    %13940 = vmatpush.bf16.msra.mxu0 %v13742
    %13941 = vmatpush.bf16.msra.mxu0 %v13740
    %13942 = vmatpush.bf16.msra.mxu0 %v13738
    %13943 = vmatpush.bf16.msra.mxu0 %v13736
    %13944 = vmatpush.bf16.msra.mxu0 %v13734
    %13945 = vmatpush.bf16.msra.mxu0 %v13732
    %13946 = vmatpush.bf16.msra.mxu0 %v13730
    %13947 = vmatpush.bf16.msra.mxu0 %v13728
    %13948 = vmatmul.bf16.gmra.mxu0 %v11561
    %v13949 = vpop.f32.mrf.mxu0
    %v13950 = vadd.f32 %v13936, %v13949
    %v13951 = vpop.f32.mrf.mxu0
    %v13952 = vadd.f32 %v13938, %v13951
    %13953 = vdwg.mxu0
    %13954 = vmatpush.bf16.msra.mxu0 %v13758
    %13955 = vmatpush.bf16.msra.mxu0 %v13756
    %13956 = vmatpush.bf16.msra.mxu0 %v13754
    %13957 = vmatpush.bf16.msra.mxu0 %v13752
    %13958 = vmatpush.bf16.msra.mxu0 %v13750
    %13959 = vmatpush.bf16.msra.mxu0 %v13748
    %13960 = vmatpush.bf16.msra.mxu0 %v13746
    %13961 = vmatpush.bf16.msra.mxu0 %v13744
    %13962 = vmatmul.bf16.gmra.mxu0 %v11562
    %v13963 = vpop.f32.mrf.mxu0
    %v13964 = vadd.f32 %v13950, %v13963
    %v13965 = vpop.f32.mrf.mxu0
    %v13966 = vadd.f32 %v13952, %v13965
    %13967 = vdwg.mxu0
    %13968 = vmatpush.bf16.msra.mxu0 %v13774
    %13969 = vmatpush.bf16.msra.mxu0 %v13772
    %13970 = vmatpush.bf16.msra.mxu0 %v13770
    %13971 = vmatpush.bf16.msra.mxu0 %v13768
    %13972 = vmatpush.bf16.msra.mxu0 %v13766
    %13973 = vmatpush.bf16.msra.mxu0 %v13764
    %13974 = vmatpush.bf16.msra.mxu0 %v13762
    %13975 = vmatpush.bf16.msra.mxu0 %v13760
    %13976 = vmatmul.bf16.gmra.mxu0 %v11563
    %v13977 = vpop.f32.mrf.mxu0
    %v13978 = vadd.f32 %v13964, %v13977
    %v13979 = vpop.f32.mrf.mxu0
    %v13980 = vadd.f32 %v13966, %v13979
    %13981 = vdwg.mxu0
    %13982 = vmatpush.bf16.msra.mxu0 %v13790
    %13983 = vmatpush.bf16.msra.mxu0 %v13788
    %13984 = vmatpush.bf16.msra.mxu0 %v13786
    %13985 = vmatpush.bf16.msra.mxu0 %v13784
    %13986 = vmatpush.bf16.msra.mxu0 %v13782
    %13987 = vmatpush.bf16.msra.mxu0 %v13780
    %13988 = vmatpush.bf16.msra.mxu0 %v13778
    %13989 = vmatpush.bf16.msra.mxu0 %v13776
    %13990 = vmatmul.bf16.gmra.mxu0 %v11564
    %v13991 = vpop.f32.mrf.mxu0
    %v13992 = vadd.f32 %v13978, %v13991
    %v13993 = vpop.f32.mrf.mxu0
    %v13994 = vadd.f32 %v13980, %v13993
    %13995 = vdwg.mxu0
    %13996 = vmatpush.bf16.msra.mxu0 0
    %13997 = vmatpush.bf16.msra.mxu0 0
    %13998 = vmatpush.bf16.msra.mxu0 %v13802
    %13999 = vmatpush.bf16.msra.mxu0 %v13800
    %14000 = vmatpush.bf16.msra.mxu0 %v13798
    %14001 = vmatpush.bf16.msra.mxu0 %v13796
    %14002 = vmatpush.bf16.msra.mxu0 %v13794
    %14003 = vmatpush.bf16.msra.mxu0 %v13792
    %14004 = vmatmul.bf16.gmra.mxu0 %v12216
    %v14005 = vpop.f32.mrf.mxu0
    %v14006 = vadd.f32 %v13992, %v14005
    %v14007 = vpop.f32.mrf.mxu0
    %v14008 = vadd.f32 %v13994, %v14007
    %14009 = vdwg.mxu0
    %14010 = vmatpush.bf16.msra.mxu0 %v13711
    %14011 = vmatpush.bf16.msra.mxu0 %v13709
    %14012 = vmatpush.bf16.msra.mxu0 %v13707
    %14013 = vmatpush.bf16.msra.mxu0 %v13705
    %14014 = vmatpush.bf16.msra.mxu0 %v13703
    %14015 = vmatpush.bf16.msra.mxu0 %v13701
    %14016 = vmatpush.bf16.msra.mxu0 %v13699
    %14017 = vmatpush.bf16.msra.mxu0 %v13697
    %14018 = vmatmul.bf16.gmra.mxu0 %v11559
    %v14019 = vpop.f32.mrf.mxu0
    %v14020 = vadd.f32 0.0, %v14019
    %v14021 = vpop.f32.mrf.mxu0
    %v14022 = vadd.f32 0.0, %v14021
    %14023 = vdwg.mxu0
    %14024 = vmatpush.bf16.msra.mxu0 %v13727
    %14025 = vmatpush.bf16.msra.mxu0 %v13725
    %14026 = vmatpush.bf16.msra.mxu0 %v13723
    %14027 = vmatpush.bf16.msra.mxu0 %v13721
    %14028 = vmatpush.bf16.msra.mxu0 %v13719
    %14029 = vmatpush.bf16.msra.mxu0 %v13717
    %14030 = vmatpush.bf16.msra.mxu0 %v13715
    %14031 = vmatpush.bf16.msra.mxu0 %v13713
    %14032 = vmatmul.bf16.gmra.mxu0 %v11560
    %v14033 = vpop.f32.mrf.mxu0
    %v14034 = vadd.f32 %v14020, %v14033
    %v14035 = vpop.f32.mrf.mxu0
    %v14036 = vadd.f32 %v14022, %v14035
    %14037 = vdwg.mxu0
    %14038 = vmatpush.bf16.msra.mxu0 %v13743
    %14039 = vmatpush.bf16.msra.mxu0 %v13741
    %14040 = vmatpush.bf16.msra.mxu0 %v13739
    %14041 = vmatpush.bf16.msra.mxu0 %v13737
    %14042 = vmatpush.bf16.msra.mxu0 %v13735
    %14043 = vmatpush.bf16.msra.mxu0 %v13733
    %14044 = vmatpush.bf16.msra.mxu0 %v13731
    %14045 = vmatpush.bf16.msra.mxu0 %v13729
    %14046 = vmatmul.bf16.gmra.mxu0 %v11561
    %v14047 = vpop.f32.mrf.mxu0
    %v14048 = vadd.f32 %v14034, %v14047
    %v14049 = vpop.f32.mrf.mxu0
    %v14050 = vadd.f32 %v14036, %v14049
    %14051 = vdwg.mxu0
    %14052 = vmatpush.bf16.msra.mxu0 %v13759
    %14053 = vmatpush.bf16.msra.mxu0 %v13757
    %14054 = vmatpush.bf16.msra.mxu0 %v13755
    %14055 = vmatpush.bf16.msra.mxu0 %v13753
    %14056 = vmatpush.bf16.msra.mxu0 %v13751
    %14057 = vmatpush.bf16.msra.mxu0 %v13749
    %14058 = vmatpush.bf16.msra.mxu0 %v13747
    %14059 = vmatpush.bf16.msra.mxu0 %v13745
    %14060 = vmatmul.bf16.gmra.mxu0 %v11562
    %v14061 = vpop.f32.mrf.mxu0
    %v14062 = vadd.f32 %v14048, %v14061
    %v14063 = vpop.f32.mrf.mxu0
    %v14064 = vadd.f32 %v14050, %v14063
    %14065 = vdwg.mxu0
    %14066 = vmatpush.bf16.msra.mxu0 %v13775
    %14067 = vmatpush.bf16.msra.mxu0 %v13773
    %14068 = vmatpush.bf16.msra.mxu0 %v13771
    %14069 = vmatpush.bf16.msra.mxu0 %v13769
    %14070 = vmatpush.bf16.msra.mxu0 %v13767
    %14071 = vmatpush.bf16.msra.mxu0 %v13765
    %14072 = vmatpush.bf16.msra.mxu0 %v13763
    %14073 = vmatpush.bf16.msra.mxu0 %v13761
    %14074 = vmatmul.bf16.gmra.mxu0 %v11563
    %v14075 = vpop.f32.mrf.mxu0
    %v14076 = vadd.f32 %v14062, %v14075
    %v14077 = vpop.f32.mrf.mxu0
    %v14078 = vadd.f32 %v14064, %v14077
    %14079 = vdwg.mxu0
    %14080 = vmatpush.bf16.msra.mxu0 %v13791
    %14081 = vmatpush.bf16.msra.mxu0 %v13789
    %14082 = vmatpush.bf16.msra.mxu0 %v13787
    %14083 = vmatpush.bf16.msra.mxu0 %v13785
    %14084 = vmatpush.bf16.msra.mxu0 %v13783
    %14085 = vmatpush.bf16.msra.mxu0 %v13781
    %14086 = vmatpush.bf16.msra.mxu0 %v13779
    %14087 = vmatpush.bf16.msra.mxu0 %v13777
    %14088 = vmatmul.bf16.gmra.mxu0 %v11564
    %v14089 = vpop.f32.mrf.mxu0
    %v14090 = vadd.f32 %v14076, %v14089
    %v14091 = vpop.f32.mrf.mxu0
    %v14092 = vadd.f32 %v14078, %v14091
    %14093 = vdwg.mxu0
    %14094 = vmatpush.bf16.msra.mxu0 0
    %14095 = vmatpush.bf16.msra.mxu0 0
    %14096 = vmatpush.bf16.msra.mxu0 %v13803
    %14097 = vmatpush.bf16.msra.mxu0 %v13801
    %14098 = vmatpush.bf16.msra.mxu0 %v13799
    %14099 = vmatpush.bf16.msra.mxu0 %v13797
    %14100 = vmatpush.bf16.msra.mxu0 %v13795
    %14101 = vmatpush.bf16.msra.mxu0 %v13793
    %14102 = vmatmul.bf16.gmra.mxu0 %v12216
    %v14103 = vpop.f32.mrf.mxu0
    %v14104 = vadd.f32 %v14090, %v14103
    %v14105 = vpop.f32.mrf.mxu0
    %v14106 = vadd.f32 %v14092, %v14105
    %14107 = vdwg.mxu0
    %v14108 = vmax.f32 %v13259, %v14006
    %v14109 = vmax.f32 %v13260, %v14104
    %v14110 = vmax.f32 %v13261, %v14008
    %v14111 = vmax.f32 %v13262, %v14106
    %s14112 = scalar_lea.vmem %s3, 2592
    %v14113 = vld [vmem:[%s14112] sm:$0xff]
    %v14114 = vld [vmem:[%s14112 + $0x8] sm:$0xff]
    %v14115 = vld [vmem:[%s14112 + $0x10] sm:$0xff]
    %v14116 = vld [vmem:[%s14112 + $0x18] sm:$0xff]
    %v14117 = vld [vmem:[%s14112 + $0x20] sm:$0xff]
    %v14118 = vld [vmem:[%s14112 + $0x28] sm:$0xff]
    %v14119 = vld [vmem:[%s14112 + $0x30] sm:$0xff]
    %v14120 = vld [vmem:[%s14112 + $0x38] sm:$0xff]
    %v14121 = vld [vmem:[%s14112 + $0x40] sm:$0xff]
    %v14122 = vld [vmem:[%s14112 + $0x48] sm:$0xff]
    %v14123 = vld [vmem:[%s14112 + $0x50] sm:$0xff]
    %v14124 = vld [vmem:[%s14112 + $0x58] sm:$0xff]
    %v14125 = vld [vmem:[%s14112 + $0x60] sm:$0xff]
    %v14126 = vld [vmem:[%s14112 + $0x68] sm:$0xff]
    %v14127 = vld [vmem:[%s14112 + $0x70] sm:$0xff]
    %v14128 = vld [vmem:[%s14112 + $0x78] sm:$0xff]
    %v14129 = vld [vmem:[%s14112 + $0x80] sm:$0xff]
    %v14130 = vld [vmem:[%s14112 + $0x88] sm:$0xff]
    %v14131 = vld [vmem:[%s14112 + $0x90] sm:$0xff]
    %v14132 = vld [vmem:[%s14112 + $0x98] sm:$0xff]
    %v14133 = vld [vmem:[%s14112 + $0xa0] sm:$0xff]
    %v14134 = vld [vmem:[%s14112 + $0xa8] sm:$0xff]
    %v14135 = vld [vmem:[%s14112 + $0xb0] sm:$0xff]
    %v14136 = vld [vmem:[%s14112 + $0xb8] sm:$0xff]
    %v14137 = vld [vmem:[%s14112 + $0xc0] sm:$0xff]
    %v14138 = vld [vmem:[%s14112 + $0xc8] sm:$0xff]
    %v14139 = vld [vmem:[%s14112 + $0xd0] sm:$0xff]
    %v14140 = vld [vmem:[%s14112 + $0xd8] sm:$0xff]
    %v14141 = vld [vmem:[%s14112 + $0xe0] sm:$0xff]
    %v14142 = vld [vmem:[%s14112 + $0xe8] sm:$0xff]
    %v14143 = vld [vmem:[%s14112 + $0xf0] sm:$0xff]
    %v14144 = vld [vmem:[%s14112 + $0xf8] sm:$0xff]
    %v14145 = vld [vmem:[%s14112 + $0x100] sm:$0xff]
    %v14146 = vld [vmem:[%s14112 + $0x108] sm:$0xff]
    %v14147 = vld [vmem:[%s14112 + $0x110] sm:$0xff]
    %v14148 = vld [vmem:[%s14112 + $0x118] sm:$0xff]
    %v14149 = vld [vmem:[%s14112 + $0x120] sm:$0xff]
    %v14150 = vld [vmem:[%s14112 + $0x128] sm:$0xff]
    %v14151 = vld [vmem:[%s14112 + $0x130] sm:$0xff]
    %v14152 = vld [vmem:[%s14112 + $0x138] sm:$0xff]
    %v14153 = vld [vmem:[%s14112 + $0x140] sm:$0xff]
    %v14154 = vld [vmem:[%s14112 + $0x148] sm:$0xff]
    %v14155 = vld [vmem:[%s14112 + $0x150] sm:$0xff]
    %v14156 = vld [vmem:[%s14112 + $0x158] sm:$0xff]
    %v14157 = vld [vmem:[%s14112 + $0x160] sm:$0xff]
    %v14158 = vld [vmem:[%s14112 + $0x168] sm:$0xff]
    %v14159 = vld [vmem:[%s14112 + $0x170] sm:$0xff]
    %v14160 = vld [vmem:[%s14112 + $0x178] sm:$0xff]
    %v14161 = vld [vmem:[%s14112 + $0x180] sm:$0xff]
    %v14162 = vld [vmem:[%s14112 + $0x188] sm:$0xff]
    %v14163 = vld [vmem:[%s14112 + $0x190] sm:$0xff]
    %v14164 = vld [vmem:[%s14112 + $0x198] sm:$0xff]
    %v14165 = vld [vmem:[%s14112 + $0x1a0] sm:$0xff]
    %v14166 = vld [vmem:[%s14112 + $0x1a8] sm:$0xff]
    %v14167 = vld [vmem:[%s14112 + $0x1b0] sm:$0xff]
    %v14168 = vld [vmem:[%s14112 + $0x1b8] sm:$0xff]
    %v14169 = vld [vmem:[%s14112 + $0x1c0] sm:$0xff]
    %v14170 = vld [vmem:[%s14112 + $0x1c8] sm:$0xff]
    %v14171 = vld [vmem:[%s14112 + $0x1d0] sm:$0xff]
    %v14172 = vld [vmem:[%s14112 + $0x1d8] sm:$0xff]
    %v14173 = vld [vmem:[%s14112 + $0x1e0] sm:$0xff]
    %v14174 = vld [vmem:[%s14112 + $0x1e8] sm:$0xff]
    %v14175 = vld [vmem:[%s14112 + $0x1f0] sm:$0xff]
    %v14176 = vld [vmem:[%s14112 + $0x1f8] sm:$0xff]
    %v14177 = vld [vmem:[%s14112 + $0x200] sm:$0xff]
    %v14178 = vld [vmem:[%s14112 + $0x208] sm:$0xff]
    %v14179 = vld [vmem:[%s14112 + $0x210] sm:$0xff]
    %v14180 = vld [vmem:[%s14112 + $0x218] sm:$0xff]
    %v14181 = vld [vmem:[%s14112 + $0x220] sm:$0xff]
    %v14182 = vld [vmem:[%s14112 + $0x228] sm:$0xff]
    %v14183 = vld [vmem:[%s14112 + $0x230] sm:$0xff]
    %v14184 = vld [vmem:[%s14112 + $0x238] sm:$0xff]
    %v14185 = vld [vmem:[%s14112 + $0x240] sm:$0xff]
    %v14186 = vld [vmem:[%s14112 + $0x248] sm:$0xff]
    %v14187 = vld [vmem:[%s14112 + $0x250] sm:$0xff]
    %v14188 = vld [vmem:[%s14112 + $0x258] sm:$0xff]
    %v14189 = vld [vmem:[%s14112 + $0x260] sm:$0xff]
    %v14190 = vld [vmem:[%s14112 + $0x268] sm:$0xff]
    %v14191 = vld [vmem:[%s14112 + $0x270] sm:$0xff]
    %v14192 = vld [vmem:[%s14112 + $0x278] sm:$0xff]
    %v14193 = vld [vmem:[%s14112 + $0x280] sm:$0xff]
    %v14194 = vld [vmem:[%s14112 + $0x288] sm:$0xff]
    %v14195 = vld [vmem:[%s14112 + $0x290] sm:$0xff]
    %v14196 = vld [vmem:[%s14112 + $0x298] sm:$0xff]
    %v14197 = vld [vmem:[%s14112 + $0x2a0] sm:$0xff]
    %v14198 = vld [vmem:[%s14112 + $0x2a8] sm:$0xff]
    %v14199 = vld [vmem:[%s14112 + $0x2b0] sm:$0xff]
    %v14200 = vld [vmem:[%s14112 + $0x2b8] sm:$0xff]
    %v14201 = vld [vmem:[%s14112 + $0x2c0] sm:$0xff]
    %v14202 = vld [vmem:[%s14112 + $0x2c8] sm:$0xff]
    %v14203 = vld [vmem:[%s14112 + $0x2d0] sm:$0xff]
    %v14204 = vld [vmem:[%s14112 + $0x2d8] sm:$0xff]
    %v14205 = vld [vmem:[%s14112 + $0x2e0] sm:$0xff]
    %v14206 = vld [vmem:[%s14112 + $0x2e8] sm:$0xff]
    %v14207 = vld [vmem:[%s14112 + $0x2f0] sm:$0xff]
    %v14208 = vld [vmem:[%s14112 + $0x2f8] sm:$0xff]
    %v14209 = vld [vmem:[%s14112 + $0x300] sm:$0xff]
    %v14210 = vld [vmem:[%s14112 + $0x308] sm:$0xff]
    %v14211 = vld [vmem:[%s14112 + $0x310] sm:$0xff]
    %v14212 = vld [vmem:[%s14112 + $0x318] sm:$0xff]
    %v14213 = vld [vmem:[%s14112 + $0x320] sm:$0xff]
    %v14214 = vld [vmem:[%s14112 + $0x328] sm:$0xff]
    %v14215 = vld [vmem:[%s14112 + $0x330] sm:$0xff]
    %v14216 = vld [vmem:[%s14112 + $0x338] sm:$0xff]
    %v14217 = vld [vmem:[%s14112 + $0x340] sm:$0xff]
    %v14218 = vld [vmem:[%s14112 + $0x348] sm:$0xff]
    %v14219 = vld [vmem:[%s14112 + $0x350] sm:$0xff]
    %v14220 = vld [vmem:[%s14112 + $0x358] sm:$0xff]
    %v14329 = vunpack.c.l.b16 %v14113
    %v14330 = vunpack.c.h.b16 %v14113
    %v14331 = vunpack.c.l.b16 %v14114
    %v14332 = vunpack.c.h.b16 %v14114
    %v14333 = vunpack.c.l.b16 %v14115
    %v14334 = vunpack.c.h.b16 %v14115
    %v14335 = vunpack.c.l.b16 %v14116
    %v14336 = vunpack.c.h.b16 %v14116
    %v14337 = vunpack.c.l.b16 %v14117
    %v14338 = vunpack.c.h.b16 %v14117
    %v14339 = vunpack.c.l.b16 %v14118
    %v14340 = vunpack.c.h.b16 %v14118
    %v14341 = vunpack.c.l.b16 %v14119
    %v14342 = vunpack.c.h.b16 %v14119
    %v14343 = vunpack.c.l.b16 %v14120
    %v14344 = vunpack.c.h.b16 %v14120
    %v14345 = vunpack.c.l.b16 %v14121
    %v14346 = vunpack.c.h.b16 %v14121
    %v14347 = vunpack.c.l.b16 %v14122
    %v14348 = vunpack.c.h.b16 %v14122
    %v14349 = vunpack.c.l.b16 %v14123
    %v14350 = vunpack.c.h.b16 %v14123
    %v14351 = vunpack.c.l.b16 %v14124
    %v14352 = vunpack.c.h.b16 %v14124
    %v14353 = vunpack.c.l.b16 %v14125
    %v14354 = vunpack.c.h.b16 %v14125
    %v14355 = vunpack.c.l.b16 %v14126
    %v14356 = vunpack.c.h.b16 %v14126
    %v14357 = vunpack.c.l.b16 %v14127
    %v14358 = vunpack.c.h.b16 %v14127
    %v14359 = vunpack.c.l.b16 %v14128
    %v14360 = vunpack.c.h.b16 %v14128
    %v14361 = vunpack.c.l.b16 %v14129
    %v14362 = vunpack.c.h.b16 %v14129
    %v14363 = vunpack.c.l.b16 %v14130
    %v14364 = vunpack.c.h.b16 %v14130
    %v14365 = vunpack.c.l.b16 %v14131
    %v14366 = vunpack.c.h.b16 %v14131
    %v14367 = vunpack.c.l.b16 %v14132
    %v14368 = vunpack.c.h.b16 %v14132
    %v14369 = vunpack.c.l.b16 %v14133
    %v14370 = vunpack.c.h.b16 %v14133
    %v14371 = vunpack.c.l.b16 %v14134
    %v14372 = vunpack.c.h.b16 %v14134
    %v14373 = vunpack.c.l.b16 %v14135
    %v14374 = vunpack.c.h.b16 %v14135
    %v14375 = vunpack.c.l.b16 %v14136
    %v14376 = vunpack.c.h.b16 %v14136
    %v14377 = vunpack.c.l.b16 %v14137
    %v14378 = vunpack.c.h.b16 %v14137
    %v14379 = vunpack.c.l.b16 %v14138
    %v14380 = vunpack.c.h.b16 %v14138
    %v14381 = vunpack.c.l.b16 %v14139
    %v14382 = vunpack.c.h.b16 %v14139
    %v14383 = vunpack.c.l.b16 %v14140
    %v14384 = vunpack.c.h.b16 %v14140
    %v14385 = vunpack.c.l.b16 %v14141
    %v14386 = vunpack.c.h.b16 %v14141
    %v14387 = vunpack.c.l.b16 %v14142
    %v14388 = vunpack.c.h.b16 %v14142
    %v14389 = vunpack.c.l.b16 %v14143
    %v14390 = vunpack.c.h.b16 %v14143
    %v14391 = vunpack.c.l.b16 %v14144
    %v14392 = vunpack.c.h.b16 %v14144
    %v14393 = vunpack.c.l.b16 %v14145
    %v14394 = vunpack.c.h.b16 %v14145
    %v14395 = vunpack.c.l.b16 %v14146
    %v14396 = vunpack.c.h.b16 %v14146
    %v14397 = vunpack.c.l.b16 %v14147
    %v14398 = vunpack.c.h.b16 %v14147
    %v14399 = vunpack.c.l.b16 %v14148
    %v14400 = vunpack.c.h.b16 %v14148
    %v14401 = vunpack.c.l.b16 %v14149
    %v14402 = vunpack.c.h.b16 %v14149
    %v14403 = vunpack.c.l.b16 %v14150
    %v14404 = vunpack.c.h.b16 %v14150
    %v14405 = vunpack.c.l.b16 %v14151
    %v14406 = vunpack.c.h.b16 %v14151
    %v14407 = vunpack.c.l.b16 %v14152
    %v14408 = vunpack.c.h.b16 %v14152
    %v14409 = vunpack.c.l.b16 %v14153
    %v14410 = vunpack.c.h.b16 %v14153
    %v14411 = vunpack.c.l.b16 %v14154
    %v14412 = vunpack.c.h.b16 %v14154
    %v14413 = vunpack.c.l.b16 %v14155
    %v14414 = vunpack.c.h.b16 %v14155
    %v14415 = vunpack.c.l.b16 %v14156
    %v14416 = vunpack.c.h.b16 %v14156
    %v14417 = vunpack.c.l.b16 %v14157
    %v14418 = vunpack.c.h.b16 %v14157
    %v14419 = vunpack.c.l.b16 %v14158
    %v14420 = vunpack.c.h.b16 %v14158
    %v14421 = vunpack.c.l.b16 %v14159
    %v14422 = vunpack.c.h.b16 %v14159
    %v14423 = vunpack.c.l.b16 %v14160
    %v14424 = vunpack.c.h.b16 %v14160
    %v14425 = vunpack.c.l.b16 %v14161
    %v14426 = vunpack.c.h.b16 %v14161
    %v14427 = vunpack.c.l.b16 %v14162
    %v14428 = vunpack.c.h.b16 %v14162
    %v14429 = vunpack.c.l.b16 %v14163
    %v14430 = vunpack.c.h.b16 %v14163
    %v14431 = vunpack.c.l.b16 %v14164
    %v14432 = vunpack.c.h.b16 %v14164
    %v14433 = vunpack.c.l.b16 %v14165
    %v14434 = vunpack.c.h.b16 %v14165
    %v14435 = vunpack.c.l.b16 %v14166
    %v14436 = vunpack.c.h.b16 %v14166
    %v14437 = vunpack.c.l.b16 %v14167
    %v14438 = vunpack.c.h.b16 %v14167
    %v14439 = vunpack.c.l.b16 %v14168
    %v14440 = vunpack.c.h.b16 %v14168
    %v14441 = vunpack.c.l.b16 %v14169
    %v14442 = vunpack.c.h.b16 %v14169
    %v14443 = vunpack.c.l.b16 %v14170
    %v14444 = vunpack.c.h.b16 %v14170
    %v14445 = vunpack.c.l.b16 %v14171
    %v14446 = vunpack.c.h.b16 %v14171
    %v14447 = vunpack.c.l.b16 %v14172
    %v14448 = vunpack.c.h.b16 %v14172
    %v14449 = vunpack.c.l.b16 %v14173
    %v14450 = vunpack.c.h.b16 %v14173
    %v14451 = vunpack.c.l.b16 %v14174
    %v14452 = vunpack.c.h.b16 %v14174
    %v14453 = vunpack.c.l.b16 %v14175
    %v14454 = vunpack.c.h.b16 %v14175
    %v14455 = vunpack.c.l.b16 %v14176
    %v14456 = vunpack.c.h.b16 %v14176
    %v14457 = vunpack.c.l.b16 %v14177
    %v14458 = vunpack.c.h.b16 %v14177
    %v14459 = vunpack.c.l.b16 %v14178
    %v14460 = vunpack.c.h.b16 %v14178
    %v14461 = vunpack.c.l.b16 %v14179
    %v14462 = vunpack.c.h.b16 %v14179
    %v14463 = vunpack.c.l.b16 %v14180
    %v14464 = vunpack.c.h.b16 %v14180
    %v14465 = vunpack.c.l.b16 %v14181
    %v14466 = vunpack.c.h.b16 %v14181
    %v14467 = vunpack.c.l.b16 %v14182
    %v14468 = vunpack.c.h.b16 %v14182
    %v14469 = vunpack.c.l.b16 %v14183
    %v14470 = vunpack.c.h.b16 %v14183
    %v14471 = vunpack.c.l.b16 %v14184
    %v14472 = vunpack.c.h.b16 %v14184
    %v14473 = vunpack.c.l.b16 %v14185
    %v14474 = vunpack.c.h.b16 %v14185
    %v14475 = vunpack.c.l.b16 %v14186
    %v14476 = vunpack.c.h.b16 %v14186
    %v14477 = vunpack.c.l.b16 %v14187
    %v14478 = vunpack.c.h.b16 %v14187
    %v14479 = vunpack.c.l.b16 %v14188
    %v14480 = vunpack.c.h.b16 %v14188
    %v14481 = vunpack.c.l.b16 %v14189
    %v14482 = vunpack.c.h.b16 %v14189
    %v14483 = vunpack.c.l.b16 %v14190
    %v14484 = vunpack.c.h.b16 %v14190
    %v14485 = vunpack.c.l.b16 %v14191
    %v14486 = vunpack.c.h.b16 %v14191
    %v14487 = vunpack.c.l.b16 %v14192
    %v14488 = vunpack.c.h.b16 %v14192
    %v14489 = vunpack.c.l.b16 %v14193
    %v14490 = vunpack.c.h.b16 %v14193
    %v14491 = vunpack.c.l.b16 %v14194
    %v14492 = vunpack.c.h.b16 %v14194
    %v14493 = vunpack.c.l.b16 %v14195
    %v14494 = vunpack.c.h.b16 %v14195
    %v14495 = vunpack.c.l.b16 %v14196
    %v14496 = vunpack.c.h.b16 %v14196
    %v14497 = vunpack.c.l.b16 %v14197
    %v14498 = vunpack.c.h.b16 %v14197
    %v14499 = vunpack.c.l.b16 %v14198
    %v14500 = vunpack.c.h.b16 %v14198
    %v14501 = vunpack.c.l.b16 %v14199
    %v14502 = vunpack.c.h.b16 %v14199
    %v14503 = vunpack.c.l.b16 %v14200
    %v14504 = vunpack.c.h.b16 %v14200
    %v14505 = vunpack.c.l.b16 %v14201
    %v14506 = vunpack.c.h.b16 %v14201
    %v14507 = vunpack.c.l.b16 %v14202
    %v14508 = vunpack.c.h.b16 %v14202
    %v14509 = vunpack.c.l.b16 %v14203
    %v14510 = vunpack.c.h.b16 %v14203
    %v14511 = vunpack.c.l.b16 %v14204
    %v14512 = vunpack.c.h.b16 %v14204
    %v14513 = vunpack.c.l.b16 %v14205
    %v14514 = vunpack.c.h.b16 %v14205
    %v14515 = vunpack.c.l.b16 %v14206
    %v14516 = vunpack.c.h.b16 %v14206
    %v14517 = vunpack.c.l.b16 %v14207
    %v14518 = vunpack.c.h.b16 %v14207
    %v14519 = vunpack.c.l.b16 %v14208
    %v14520 = vunpack.c.h.b16 %v14208
    %v14521 = vunpack.c.l.b16 %v14209
    %v14522 = vunpack.c.h.b16 %v14209
    %v14523 = vunpack.c.l.b16 %v14210
    %v14524 = vunpack.c.h.b16 %v14210
    %v14525 = vunpack.c.l.b16 %v14211
    %v14526 = vunpack.c.h.b16 %v14211
    %v14527 = vunpack.c.l.b16 %v14212
    %v14528 = vunpack.c.h.b16 %v14212
    %v14529 = vunpack.c.l.b16 %v14213
    %v14530 = vunpack.c.h.b16 %v14213
    %v14531 = vunpack.c.l.b16 %v14214
    %v14532 = vunpack.c.h.b16 %v14214
    %v14533 = vunpack.c.l.b16 %v14215
    %v14534 = vunpack.c.h.b16 %v14215
    %v14535 = vunpack.c.l.b16 %v14216
    %v14536 = vunpack.c.h.b16 %v14216
    %v14537 = vunpack.c.l.b16 %v14217
    %v14538 = vunpack.c.h.b16 %v14217
    %v14539 = vunpack.c.l.b16 %v14218
    %v14540 = vunpack.c.h.b16 %v14218
    %v14541 = vunpack.c.l.b16 %v14219
    %v14542 = vunpack.c.h.b16 %v14219
    %v14543 = vunpack.c.l.b16 %v14220
    %v14544 = vunpack.c.h.b16 %v14220
    %v14545 = vpack.c.b16 %v14331, %v14329
    %v14546 = vpack.c.b16 %v14332, %v14330
    %v14547 = vpack.c.b16 %v14335, %v14333
    %v14548 = vpack.c.b16 %v14336, %v14334
    %v14549 = vpack.c.b16 %v14339, %v14337
    %v14550 = vpack.c.b16 %v14340, %v14338
    %v14551 = vpack.c.b16 %v14343, %v14341
    %v14552 = vpack.c.b16 %v14344, %v14342
    %v14553 = vpack.c.b16 %v14347, %v14345
    %v14554 = vpack.c.b16 %v14348, %v14346
    %v14555 = vpack.c.b16 %v14351, %v14349
    %v14556 = vpack.c.b16 %v14352, %v14350
    %v14557 = vpack.c.b16 %v14355, %v14353
    %v14558 = vpack.c.b16 %v14356, %v14354
    %v14559 = vpack.c.b16 %v14359, %v14357
    %v14560 = vpack.c.b16 %v14360, %v14358
    %v14561 = vpack.c.b16 %v14363, %v14361
    %v14562 = vpack.c.b16 %v14364, %v14362
    %v14563 = vpack.c.b16 %v14367, %v14365
    %v14564 = vpack.c.b16 %v14368, %v14366
    %v14565 = vpack.c.b16 %v14371, %v14369
    %v14566 = vpack.c.b16 %v14372, %v14370
    %v14567 = vpack.c.b16 %v14375, %v14373
    %v14568 = vpack.c.b16 %v14376, %v14374
    %v14569 = vpack.c.b16 %v14379, %v14377
    %v14570 = vpack.c.b16 %v14380, %v14378
    %v14571 = vpack.c.b16 %v14383, %v14381
    %v14572 = vpack.c.b16 %v14384, %v14382
    %v14573 = vpack.c.b16 %v14387, %v14385
    %v14574 = vpack.c.b16 %v14388, %v14386
    %v14575 = vpack.c.b16 %v14391, %v14389
    %v14576 = vpack.c.b16 %v14392, %v14390
    %v14577 = vpack.c.b16 %v14395, %v14393
    %v14578 = vpack.c.b16 %v14396, %v14394
    %v14579 = vpack.c.b16 %v14399, %v14397
    %v14580 = vpack.c.b16 %v14400, %v14398
    %v14581 = vpack.c.b16 %v14403, %v14401
    %v14582 = vpack.c.b16 %v14404, %v14402
    %v14583 = vpack.c.b16 %v14407, %v14405
    %v14584 = vpack.c.b16 %v14408, %v14406
    %v14585 = vpack.c.b16 %v14411, %v14409
    %v14586 = vpack.c.b16 %v14412, %v14410
    %v14587 = vpack.c.b16 %v14415, %v14413
    %v14588 = vpack.c.b16 %v14416, %v14414
    %v14589 = vpack.c.b16 %v14419, %v14417
    %v14590 = vpack.c.b16 %v14420, %v14418
    %v14591 = vpack.c.b16 %v14423, %v14421
    %v14592 = vpack.c.b16 %v14424, %v14422
    %v14593 = vpack.c.b16 %v14427, %v14425
    %v14594 = vpack.c.b16 %v14428, %v14426
    %v14595 = vpack.c.b16 %v14431, %v14429
    %v14596 = vpack.c.b16 %v14432, %v14430
    %v14597 = vpack.c.b16 %v14435, %v14433
    %v14598 = vpack.c.b16 %v14436, %v14434
    %v14599 = vpack.c.b16 %v14439, %v14437
    %v14600 = vpack.c.b16 %v14440, %v14438
    %v14601 = vpack.c.b16 %v14443, %v14441
    %v14602 = vpack.c.b16 %v14444, %v14442
    %v14603 = vpack.c.b16 %v14447, %v14445
    %v14604 = vpack.c.b16 %v14448, %v14446
    %v14605 = vpack.c.b16 %v14451, %v14449
    %v14606 = vpack.c.b16 %v14452, %v14450
    %v14607 = vpack.c.b16 %v14455, %v14453
    %v14608 = vpack.c.b16 %v14456, %v14454
    %v14609 = vpack.c.b16 %v14459, %v14457
    %v14610 = vpack.c.b16 %v14460, %v14458
    %v14611 = vpack.c.b16 %v14463, %v14461
    %v14612 = vpack.c.b16 %v14464, %v14462
    %v14613 = vpack.c.b16 %v14467, %v14465
    %v14614 = vpack.c.b16 %v14468, %v14466
    %v14615 = vpack.c.b16 %v14471, %v14469
    %v14616 = vpack.c.b16 %v14472, %v14470
    %v14617 = vpack.c.b16 %v14475, %v14473
    %v14618 = vpack.c.b16 %v14476, %v14474
    %v14619 = vpack.c.b16 %v14479, %v14477
    %v14620 = vpack.c.b16 %v14480, %v14478
    %v14621 = vpack.c.b16 %v14483, %v14481
    %v14622 = vpack.c.b16 %v14484, %v14482
    %v14623 = vpack.c.b16 %v14487, %v14485
    %v14624 = vpack.c.b16 %v14488, %v14486
    %v14625 = vpack.c.b16 %v14491, %v14489
    %v14626 = vpack.c.b16 %v14492, %v14490
    %v14627 = vpack.c.b16 %v14495, %v14493
    %v14628 = vpack.c.b16 %v14496, %v14494
    %v14629 = vpack.c.b16 %v14499, %v14497
    %v14630 = vpack.c.b16 %v14500, %v14498
    %v14631 = vpack.c.b16 %v14503, %v14501
    %v14632 = vpack.c.b16 %v14504, %v14502
    %v14633 = vpack.c.b16 %v14507, %v14505
    %v14634 = vpack.c.b16 %v14508, %v14506
    %v14635 = vpack.c.b16 %v14511, %v14509
    %v14636 = vpack.c.b16 %v14512, %v14510
    %v14637 = vpack.c.b16 %v14515, %v14513
    %v14638 = vpack.c.b16 %v14516, %v14514
    %v14639 = vpack.c.b16 %v14519, %v14517
    %v14640 = vpack.c.b16 %v14520, %v14518
    %v14641 = vpack.c.b16 %v14523, %v14521
    %v14642 = vpack.c.b16 %v14524, %v14522
    %v14643 = vpack.c.b16 %v14527, %v14525
    %v14644 = vpack.c.b16 %v14528, %v14526
    %v14645 = vpack.c.b16 %v14531, %v14529
    %v14646 = vpack.c.b16 %v14532, %v14530
    %v14647 = vpack.c.b16 %v14535, %v14533
    %v14648 = vpack.c.b16 %v14536, %v14534
    %v14649 = vpack.c.b16 %v14539, %v14537
    %v14650 = vpack.c.b16 %v14540, %v14538
    %v14651 = vpack.c.b16 %v14543, %v14541
    %v14652 = vpack.c.b16 %v14544, %v14542
    %14761 = vmatpush.bf16.msra.mxu0 %v14559
    %14762 = vmatpush.bf16.msra.mxu0 %v14557
    %14763 = vmatpush.bf16.msra.mxu0 %v14555
    %14764 = vmatpush.bf16.msra.mxu0 %v14553
    %14765 = vmatpush.bf16.msra.mxu0 %v14551
    %14766 = vmatpush.bf16.msra.mxu0 %v14549
    %14767 = vmatpush.bf16.msra.mxu0 %v14547
    %14768 = vmatpush.bf16.msra.mxu0 %v14545
    %14769 = vmatmul.bf16.gmra.mxu0 %v11559
    %v14770 = vpop.f32.mrf.mxu0
    %v14771 = vadd.f32 0.0, %v14770
    %v14772 = vpop.f32.mrf.mxu0
    %v14773 = vadd.f32 0.0, %v14772
    %14774 = vdwg.mxu0
    %14775 = vmatpush.bf16.msra.mxu0 %v14575
    %14776 = vmatpush.bf16.msra.mxu0 %v14573
    %14777 = vmatpush.bf16.msra.mxu0 %v14571
    %14778 = vmatpush.bf16.msra.mxu0 %v14569
    %14779 = vmatpush.bf16.msra.mxu0 %v14567
    %14780 = vmatpush.bf16.msra.mxu0 %v14565
    %14781 = vmatpush.bf16.msra.mxu0 %v14563
    %14782 = vmatpush.bf16.msra.mxu0 %v14561
    %14783 = vmatmul.bf16.gmra.mxu0 %v11560
    %v14784 = vpop.f32.mrf.mxu0
    %v14785 = vadd.f32 %v14771, %v14784
    %v14786 = vpop.f32.mrf.mxu0
    %v14787 = vadd.f32 %v14773, %v14786
    %14788 = vdwg.mxu0
    %14789 = vmatpush.bf16.msra.mxu0 %v14591
    %14790 = vmatpush.bf16.msra.mxu0 %v14589
    %14791 = vmatpush.bf16.msra.mxu0 %v14587
    %14792 = vmatpush.bf16.msra.mxu0 %v14585
    %14793 = vmatpush.bf16.msra.mxu0 %v14583
    %14794 = vmatpush.bf16.msra.mxu0 %v14581
    %14795 = vmatpush.bf16.msra.mxu0 %v14579
    %14796 = vmatpush.bf16.msra.mxu0 %v14577
    %14797 = vmatmul.bf16.gmra.mxu0 %v11561
    %v14798 = vpop.f32.mrf.mxu0
    %v14799 = vadd.f32 %v14785, %v14798
    %v14800 = vpop.f32.mrf.mxu0
    %v14801 = vadd.f32 %v14787, %v14800
    %14802 = vdwg.mxu0
    %14803 = vmatpush.bf16.msra.mxu0 %v14607
    %14804 = vmatpush.bf16.msra.mxu0 %v14605
    %14805 = vmatpush.bf16.msra.mxu0 %v14603
    %14806 = vmatpush.bf16.msra.mxu0 %v14601
    %14807 = vmatpush.bf16.msra.mxu0 %v14599
    %14808 = vmatpush.bf16.msra.mxu0 %v14597
    %14809 = vmatpush.bf16.msra.mxu0 %v14595
    %14810 = vmatpush.bf16.msra.mxu0 %v14593
    %14811 = vmatmul.bf16.gmra.mxu0 %v11562
    %v14812 = vpop.f32.mrf.mxu0
    %v14813 = vadd.f32 %v14799, %v14812
    %v14814 = vpop.f32.mrf.mxu0
    %v14815 = vadd.f32 %v14801, %v14814
    %14816 = vdwg.mxu0
    %14817 = vmatpush.bf16.msra.mxu0 %v14623
    %14818 = vmatpush.bf16.msra.mxu0 %v14621
    %14819 = vmatpush.bf16.msra.mxu0 %v14619
    %14820 = vmatpush.bf16.msra.mxu0 %v14617
    %14821 = vmatpush.bf16.msra.mxu0 %v14615
    %14822 = vmatpush.bf16.msra.mxu0 %v14613
    %14823 = vmatpush.bf16.msra.mxu0 %v14611
    %14824 = vmatpush.bf16.msra.mxu0 %v14609
    %14825 = vmatmul.bf16.gmra.mxu0 %v11563
    %v14826 = vpop.f32.mrf.mxu0
    %v14827 = vadd.f32 %v14813, %v14826
    %v14828 = vpop.f32.mrf.mxu0
    %v14829 = vadd.f32 %v14815, %v14828
    %14830 = vdwg.mxu0
    %14831 = vmatpush.bf16.msra.mxu0 %v14639
    %14832 = vmatpush.bf16.msra.mxu0 %v14637
    %14833 = vmatpush.bf16.msra.mxu0 %v14635
    %14834 = vmatpush.bf16.msra.mxu0 %v14633
    %14835 = vmatpush.bf16.msra.mxu0 %v14631
    %14836 = vmatpush.bf16.msra.mxu0 %v14629
    %14837 = vmatpush.bf16.msra.mxu0 %v14627
    %14838 = vmatpush.bf16.msra.mxu0 %v14625
    %14839 = vmatmul.bf16.gmra.mxu0 %v11564
    %v14840 = vpop.f32.mrf.mxu0
    %v14841 = vadd.f32 %v14827, %v14840
    %v14842 = vpop.f32.mrf.mxu0
    %v14843 = vadd.f32 %v14829, %v14842
    %14844 = vdwg.mxu0
    %14845 = vmatpush.bf16.msra.mxu0 0
    %14846 = vmatpush.bf16.msra.mxu0 0
    %14847 = vmatpush.bf16.msra.mxu0 %v14651
    %14848 = vmatpush.bf16.msra.mxu0 %v14649
    %14849 = vmatpush.bf16.msra.mxu0 %v14647
    %14850 = vmatpush.bf16.msra.mxu0 %v14645
    %14851 = vmatpush.bf16.msra.mxu0 %v14643
    %14852 = vmatpush.bf16.msra.mxu0 %v14641
    %14853 = vmatmul.bf16.gmra.mxu0 %v12216
    %v14854 = vpop.f32.mrf.mxu0
    %v14855 = vadd.f32 %v14841, %v14854
    %v14856 = vpop.f32.mrf.mxu0
    %v14857 = vadd.f32 %v14843, %v14856
    %14858 = vdwg.mxu0
    %14859 = vmatpush.bf16.msra.mxu0 %v14560
    %14860 = vmatpush.bf16.msra.mxu0 %v14558
    %14861 = vmatpush.bf16.msra.mxu0 %v14556
    %14862 = vmatpush.bf16.msra.mxu0 %v14554
    %14863 = vmatpush.bf16.msra.mxu0 %v14552
    %14864 = vmatpush.bf16.msra.mxu0 %v14550
    %14865 = vmatpush.bf16.msra.mxu0 %v14548
    %14866 = vmatpush.bf16.msra.mxu0 %v14546
    %14867 = vmatmul.bf16.gmra.mxu0 %v11559
    %v14868 = vpop.f32.mrf.mxu0
    %v14869 = vadd.f32 0.0, %v14868
    %v14870 = vpop.f32.mrf.mxu0
    %v14871 = vadd.f32 0.0, %v14870
    %14872 = vdwg.mxu0
    %14873 = vmatpush.bf16.msra.mxu0 %v14576
    %14874 = vmatpush.bf16.msra.mxu0 %v14574
    %14875 = vmatpush.bf16.msra.mxu0 %v14572
    %14876 = vmatpush.bf16.msra.mxu0 %v14570
    %14877 = vmatpush.bf16.msra.mxu0 %v14568
    %14878 = vmatpush.bf16.msra.mxu0 %v14566
    %14879 = vmatpush.bf16.msra.mxu0 %v14564
    %14880 = vmatpush.bf16.msra.mxu0 %v14562
    %14881 = vmatmul.bf16.gmra.mxu0 %v11560
    %v14882 = vpop.f32.mrf.mxu0
    %v14883 = vadd.f32 %v14869, %v14882
    %v14884 = vpop.f32.mrf.mxu0
    %v14885 = vadd.f32 %v14871, %v14884
    %14886 = vdwg.mxu0
    %14887 = vmatpush.bf16.msra.mxu0 %v14592
    %14888 = vmatpush.bf16.msra.mxu0 %v14590
    %14889 = vmatpush.bf16.msra.mxu0 %v14588
    %14890 = vmatpush.bf16.msra.mxu0 %v14586
    %14891 = vmatpush.bf16.msra.mxu0 %v14584
    %14892 = vmatpush.bf16.msra.mxu0 %v14582
    %14893 = vmatpush.bf16.msra.mxu0 %v14580
    %14894 = vmatpush.bf16.msra.mxu0 %v14578
    %14895 = vmatmul.bf16.gmra.mxu0 %v11561
    %v14896 = vpop.f32.mrf.mxu0
    %v14897 = vadd.f32 %v14883, %v14896
    %v14898 = vpop.f32.mrf.mxu0
    %v14899 = vadd.f32 %v14885, %v14898
    %14900 = vdwg.mxu0
    %14901 = vmatpush.bf16.msra.mxu0 %v14608
    %14902 = vmatpush.bf16.msra.mxu0 %v14606
    %14903 = vmatpush.bf16.msra.mxu0 %v14604
    %14904 = vmatpush.bf16.msra.mxu0 %v14602
    %14905 = vmatpush.bf16.msra.mxu0 %v14600
    %14906 = vmatpush.bf16.msra.mxu0 %v14598
    %14907 = vmatpush.bf16.msra.mxu0 %v14596
    %14908 = vmatpush.bf16.msra.mxu0 %v14594
    %14909 = vmatmul.bf16.gmra.mxu0 %v11562
    %v14910 = vpop.f32.mrf.mxu0
    %v14911 = vadd.f32 %v14897, %v14910
    %v14912 = vpop.f32.mrf.mxu0
    %v14913 = vadd.f32 %v14899, %v14912
    %14914 = vdwg.mxu0
    %14915 = vmatpush.bf16.msra.mxu0 %v14624
    %14916 = vmatpush.bf16.msra.mxu0 %v14622
    %14917 = vmatpush.bf16.msra.mxu0 %v14620
    %14918 = vmatpush.bf16.msra.mxu0 %v14618
    %14919 = vmatpush.bf16.msra.mxu0 %v14616
    %14920 = vmatpush.bf16.msra.mxu0 %v14614
    %14921 = vmatpush.bf16.msra.mxu0 %v14612
    %14922 = vmatpush.bf16.msra.mxu0 %v14610
    %14923 = vmatmul.bf16.gmra.mxu0 %v11563
    %v14924 = vpop.f32.mrf.mxu0
    %v14925 = vadd.f32 %v14911, %v14924
    %v14926 = vpop.f32.mrf.mxu0
    %v14927 = vadd.f32 %v14913, %v14926
    %14928 = vdwg.mxu0
    %14929 = vmatpush.bf16.msra.mxu0 %v14640
    %14930 = vmatpush.bf16.msra.mxu0 %v14638
    %14931 = vmatpush.bf16.msra.mxu0 %v14636
    %14932 = vmatpush.bf16.msra.mxu0 %v14634
    %14933 = vmatpush.bf16.msra.mxu0 %v14632
    %14934 = vmatpush.bf16.msra.mxu0 %v14630
    %14935 = vmatpush.bf16.msra.mxu0 %v14628
    %14936 = vmatpush.bf16.msra.mxu0 %v14626
    %14937 = vmatmul.bf16.gmra.mxu0 %v11564
    %v14938 = vpop.f32.mrf.mxu0
    %v14939 = vadd.f32 %v14925, %v14938
    %v14940 = vpop.f32.mrf.mxu0
    %v14941 = vadd.f32 %v14927, %v14940
    %14942 = vdwg.mxu0
    %14943 = vmatpush.bf16.msra.mxu0 0
    %14944 = vmatpush.bf16.msra.mxu0 0
    %14945 = vmatpush.bf16.msra.mxu0 %v14652
    %14946 = vmatpush.bf16.msra.mxu0 %v14650
    %14947 = vmatpush.bf16.msra.mxu0 %v14648
    %14948 = vmatpush.bf16.msra.mxu0 %v14646
    %14949 = vmatpush.bf16.msra.mxu0 %v14644
    %14950 = vmatpush.bf16.msra.mxu0 %v14642
    %14951 = vmatmul.bf16.gmra.mxu0 %v12216
    %v14952 = vpop.f32.mrf.mxu0
    %v14953 = vadd.f32 %v14939, %v14952
    %v14954 = vpop.f32.mrf.mxu0
    %v14955 = vadd.f32 %v14941, %v14954
    %14956 = vdwg.mxu0
    %v14957 = vmax.f32 %v14108, %v14855
    %v14958 = vmax.f32 %v14109, %v14953
    %v14959 = vmax.f32 %v14110, %v14857
    %v14960 = vmax.f32 %v14111, %v14955
    %v14961 = vld [vmem:[%s4] sm:$0x3]
    %v14963 = vperm.slane %v14961, 0
    %v14964 = vperm.slane %v14961, 1
    %v14967 = vadd.f32 %v14957, %v14963
    %v14968 = vadd.f32 %v14958, %v14964
    %v14969 = vadd.f32 %v14959, %v14963
    %v14970 = vadd.f32 %v14960, %v14964
    %v14971 = vmax.f32 %v14967, 0.0
    %v14972 = vmax.f32 %v14968, 0.0
    %v14973 = vmax.f32 %v14969, 0.0
    %v14974 = vmax.f32 %v14970, 0.0
    %v14975 = vpack.c.bf16 %v14973, %v14971
    %v14976 = vpack.c.bf16 %v14974, %v14972
    %v14977 = vld [vmem:[%s5] sm:$0xf]
    %v14978 = vld [vmem:[%s5 + $0x4] sm:$0xf]
    %v14979 = vld [vmem:[%s5 + $0x8] sm:$0xf]
    %v14980 = vld [vmem:[%s5 + $0xc] sm:$0xf]
    %v14981 = vld [vmem:[%s5 + $0x10] sm:$0xf]
    %v14982 = vld [vmem:[%s5 + $0x14] sm:$0xf]
    %v14983 = vld [vmem:[%s5 + $0x18] sm:$0xf]
    %v14984 = vld [vmem:[%s5 + $0x1c] sm:$0xf]
    %v14985 = vld [vmem:[%s5 + $0x20] sm:$0xf]
    %v14986 = vld [vmem:[%s5 + $0x24] sm:$0xf]
    %v14987 = vld [vmem:[%s5 + $0x28] sm:$0xf]
    %v14988 = vld [vmem:[%s5 + $0x2c] sm:$0xf]
    %v14989 = vld [vmem:[%s5 + $0x30] sm:$0xf]
    %v14990 = vld [vmem:[%s5 + $0x34] sm:$0xf]
    %v14991 = vld [vmem:[%s5 + $0x38] sm:$0xf]
    %v14992 = vld [vmem:[%s5 + $0x3c] sm:$0xf]
    %v14993 = vld [vmem:[%s5 + $0x40] sm:$0xf]
    %v14994 = vld [vmem:[%s5 + $0x44] sm:$0xf]
    %v14995 = vld [vmem:[%s5 + $0x48] sm:$0xf]
    %v14996 = vld [vmem:[%s5 + $0x4c] sm:$0xf]
    %v14997 = vld [vmem:[%s5 + $0x50] sm:$0xf]
    %v14998 = vld [vmem:[%s5 + $0x54] sm:$0xf]
    %v14999 = vld [vmem:[%s5 + $0x58] sm:$0xf]
    %v15000 = vld [vmem:[%s5 + $0x5c] sm:$0xf]
    %v15001 = vld [vmem:[%s6] sm:$0x1]
    %v15003 = vperm.slane %v15001, 0
    %v15029 = vunpack.c.l.b16 %v14977
    %v15030 = vunpack.c.l.b16 %v14978
    %v15031 = vunpack.c.l.b16 %v14979
    %v15032 = vunpack.c.l.b16 %v14980
    %v15033 = vunpack.c.l.b16 %v14981
    %v15034 = vunpack.c.l.b16 %v14982
    %v15035 = vunpack.c.l.b16 %v14983
    %v15036 = vunpack.c.l.b16 %v14984
    %v15037 = vunpack.c.l.b16 %v14985
    %v15038 = vunpack.c.l.b16 %v14986
    %v15039 = vunpack.c.l.b16 %v14987
    %v15040 = vunpack.c.l.b16 %v14988
    %v15041 = vunpack.c.l.b16 %v14989
    %v15042 = vunpack.c.l.b16 %v14990
    %v15043 = vunpack.c.l.b16 %v14991
    %v15044 = vunpack.c.l.b16 %v14992
    %v15045 = vunpack.c.l.b16 %v14993
    %v15046 = vunpack.c.l.b16 %v14994
    %v15047 = vunpack.c.l.b16 %v14995
    %v15048 = vunpack.c.l.b16 %v14996
    %v15049 = vunpack.c.l.b16 %v14997
    %v15050 = vunpack.c.l.b16 %v14998
    %v15051 = vunpack.c.l.b16 %v14999
    %v15052 = vunpack.c.l.b16 %v15000
    %v15053 = vpack.c.b16 %v15030, %v15029
    %v15054 = vpack.c.b16 %v15032, %v15031
    %v15055 = vpack.c.b16 %v15034, %v15033
    %v15056 = vpack.c.b16 %v15036, %v15035
    %v15057 = vpack.c.b16 %v15038, %v15037
    %v15058 = vpack.c.b16 %v15040, %v15039
    %v15059 = vpack.c.b16 %v15042, %v15041
    %v15060 = vpack.c.b16 %v15044, %v15043
    %v15061 = vpack.c.b16 %v15046, %v15045
    %v15062 = vpack.c.b16 %v15048, %v15047
    %v15063 = vpack.c.b16 %v15050, %v15049
    %v15064 = vpack.c.b16 %v15052, %v15051
    %vm15077 = vcmask 523264
    %v15079 = vsel %vm15077, %v14976, 0
    %15081 = vmatpush.bf16.msra.mxu0 %v15060
    %15082 = vmatpush.bf16.msra.mxu0 %v15059
    %15083 = vmatpush.bf16.msra.mxu0 %v15058
    %15084 = vmatpush.bf16.msra.mxu0 %v15057
    %15085 = vmatpush.bf16.msra.mxu0 %v15056
    %15086 = vmatpush.bf16.msra.mxu0 %v15055
    %15087 = vmatpush.bf16.msra.mxu0 %v15054
    %15088 = vmatpush.bf16.msra.mxu0 %v15053
    %15089 = vmatmul.bf16.gmra.mxu0 %v14975
    %v15090 = vpop.f32.mrf.mxu0
    %v15091 = vadd.f32 %v15003, %v15090
    %v15092 = vpop.f32.mrf.mxu0
    %v15093 = vadd.f32 %v15003, %v15092
    %15094 = vdwg.mxu0
    %15095 = vmatpush.bf16.msra.mxu0 0
    %15096 = vmatpush.bf16.msra.mxu0 0
    %15097 = vmatpush.bf16.msra.mxu0 0
    %15098 = vmatpush.bf16.msra.mxu0 0
    %15099 = vmatpush.bf16.msra.mxu0 %v15064
    %15100 = vmatpush.bf16.msra.mxu0 %v15063
    %15101 = vmatpush.bf16.msra.mxu0 %v15062
    %15102 = vmatpush.bf16.msra.mxu0 %v15061
    %15103 = vmatmul.bf16.gmra.mxu0 %v15079
    %v15104 = vpop.f32.mrf.mxu0
    %v15105 = vadd.f32 %v15091, %v15104
    %v15106 = vpop.f32.mrf.mxu0
    %v15107 = vadd.f32 %v15093, %v15106
    %15108 = vdwg.mxu0
    %v15109 = vmax.f32 %v15105, 0.0
    %v15110 = vmax.f32 %v15107, 0.0
    %v15111 = vpack.c.bf16 %v15110, %v15109
    %v15112 = vld [vmem:[%s7] sm:$0xf]
    %v15113 = vld [vmem:[%s7 + $0x4] sm:$0xf]
    %v15114 = vld [vmem:[%s7 + $0x8] sm:$0xf]
    %v15115 = vld [vmem:[%s7 + $0xc] sm:$0xf]
    %v15116 = vld [vmem:[%s7 + $0x10] sm:$0xf]
    %v15117 = vld [vmem:[%s7 + $0x14] sm:$0xf]
    %v15118 = vld [vmem:[%s7 + $0x18] sm:$0xf]
    %v15119 = vld [vmem:[%s7 + $0x1c] sm:$0xf]
    %v15120 = vld [vmem:[%s7 + $0x20] sm:$0xf]
    %v15121 = vld [vmem:[%s7 + $0x24] sm:$0xf]
    %v15122 = vld [vmem:[%s7 + $0x28] sm:$0xf]
    %v15123 = vld [vmem:[%s7 + $0x2c] sm:$0xf]
    %v15124 = vld [vmem:[%s7 + $0x30] sm:$0xf]
    %v15125 = vld [vmem:[%s7 + $0x34] sm:$0xf]
    %v15126 = vld [vmem:[%s7 + $0x38] sm:$0xf]
    %v15127 = vld [vmem:[%s8] sm:$0x1]
    %v15129 = vperm.slane %v15127, 0
    %v15146 = vunpack.c.l.b16 %v15112
    %v15147 = vunpack.c.l.b16 %v15113
    %v15148 = vunpack.c.l.b16 %v15114
    %v15149 = vunpack.c.l.b16 %v15115
    %v15150 = vunpack.c.l.b16 %v15116
    %v15151 = vunpack.c.l.b16 %v15117
    %v15152 = vunpack.c.l.b16 %v15118
    %v15153 = vunpack.c.l.b16 %v15119
    %v15154 = vunpack.c.l.b16 %v15120
    %v15155 = vunpack.c.l.b16 %v15121
    %v15156 = vunpack.c.l.b16 %v15122
    %v15157 = vunpack.c.l.b16 %v15123
    %v15158 = vunpack.c.l.b16 %v15124
    %v15159 = vunpack.c.l.b16 %v15125
    %v15160 = vunpack.c.l.b16 %v15126
    %v15161 = vpack.c.b16 %v15147, %v15146
    %v15162 = vpack.c.b16 %v15149, %v15148
    %v15163 = vpack.c.b16 %v15151, %v15150
    %v15164 = vpack.c.b16 %v15153, %v15152
    %v15165 = vpack.c.b16 %v15155, %v15154
    %v15166 = vpack.c.b16 %v15157, %v15156
    %v15167 = vpack.c.b16 %v15159, %v15158
    %v15168 = vpack.c.b16 %v15160, %v15160
    %vm15176 = vcmask 982016
    %v15178 = vsel %vm15176, %v15111, 0
    %vm15180 = vcmask 1043456
    %v15182 = vsel %vm15180, %v15168, 0
    %15184 = vmatpush.bf16.msra.mxu0 %v15182
    %15185 = vmatpush.bf16.msra.mxu0 %v15167
    %15186 = vmatpush.bf16.msra.mxu0 %v15166
    %15187 = vmatpush.bf16.msra.mxu0 %v15165
    %15188 = vmatpush.bf16.msra.mxu0 %v15164
    %15189 = vmatpush.bf16.msra.mxu0 %v15163
    %15190 = vmatpush.bf16.msra.mxu0 %v15162
    %15191 = vmatpush.bf16.msra.mxu0 %v15161
    %15192 = vmatmul.bf16.gmra.mxu0 %v15178
    %v15193 = vpop.f32.mrf.mxu0
    %v15194 = vadd.f32 %v15129, %v15193
    %v15195 = vpop.f32.mrf.mxu0
    %v15196 = vadd.f32 %v15129, %v15195
    %15197 = vdwg.mxu0
    %v15198 = vmax.f32 %v15194, 0.0
    %v15199 = vmax.f32 %v15196, 0.0
    %v15200 = vpack.c.bf16 %v15199, %v15198
    %v15201 = vld [vmem:[%s9] sm:$0xf]
    %v15202 = vld [vmem:[%s9 + $0x4] sm:$0xf]
    %v15203 = vld [vmem:[%s9 + $0x8] sm:$0xf]
    %v15204 = vld [vmem:[%s9 + $0xc] sm:$0xf]
    %v15205 = vld [vmem:[%s9 + $0x10] sm:$0xf]
    %v15206 = vld [vmem:[%s9 + $0x14] sm:$0xf]
    %v15207 = vld [vmem:[%s9 + $0x18] sm:$0xf]
    %v15208 = vld [vmem:[%s9 + $0x1c] sm:$0x3]
    %v15209 = vld [vmem:[%s10] sm:$0x1]
    %v15211 = vperm.slane %v15209, 0
    %v15221 = vunpack.c.l.b16 %v15201
    %v15222 = vunpack.c.l.b16 %v15202
    %v15223 = vunpack.c.l.b16 %v15203
    %v15224 = vunpack.c.l.b16 %v15204
    %v15225 = vunpack.c.l.b16 %v15205
    %v15226 = vunpack.c.l.b16 %v15206
    %v15227 = vunpack.c.l.b16 %v15207
    %v15228 = vunpack.c.l.b16 %v15208
    %v15229 = vpack.c.b16 %v15222, %v15221
    %v15230 = vpack.c.b16 %v15224, %v15223
    %v15231 = vpack.c.b16 %v15226, %v15225
    %v15232 = vpack.c.b16 %v15228, %v15227
    %vm15236 = vcmask 490496
    %v15238 = vsel %vm15236, %v15200, 0
    %vm15240 = vcmask 1045504
    %v15242 = vsel %vm15240, %v15232, 0
    %15244 = vmatpush.bf16.msra.mxu0 0
    %15245 = vmatpush.bf16.msra.mxu0 0
    %15246 = vmatpush.bf16.msra.mxu0 0
    %15247 = vmatpush.bf16.msra.mxu0 0
    %15248 = vmatpush.bf16.msra.mxu0 %v15242
    %15249 = vmatpush.bf16.msra.mxu0 %v15231
    %15250 = vmatpush.bf16.msra.mxu0 %v15230
    %15251 = vmatpush.bf16.msra.mxu0 %v15229
    %15252 = vmatmul.bf16.gmra.mxu0 %v15238
    %v15253 = vpop.f32.mrf.mxu0
    %v15254 = vadd.f32 %v15211, %v15253
    %v15255 = vpop.f32.mrf.mxu0
    %v15256 = vadd.f32 %v15211, %v15255
    %15257 = vdwg.mxu0
    %15258 = vst [vmem:[%s11] sm:$0xff] %v15254
    %15259 = vst [vmem:[%s11 + $0x8] sm:$0xff] %v15256
    // Predicated region
    $region50: #{network_forward.1} parent=1 // pred_check
      _
    $region51: #{network_forward.1} parent=1 // pred_check_branch
      %15261 = sbr.rel (0) target = $region53
    $region52: #{network_forward.1} parent=1 // pred_region
      _
    $region53: #{network_forward.1} parent=1 // pred_fallthru
      _
    // Predicated region
    $region54: #{network_forward.1} parent=1 // pred_check
      _
    $region55: #{network_forward.1} parent=1 // pred_check_branch
      %15263 = sbr.rel (0) target = $region57
    $region56: #{network_forward.1} parent=1 // pred_region
      _
    $region57: #{network_forward.1} parent=1 // pred_fallthru
      _
    %15264 = vsyncpa [#allocation3], 1

</llo_original>
